<compile_context>
chip_gen: v7x
topology: tpu7x:2x2x1
jax: 0.10.0
libtpu: 0.0.40
codegen_flags: <defaults>
</compile_context>

<pallas_src>
import jax
import jax.numpy as jnp
from jax.experimental import pallas as pl
from jax.experimental.pallas import tpu as pltpu


_MAX_BLOCK_K = 1024     # cap on per-step contraction depth (VMEM-friendly, incl. v7x 64 MiB)
_MAX_BLOCK_M = 512      # large row tiles amortize the ~0.35us per-grid-step overhead
_VMEM_LIMIT = 48 * 1024 * 1024


def _round_up(x, m):
    return ((x + m - 1) // m) * m


# ---------------------------------------------------------------------------
# Pallas kernels
# ---------------------------------------------------------------------------
def _conv_bias_relu_kernel(p_ref, w_ref, b_ref, o_ref, acc_ref):
    """One (block_m, block_k) @ (block_k, cout_pad) MXU step of the conv GEMM.

    BN scale is pre-folded into w, so the epilogue is just  + bias, ReLU.
    f32 accumulation lives in a VMEM scratch across the K grid axis.
    """
    k = pl.program_id(1)

    @pl.when(k == 0)
    def _():
        acc_ref[...] = jnp.zeros_like(acc_ref)

    acc_ref[...] += jnp.dot(p_ref[...], w_ref[...],
                            preferred_element_type=jnp.float32)

    @pl.when(k == pl.num_programs(1) - 1)
    def _():
        y = acc_ref[...] + b_ref[...]
        o_ref[...] = jnp.maximum(y, 0.0).astype(o_ref.dtype)


def _maxpool_kernel(x_ref, o_ref):
    # x_ref: (KH*KW, block_m, C) window taps; elementwise max over the taps.
    o_ref[...] = jnp.max(x_ref[...], axis=0).astype(o_ref.dtype)


# ---------------------------------------------------------------------------
# Wrappers (layout plumbing / glue)
# ---------------------------------------------------------------------------
def _im2col_nhwc(x_nhwc, kh, kw, stride, padding):
    n, h, w, c = x_nhwc.shape
    if padding:
        x_nhwc = jnp.pad(
            x_nhwc, ((0, 0), (padding, padding), (padding, padding), (0, 0)))
    hp, wp = h + 2 * padding, w + 2 * padding
    oh = (hp - kh) // stride + 1
    ow = (wp - kw) // stride + 1
    cols = []
    for i in range(kh):
        for j in range(kw):
            cols.append(x_nhwc[:, i:i + stride * (oh - 1) + 1:stride,
                               j:j + stride * (ow - 1) + 1:stride, :])
    patches = jnp.concatenate(cols, axis=-1)            # (N, OH, OW, KH*KW*C)
    return patches.reshape(n * oh * ow, kh * kw * c), oh, ow


def _conv_bn_relu_nhwc(x_nhwc, weight, gamma, beta, mean, var,
                       *, stride, padding, eps=1e-3):
    """Conv2d(bias=False) + eval-mode BatchNorm2d + ReLU on an NHWC tensor."""
    c_out, c_in, kh, kw = weight.shape
    n = x_nhwc.shape[0]

    # Fold eval-mode BN into the conv weight (scale) and a per-channel bias.
    scale = (gamma / jnp.sqrt(var + eps)).astype(jnp.float32)
    bias = (beta - mean * scale).astype(jnp.float32)
    w_folded = weight.astype(jnp.float32) * scale[:, None, None, None]

    # im2col (glue).  NOTE: this materializes the KH*KW-fold patch expansion in
    # HBM, so the kernel is HBM-bound on patch reads; see TODO(synk) above.
    patches, oh, ow = _im2col_nhwc(x_nhwc, kh, kw, stride, padding)
    m, k = patches.shape

    # Weight (Cout,Cin,KH,KW) -> (KH,KW,Cin,Cout) -> (K,Cout); matches patch order.
    w_mat = jnp.transpose(w_folded, (2, 3, 1, 0)).reshape(k, c_out)

    # --- K (contraction) tiling: one step if small, else 128-aligned K tiles.
    nk = -(-k // _MAX_BLOCK_K)
    if nk == 1:
        block_k = _round_up(k, 8)
    else:
        block_k = _round_up(-(-k // nk), 128)
    k_pad = nk * block_k

    # --- Lane-dense output channels (multiple of 128).
    cout_pad = _round_up(c_out, 128)

    # --- M (row) tiling; "parallel" grid axis.  (At realistic shapes block_m
    #     stays 512 so the M grid keeps >=2 steps for v7x's two TensorCores.)
    block_m = min(_MAX_BLOCK_M, _round_up(m, 8))
    m_pad = _round_up(m, block_m)
    nm = m_pad // block_m

    patches = jnp.pad(patches, ((0, m_pad - m), (0, k_pad - k)))
    w_mat = jnp.pad(w_mat, ((0, k_pad - k), (0, cout_pad - c_out)))
    bias = jnp.pad(bias, (0, cout_pad - c_out)).reshape(1, cout_pad)

    out = pl.pallas_call(
        _conv_bias_relu_kernel,
        out_shape=jax.ShapeDtypeStruct((m_pad, cout_pad), jnp.float32),
        grid_spec=pltpu.PrefetchScalarGridSpec(
            num_scalar_prefetch=0,
            grid=(nm, nk),
            in_specs=[
                pl.BlockSpec((block_m, block_k), lambda i, kk: (i, kk)),
                pl.BlockSpec((block_k, cout_pad), lambda i, kk: (kk, 0)),
                pl.BlockSpec((1, cout_pad), lambda i, kk: (0, 0)),
            ],
            out_specs=pl.BlockSpec((block_m, cout_pad), lambda i, kk: (i, 0)),
            scratch_shapes=[pltpu.VMEM((block_m, cout_pad), jnp.float32)],
        ),
        compiler_params=pltpu.CompilerParams(
            dimension_semantics=("parallel", "arbitrary"),
            vmem_limit_bytes=_VMEM_LIMIT,
        ),
    )(patches.astype(jnp.bfloat16), w_mat.astype(jnp.bfloat16), bias)

    return out[:m, :c_out].reshape(n, oh, ow, c_out)


def _maxpool3x3_s2_nhwc(x_nhwc):
    """MaxPool2d(kernel=3, stride=2, no padding) on an NHWC tensor."""
    n, h, w, c = x_nhwc.shape
    oh = (h - 3) // 2 + 1
    ow = (w - 3) // 2 + 1
    taps = []
    for i in range(3):
        for j in range(3):
            taps.append(x_nhwc[:, i:i + 2 * (oh - 1) + 1:2,
                               j:j + 2 * (ow - 1) + 1:2, :])
    stacked = jnp.stack(taps, axis=0).reshape(9, n * oh * ow, c)

    m = n * oh * ow
    block_m = min(_MAX_BLOCK_M, _round_up(m, 8))
    m_pad = _round_up(m, block_m)
    stacked = jnp.pad(stacked, ((0, 0), (0, m_pad - m), (0, 0)))

    out = pl.pallas_call(
        _maxpool_kernel,
        out_shape=jax.ShapeDtypeStruct((m_pad, c), jnp.float32),
        grid_spec=pltpu.PrefetchScalarGridSpec(
            num_scalar_prefetch=0,
            grid=(m_pad // block_m,),
            in_specs=[pl.BlockSpec((9, block_m, c), lambda i: (0, i, 0))],
            out_specs=pl.BlockSpec((block_m, c), lambda i: (i, 0)),
        ),
        compiler_params=pltpu.CompilerParams(
            dimension_semantics=("parallel",),
            vmem_limit_bytes=_VMEM_LIMIT,
        ),
    )(stacked.astype(jnp.float32))
    return out[:m].reshape(n, oh, ow, c)


@jax.jit
def reduction_a(x_nchw, params):
    """Forward of Reduction_A.  x_nchw: (N, 256, H, W) -> (N, 896, OH, OW)."""
    x = jnp.transpose(x_nchw, (0, 2, 3, 1))                       # NCHW -> NHWC once

    b0 = _conv_bn_relu_nhwc(x, *params["branch0"], stride=2, padding=0)

    y = _conv_bn_relu_nhwc(x, *params["branch1_0"], stride=1, padding=0)
    y = _conv_bn_relu_nhwc(y, *params["branch1_1"], stride=1, padding=1)
    b1 = _conv_bn_relu_nhwc(y, *params["branch1_2"], stride=2, padding=0)

    b2 = _maxpool3x3_s2_nhwc(x)

    out = jnp.concatenate([b0, b1, b2], axis=-1)   # == torch.cat(dim=1) in NCHW
    return jnp.transpose(out, (0, 3, 1, 2))        # back to NCHW


# ---------------------------------------------------------------------------
# Self-test
# ---------------------------------------------------------------------------
def _ref_conv_bn_relu(x, w, gamma, beta, mean, var, stride, padding, eps=1e-3):
    # Reference mirroring the kernel's numerics: BN scale folded into bf16
    # weights, bf16 activations, f32 accumulation, f32 bias + ReLU.
    scale = gamma / jnp.sqrt(var + eps)
    bias = beta - mean * scale
    wf = (w.astype(jnp.float32) * scale[:, None, None, None]).astype(jnp.bfloat16)
    y = jax.lax.conv_general_dilated(
        x.astype(jnp.bfloat16), wf, (stride, stride),
        [(padding, padding), (padding, padding)],
        dimension_numbers=("NCHW", "OIHW", "NCHW"),
        preferred_element_type=jnp.float32)
    return jnp.maximum(y + bias[None, :, None, None], 0.0)


if __name__ == "__main__":
    key = jax.random.PRNGKey(0)

    def make_conv_params(k, c_in, c_out, ksize):
        ks = jax.random.split(k, 5)
        w = 0.05 * jax.random.normal(ks[0], (c_out, c_in, ksize, ksize), jnp.float32)
        gamma = 1.0 + 0.1 * jax.random.normal(ks[1], (c_out,), jnp.float32)
        beta = 0.1 * jax.random.normal(ks[2], (c_out,), jnp.float32)
        mean = 0.1 * jax.random.normal(ks[3], (c_out,), jnp.float32)
        var = jnp.abs(jax.random.normal(ks[4], (c_out,), jnp.float32)) + 0.5
        return (w, gamma, beta, mean, var)

    k0, k1, k2, k3, kx = jax.random.split(key, 5)
    params = {
        "branch0":   make_conv_params(k0, 256, 384, 3),   # channel counts fixed by module
        "branch1_0": make_conv_params(k1, 256, 192, 1),
        "branch1_1": make_conv_params(k2, 192, 192, 3),
        "branch1_2": make_conv_params(k3, 192, 256, 3),
    }

    # Small spatial size; channels are dictated by Reduction_A itself (Cin=256).
    N, C, H, W = 2, 256, 9, 9
    x = jax.random.normal(kx, (N, C, H, W), jnp.float32)

    y = reduction_a(x, params)
    jax.block_until_ready(y)

    # Lightweight sanity check against a pure-JAX reference with matched numerics.
    r0 = _ref_conv_bn_relu(x, *params["branch0"], 2, 0)
    r1 = _ref_conv_bn_relu(x, *params["branch1_0"], 1, 0)
    r1 = _ref_conv_bn_relu(r1, *params["branch1_1"], 1, 1)
    r1 = _ref_conv_bn_relu(r1, *params["branch1_2"], 2, 0)
    r2 = jax.lax.reduce_window(x, -jnp.inf, jax.lax.max,
                               (1, 1, 3, 3), (1, 1, 2, 2), "VALID")
    ref = jnp.concatenate([r0, r1, r2], axis=1)

    assert y.shape == (N, 384 + 256 + 256, 4, 4), y.shape
    assert jnp.allclose(y, ref, atol=2e-2, rtol=2e-2), "mismatch vs reference"

    print("KERNEL_OK")
</pallas_src>

<mosaic_0001>
module attributes {stable_mosaic.version = 11 : i64} {
  func.func @_conv_bias_relu_kernel(%arg0: i32, %arg1: i32, %arg2: memref<168x256xbf16, #tpu.memory_space<vmem>>, %arg3: memref<256x256xbf16, #tpu.memory_space<vmem>>, %arg4: memref<1x256xf32, #tpu.memory_space<vmem>>, %arg5: memref<168x256xf32, #tpu.memory_space<vmem>>, %arg6: memref<168x256xf32, #tpu.memory_space<vmem>>) attributes {dimension_semantics = [#tpu.dimension_semantics<parallel>, #tpu.dimension_semantics<arbitrary>], iteration_bounds = array<i64: 1, 1>, scalar_prefetch = 0 : i64, scratch_operands = 1 : i64, tpu.core_type = #tpu.core_type<tc>, window_params = [{transform_indices = @transform_0, window_bounds = array<i64: 168, 256>}, {transform_indices = @transform_1, window_bounds = array<i64: 256, 256>}, {pipeline_mode = #tpu.pipeline_mode<synchronous>, transform_indices = @transform_2, window_bounds = array<i64: 1, 256>}, {transform_indices = @transform_3, window_bounds = array<i64: 168, 256>}]} {
    %c0_i32 = arith.constant 0 : i32
    %0 = arith.cmpi eq, %arg1, %c0_i32 : i32
    %1 = arith.extui %0 : i1 to i32
    %c0_i32_0 = arith.constant 0 : i32
    %2 = arith.cmpi ne, %1, %c0_i32_0 : i32
    scf.if %2 {
      %cst_10 = arith.constant 0.000000e+00 : f32
      %12 = vector.broadcast %cst_10 : f32 to vector<168x256xf32>
      %c0_11 = arith.constant 0 : index
      %c0_12 = arith.constant 0 : index
      %13 = vector.load %arg6[%c0_11, %c0_12] : memref<168x256xf32, #tpu.memory_space<vmem>>, vector<168x256xf32>
      tpu.vector_store %arg6[%c0_11, %c0_12], %12 {strides = array<i32>} : memref<168x256xf32, #tpu.memory_space<vmem>>, vector<168x256xf32>,
    } else {
    }
    %c0 = arith.constant 0 : index
    %c0_1 = arith.constant 0 : index
    %3 = vector.load %arg6[%c0, %c0_1] : memref<168x256xf32, #tpu.memory_space<vmem>>, vector<168x256xf32>
    %c0_2 = arith.constant 0 : index
    %c0_3 = arith.constant 0 : index
    %4 = vector.load %arg2[%c0_2, %c0_3] : memref<168x256xbf16, #tpu.memory_space<vmem>>, vector<168x256xbf16>
    %c0_4 = arith.constant 0 : index
    %c0_5 = arith.constant 0 : index
    %5 = vector.load %arg3[%c0_4, %c0_5] : memref<256x256xbf16, #tpu.memory_space<vmem>>, vector<256x256xbf16>
    %cst = arith.constant dense<0.000000e+00> : vector<168x256xf32>
    %6 = tpu.matmul %4, %5, %cst {dimension_numbers = #tpu.dot_dimension_numbers<[1], [0], [0], [1], [0, 0, 1, 1], [], []>} : vector<168x256xbf16>, vector<256x256xbf16>, vector<168x256xf32> -> vector<168x256xf32>
    %7 = arith.addf %3, %6 : vector<168x256xf32>
    %c0_6 = arith.constant 0 : index
    %c0_7 = arith.constant 0 : index
    %8 = vector.load %arg6[%c0_6, %c0_7] : memref<168x256xf32, #tpu.memory_space<vmem>>, vector<168x256xf32>
    tpu.vector_store %arg6[%c0_6, %c0_7], %7 {strides = array<i32>} : memref<168x256xf32, #tpu.memory_space<vmem>>, vector<168x256xf32>,
    %c0_i32_8 = arith.constant 0 : i32
    %9 = arith.cmpi eq, %arg1, %c0_i32_8 : i32
    %10 = arith.extui %9 : i1 to i32
    %c0_i32_9 = arith.constant 0 : i32
    %11 = arith.cmpi ne, %10, %c0_i32_9 : i32
    scf.if %11 {
      %c0_10 = arith.constant 0 : index
      %c0_11 = arith.constant 0 : index
      %12 = vector.load %arg6[%c0_10, %c0_11] : memref<168x256xf32, #tpu.memory_space<vmem>>, vector<168x256xf32>
      %c0_12 = arith.constant 0 : index
      %c0_13 = arith.constant 0 : index
      %13 = vector.load %arg4[%c0_12, %c0_13] : memref<1x256xf32, #tpu.memory_space<vmem>>, vector<1x256xf32>
      %14 = vector.broadcast %13 : vector<1x256xf32> to vector<168x256xf32>
      %15 = arith.addf %12, %14 : vector<168x256xf32>
      %cst_14 = arith.constant 0.000000e+00 : f32
      %16 = vector.broadcast %cst_14 : f32 to vector<168x256xf32>
      %17 = arith.maximumf %15, %16 : vector<168x256xf32>
      %c0_15 = arith.constant 0 : index
      %c0_16 = arith.constant 0 : index
      %18 = vector.load %arg5[%c0_15, %c0_16] : memref<168x256xf32, #tpu.memory_space<vmem>>, vector<168x256xf32>
      tpu.vector_store %arg5[%c0_15, %c0_16], %17 {strides = array<i32>} : memref<168x256xf32, #tpu.memory_space<vmem>>, vector<168x256xf32>,
    } else {
    }
    return
  }
  func.func @transform_0(%arg0: i32, %arg1: i32) -> (i32, i32) {
    %c0_i32 = arith.constant 0 : i32
    return %arg0, %arg1 : i32, i32
  }
  func.func @transform_1(%arg0: i32, %arg1: i32) -> (i32, i32) {
    %c0_i32 = arith.constant 0 : i32
    %c0_i32_0 = arith.constant 0 : i32
    return %arg1, %c0_i32 : i32, i32
  }
  func.func @transform_2(%arg0: i32, %arg1: i32) -> (i32, i32) {
    %c0_i32 = arith.constant 0 : i32
    %c0_i32_0 = arith.constant 0 : i32
    %c0_i32_1 = arith.constant 0 : i32
    return %c0_i32, %c0_i32_0 : i32, i32
  }
  func.func @transform_3(%arg0: i32, %arg1: i32) -> (i32, i32) {
    %c0_i32 = arith.constant 0 : i32
    %c0_i32_0 = arith.constant 0 : i32
    return %arg0, %c0_i32 : i32, i32
  }
}

module attributes {stable_mosaic.version = 11 : i64} {
  func.func @_maxpool_kernel(%arg0: i32, %arg1: memref<9x32x256xf32, #tpu.memory_space<vmem>>, %arg2: memref<32x256xf32, #tpu.memory_space<vmem>>) attributes {dimension_semantics = [#tpu.dimension_semantics<parallel>], iteration_bounds = array<i64: 1>, scalar_prefetch = 0 : i64, scratch_operands = 0 : i64, tpu.core_type = #tpu.core_type<tc>, window_params = [{transform_indices = @transform_0, window_bounds = array<i64: 9, 32, 256>}, {transform_indices = @transform_1, window_bounds = array<i64: 32, 256>}]} {
    %c0 = arith.constant 0 : index
    %c0_0 = arith.constant 0 : index
    %c0_1 = arith.constant 0 : index
    %0 = vector.load %arg1[%c0, %c0_0, %c0_1] : memref<9x32x256xf32, #tpu.memory_space<vmem>>, vector<9x32x256xf32>
    %cst = arith.constant dense<0xFF800000> : vector<32x256xf32>
    %1 = vector.multi_reduction <maximumf>, %0, %cst [0] : vector<9x32x256xf32> to vector<32x256xf32>
    %c0_2 = arith.constant 0 : index
    %c0_3 = arith.constant 0 : index
    %2 = vector.load %arg2[%c0_2, %c0_3] : memref<32x256xf32, #tpu.memory_space<vmem>>, vector<32x256xf32>
    tpu.vector_store %arg2[%c0_2, %c0_3], %1 {strides = array<i32>} : memref<32x256xf32, #tpu.memory_space<vmem>>, vector<32x256xf32>,
    return
  }
  func.func @transform_0(%arg0: i32) -> (i32, i32, i32) {
    %c0_i32 = arith.constant 0 : i32
    %c0_i32_0 = arith.constant 0 : i32
    %c0_i32_1 = arith.constant 0 : i32
    return %c0_i32, %arg0, %c0_i32_0 : i32, i32, i32
  }
  func.func @transform_1(%arg0: i32) -> (i32, i32) {
    %c0_i32 = arith.constant 0 : i32
    %c0_i32_0 = arith.constant 0 : i32
    return %arg0, %c0_i32 : i32, i32
  }
}

module attributes {stable_mosaic.version = 11 : i64} {
  func.func @_conv_bias_relu_kernel(%arg0: i32, %arg1: i32, %arg2: memref<168x896xbf16, #tpu.memory_space<vmem>>, %arg3: memref<896x256xbf16, #tpu.memory_space<vmem>>, %arg4: memref<1x256xf32, #tpu.memory_space<vmem>>, %arg5: memref<168x256xf32, #tpu.memory_space<vmem>>, %arg6: memref<168x256xf32, #tpu.memory_space<vmem>>) attributes {dimension_semantics = [#tpu.dimension_semantics<parallel>, #tpu.dimension_semantics<arbitrary>], iteration_bounds = array<i64: 1, 2>, scalar_prefetch = 0 : i64, scratch_operands = 1 : i64, tpu.core_type = #tpu.core_type<tc>, window_params = [{transform_indices = @transform_0, window_bounds = array<i64: 168, 896>}, {transform_indices = @transform_1, window_bounds = array<i64: 896, 256>}, {pipeline_mode = #tpu.pipeline_mode<synchronous>, transform_indices = @transform_2, window_bounds = array<i64: 1, 256>}, {transform_indices = @transform_3, window_bounds = array<i64: 168, 256>}]} {
    %c0_i32 = arith.constant 0 : i32
    %0 = arith.cmpi eq, %arg1, %c0_i32 : i32
    %1 = arith.extui %0 : i1 to i32
    %c0_i32_0 = arith.constant 0 : i32
    %2 = arith.cmpi ne, %1, %c0_i32_0 : i32
    scf.if %2 {
      %cst_9 = arith.constant 0.000000e+00 : f32
      %12 = vector.broadcast %cst_9 : f32 to vector<168x256xf32>
      %c0_10 = arith.constant 0 : index
      %c0_11 = arith.constant 0 : index
      %13 = vector.load %arg6[%c0_10, %c0_11] : memref<168x256xf32, #tpu.memory_space<vmem>>, vector<168x256xf32>
      tpu.vector_store %arg6[%c0_10, %c0_11], %12 {strides = array<i32>} : memref<168x256xf32, #tpu.memory_space<vmem>>, vector<168x256xf32>,
    } else {
    }
    %c0 = arith.constant 0 : index
    %c0_1 = arith.constant 0 : index
    %3 = vector.load %arg6[%c0, %c0_1] : memref<168x256xf32, #tpu.memory_space<vmem>>, vector<168x256xf32>
    %c0_2 = arith.constant 0 : index
    %c0_3 = arith.constant 0 : index
    %4 = vector.load %arg2[%c0_2, %c0_3] : memref<168x896xbf16, #tpu.memory_space<vmem>>, vector<168x896xbf16>
    %c0_4 = arith.constant 0 : index
    %c0_5 = arith.constant 0 : index
    %5 = vector.load %arg3[%c0_4, %c0_5] : memref<896x256xbf16, #tpu.memory_space<vmem>>, vector<896x256xbf16>
    %cst = arith.constant dense<0.000000e+00> : vector<168x256xf32>
    %6 = tpu.matmul %4, %5, %cst {dimension_numbers = #tpu.dot_dimension_numbers<[1], [0], [0], [1], [0, 0, 1, 1], [], []>} : vector<168x896xbf16>, vector<896x256xbf16>, vector<168x256xf32> -> vector<168x256xf32>
    %7 = arith.addf %3, %6 : vector<168x256xf32>
    %c0_6 = arith.constant 0 : index
    %c0_7 = arith.constant 0 : index
    %8 = vector.load %arg6[%c0_6, %c0_7] : memref<168x256xf32, #tpu.memory_space<vmem>>, vector<168x256xf32>
    tpu.vector_store %arg6[%c0_6, %c0_7], %7 {strides = array<i32>} : memref<168x256xf32, #tpu.memory_space<vmem>>, vector<168x256xf32>,
    %c1_i32 = arith.constant 1 : i32
    %9 = arith.cmpi eq, %arg1, %c1_i32 : i32
    %10 = arith.extui %9 : i1 to i32
    %c0_i32_8 = arith.constant 0 : i32
    %11 = arith.cmpi ne, %10, %c0_i32_8 : i32
    scf.if %11 {
      %c0_9 = arith.constant 0 : index
      %c0_10 = arith.constant 0 : index
      %12 = vector.load %arg6[%c0_9, %c0_10] : memref<168x256xf32, #tpu.memory_space<vmem>>, vector<168x256xf32>
      %c0_11 = arith.constant 0 : index
      %c0_12 = arith.constant 0 : index
      %13 = vector.load %arg4[%c0_11, %c0_12] : memref<1x256xf32, #tpu.memory_space<vmem>>, vector<1x256xf32>
      %14 = vector.broadcast %13 : vector<1x256xf32> to vector<168x256xf32>
      %15 = arith.addf %12, %14 : vector<168x256xf32>
      %cst_13 = arith.constant 0.000000e+00 : f32
      %16 = vector.broadcast %cst_13 : f32 to vector<168x256xf32>
      %17 = arith.maximumf %15, %16 : vector<168x256xf32>
      %c0_14 = arith.constant 0 : index
      %c0_15 = arith.constant 0 : index
      %18 = vector.load %arg5[%c0_14, %c0_15] : memref<168x256xf32, #tpu.memory_space<vmem>>, vector<168x256xf32>
      tpu.vector_store %arg5[%c0_14, %c0_15], %17 {strides = array<i32>} : memref<168x256xf32, #tpu.memory_space<vmem>>, vector<168x256xf32>,
    } else {
    }
    return
  }
  func.func @transform_0(%arg0: i32, %arg1: i32) -> (i32, i32) {
    %c0_i32 = arith.constant 0 : i32
    return %arg0, %arg1 : i32, i32
  }
  func.func @transform_1(%arg0: i32, %arg1: i32) -> (i32, i32) {
    %c0_i32 = arith.constant 0 : i32
    %c0_i32_0 = arith.constant 0 : i32
    return %arg1, %c0_i32 : i32, i32
  }
  func.func @transform_2(%arg0: i32, %arg1: i32) -> (i32, i32) {
    %c0_i32 = arith.constant 0 : i32
    %c0_i32_0 = arith.constant 0 : i32
    %c0_i32_1 = arith.constant 0 : i32
    return %c0_i32, %c0_i32_0 : i32, i32
  }
  func.func @transform_3(%arg0: i32, %arg1: i32) -> (i32, i32) {
    %c0_i32 = arith.constant 0 : i32
    %c0_i32_0 = arith.constant 0 : i32
    return %arg0, %c0_i32 : i32, i32
  }
}

module attributes {stable_mosaic.version = 11 : i64} {
  func.func @_conv_bias_relu_kernel(%arg0: i32, %arg1: i32, %arg2: memref<32x896xbf16, #tpu.memory_space<vmem>>, %arg3: memref<896x256xbf16, #tpu.memory_space<vmem>>, %arg4: memref<1x256xf32, #tpu.memory_space<vmem>>, %arg5: memref<32x256xf32, #tpu.memory_space<vmem>>, %arg6: memref<32x256xf32, #tpu.memory_space<vmem>>) attributes {dimension_semantics = [#tpu.dimension_semantics<parallel>, #tpu.dimension_semantics<arbitrary>], iteration_bounds = array<i64: 1, 2>, scalar_prefetch = 0 : i64, scratch_operands = 1 : i64, tpu.core_type = #tpu.core_type<tc>, window_params = [{transform_indices = @transform_0, window_bounds = array<i64: 32, 896>}, {transform_indices = @transform_1, window_bounds = array<i64: 896, 256>}, {pipeline_mode = #tpu.pipeline_mode<synchronous>, transform_indices = @transform_2, window_bounds = array<i64: 1, 256>}, {transform_indices = @transform_3, window_bounds = array<i64: 32, 256>}]} {
    %c0_i32 = arith.constant 0 : i32
    %0 = arith.cmpi eq, %arg1, %c0_i32 : i32
    %1 = arith.extui %0 : i1 to i32
    %c0_i32_0 = arith.constant 0 : i32
    %2 = arith.cmpi ne, %1, %c0_i32_0 : i32
    scf.if %2 {
      %cst_9 = arith.constant 0.000000e+00 : f32
      %12 = vector.broadcast %cst_9 : f32 to vector<32x256xf32>
      %c0_10 = arith.constant 0 : index
      %c0_11 = arith.constant 0 : index
      %13 = vector.load %arg6[%c0_10, %c0_11] : memref<32x256xf32, #tpu.memory_space<vmem>>, vector<32x256xf32>
      tpu.vector_store %arg6[%c0_10, %c0_11], %12 {strides = array<i32>} : memref<32x256xf32, #tpu.memory_space<vmem>>, vector<32x256xf32>,
    } else {
    }
    %c0 = arith.constant 0 : index
    %c0_1 = arith.constant 0 : index
    %3 = vector.load %arg6[%c0, %c0_1] : memref<32x256xf32, #tpu.memory_space<vmem>>, vector<32x256xf32>
    %c0_2 = arith.constant 0 : index
    %c0_3 = arith.constant 0 : index
    %4 = vector.load %arg2[%c0_2, %c0_3] : memref<32x896xbf16, #tpu.memory_space<vmem>>, vector<32x896xbf16>
    %c0_4 = arith.constant 0 : index
    %c0_5 = arith.constant 0 : index
    %5 = vector.load %arg3[%c0_4, %c0_5] : memref<896x256xbf16, #tpu.memory_space<vmem>>, vector<896x256xbf16>
    %cst = arith.constant dense<0.000000e+00> : vector<32x256xf32>
    %6 = tpu.matmul %4, %5, %cst {dimension_numbers = #tpu.dot_dimension_numbers<[1], [0], [0], [1], [0, 0, 1, 1], [], []>} : vector<32x896xbf16>, vector<896x256xbf16>, vector<32x256xf32> -> vector<32x256xf32>
    %7 = arith.addf %3, %6 : vector<32x256xf32>
    %c0_6 = arith.constant 0 : index
    %c0_7 = arith.constant 0 : index
    %8 = vector.load %arg6[%c0_6, %c0_7] : memref<32x256xf32, #tpu.memory_space<vmem>>, vector<32x256xf32>
    tpu.vector_store %arg6[%c0_6, %c0_7], %7 {strides = array<i32>} : memref<32x256xf32, #tpu.memory_space<vmem>>, vector<32x256xf32>,
    %c1_i32 = arith.constant 1 : i32
    %9 = arith.cmpi eq, %arg1, %c1_i32 : i32
    %10 = arith.extui %9 : i1 to i32
    %c0_i32_8 = arith.constant 0 : i32
    %11 = arith.cmpi ne, %10, %c0_i32_8 : i32
    scf.if %11 {
      %c0_9 = arith.constant 0 : index
      %c0_10 = arith.constant 0 : index
      %12 = vector.load %arg6[%c0_9, %c0_10] : memref<32x256xf32, #tpu.memory_space<vmem>>, vector<32x256xf32>
      %c0_11 = arith.constant 0 : index
      %c0_12 = arith.constant 0 : index
      %13 = vector.load %arg4[%c0_11, %c0_12] : memref<1x256xf32, #tpu.memory_space<vmem>>, vector<1x256xf32>
      %14 = vector.broadcast %13 : vector<1x256xf32> to vector<32x256xf32>
      %15 = arith.addf %12, %14 : vector<32x256xf32>
      %cst_13 = arith.constant 0.000000e+00 : f32
      %16 = vector.broadcast %cst_13 : f32 to vector<32x256xf32>
      %17 = arith.maximumf %15, %16 : vector<32x256xf32>
      %c0_14 = arith.constant 0 : index
      %c0_15 = arith.constant 0 : index
      %18 = vector.load %arg5[%c0_14, %c0_15] : memref<32x256xf32, #tpu.memory_space<vmem>>, vector<32x256xf32>
      tpu.vector_store %arg5[%c0_14, %c0_15], %17 {strides = array<i32>} : memref<32x256xf32, #tpu.memory_space<vmem>>, vector<32x256xf32>,
    } else {
    }
    return
  }
  func.func @transform_0(%arg0: i32, %arg1: i32) -> (i32, i32) {
    %c0_i32 = arith.constant 0 : i32
    return %arg0, %arg1 : i32, i32
  }
  func.func @transform_1(%arg0: i32, %arg1: i32) -> (i32, i32) {
    %c0_i32 = arith.constant 0 : i32
    %c0_i32_0 = arith.constant 0 : i32
    return %arg1, %c0_i32 : i32, i32
  }
  func.func @transform_2(%arg0: i32, %arg1: i32) -> (i32, i32) {
    %c0_i32 = arith.constant 0 : i32
    %c0_i32_0 = arith.constant 0 : i32
    %c0_i32_1 = arith.constant 0 : i32
    return %c0_i32, %c0_i32_0 : i32, i32
  }
  func.func @transform_3(%arg0: i32, %arg1: i32) -> (i32, i32) {
    %c0_i32 = arith.constant 0 : i32
    %c0_i32_0 = arith.constant 0 : i32
    return %arg0, %c0_i32 : i32, i32
  }
}

module attributes {stable_mosaic.version = 11 : i64} {
  func.func @_conv_bias_relu_kernel(%arg0: i32, %arg1: i32, %arg2: memref<32x768xbf16, #tpu.memory_space<vmem>>, %arg3: memref<768x384xbf16, #tpu.memory_space<vmem>>, %arg4: memref<1x384xf32, #tpu.memory_space<vmem>>, %arg5: memref<32x384xf32, #tpu.memory_space<vmem>>, %arg6: memref<32x384xf32, #tpu.memory_space<vmem>>) attributes {dimension_semantics = [#tpu.dimension_semantics<parallel>, #tpu.dimension_semantics<arbitrary>], iteration_bounds = array<i64: 1, 3>, scalar_prefetch = 0 : i64, scratch_operands = 1 : i64, tpu.core_type = #tpu.core_type<tc>, window_params = [{transform_indices = @transform_0, window_bounds = array<i64: 32, 768>}, {transform_indices = @transform_1, window_bounds = array<i64: 768, 384>}, {pipeline_mode = #tpu.pipeline_mode<synchronous>, transform_indices = @transform_2, window_bounds = array<i64: 1, 384>}, {transform_indices = @transform_3, window_bounds = array<i64: 32, 384>}]} {
    %c0_i32 = arith.constant 0 : i32
    %0 = arith.cmpi eq, %arg1, %c0_i32 : i32
    %1 = arith.extui %0 : i1 to i32
    %c0_i32_0 = arith.constant 0 : i32
    %2 = arith.cmpi ne, %1, %c0_i32_0 : i32
    scf.if %2 {
      %cst_9 = arith.constant 0.000000e+00 : f32
      %12 = vector.broadcast %cst_9 : f32 to vector<32x384xf32>
      %c0_10 = arith.constant 0 : index
      %c0_11 = arith.constant 0 : index
      %13 = vector.load %arg6[%c0_10, %c0_11] : memref<32x384xf32, #tpu.memory_space<vmem>>, vector<32x384xf32>
      tpu.vector_store %arg6[%c0_10, %c0_11], %12 {strides = array<i32>} : memref<32x384xf32, #tpu.memory_space<vmem>>, vector<32x384xf32>,
    } else {
    }
    %c0 = arith.constant 0 : index
    %c0_1 = arith.constant 0 : index
    %3 = vector.load %arg6[%c0, %c0_1] : memref<32x384xf32, #tpu.memory_space<vmem>>, vector<32x384xf32>
    %c0_2 = arith.constant 0 : index
    %c0_3 = arith.constant 0 : index
    %4 = vector.load %arg2[%c0_2, %c0_3] : memref<32x768xbf16, #tpu.memory_space<vmem>>, vector<32x768xbf16>
    %c0_4 = arith.constant 0 : index
    %c0_5 = arith.constant 0 : index
    %5 = vector.load %arg3[%c0_4, %c0_5] : memref<768x384xbf16, #tpu.memory_space<vmem>>, vector<768x384xbf16>
    %cst = arith.constant dense<0.000000e+00> : vector<32x384xf32>
    %6 = tpu.matmul %4, %5, %cst {dimension_numbers = #tpu.dot_dimension_numbers<[1], [0], [0], [1], [0, 0, 1, 1], [], []>} : vector<32x768xbf16>, vector<768x384xbf16>, vector<32x384xf32> -> vector<32x384xf32>
    %7 = arith.addf %3, %6 : vector<32x384xf32>
    %c0_6 = arith.constant 0 : index
    %c0_7 = arith.constant 0 : index
    %8 = vector.load %arg6[%c0_6, %c0_7] : memref<32x384xf32, #tpu.memory_space<vmem>>, vector<32x384xf32>
    tpu.vector_store %arg6[%c0_6, %c0_7], %7 {strides = array<i32>} : memref<32x384xf32, #tpu.memory_space<vmem>>, vector<32x384xf32>,
    %c2_i32 = arith.constant 2 : i32
    %9 = arith.cmpi eq, %arg1, %c2_i32 : i32
    %10 = arith.extui %9 : i1 to i32
    %c0_i32_8 = arith.constant 0 : i32
    %11 = arith.cmpi ne, %10, %c0_i32_8 : i32
    scf.if %11 {
      %c0_9 = arith.constant 0 : index
      %c0_10 = arith.constant 0 : index
      %12 = vector.load %arg6[%c0_9, %c0_10] : memref<32x384xf32, #tpu.memory_space<vmem>>, vector<32x384xf32>
      %c0_11 = arith.constant 0 : index
      %c0_12 = arith.constant 0 : index
      %13 = vector.load %arg4[%c0_11, %c0_12] : memref<1x384xf32, #tpu.memory_space<vmem>>, vector<1x384xf32>
      %14 = vector.broadcast %13 : vector<1x384xf32> to vector<32x384xf32>
      %15 = arith.addf %12, %14 : vector<32x384xf32>
      %cst_13 = arith.constant 0.000000e+00 : f32
      %16 = vector.broadcast %cst_13 : f32 to vector<32x384xf32>
      %17 = arith.maximumf %15, %16 : vector<32x384xf32>
      %c0_14 = arith.constant 0 : index
      %c0_15 = arith.constant 0 : index
      %18 = vector.load %arg5[%c0_14, %c0_15] : memref<32x384xf32, #tpu.memory_space<vmem>>, vector<32x384xf32>
      tpu.vector_store %arg5[%c0_14, %c0_15], %17 {strides = array<i32>} : memref<32x384xf32, #tpu.memory_space<vmem>>, vector<32x384xf32>,
    } else {
    }
    return
  }
  func.func @transform_0(%arg0: i32, %arg1: i32) -> (i32, i32) {
    %c0_i32 = arith.constant 0 : i32
    return %arg0, %arg1 : i32, i32
  }
  func.func @transform_1(%arg0: i32, %arg1: i32) -> (i32, i32) {
    %c0_i32 = arith.constant 0 : i32
    %c0_i32_0 = arith.constant 0 : i32
    return %arg1, %c0_i32 : i32, i32
  }
  func.func @transform_2(%arg0: i32, %arg1: i32) -> (i32, i32) {
    %c0_i32 = arith.constant 0 : i32
    %c0_i32_0 = arith.constant 0 : i32
    %c0_i32_1 = arith.constant 0 : i32
    return %c0_i32, %c0_i32_0 : i32, i32
  }
  func.func @transform_3(%arg0: i32, %arg1: i32) -> (i32, i32) {
    %c0_i32 = arith.constant 0 : i32
    %c0_i32_0 = arith.constant 0 : i32
    return %arg0, %c0_i32 : i32, i32
  }
}

</mosaic_0001>

<llo_original>
// kernel: reduction_a.6
$region0: #{reduction_a.6}
  #allocation0 [shape = 'u32[]', space=smem, size = 0x4, offset = 0x4, fixed_abs, tag = 'smem constant byte address 0x4 - core index']
  #allocation1 [shape = 'u32[144,128]{1,0:T(1,128)}', space=vmem, size = 0x12000, scoped, tag = 'internal scratch']
  #allocation2 [shape = 'f32[168,256]{1,0:T(8,128)}', space=vmem, size = 0x2a000, scoped, tag = 'scratch operand']
  %s0 = inlined_call_operand.vmem [shape: bf16[168,256], index: 0, kind: input, shape index: {}]
  %s1 = inlined_call_operand.vmem [shape: bf16[256,256], index: 1, kind: input, shape index: {}]
  %s2 = inlined_call_operand.vmem [shape: f32[1,256], index: 2, kind: input, shape index: {}]
  %s3 = inlined_call_operand.vmem [shape: f32[168,256], index: 3, kind: output, shape index: {}]
  %s4 = sld [smem:[#allocation0]]
  $region30: #{reduction_a.6} parent=0
    _
  %s6 = ssub.s32 1, %s4
  %s7 = scalar_select 0, %s6, %s4
  // Predicated region
  $region2: #{reduction_a.6} parent=0 // pred_check
    _
  $region3: #{reduction_a.6} parent=0 // pred_check_branch
    %9 = sbr.rel (0) target = $region5
  $region4: #{reduction_a.6} parent=0 // pred_region
    _
  $region5: #{reduction_a.6} parent=0 // pred_fallthru
    _
  // Predicated region
  $region6: #{reduction_a.6} parent=0 // pred_check
    _
  $region7: #{reduction_a.6} parent=0 // pred_check_branch
    %11 = sbr.rel (0) target = $region9
  $region8: #{reduction_a.6} parent=0 // pred_region
    _
  $region9: #{reduction_a.6} parent=0 // pred_fallthru
    _
  // Predicated region
  $region10: #{reduction_a.6} parent=0 // pred_check
    _
  $region11: #{reduction_a.6} parent=0 // pred_check_branch
    %13 = sbr.rel (0) target = $region13
  $region12: #{reduction_a.6} parent=0 // pred_region
    _
  $region13: #{reduction_a.6} parent=0 // pred_fallthru
    _
  %p14 = scmp.eq.s32.totalorder 0, 0
  // Predicated region
  $region14: #{reduction_a.6} parent=0 // pred_check
    %p15 = pneg %p14
  $region15: #{reduction_a.6} parent=0 // pred_check_branch
    %17 = sbr.rel (%p15) target = $region17
  $region16: #{reduction_a.6} parent=0 // pred_region
    %18 = vst [vmem:[#allocation2] sm:$0xff] 0.0
    %19 = vst [vmem:[#allocation2 + $0x8] sm:$0xff] 0.0
    %20 = vst [vmem:[#allocation2 + $0x10] sm:$0xff] 0.0
    %21 = vst [vmem:[#allocation2 + $0x18] sm:$0xff] 0.0
    %22 = vst [vmem:[#allocation2 + $0x20] sm:$0xff] 0.0
    %23 = vst [vmem:[#allocation2 + $0x28] sm:$0xff] 0.0
    %24 = vst [vmem:[#allocation2 + $0x30] sm:$0xff] 0.0
    %25 = vst [vmem:[#allocation2 + $0x38] sm:$0xff] 0.0
    %26 = vst [vmem:[#allocation2 + $0x40] sm:$0xff] 0.0
    %27 = vst [vmem:[#allocation2 + $0x48] sm:$0xff] 0.0
    %28 = vst [vmem:[#allocation2 + $0x50] sm:$0xff] 0.0
    %29 = vst [vmem:[#allocation2 + $0x58] sm:$0xff] 0.0
    %30 = vst [vmem:[#allocation2 + $0x60] sm:$0xff] 0.0
    %31 = vst [vmem:[#allocation2 + $0x68] sm:$0xff] 0.0
    %32 = vst [vmem:[#allocation2 + $0x70] sm:$0xff] 0.0
    %33 = vst [vmem:[#allocation2 + $0x78] sm:$0xff] 0.0
    %34 = vst [vmem:[#allocation2 + $0x80] sm:$0xff] 0.0
    %35 = vst [vmem:[#allocation2 + $0x88] sm:$0xff] 0.0
    %36 = vst [vmem:[#allocation2 + $0x90] sm:$0xff] 0.0
    %37 = vst [vmem:[#allocation2 + $0x98] sm:$0xff] 0.0
    %38 = vst [vmem:[#allocation2 + $0xa0] sm:$0xff] 0.0
    %39 = vst [vmem:[#allocation2 + $0xa8] sm:$0xff] 0.0
    %40 = vst [vmem:[#allocation2 + $0xb0] sm:$0xff] 0.0
    %41 = vst [vmem:[#allocation2 + $0xb8] sm:$0xff] 0.0
    %42 = vst [vmem:[#allocation2 + $0xc0] sm:$0xff] 0.0
    %43 = vst [vmem:[#allocation2 + $0xc8] sm:$0xff] 0.0
    %44 = vst [vmem:[#allocation2 + $0xd0] sm:$0xff] 0.0
    %45 = vst [vmem:[#allocation2 + $0xd8] sm:$0xff] 0.0
    %46 = vst [vmem:[#allocation2 + $0xe0] sm:$0xff] 0.0
    %47 = vst [vmem:[#allocation2 + $0xe8] sm:$0xff] 0.0
    %48 = vst [vmem:[#allocation2 + $0xf0] sm:$0xff] 0.0
    %49 = vst [vmem:[#allocation2 + $0xf8] sm:$0xff] 0.0
    %50 = vst [vmem:[#allocation2 + $0x100] sm:$0xff] 0.0
    %51 = vst [vmem:[#allocation2 + $0x108] sm:$0xff] 0.0
    %52 = vst [vmem:[#allocation2 + $0x110] sm:$0xff] 0.0
    %53 = vst [vmem:[#allocation2 + $0x118] sm:$0xff] 0.0
    %54 = vst [vmem:[#allocation2 + $0x120] sm:$0xff] 0.0
    %55 = vst [vmem:[#allocation2 + $0x128] sm:$0xff] 0.0
    %56 = vst [vmem:[#allocation2 + $0x130] sm:$0xff] 0.0
    %57 = vst [vmem:[#allocation2 + $0x138] sm:$0xff] 0.0
    %58 = vst [vmem:[#allocation2 + $0x140] sm:$0xff] 0.0
    %59 = vst [vmem:[#allocation2 + $0x148] sm:$0xff] 0.0
  $region17: #{reduction_a.6} parent=0 // pred_fallthru
    _
  %v60 = vld [vmem:[#allocation2] sm:$0xff]
  %v61 = vld [vmem:[#allocation2 + $0x8] sm:$0xff]
  %v62 = vld [vmem:[#allocation2 + $0x10] sm:$0xff]
  %v63 = vld [vmem:[#allocation2 + $0x18] sm:$0xff]
  %v64 = vld [vmem:[#allocation2 + $0x20] sm:$0xff]
  %v65 = vld [vmem:[#allocation2 + $0x28] sm:$0xff]
  %v66 = vld [vmem:[#allocation2 + $0x30] sm:$0xff]
  %v67 = vld [vmem:[#allocation2 + $0x38] sm:$0xff]
  %v68 = vld [vmem:[#allocation2 + $0x40] sm:$0xff]
  %v69 = vld [vmem:[#allocation2 + $0x48] sm:$0xff]
  %v70 = vld [vmem:[#allocation2 + $0x50] sm:$0xff]
  %v71 = vld [vmem:[#allocation2 + $0x58] sm:$0xff]
  %v72 = vld [vmem:[#allocation2 + $0x60] sm:$0xff]
  %v73 = vld [vmem:[#allocation2 + $0x68] sm:$0xff]
  %v74 = vld [vmem:[#allocation2 + $0x70] sm:$0xff]
  %v75 = vld [vmem:[#allocation2 + $0x78] sm:$0xff]
  %v76 = vld [vmem:[#allocation2 + $0x80] sm:$0xff]
  %v77 = vld [vmem:[#allocation2 + $0x88] sm:$0xff]
  %v78 = vld [vmem:[#allocation2 + $0x90] sm:$0xff]
  %v79 = vld [vmem:[#allocation2 + $0x98] sm:$0xff]
  %v80 = vld [vmem:[#allocation2 + $0xa0] sm:$0xff]
  %v81 = vld [vmem:[#allocation2 + $0xa8] sm:$0xff]
  %v82 = vld [vmem:[#allocation2 + $0xb0] sm:$0xff]
  %v83 = vld [vmem:[#allocation2 + $0xb8] sm:$0xff]
  %v84 = vld [vmem:[#allocation2 + $0xc0] sm:$0xff]
  %v85 = vld [vmem:[#allocation2 + $0xc8] sm:$0xff]
  %v86 = vld [vmem:[#allocation2 + $0xd0] sm:$0xff]
  %v87 = vld [vmem:[#allocation2 + $0xd8] sm:$0xff]
  %v88 = vld [vmem:[#allocation2 + $0xe0] sm:$0xff]
  %v89 = vld [vmem:[#allocation2 + $0xe8] sm:$0xff]
  %v90 = vld [vmem:[#allocation2 + $0xf0] sm:$0xff]
  %v91 = vld [vmem:[#allocation2 + $0xf8] sm:$0xff]
  %v92 = vld [vmem:[#allocation2 + $0x100] sm:$0xff]
  %v93 = vld [vmem:[#allocation2 + $0x108] sm:$0xff]
  %v94 = vld [vmem:[#allocation2 + $0x110] sm:$0xff]
  %v95 = vld [vmem:[#allocation2 + $0x118] sm:$0xff]
  %v96 = vld [vmem:[#allocation2 + $0x120] sm:$0xff]
  %v97 = vld [vmem:[#allocation2 + $0x128] sm:$0xff]
  %v98 = vld [vmem:[#allocation2 + $0x130] sm:$0xff]
  %v99 = vld [vmem:[#allocation2 + $0x138] sm:$0xff]
  %v100 = vld [vmem:[#allocation2 + $0x140] sm:$0xff]
  %v101 = vld [vmem:[#allocation2 + $0x148] sm:$0xff]
  %v102 = vld [vmem:[%s0] sm:$0xff]
  %v103 = vld [vmem:[%s0 + $0x8] sm:$0xff]
  %v104 = vld [vmem:[%s0 + $0x10] sm:$0xff]
  %v105 = vld [vmem:[%s0 + $0x18] sm:$0xff]
  %v106 = vld [vmem:[%s0 + $0x20] sm:$0xff]
  %v107 = vld [vmem:[%s0 + $0x28] sm:$0xff]
  %v108 = vld [vmem:[%s0 + $0x30] sm:$0xff]
  %v109 = vld [vmem:[%s0 + $0x38] sm:$0xff]
  %v110 = vld [vmem:[%s0 + $0x40] sm:$0xff]
  %v111 = vld [vmem:[%s0 + $0x48] sm:$0xff]
  %v112 = vld [vmem:[%s0 + $0x50] sm:$0xff]
  %v113 = vld [vmem:[%s0 + $0x58] sm:$0xff]
  %v114 = vld [vmem:[%s0 + $0x60] sm:$0xff]
  %v115 = vld [vmem:[%s0 + $0x68] sm:$0xff]
  %v116 = vld [vmem:[%s0 + $0x70] sm:$0xff]
  %v117 = vld [vmem:[%s0 + $0x78] sm:$0xff]
  %v118 = vld [vmem:[%s0 + $0x80] sm:$0xff]
  %v119 = vld [vmem:[%s0 + $0x88] sm:$0xff]
  %v120 = vld [vmem:[%s0 + $0x90] sm:$0xff]
  %v121 = vld [vmem:[%s0 + $0x98] sm:$0xff]
  %v122 = vld [vmem:[%s0 + $0xa0] sm:$0xff]
  %v123 = vld [vmem:[%s1] sm:$0xff]
  %v124 = vld [vmem:[%s1 + $0x8] sm:$0xff]
  %v125 = vld [vmem:[%s1 + $0x10] sm:$0xff]
  %v126 = vld [vmem:[%s1 + $0x18] sm:$0xff]
  %v127 = vld [vmem:[%s1 + $0x20] sm:$0xff]
  %v128 = vld [vmem:[%s1 + $0x28] sm:$0xff]
  %v129 = vld [vmem:[%s1 + $0x30] sm:$0xff]
  %v130 = vld [vmem:[%s1 + $0x38] sm:$0xff]
  %v131 = vld [vmem:[%s1 + $0x40] sm:$0xff]
  %v132 = vld [vmem:[%s1 + $0x48] sm:$0xff]
  %v133 = vld [vmem:[%s1 + $0x50] sm:$0xff]
  %v134 = vld [vmem:[%s1 + $0x58] sm:$0xff]
  %v135 = vld [vmem:[%s1 + $0x60] sm:$0xff]
  %v136 = vld [vmem:[%s1 + $0x68] sm:$0xff]
  %v137 = vld [vmem:[%s1 + $0x70] sm:$0xff]
  %v138 = vld [vmem:[%s1 + $0x78] sm:$0xff]
  %v139 = vld [vmem:[%s1 + $0x80] sm:$0xff]
  %v140 = vld [vmem:[%s1 + $0x88] sm:$0xff]
  %v141 = vld [vmem:[%s1 + $0x90] sm:$0xff]
  %v142 = vld [vmem:[%s1 + $0x98] sm:$0xff]
  %v143 = vld [vmem:[%s1 + $0xa0] sm:$0xff]
  %v144 = vld [vmem:[%s1 + $0xa8] sm:$0xff]
  %v145 = vld [vmem:[%s1 + $0xb0] sm:$0xff]
  %v146 = vld [vmem:[%s1 + $0xb8] sm:$0xff]
  %v147 = vld [vmem:[%s1 + $0xc0] sm:$0xff]
  %v148 = vld [vmem:[%s1 + $0xc8] sm:$0xff]
  %v149 = vld [vmem:[%s1 + $0xd0] sm:$0xff]
  %v150 = vld [vmem:[%s1 + $0xd8] sm:$0xff]
  %v151 = vld [vmem:[%s1 + $0xe0] sm:$0xff]
  %v152 = vld [vmem:[%s1 + $0xe8] sm:$0xff]
  %v153 = vld [vmem:[%s1 + $0xf0] sm:$0xff]
  %v154 = vld [vmem:[%s1 + $0xf8] sm:$0xff]
  %v176 = vunpack.c.l.b16 %v102
  %v177 = vunpack.c.h.b16 %v102
  %v178 = vunpack.c.l.b16 %v103
  %v179 = vunpack.c.h.b16 %v103
  %v180 = vunpack.c.l.b16 %v104
  %v181 = vunpack.c.h.b16 %v104
  %v182 = vunpack.c.l.b16 %v105
  %v183 = vunpack.c.h.b16 %v105
  %v184 = vunpack.c.l.b16 %v106
  %v185 = vunpack.c.h.b16 %v106
  %v186 = vunpack.c.l.b16 %v107
  %v187 = vunpack.c.h.b16 %v107
  %v188 = vunpack.c.l.b16 %v108
  %v189 = vunpack.c.h.b16 %v108
  %v190 = vunpack.c.l.b16 %v109
  %v191 = vunpack.c.h.b16 %v109
  %v192 = vunpack.c.l.b16 %v110
  %v193 = vunpack.c.h.b16 %v110
  %v194 = vunpack.c.l.b16 %v111
  %v195 = vunpack.c.h.b16 %v111
  %v196 = vunpack.c.l.b16 %v112
  %v197 = vunpack.c.h.b16 %v112
  %v198 = vunpack.c.l.b16 %v113
  %v199 = vunpack.c.h.b16 %v113
  %v200 = vunpack.c.l.b16 %v114
  %v201 = vunpack.c.h.b16 %v114
  %v202 = vunpack.c.l.b16 %v115
  %v203 = vunpack.c.h.b16 %v115
  %v204 = vunpack.c.l.b16 %v116
  %v205 = vunpack.c.h.b16 %v116
  %v206 = vunpack.c.l.b16 %v117
  %v207 = vunpack.c.h.b16 %v117
  %v208 = vunpack.c.l.b16 %v118
  %v209 = vunpack.c.h.b16 %v118
  %v210 = vunpack.c.l.b16 %v119
  %v211 = vunpack.c.h.b16 %v119
  %v212 = vunpack.c.l.b16 %v120
  %v213 = vunpack.c.h.b16 %v120
  %v214 = vunpack.c.l.b16 %v121
  %v215 = vunpack.c.h.b16 %v121
  %v216 = vunpack.c.l.b16 %v122
  %v217 = vunpack.c.h.b16 %v122
  %v218 = vpack.c.b16 %v178, %v176
  %v219 = vpack.c.b16 %v179, %v177
  %v220 = vpack.c.b16 %v182, %v180
  %v221 = vpack.c.b16 %v183, %v181
  %v222 = vpack.c.b16 %v186, %v184
  %v223 = vpack.c.b16 %v187, %v185
  %v224 = vpack.c.b16 %v190, %v188
  %v225 = vpack.c.b16 %v191, %v189
  %v226 = vpack.c.b16 %v194, %v192
  %v227 = vpack.c.b16 %v195, %v193
  %v228 = vpack.c.b16 %v198, %v196
  %v229 = vpack.c.b16 %v199, %v197
  %v230 = vpack.c.b16 %v202, %v200
  %v231 = vpack.c.b16 %v203, %v201
  %v232 = vpack.c.b16 %v206, %v204
  %v233 = vpack.c.b16 %v207, %v205
  %v234 = vpack.c.b16 %v210, %v208
  %v235 = vpack.c.b16 %v211, %v209
  %v236 = vpack.c.b16 %v214, %v212
  %v237 = vpack.c.b16 %v215, %v213
  %v238 = vpack.c.b16 %v216, %v216
  %v239 = vpack.c.b16 %v217, %v217
  %v294 = vunpack.c.l.b16 %v123
  %v295 = vunpack.c.h.b16 %v123
  %v296 = vunpack.c.l.b16 %v124
  %v297 = vunpack.c.h.b16 %v124
  %v298 = vunpack.c.l.b16 %v125
  %v299 = vunpack.c.h.b16 %v125
  %v300 = vunpack.c.l.b16 %v126
  %v301 = vunpack.c.h.b16 %v126
  %v302 = vunpack.c.l.b16 %v127
  %v303 = vunpack.c.h.b16 %v127
  %v304 = vunpack.c.l.b16 %v128
  %v305 = vunpack.c.h.b16 %v128
  %v306 = vunpack.c.l.b16 %v129
  %v307 = vunpack.c.h.b16 %v129
  %v308 = vunpack.c.l.b16 %v130
  %v309 = vunpack.c.h.b16 %v130
  %v310 = vunpack.c.l.b16 %v131
  %v311 = vunpack.c.h.b16 %v131
  %v312 = vunpack.c.l.b16 %v132
  %v313 = vunpack.c.h.b16 %v132
  %v314 = vunpack.c.l.b16 %v133
  %v315 = vunpack.c.h.b16 %v133
  %v316 = vunpack.c.l.b16 %v134
  %v317 = vunpack.c.h.b16 %v134
  %v318 = vunpack.c.l.b16 %v135
  %v319 = vunpack.c.h.b16 %v135
  %v320 = vunpack.c.l.b16 %v136
  %v321 = vunpack.c.h.b16 %v136
  %v322 = vunpack.c.l.b16 %v137
  %v323 = vunpack.c.h.b16 %v137
  %v324 = vunpack.c.l.b16 %v138
  %v325 = vunpack.c.h.b16 %v138
  %v326 = vunpack.c.l.b16 %v139
  %v327 = vunpack.c.h.b16 %v139
  %v328 = vunpack.c.l.b16 %v140
  %v329 = vunpack.c.h.b16 %v140
  %v330 = vunpack.c.l.b16 %v141
  %v331 = vunpack.c.h.b16 %v141
  %v332 = vunpack.c.l.b16 %v142
  %v333 = vunpack.c.h.b16 %v142
  %v334 = vunpack.c.l.b16 %v143
  %v335 = vunpack.c.h.b16 %v143
  %v336 = vunpack.c.l.b16 %v144
  %v337 = vunpack.c.h.b16 %v144
  %v338 = vunpack.c.l.b16 %v145
  %v339 = vunpack.c.h.b16 %v145
  %v340 = vunpack.c.l.b16 %v146
  %v341 = vunpack.c.h.b16 %v146
  %v342 = vunpack.c.l.b16 %v147
  %v343 = vunpack.c.h.b16 %v147
  %v344 = vunpack.c.l.b16 %v148
  %v345 = vunpack.c.h.b16 %v148
  %v346 = vunpack.c.l.b16 %v149
  %v347 = vunpack.c.h.b16 %v149
  %v348 = vunpack.c.l.b16 %v150
  %v349 = vunpack.c.h.b16 %v150
  %v350 = vunpack.c.l.b16 %v151
  %v351 = vunpack.c.h.b16 %v151
  %v352 = vunpack.c.l.b16 %v152
  %v353 = vunpack.c.h.b16 %v152
  %v354 = vunpack.c.l.b16 %v153
  %v355 = vunpack.c.h.b16 %v153
  %v356 = vunpack.c.l.b16 %v154
  %v357 = vunpack.c.h.b16 %v154
  %v358 = vpack.c.b16 %v296, %v294
  %v359 = vpack.c.b16 %v297, %v295
  %v360 = vpack.c.b16 %v300, %v298
  %v361 = vpack.c.b16 %v301, %v299
  %v362 = vpack.c.b16 %v304, %v302
  %v363 = vpack.c.b16 %v305, %v303
  %v364 = vpack.c.b16 %v308, %v306
  %v365 = vpack.c.b16 %v309, %v307
  %v366 = vpack.c.b16 %v312, %v310
  %v367 = vpack.c.b16 %v313, %v311
  %v368 = vpack.c.b16 %v316, %v314
  %v369 = vpack.c.b16 %v317, %v315
  %v370 = vpack.c.b16 %v320, %v318
  %v371 = vpack.c.b16 %v321, %v319
  %v372 = vpack.c.b16 %v324, %v322
  %v373 = vpack.c.b16 %v325, %v323
  %v374 = vpack.c.b16 %v328, %v326
  %v375 = vpack.c.b16 %v329, %v327
  %v376 = vpack.c.b16 %v332, %v330
  %v377 = vpack.c.b16 %v333, %v331
  %v378 = vpack.c.b16 %v336, %v334
  %v379 = vpack.c.b16 %v337, %v335
  %v380 = vpack.c.b16 %v340, %v338
  %v381 = vpack.c.b16 %v341, %v339
  %v382 = vpack.c.b16 %v344, %v342
  %v383 = vpack.c.b16 %v345, %v343
  %v384 = vpack.c.b16 %v348, %v346
  %v385 = vpack.c.b16 %v349, %v347
  %v386 = vpack.c.b16 %v352, %v350
  %v387 = vpack.c.b16 %v353, %v351
  %v388 = vpack.c.b16 %v356, %v354
  %v389 = vpack.c.b16 %v357, %v355
  %422 = vmatprep.subr.bf16.mxu0 %v359
  %423 = vmatpush1.bf16.msra.mxu0 %v358
  %424 = vmatprep.subr.bf16.mxu0 %v361
  %425 = vmatpush1.bf16.msra.mxu0 %v360
  %426 = vmatprep.subr.bf16.mxu0 %v363
  %427 = vmatpush1.bf16.msra.mxu0 %v362
  %428 = vmatprep.subr.bf16.mxu0 %v365
  %429 = vmatpush1.bf16.msra.mxu0 %v364
  %430 = vmatprep.subr.bf16.mxu0 %v367
  %431 = vmatpush1.bf16.msra.mxu0 %v366
  %432 = vmatprep.subr.bf16.mxu0 %v369
  %433 = vmatpush1.bf16.msra.mxu0 %v368
  %434 = vmatprep.subr.bf16.mxu0 %v371
  %435 = vmatpush1.bf16.msra.mxu0 %v370
  %436 = vmatprep.subr.bf16.mxu0 %v373
  %437 = vmatpush1.bf16.msra.mxu0 %v372
  %438 = vmatprep.subr.bf16.mxu0 %v375
  %439 = vmatpush1.bf16.msra.mxu0 %v374
  %440 = vmatprep.subr.bf16.mxu0 %v377
  %441 = vmatpush1.bf16.msra.mxu0 %v376
  %442 = vmatprep.subr.bf16.mxu0 %v379
  %443 = vmatpush1.bf16.msra.mxu0 %v378
  %444 = vmatprep.subr.bf16.mxu0 %v381
  %445 = vmatpush1.bf16.msra.mxu0 %v380
  %446 = vmatprep.subr.bf16.mxu0 %v383
  %447 = vmatpush1.bf16.msra.mxu0 %v382
  %448 = vmatprep.subr.bf16.mxu0 %v385
  %449 = vmatpush1.bf16.msra.mxu0 %v384
  %450 = vmatprep.subr.bf16.mxu0 %v387
  %451 = vmatpush1.bf16.msra.mxu0 %v386
  %452 = vmatprep.subr.bf16.mxu0 %v389
  %453 = vmatpush1.bf16.msra.mxu0 %v388
  %454 = vmatprep.mubr.bf16.mxu0 %v219
  %455 = vmatmul.mubr.bf16.gmra.mrb[0].mxu0 %v218
  %v456 = vpop.f32.mrb[0].mxu0
  %v457 = vadd.f32 0.0, %v456
  %v458 = vpop.f32.mrb[0].mxu0
  %v459 = vadd.f32 0.0, %v458
  %v460 = vpop.f32.mrb[0].mxu0
  %v461 = vadd.f32 0.0, %v460
  %v462 = vpop.f32.mrb[0].mxu0
  %v463 = vadd.f32 0.0, %v462
  %464 = vmatprep.mubr.bf16.mxu0 %v221
  %465 = vmatmul.mubr.bf16.gmra.mrb[0].mxu0 %v220
  %v466 = vpop.f32.mrb[0].mxu0
  %v467 = vadd.f32 0.0, %v466
  %v468 = vpop.f32.mrb[0].mxu0
  %v469 = vadd.f32 0.0, %v468
  %v470 = vpop.f32.mrb[0].mxu0
  %v471 = vadd.f32 0.0, %v470
  %v472 = vpop.f32.mrb[0].mxu0
  %v473 = vadd.f32 0.0, %v472
  %474 = vmatprep.mubr.bf16.mxu0 %v223
  %475 = vmatmul.mubr.bf16.gmra.mrb[0].mxu0 %v222
  %v476 = vpop.f32.mrb[0].mxu0
  %v477 = vadd.f32 0.0, %v476
  %v478 = vpop.f32.mrb[0].mxu0
  %v479 = vadd.f32 0.0, %v478
  %v480 = vpop.f32.mrb[0].mxu0
  %v481 = vadd.f32 0.0, %v480
  %v482 = vpop.f32.mrb[0].mxu0
  %v483 = vadd.f32 0.0, %v482
  %484 = vmatprep.mubr.bf16.mxu0 %v225
  %485 = vmatmul.mubr.bf16.gmra.mrb[0].mxu0 %v224
  %v486 = vpop.f32.mrb[0].mxu0
  %v487 = vadd.f32 0.0, %v486
  %v488 = vpop.f32.mrb[0].mxu0
  %v489 = vadd.f32 0.0, %v488
  %v490 = vpop.f32.mrb[0].mxu0
  %v491 = vadd.f32 0.0, %v490
  %v492 = vpop.f32.mrb[0].mxu0
  %v493 = vadd.f32 0.0, %v492
  %494 = vmatprep.mubr.bf16.mxu0 %v227
  %495 = vmatmul.mubr.bf16.gmra.mrb[0].mxu0 %v226
  %v496 = vpop.f32.mrb[0].mxu0
  %v497 = vadd.f32 0.0, %v496
  %v498 = vpop.f32.mrb[0].mxu0
  %v499 = vadd.f32 0.0, %v498
  %v500 = vpop.f32.mrb[0].mxu0
  %v501 = vadd.f32 0.0, %v500
  %v502 = vpop.f32.mrb[0].mxu0
  %v503 = vadd.f32 0.0, %v502
  %504 = vmatprep.mubr.bf16.mxu0 %v229
  %505 = vmatmul.mubr.bf16.gmra.mrb[0].mxu0 %v228
  %v506 = vpop.f32.mrb[0].mxu0
  %v507 = vadd.f32 0.0, %v506
  %v508 = vpop.f32.mrb[0].mxu0
  %v509 = vadd.f32 0.0, %v508
  %v510 = vpop.f32.mrb[0].mxu0
  %v511 = vadd.f32 0.0, %v510
  %v512 = vpop.f32.mrb[0].mxu0
  %v513 = vadd.f32 0.0, %v512
  %514 = vmatprep.mubr.bf16.mxu0 %v231
  %515 = vmatmul.mubr.bf16.gmra.mrb[0].mxu0 %v230
  %v516 = vpop.f32.mrb[0].mxu0
  %v517 = vadd.f32 0.0, %v516
  %v518 = vpop.f32.mrb[0].mxu0
  %v519 = vadd.f32 0.0, %v518
  %v520 = vpop.f32.mrb[0].mxu0
  %v521 = vadd.f32 0.0, %v520
  %v522 = vpop.f32.mrb[0].mxu0
  %v523 = vadd.f32 0.0, %v522
  %524 = vmatprep.mubr.bf16.mxu0 %v233
  %525 = vmatmul.mubr.bf16.gmra.mrb[0].mxu0 %v232
  %v526 = vpop.f32.mrb[0].mxu0
  %v527 = vadd.f32 0.0, %v526
  %v528 = vpop.f32.mrb[0].mxu0
  %v529 = vadd.f32 0.0, %v528
  %v530 = vpop.f32.mrb[0].mxu0
  %v531 = vadd.f32 0.0, %v530
  %v532 = vpop.f32.mrb[0].mxu0
  %v533 = vadd.f32 0.0, %v532
  %534 = vmatprep.mubr.bf16.mxu0 %v235
  %535 = vmatmul.mubr.bf16.gmra.mrb[0].mxu0 %v234
  %v536 = vpop.f32.mrb[0].mxu0
  %v537 = vadd.f32 0.0, %v536
  %v538 = vpop.f32.mrb[0].mxu0
  %v539 = vadd.f32 0.0, %v538
  %v540 = vpop.f32.mrb[0].mxu0
  %v541 = vadd.f32 0.0, %v540
  %v542 = vpop.f32.mrb[0].mxu0
  %v543 = vadd.f32 0.0, %v542
  %544 = vmatprep.mubr.bf16.mxu0 %v237
  %545 = vmatmul.mubr.bf16.gmra.mrb[0].mxu0 %v236
  %v546 = vpop.f32.mrb[0].mxu0
  %v547 = vadd.f32 0.0, %v546
  %v548 = vpop.f32.mrb[0].mxu0
  %v549 = vadd.f32 0.0, %v548
  %v550 = vpop.f32.mrb[0].mxu0
  %v551 = vadd.f32 0.0, %v550
  %v552 = vpop.f32.mrb[0].mxu0
  %v553 = vadd.f32 0.0, %v552
  %554 = vmatprep.mubr.bf16.mxu0 %v239
  %555 = vmatmul.mubr.bf16.gmra.mrb[0].mxu0 %v238
  %v556 = vpop.f32.mrb[0].mxu0
  %v557 = vadd.f32 0.0, %v556
  %v558 = vpop.f32.mrb[0].mxu0
  %v559 = vadd.f32 0.0, %v558
  %v560 = vpop.f32.mrb[0].mxu0
  %v561 = vpop.f32.mrb[0].mxu0
  %562 = vdwg.mxu0
  %v563 = vadd.f32 %v60, %v457
  %v564 = vadd.f32 %v61, %v459
  %v565 = vadd.f32 %v62, %v461
  %v566 = vadd.f32 %v63, %v463
  %v567 = vadd.f32 %v64, %v467
  %v568 = vadd.f32 %v65, %v469
  %v569 = vadd.f32 %v66, %v471
  %v570 = vadd.f32 %v67, %v473
  %v571 = vadd.f32 %v68, %v477
  %v572 = vadd.f32 %v69, %v479
  %v573 = vadd.f32 %v70, %v481
  %v574 = vadd.f32 %v71, %v483
  %v575 = vadd.f32 %v72, %v487
  %v576 = vadd.f32 %v73, %v489
  %v577 = vadd.f32 %v74, %v491
  %v578 = vadd.f32 %v75, %v493
  %v579 = vadd.f32 %v76, %v497
  %v580 = vadd.f32 %v77, %v499
  %v581 = vadd.f32 %v78, %v501
  %v582 = vadd.f32 %v79, %v503
  %v583 = vadd.f32 %v80, %v507
  %v584 = vadd.f32 %v81, %v509
  %v585 = vadd.f32 %v82, %v511
  %v586 = vadd.f32 %v83, %v513
  %v587 = vadd.f32 %v84, %v517
  %v588 = vadd.f32 %v85, %v519
  %v589 = vadd.f32 %v86, %v521
  %v590 = vadd.f32 %v87, %v523
  %v591 = vadd.f32 %v88, %v527
  %v592 = vadd.f32 %v89, %v529
  %v593 = vadd.f32 %v90, %v531
  %v594 = vadd.f32 %v91, %v533
  %v595 = vadd.f32 %v92, %v537
  %v596 = vadd.f32 %v93, %v539
  %v597 = vadd.f32 %v94, %v541
  %v598 = vadd.f32 %v95, %v543
  %v599 = vadd.f32 %v96, %v547
  %v600 = vadd.f32 %v97, %v549
  %v601 = vadd.f32 %v98, %v551
  %v602 = vadd.f32 %v99, %v553
  %v603 = vadd.f32 %v100, %v557
  %v604 = vadd.f32 %v101, %v559
  %605 = vst [vmem:[#allocation2] sm:$0xff] %v563
  %606 = vst [vmem:[#allocation2 + $0x8] sm:$0xff] %v564
  %607 = vst [vmem:[#allocation2 + $0x10] sm:$0xff] %v565
  %608 = vst [vmem:[#allocation2 + $0x18] sm:$0xff] %v566
  %609 = vst [vmem:[#allocation2 + $0x20] sm:$0xff] %v567
  %610 = vst [vmem:[#allocation2 + $0x28] sm:$0xff] %v568
  %611 = vst [vmem:[#allocation2 + $0x30] sm:$0xff] %v569
  %612 = vst [vmem:[#allocation2 + $0x38] sm:$0xff] %v570
  %613 = vst [vmem:[#allocation2 + $0x40] sm:$0xff] %v571
  %614 = vst [vmem:[#allocation2 + $0x48] sm:$0xff] %v572
  %615 = vst [vmem:[#allocation2 + $0x50] sm:$0xff] %v573
  %616 = vst [vmem:[#allocation2 + $0x58] sm:$0xff] %v574
  %617 = vst [vmem:[#allocation2 + $0x60] sm:$0xff] %v575
  %618 = vst [vmem:[#allocation2 + $0x68] sm:$0xff] %v576
  %619 = vst [vmem:[#allocation2 + $0x70] sm:$0xff] %v577
  %620 = vst [vmem:[#allocation2 + $0x78] sm:$0xff] %v578
  %621 = vst [vmem:[#allocation2 + $0x80] sm:$0xff] %v579
  %622 = vst [vmem:[#allocation2 + $0x88] sm:$0xff] %v580
  %623 = vst [vmem:[#allocation2 + $0x90] sm:$0xff] %v581
  %624 = vst [vmem:[#allocation2 + $0x98] sm:$0xff] %v582
  %625 = vst [vmem:[#allocation2 + $0xa0] sm:$0xff] %v583
  %626 = vst [vmem:[#allocation2 + $0xa8] sm:$0xff] %v584
  %627 = vst [vmem:[#allocation2 + $0xb0] sm:$0xff] %v585
  %628 = vst [vmem:[#allocation2 + $0xb8] sm:$0xff] %v586
  %629 = vst [vmem:[#allocation2 + $0xc0] sm:$0xff] %v587
  %630 = vst [vmem:[#allocation2 + $0xc8] sm:$0xff] %v588
  %631 = vst [vmem:[#allocation2 + $0xd0] sm:$0xff] %v589
  %632 = vst [vmem:[#allocation2 + $0xd8] sm:$0xff] %v590
  %633 = vst [vmem:[#allocation2 + $0xe0] sm:$0xff] %v591
  %634 = vst [vmem:[#allocation2 + $0xe8] sm:$0xff] %v592
  %635 = vst [vmem:[#allocation2 + $0xf0] sm:$0xff] %v593
  %636 = vst [vmem:[#allocation2 + $0xf8] sm:$0xff] %v594
  %637 = vst [vmem:[#allocation2 + $0x100] sm:$0xff] %v595
  %638 = vst [vmem:[#allocation2 + $0x108] sm:$0xff] %v596
  %639 = vst [vmem:[#allocation2 + $0x110] sm:$0xff] %v597
  %640 = vst [vmem:[#allocation2 + $0x118] sm:$0xff] %v598
  %641 = vst [vmem:[#allocation2 + $0x120] sm:$0xff] %v599
  %642 = vst [vmem:[#allocation2 + $0x128] sm:$0xff] %v600
  %643 = vst [vmem:[#allocation2 + $0x130] sm:$0xff] %v601
  %644 = vst [vmem:[#allocation2 + $0x138] sm:$0xff] %v602
  %645 = vst [vmem:[#allocation2 + $0x140] sm:$0xff] %v603
  %646 = vst [vmem:[#allocation2 + $0x148] sm:$0xff] %v604
  // Predicated region
  $region18: #{reduction_a.6} parent=0 // pred_check
    %p647 = pneg %p14
  $region19: #{reduction_a.6} parent=0 // pred_check_branch
    %649 = sbr.rel (%p647) target = $region21
  $region20: #{reduction_a.6} parent=0 // pred_region
    %v650 = vld [vmem:[#allocation2] sm:$0xff]
    %v651 = vld [vmem:[#allocation2 + $0x8] sm:$0xff]
    %v652 = vld [vmem:[#allocation2 + $0x10] sm:$0xff]
    %v653 = vld [vmem:[#allocation2 + $0x18] sm:$0xff]
    %v654 = vld [vmem:[#allocation2 + $0x20] sm:$0xff]
    %v655 = vld [vmem:[#allocation2 + $0x28] sm:$0xff]
    %v656 = vld [vmem:[#allocation2 + $0x30] sm:$0xff]
    %v657 = vld [vmem:[#allocation2 + $0x38] sm:$0xff]
    %v658 = vld [vmem:[#allocation2 + $0x40] sm:$0xff]
    %v659 = vld [vmem:[#allocation2 + $0x48] sm:$0xff]
    %v660 = vld [vmem:[#allocation2 + $0x50] sm:$0xff]
    %v661 = vld [vmem:[#allocation2 + $0x58] sm:$0xff]
    %v662 = vld [vmem:[#allocation2 + $0x60] sm:$0xff]
    %v663 = vld [vmem:[#allocation2 + $0x68] sm:$0xff]
    %v664 = vld [vmem:[#allocation2 + $0x70] sm:$0xff]
    %v665 = vld [vmem:[#allocation2 + $0x78] sm:$0xff]
    %v666 = vld [vmem:[#allocation2 + $0x80] sm:$0xff]
    %v667 = vld [vmem:[#allocation2 + $0x88] sm:$0xff]
    %v668 = vld [vmem:[#allocation2 + $0x90] sm:$0xff]
    %v669 = vld [vmem:[#allocation2 + $0x98] sm:$0xff]
    %v670 = vld [vmem:[#allocation2 + $0xa0] sm:$0xff]
    %v671 = vld [vmem:[#allocation2 + $0xa8] sm:$0xff]
    %v672 = vld [vmem:[#allocation2 + $0xb0] sm:$0xff]
    %v673 = vld [vmem:[#allocation2 + $0xb8] sm:$0xff]
    %v674 = vld [vmem:[#allocation2 + $0xc0] sm:$0xff]
    %v675 = vld [vmem:[#allocation2 + $0xc8] sm:$0xff]
    %v676 = vld [vmem:[#allocation2 + $0xd0] sm:$0xff]
    %v677 = vld [vmem:[#allocation2 + $0xd8] sm:$0xff]
    %v678 = vld [vmem:[#allocation2 + $0xe0] sm:$0xff]
    %v679 = vld [vmem:[#allocation2 + $0xe8] sm:$0xff]
    %v680 = vld [vmem:[#allocation2 + $0xf0] sm:$0xff]
    %v681 = vld [vmem:[#allocation2 + $0xf8] sm:$0xff]
    %v682 = vld [vmem:[#allocation2 + $0x100] sm:$0xff]
    %v683 = vld [vmem:[#allocation2 + $0x108] sm:$0xff]
    %v684 = vld [vmem:[#allocation2 + $0x110] sm:$0xff]
    %v685 = vld [vmem:[#allocation2 + $0x118] sm:$0xff]
    %v686 = vld [vmem:[#allocation2 + $0x120] sm:$0xff]
    %v687 = vld [vmem:[#allocation2 + $0x128] sm:$0xff]
    %v688 = vld [vmem:[#allocation2 + $0x130] sm:$0xff]
    %v689 = vld [vmem:[#allocation2 + $0x138] sm:$0xff]
    %v690 = vld [vmem:[#allocation2 + $0x140] sm:$0xff]
    %v691 = vld [vmem:[#allocation2 + $0x148] sm:$0xff]
    %v692 = vld [vmem:[%s2] sm:$0x3]
    %v694 = vlaneseq
    %v695 = vshrl.u32 %v694, 7
    %v696 = vsub.s32 0, %v695
    %v697 = vrot.slane %v692, %v696
    %v698 = vlaneseq
    %v699 = vshrl.u32 %v698, 7
    %v700 = vsub.s32 1, %v699
    %v701 = vrot.slane %v692, %v700
    %v704 = vadd.f32 %v650, %v697
    %v705 = vadd.f32 %v651, %v701
    %v706 = vadd.f32 %v652, %v697
    %v707 = vadd.f32 %v653, %v701
    %v708 = vadd.f32 %v654, %v697
    %v709 = vadd.f32 %v655, %v701
    %v710 = vadd.f32 %v656, %v697
    %v711 = vadd.f32 %v657, %v701
    %v712 = vadd.f32 %v658, %v697
    %v713 = vadd.f32 %v659, %v701
    %v714 = vadd.f32 %v660, %v697
    %v715 = vadd.f32 %v661, %v701
    %v716 = vadd.f32 %v662, %v697
    %v717 = vadd.f32 %v663, %v701
    %v718 = vadd.f32 %v664, %v697
    %v719 = vadd.f32 %v665, %v701
    %v720 = vadd.f32 %v666, %v697
    %v721 = vadd.f32 %v667, %v701
    %v722 = vadd.f32 %v668, %v697
    %v723 = vadd.f32 %v669, %v701
    %v724 = vadd.f32 %v670, %v697
    %v725 = vadd.f32 %v671, %v701
    %v726 = vadd.f32 %v672, %v697
    %v727 = vadd.f32 %v673, %v701
    %v728 = vadd.f32 %v674, %v697
    %v729 = vadd.f32 %v675, %v701
    %v730 = vadd.f32 %v676, %v697
    %v731 = vadd.f32 %v677, %v701
    %v732 = vadd.f32 %v678, %v697
    %v733 = vadd.f32 %v679, %v701
    %v734 = vadd.f32 %v680, %v697
    %v735 = vadd.f32 %v681, %v701
    %v736 = vadd.f32 %v682, %v697
    %v737 = vadd.f32 %v683, %v701
    %v738 = vadd.f32 %v684, %v697
    %v739 = vadd.f32 %v685, %v701
    %v740 = vadd.f32 %v686, %v697
    %v741 = vadd.f32 %v687, %v701
    %v742 = vadd.f32 %v688, %v697
    %v743 = vadd.f32 %v689, %v701
    %v744 = vadd.f32 %v690, %v697
    %v745 = vadd.f32 %v691, %v701
    %v746 = vmax.f32 %v704, 0.0
    %v747 = vmax.f32 %v705, 0.0
    %v748 = vmax.f32 %v706, 0.0
    %v749 = vmax.f32 %v707, 0.0
    %v750 = vmax.f32 %v708, 0.0
    %v751 = vmax.f32 %v709, 0.0
    %v752 = vmax.f32 %v710, 0.0
    %v753 = vmax.f32 %v711, 0.0
    %v754 = vmax.f32 %v712, 0.0
    %v755 = vmax.f32 %v713, 0.0
    %v756 = vmax.f32 %v714, 0.0
    %v757 = vmax.f32 %v715, 0.0
    %v758 = vmax.f32 %v716, 0.0
    %v759 = vmax.f32 %v717, 0.0
    %v760 = vmax.f32 %v718, 0.0
    %v761 = vmax.f32 %v719, 0.0
    %v762 = vmax.f32 %v720, 0.0
    %v763 = vmax.f32 %v721, 0.0
    %v764 = vmax.f32 %v722, 0.0
    %v765 = vmax.f32 %v723, 0.0
    %v766 = vmax.f32 %v724, 0.0
    %v767 = vmax.f32 %v725, 0.0
    %v768 = vmax.f32 %v726, 0.0
    %v769 = vmax.f32 %v727, 0.0
    %v770 = vmax.f32 %v728, 0.0
    %v771 = vmax.f32 %v729, 0.0
    %v772 = vmax.f32 %v730, 0.0
    %v773 = vmax.f32 %v731, 0.0
    %v774 = vmax.f32 %v732, 0.0
    %v775 = vmax.f32 %v733, 0.0
    %v776 = vmax.f32 %v734, 0.0
    %v777 = vmax.f32 %v735, 0.0
    %v778 = vmax.f32 %v736, 0.0
    %v779 = vmax.f32 %v737, 0.0
    %v780 = vmax.f32 %v738, 0.0
    %v781 = vmax.f32 %v739, 0.0
    %v782 = vmax.f32 %v740, 0.0
    %v783 = vmax.f32 %v741, 0.0
    %v784 = vmax.f32 %v742, 0.0
    %v785 = vmax.f32 %v743, 0.0
    %v786 = vmax.f32 %v744, 0.0
    %v787 = vmax.f32 %v745, 0.0
    %788 = vst [vmem:[%s3] sm:$0xff] %v746
    %789 = vst [vmem:[%s3 + $0x8] sm:$0xff] %v747
    %790 = vst [vmem:[%s3 + $0x10] sm:$0xff] %v748
    %791 = vst [vmem:[%s3 + $0x18] sm:$0xff] %v749
    %792 = vst [vmem:[%s3 + $0x20] sm:$0xff] %v750
    %793 = vst [vmem:[%s3 + $0x28] sm:$0xff] %v751
    %794 = vst [vmem:[%s3 + $0x30] sm:$0xff] %v752
    %795 = vst [vmem:[%s3 + $0x38] sm:$0xff] %v753
    %796 = vst [vmem:[%s3 + $0x40] sm:$0xff] %v754
    %797 = vst [vmem:[%s3 + $0x48] sm:$0xff] %v755
    %798 = vst [vmem:[%s3 + $0x50] sm:$0xff] %v756
    %799 = vst [vmem:[%s3 + $0x58] sm:$0xff] %v757
    %800 = vst [vmem:[%s3 + $0x60] sm:$0xff] %v758
    %801 = vst [vmem:[%s3 + $0x68] sm:$0xff] %v759
    %802 = vst [vmem:[%s3 + $0x70] sm:$0xff] %v760
    %803 = vst [vmem:[%s3 + $0x78] sm:$0xff] %v761
    %804 = vst [vmem:[%s3 + $0x80] sm:$0xff] %v762
    %805 = vst [vmem:[%s3 + $0x88] sm:$0xff] %v763
    %806 = vst [vmem:[%s3 + $0x90] sm:$0xff] %v764
    %807 = vst [vmem:[%s3 + $0x98] sm:$0xff] %v765
    %808 = vst [vmem:[%s3 + $0xa0] sm:$0xff] %v766
    %809 = vst [vmem:[%s3 + $0xa8] sm:$0xff] %v767
    %810 = vst [vmem:[%s3 + $0xb0] sm:$0xff] %v768
    %811 = vst [vmem:[%s3 + $0xb8] sm:$0xff] %v769
    %812 = vst [vmem:[%s3 + $0xc0] sm:$0xff] %v770
    %813 = vst [vmem:[%s3 + $0xc8] sm:$0xff] %v771
    %814 = vst [vmem:[%s3 + $0xd0] sm:$0xff] %v772
    %815 = vst [vmem:[%s3 + $0xd8] sm:$0xff] %v773
    %816 = vst [vmem:[%s3 + $0xe0] sm:$0xff] %v774
    %817 = vst [vmem:[%s3 + $0xe8] sm:$0xff] %v775
    %818 = vst [vmem:[%s3 + $0xf0] sm:$0xff] %v776
    %819 = vst [vmem:[%s3 + $0xf8] sm:$0xff] %v777
    %820 = vst [vmem:[%s3 + $0x100] sm:$0xff] %v778
    %821 = vst [vmem:[%s3 + $0x108] sm:$0xff] %v779
    %822 = vst [vmem:[%s3 + $0x110] sm:$0xff] %v780
    %823 = vst [vmem:[%s3 + $0x118] sm:$0xff] %v781
    %824 = vst [vmem:[%s3 + $0x120] sm:$0xff] %v782
    %825 = vst [vmem:[%s3 + $0x128] sm:$0xff] %v783
    %826 = vst [vmem:[%s3 + $0x130] sm:$0xff] %v784
    %827 = vst [vmem:[%s3 + $0x138] sm:$0xff] %v785
    %828 = vst [vmem:[%s3 + $0x140] sm:$0xff] %v786
    %829 = vst [vmem:[%s3 + $0x148] sm:$0xff] %v787
  $region21: #{reduction_a.6} parent=0 // pred_fallthru
    _
  // Predicated region
  $region22: #{reduction_a.6} parent=0 // pred_check
    _
  $region23: #{reduction_a.6} parent=0 // pred_check_branch
    %831 = sbr.rel (0) target = $region25
  $region24: #{reduction_a.6} parent=0 // pred_region
    _
  $region25: #{reduction_a.6} parent=0 // pred_fallthru
    _
  // Predicated region
  $region26: #{reduction_a.6} parent=0 // pred_check
    _
  $region27: #{reduction_a.6} parent=0 // pred_check_branch
    %833 = sbr.rel (0) target = $region29
  $region28: #{reduction_a.6} parent=0 // pred_region
    _
  $region29: #{reduction_a.6} parent=0 // pred_fallthru
    _

// kernel: reduction_a.9
$region0: #{reduction_a.9}
  #allocation0 [shape = 'u32[]', space=smem, size = 0x4, offset = 0x4, fixed_abs, tag = 'smem constant byte address 0x4 - core index']
  #allocation1 [shape = 'u32[144,128]{1,0:T(1,128)}', space=vmem, size = 0x12000, scoped, tag = 'internal scratch']
  %s0 = inlined_call_operand.vmem [shape: f32[9,32,256], index: 0, kind: input, shape index: {}]
  %s1 = inlined_call_operand.vmem [shape: f32[32,256], index: 1, kind: output, shape index: {}]
  %s2 = sld [smem:[#allocation0]]
  $region14: #{reduction_a.9} parent=0
    _
  %s4 = ssub.s32 1, %s2
  %s5 = scalar_select 0, %s4, %s2
  // Predicated region
  $region2: #{reduction_a.9} parent=0 // pred_check
    _
  $region3: #{reduction_a.9} parent=0 // pred_check_branch
    %7 = sbr.rel (0) target = $region5
  $region4: #{reduction_a.9} parent=0 // pred_region
    _
  $region5: #{reduction_a.9} parent=0 // pred_fallthru
    _
  %v8 = vld [vmem:[%s0] sm:$0xff]
  %v9 = vld [vmem:[%s0 + $0x8] sm:$0xff]
  %v10 = vld [vmem:[%s0 + $0x10] sm:$0xff]
  %v11 = vld [vmem:[%s0 + $0x18] sm:$0xff]
  %v12 = vld [vmem:[%s0 + $0x20] sm:$0xff]
  %v13 = vld [vmem:[%s0 + $0x28] sm:$0xff]
  %v14 = vld [vmem:[%s0 + $0x30] sm:$0xff]
  %v15 = vld [vmem:[%s0 + $0x38] sm:$0xff]
  %v16 = vld [vmem:[%s0 + $0x40] sm:$0xff]
  %v17 = vld [vmem:[%s0 + $0x48] sm:$0xff]
  %v18 = vld [vmem:[%s0 + $0x50] sm:$0xff]
  %v19 = vld [vmem:[%s0 + $0x58] sm:$0xff]
  %v20 = vld [vmem:[%s0 + $0x60] sm:$0xff]
  %v21 = vld [vmem:[%s0 + $0x68] sm:$0xff]
  %v22 = vld [vmem:[%s0 + $0x70] sm:$0xff]
  %v23 = vld [vmem:[%s0 + $0x78] sm:$0xff]
  %v24 = vld [vmem:[%s0 + $0x80] sm:$0xff]
  %v25 = vld [vmem:[%s0 + $0x88] sm:$0xff]
  %v26 = vld [vmem:[%s0 + $0x90] sm:$0xff]
  %v27 = vld [vmem:[%s0 + $0x98] sm:$0xff]
  %v28 = vld [vmem:[%s0 + $0xa0] sm:$0xff]
  %v29 = vld [vmem:[%s0 + $0xa8] sm:$0xff]
  %v30 = vld [vmem:[%s0 + $0xb0] sm:$0xff]
  %v31 = vld [vmem:[%s0 + $0xb8] sm:$0xff]
  %v32 = vld [vmem:[%s0 + $0xc0] sm:$0xff]
  %v33 = vld [vmem:[%s0 + $0xc8] sm:$0xff]
  %v34 = vld [vmem:[%s0 + $0xd0] sm:$0xff]
  %v35 = vld [vmem:[%s0 + $0xd8] sm:$0xff]
  %v36 = vld [vmem:[%s0 + $0xe0] sm:$0xff]
  %v37 = vld [vmem:[%s0 + $0xe8] sm:$0xff]
  %v38 = vld [vmem:[%s0 + $0xf0] sm:$0xff]
  %v39 = vld [vmem:[%s0 + $0xf8] sm:$0xff]
  %v40 = vld [vmem:[%s0 + $0x100] sm:$0xff]
  %v41 = vld [vmem:[%s0 + $0x108] sm:$0xff]
  %v42 = vld [vmem:[%s0 + $0x110] sm:$0xff]
  %v43 = vld [vmem:[%s0 + $0x118] sm:$0xff]
  %v44 = vld [vmem:[%s0 + $0x120] sm:$0xff]
  %v45 = vld [vmem:[%s0 + $0x128] sm:$0xff]
  %v46 = vld [vmem:[%s0 + $0x130] sm:$0xff]
  %v47 = vld [vmem:[%s0 + $0x138] sm:$0xff]
  %v48 = vld [vmem:[%s0 + $0x140] sm:$0xff]
  %v49 = vld [vmem:[%s0 + $0x148] sm:$0xff]
  %v50 = vld [vmem:[%s0 + $0x150] sm:$0xff]
  %v51 = vld [vmem:[%s0 + $0x158] sm:$0xff]
  %v52 = vld [vmem:[%s0 + $0x160] sm:$0xff]
  %v53 = vld [vmem:[%s0 + $0x168] sm:$0xff]
  %v54 = vld [vmem:[%s0 + $0x170] sm:$0xff]
  %v55 = vld [vmem:[%s0 + $0x178] sm:$0xff]
  %v56 = vld [vmem:[%s0 + $0x180] sm:$0xff]
  %v57 = vld [vmem:[%s0 + $0x188] sm:$0xff]
  %v58 = vld [vmem:[%s0 + $0x190] sm:$0xff]
  %v59 = vld [vmem:[%s0 + $0x198] sm:$0xff]
  %v60 = vld [vmem:[%s0 + $0x1a0] sm:$0xff]
  %v61 = vld [vmem:[%s0 + $0x1a8] sm:$0xff]
  %v62 = vld [vmem:[%s0 + $0x1b0] sm:$0xff]
  %v63 = vld [vmem:[%s0 + $0x1b8] sm:$0xff]
  %v64 = vld [vmem:[%s0 + $0x1c0] sm:$0xff]
  %v65 = vld [vmem:[%s0 + $0x1c8] sm:$0xff]
  %v66 = vld [vmem:[%s0 + $0x1d0] sm:$0xff]
  %v67 = vld [vmem:[%s0 + $0x1d8] sm:$0xff]
  %v68 = vld [vmem:[%s0 + $0x1e0] sm:$0xff]
  %v69 = vld [vmem:[%s0 + $0x1e8] sm:$0xff]
  %v70 = vld [vmem:[%s0 + $0x1f0] sm:$0xff]
  %v71 = vld [vmem:[%s0 + $0x1f8] sm:$0xff]
  %v72 = vld [vmem:[%s0 + $0x200] sm:$0xff]
  %v73 = vld [vmem:[%s0 + $0x208] sm:$0xff]
  %v74 = vld [vmem:[%s0 + $0x210] sm:$0xff]
  %v75 = vld [vmem:[%s0 + $0x218] sm:$0xff]
  %v76 = vld [vmem:[%s0 + $0x220] sm:$0xff]
  %v77 = vld [vmem:[%s0 + $0x228] sm:$0xff]
  %v78 = vld [vmem:[%s0 + $0x230] sm:$0xff]
  %v79 = vld [vmem:[%s0 + $0x238] sm:$0xff]
  %v80 = vmax.f32 %v8, %v16
  %v81 = vmax.f32 %v80, %v24
  %v82 = vmax.f32 %v81, %v32
  %v83 = vmax.f32 %v82, %v40
  %v84 = vmax.f32 %v83, %v48
  %v85 = vmax.f32 %v84, %v56
  %v86 = vmax.f32 %v85, %v64
  %v87 = vmax.f32 %v86, %v72
  %v88 = vmax.f32 %v9, %v17
  %v89 = vmax.f32 %v88, %v25
  %v90 = vmax.f32 %v89, %v33
  %v91 = vmax.f32 %v90, %v41
  %v92 = vmax.f32 %v91, %v49
  %v93 = vmax.f32 %v92, %v57
  %v94 = vmax.f32 %v93, %v65
  %v95 = vmax.f32 %v94, %v73
  %v96 = vmax.f32 %v10, %v18
  %v97 = vmax.f32 %v96, %v26
  %v98 = vmax.f32 %v97, %v34
  %v99 = vmax.f32 %v98, %v42
  %v100 = vmax.f32 %v99, %v50
  %v101 = vmax.f32 %v100, %v58
  %v102 = vmax.f32 %v101, %v66
  %v103 = vmax.f32 %v102, %v74
  %v104 = vmax.f32 %v11, %v19
  %v105 = vmax.f32 %v104, %v27
  %v106 = vmax.f32 %v105, %v35
  %v107 = vmax.f32 %v106, %v43
  %v108 = vmax.f32 %v107, %v51
  %v109 = vmax.f32 %v108, %v59
  %v110 = vmax.f32 %v109, %v67
  %v111 = vmax.f32 %v110, %v75
  %v112 = vmax.f32 %v12, %v20
  %v113 = vmax.f32 %v112, %v28
  %v114 = vmax.f32 %v113, %v36
  %v115 = vmax.f32 %v114, %v44
  %v116 = vmax.f32 %v115, %v52
  %v117 = vmax.f32 %v116, %v60
  %v118 = vmax.f32 %v117, %v68
  %v119 = vmax.f32 %v118, %v76
  %v120 = vmax.f32 %v13, %v21
  %v121 = vmax.f32 %v120, %v29
  %v122 = vmax.f32 %v121, %v37
  %v123 = vmax.f32 %v122, %v45
  %v124 = vmax.f32 %v123, %v53
  %v125 = vmax.f32 %v124, %v61
  %v126 = vmax.f32 %v125, %v69
  %v127 = vmax.f32 %v126, %v77
  %v128 = vmax.f32 %v14, %v22
  %v129 = vmax.f32 %v128, %v30
  %v130 = vmax.f32 %v129, %v38
  %v131 = vmax.f32 %v130, %v46
  %v132 = vmax.f32 %v131, %v54
  %v133 = vmax.f32 %v132, %v62
  %v134 = vmax.f32 %v133, %v70
  %v135 = vmax.f32 %v134, %v78
  %v136 = vmax.f32 %v15, %v23
  %v137 = vmax.f32 %v136, %v31
  %v138 = vmax.f32 %v137, %v39
  %v139 = vmax.f32 %v138, %v47
  %v140 = vmax.f32 %v139, %v55
  %v141 = vmax.f32 %v140, %v63
  %v142 = vmax.f32 %v141, %v71
  %v143 = vmax.f32 %v142, %v79
  %144 = vst [vmem:[%s1] sm:$0xff] %v87
  %145 = vst [vmem:[%s1 + $0x8] sm:$0xff] %v95
  %146 = vst [vmem:[%s1 + $0x10] sm:$0xff] %v103
  %147 = vst [vmem:[%s1 + $0x18] sm:$0xff] %v111
  %148 = vst [vmem:[%s1 + $0x20] sm:$0xff] %v119
  %149 = vst [vmem:[%s1 + $0x28] sm:$0xff] %v127
  %150 = vst [vmem:[%s1 + $0x30] sm:$0xff] %v135
  %151 = vst [vmem:[%s1 + $0x38] sm:$0xff] %v143
  // Predicated region
  $region6: #{reduction_a.9} parent=0 // pred_check
    _
  $region7: #{reduction_a.9} parent=0 // pred_check_branch
    %153 = sbr.rel (0) target = $region9
  $region8: #{reduction_a.9} parent=0 // pred_region
    _
  $region9: #{reduction_a.9} parent=0 // pred_fallthru
    _
  // Predicated region
  $region10: #{reduction_a.9} parent=0 // pred_check
    _
  $region11: #{reduction_a.9} parent=0 // pred_check_branch
    %155 = sbr.rel (0) target = $region13
  $region12: #{reduction_a.9} parent=0 // pred_region
    _
  $region13: #{reduction_a.9} parent=0 // pred_fallthru
    _

// kernel: reduction_a.7
$region0: #{reduction_a.7}
  #allocation0 [shape = 'u32[]', space=smem, size = 0x4, offset = 0x4, fixed_abs, tag = 'smem constant byte address 0x4 - core index']
  #allocation1 [shape = 'u32[144,128]{1,0:T(1,128)}', space=vmem, size = 0x12000, scoped, tag = 'internal scratch']
  #allocation2 [shape = 'f32[168,256]{1,0:T(8,128)}', space=vmem, size = 0x2a000, scoped, tag = 'scratch operand']
  %s0 = inlined_call_operand.vmem [shape: bf16[168,1792], index: 0, kind: input, shape index: {}]
  %s1 = inlined_call_operand.vmem [shape: bf16[1792,256], index: 1, kind: input, shape index: {}]
  %s2 = inlined_call_operand.vmem [shape: f32[1,256], index: 2, kind: input, shape index: {}]
  %s3 = inlined_call_operand.vmem [shape: f32[168,256], index: 3, kind: output, shape index: {}]
  %s4 = sld [smem:[#allocation0]]
  $region79: #{reduction_a.7} parent=0
    _
  %s6 = ssub.s32 1, %s4
  %s7 = scalar_select 0, %s6, %s4
  $region1: #{reduction_a.7} parent=0
    #allocation3 [shape = 'u8[602112]{0}', space=vmem, size = 0x93000, scoped, tag = 'input window, operand 0']
    loop: start=0, step=1, limit=4
    $region2: #{reduction_a.7} parent=1 // loop_pre_header
      _
    $region3: #{reduction_a.7} parent=1 // loop_header
      %s9 = sphi 0, %s13
      %p10 = scmp.ge.s32.totalorder %s9, 4
      %s16 = sphi 0, %s28
      %s17 = sphi 0, %s24
      %s18 = sphi 0, %s16
      %s19 = sphi 0, %s17
      %s20 = sphi 0, %s18
      %s21 = sphi 0, %s19
      %s33 = sphi 0, %s35
      %s36 = sphi 0, %s33
      %s37 = sphi 0, %s36
      %s53 = sphi 0, %s37
      %s59 = sphi 0, %s61
      %s62 = sphi 0, %s59
      %s63 = sphi 0, %s62
      %s79 = sphi 0, %s63
      %s83 = sphi 0, %s83
      %s85 = sphi 0, %s83
      %s86 = sphi 0, %s85
      %s100 = sphi 0, %s86
      %s106 = sphi 0, %s108
      %s109 = sphi 0, %s106
      %s110 = sphi 0, %s109
      %s126 = sphi 0, %s110
    $region4: #{reduction_a.7} parent=1 // loop_header_branch
      %12 = sbr.rel (%p10) target = $region8
    $region5: #{reduction_a.7} parent=1 // loop_body
      %s14 = ssub.s32 %s9, 1
      %s15 = ssub.s32 %s9, 2
      %s22 = sadd.s32 1, %s17
      %p23 = scmp.ge.s32.totalorder %s22, 2
      %s24 = scalar_select %p23, 0, %s22
      %s25 = sadd.s32 1, %s16
      %s26 = scalar_select %p23, %s25, %s16
      %p27 = scmp.ge.s32.totalorder %s26, 1
      %s28 = scalar_select %p27, 0, %s26
      %s29 = ssub.s32 %s16, %s28
      %s30 = ssub.s32 %s17, %s24
      %s31 = sor.u32 %s29, %s30
      %p32 = scmp.eq.s32.totalorder %s31, 0
      %s34 = sadd.s32 %s33, 1
      %s35 = scalar_select %p32, %s33, %s34
      %p38 = pneg %p32
      %p39 = scmp.eq.s32.totalorder %s9, 1
      %p40 = por %p38, %p39
      %p41 = scmp.ne.s32.totalorder %s33, %s36
      %p42 = scmp.eq.s32.totalorder %s9, 0
      %p43 = por %p41, %p42
      %p44 = scmp.ne.s32.totalorder %s33, %s36
      %p45 = scmp.eq.s32.totalorder %s14, 1
      %p46 = por %p44, %p45
      %p47 = scmp.ne.s32.totalorder %s36, %s37
      %p48 = scmp.eq.s32.totalorder %s14, 0
      %p49 = por %p47, %p48
      %p50 = scmp.ne.s32.totalorder %s36, %s37
      %p51 = scmp.eq.s32.totalorder %s15, 1
      %p52 = por %p50, %p51
      %p54 = scmp.ne.s32.totalorder %s37, %s53
      %p55 = scmp.eq.s32.totalorder %s15, 0
      %p56 = por %p54, %p55
      %s57 = ssub.s32 %s17, %s24
      %p58 = scmp.eq.s32.totalorder %s57, 0
      %s60 = sadd.s32 %s59, 1
      %s61 = scalar_select %p58, %s59, %s60
      %p64 = pneg %p58
      %p65 = scmp.eq.s32.totalorder %s9, 1
      %p66 = por %p64, %p65
      %p67 = scmp.ne.s32.totalorder %s59, %s62
      %p68 = scmp.eq.s32.totalorder %s9, 0
      %p69 = por %p67, %p68
      %p70 = scmp.ne.s32.totalorder %s59, %s62
      %p71 = scmp.eq.s32.totalorder %s14, 1
      %p72 = por %p70, %p71
      %p73 = scmp.ne.s32.totalorder %s62, %s63
      %p74 = scmp.eq.s32.totalorder %s14, 0
      %p75 = por %p73, %p74
      %p76 = scmp.ne.s32.totalorder %s62, %s63
      %p77 = scmp.eq.s32.totalorder %s15, 1
      %p78 = por %p76, %p77
      %p80 = scmp.ne.s32.totalorder %s63, %s79
      %p81 = scmp.eq.s32.totalorder %s15, 0
      %p82 = por %p80, %p81
      %s84 = sadd.s32 %s83, 1
      %p87 = scmp.eq.s32.totalorder %s9, 1
      %p88 = scmp.ne.s32.totalorder %s83, %s85
      %p89 = scmp.eq.s32.totalorder %s9, 0
      %p90 = por %p88, %p89
      %p91 = scmp.ne.s32.totalorder %s83, %s85
      %p92 = scmp.eq.s32.totalorder %s14, 1
      %p93 = por %p91, %p92
      %p94 = scmp.ne.s32.totalorder %s85, %s86
      %p95 = scmp.eq.s32.totalorder %s14, 0
      %p96 = por %p94, %p95
      %p97 = scmp.ne.s32.totalorder %s85, %s86
      %p98 = scmp.eq.s32.totalorder %s15, 1
      %p99 = por %p97, %p98
      %p101 = scmp.ne.s32.totalorder %s86, %s100
      %p102 = scmp.eq.s32.totalorder %s15, 0
      %p103 = por %p101, %p102
      %s104 = ssub.s32 %s16, %s28
      %p105 = scmp.eq.s32.totalorder %s104, 0
      %s107 = sadd.s32 %s106, 1
      %s108 = scalar_select %p105, %s106, %s107
      %p111 = pneg %p105
      %p112 = scmp.eq.s32.totalorder %s9, 1
      %p113 = por %p111, %p112
      %p114 = scmp.ne.s32.totalorder %s106, %s109
      %p115 = scmp.eq.s32.totalorder %s9, 0
      %p116 = por %p114, %p115
      %p117 = scmp.ne.s32.totalorder %s106, %s109
      %p118 = scmp.eq.s32.totalorder %s14, 1
      %p119 = por %p117, %p118
      %p120 = scmp.ne.s32.totalorder %s109, %s110
      %p121 = scmp.eq.s32.totalorder %s14, 0
      %p122 = por %p120, %p121
      %p123 = scmp.ne.s32.totalorder %s109, %s110
      %p124 = scmp.eq.s32.totalorder %s15, 1
      %p125 = por %p123, %p124
      %p127 = scmp.ne.s32.totalorder %s110, %s126
      %p128 = scmp.eq.s32.totalorder %s15, 0
      %p129 = por %p127, %p128
      %p130 = scmp.le.s32.totalorder 1, %s9
      %p131 = scmp.lt.s32.totalorder %s9, 3
      %p132 = pnand %p130, %p131
      %p133 = pneg %p132
      // Predicated region
      $region9: #{reduction_a.7} parent=5 // pred_check
        _
      $region10: #{reduction_a.7} parent=5 // pred_check_branch
        %135 = sbr.rel (%p132) target = $region12
      $region11: #{reduction_a.7} parent=5 // pred_region
        %s136 = ssub.s32 %s9, 1
        // Predicated region
        $region13: #{reduction_a.7} parent=11 // pred_check
          %p137 = pneg %p96
        $region14: #{reduction_a.7} parent=11 // pred_check_branch
          %139 = sbr.rel (%p137) target = $region16
        $region15: #{reduction_a.7} parent=11 // pred_region
          _
        $region16: #{reduction_a.7} parent=11 // pred_fallthru
          _
      $region12: #{reduction_a.7} parent=5 // pred_fallthru
        _
      %p140 = scmp.lt.s32.totalorder %s9, 2
      // Predicated region
      $region17: #{reduction_a.7} parent=5 // pred_check
        %p141 = pneg %p140
      $region18: #{reduction_a.7} parent=5 // pred_check_branch
        %143 = sbr.rel (%p141) target = $region20
      $region19: #{reduction_a.7} parent=5 // pred_region
        // Predicated region
        $region21: #{reduction_a.7} parent=19 // pred_check
          %p144 = pneg %p43
        $region22: #{reduction_a.7} parent=19 // pred_check_branch
          %146 = sbr.rel (%p144) target = $region24
        $region23: #{reduction_a.7} parent=19 // pred_region
          %s147 = sand.u32 %s33, 1
          %s148 = sand.u32 %s33, 1
          %s149 = smul.addr %s148, 588
          %s150 = scalar_lea.vmem [#allocation3], %s149
          %s151 = smul.u32 21, %s16
          %s152 = smul.u32 7, %s17
          %s153 = smul.addr %s151, 14
          %s154 = sadd.s32 %s152, %s153
          %s155 = smul.addr %s154, 4
          %s156 = scalar_lea.vmem %s0, %s155
          // Predicated region
          $region25: #{reduction_a.7} parent=23 // pred_check
            _
          $region26: #{reduction_a.7} parent=23 // pred_check_branch
            %158 = sbr.rel (0) target = $region28
          $region27: #{reduction_a.7} parent=23 // pred_region
            // Predicated region
            $region29: #{reduction_a.7} parent=27 // pred_check
              _
            $region30: #{reduction_a.7} parent=27 // pred_check_branch
              %160 = sbr.rel (0) target = $region32
            $region31: #{reduction_a.7} parent=27 // pred_region
              %s161 = scalar_lea.vmem %s156, 24
              %s162 = scalar_lea.vmem %s150, 24 [#allocation3]
              loop: start=0, step=1, limit=1
              $region33: #{reduction_a.7} parent=31 // loop_pre_header
                _
              $region34: #{reduction_a.7} parent=31 // loop_header
                %s164 = sphi 0, %s168
                %p165 = scmp.ge.s32.totalorder %s164, 1
                %s169 = sphi %s156, %s156
                %s170 = sphi %s150, %s150
              $region35: #{reduction_a.7} parent=31 // loop_header_branch
                %167 = sbr.rel (%p165) target = $region39
              $region36: #{reduction_a.7} parent=31 // loop_body
                %v171 = vld [vmem:[%s169] sm:$0xff]
                %172 = vst [vmem:[%s170] sm:$0xff] %v171
                %v173 = vld [vmem:[%s169 + $0x8] sm:$0xff]
                %174 = vst [vmem:[%s170 + $0x8] sm:$0xff] %v173
                %v175 = vld [vmem:[%s169 + $0x10] sm:$0xff]
                %176 = vst [vmem:[%s170 + $0x10] sm:$0xff] %v175
                %v177 = vld [vmem:[%s169 + $0x38] sm:$0xff]
                %178 = vst [vmem:[%s170 + $0x1c] sm:$0xff] %v177
                %v179 = vld [vmem:[%s169 + $0x40] sm:$0xff]
                %180 = vst [vmem:[%s170 + $0x24] sm:$0xff] %v179
                %v181 = vld [vmem:[%s169 + $0x48] sm:$0xff]
                %182 = vst [vmem:[%s170 + $0x2c] sm:$0xff] %v181
                %v183 = vld [vmem:[%s169 + $0x70] sm:$0xff]
                %184 = vst [vmem:[%s170 + $0x38] sm:$0xff] %v183
                %v185 = vld [vmem:[%s169 + $0x78] sm:$0xff]
                %186 = vst [vmem:[%s170 + $0x40] sm:$0xff] %v185
                %v187 = vld [vmem:[%s169 + $0x80] sm:$0xff]
                %188 = vst [vmem:[%s170 + $0x48] sm:$0xff] %v187
                %v189 = vld [vmem:[%s169 + $0xa8] sm:$0xff]
                %190 = vst [vmem:[%s170 + $0x54] sm:$0xff] %v189
                %v191 = vld [vmem:[%s169 + $0xb0] sm:$0xff]
                %192 = vst [vmem:[%s170 + $0x5c] sm:$0xff] %v191
                %v193 = vld [vmem:[%s169 + $0xb8] sm:$0xff]
                %194 = vst [vmem:[%s170 + $0x64] sm:$0xff] %v193
                %v195 = vld [vmem:[%s169 + $0xe0] sm:$0xff]
                %196 = vst [vmem:[%s170 + $0x70] sm:$0xff] %v195
                %v197 = vld [vmem:[%s169 + $0xe8] sm:$0xff]
                %198 = vst [vmem:[%s170 + $0x78] sm:$0xff] %v197
                %v199 = vld [vmem:[%s169 + $0xf0] sm:$0xff]
                %200 = vst [vmem:[%s170 + $0x80] sm:$0xff] %v199
                %v201 = vld [vmem:[%s169 + $0x118] sm:$0xff]
                %202 = vst [vmem:[%s170 + $0x8c] sm:$0xff] %v201
                %v203 = vld [vmem:[%s169 + $0x120] sm:$0xff]
                %204 = vst [vmem:[%s170 + $0x94] sm:$0xff] %v203
                %v205 = vld [vmem:[%s169 + $0x128] sm:$0xff]
                %206 = vst [vmem:[%s170 + $0x9c] sm:$0xff] %v205
                %v207 = vld [vmem:[%s169 + $0x150] sm:$0xff]
                %208 = vst [vmem:[%s170 + $0xa8] sm:$0xff] %v207
                %v209 = vld [vmem:[%s169 + $0x158] sm:$0xff]
                %210 = vst [vmem:[%s170 + $0xb0] sm:$0xff] %v209
                %v211 = vld [vmem:[%s169 + $0x160] sm:$0xff]
                %212 = vst [vmem:[%s170 + $0xb8] sm:$0xff] %v211
                %v213 = vld [vmem:[%s169 + $0x188] sm:$0xff]
                %214 = vst [vmem:[%s170 + $0xc4] sm:$0xff] %v213
                %v215 = vld [vmem:[%s169 + $0x190] sm:$0xff]
                %216 = vst [vmem:[%s170 + $0xcc] sm:$0xff] %v215
                %v217 = vld [vmem:[%s169 + $0x198] sm:$0xff]
                %218 = vst [vmem:[%s170 + $0xd4] sm:$0xff] %v217
                %v219 = vld [vmem:[%s169 + $0x1c0] sm:$0xff]
                %220 = vst [vmem:[%s170 + $0xe0] sm:$0xff] %v219
                %v221 = vld [vmem:[%s169 + $0x1c8] sm:$0xff]
                %222 = vst [vmem:[%s170 + $0xe8] sm:$0xff] %v221
                %v223 = vld [vmem:[%s169 + $0x1d0] sm:$0xff]
                %224 = vst [vmem:[%s170 + $0xf0] sm:$0xff] %v223
                %v225 = vld [vmem:[%s169 + $0x1f8] sm:$0xff]
                %226 = vst [vmem:[%s170 + $0xfc] sm:$0xff] %v225
                %v227 = vld [vmem:[%s169 + $0x200] sm:$0xff]
                %228 = vst [vmem:[%s170 + $0x104] sm:$0xff] %v227
                %v229 = vld [vmem:[%s169 + $0x208] sm:$0xff]
                %230 = vst [vmem:[%s170 + $0x10c] sm:$0xff] %v229
                %v231 = vld [vmem:[%s169 + $0x230] sm:$0xff]
                %232 = vst [vmem:[%s170 + $0x118] sm:$0xff] %v231
                %v233 = vld [vmem:[%s169 + $0x238] sm:$0xff]
                %234 = vst [vmem:[%s170 + $0x120] sm:$0xff] %v233
                %v235 = vld [vmem:[%s169 + $0x240] sm:$0xff]
                %236 = vst [vmem:[%s170 + $0x128] sm:$0xff] %v235
                %v237 = vld [vmem:[%s169 + $0x268] sm:$0xff]
                %238 = vst [vmem:[%s170 + $0x134] sm:$0xff] %v237
                %v239 = vld [vmem:[%s169 + $0x270] sm:$0xff]
                %240 = vst [vmem:[%s170 + $0x13c] sm:$0xff] %v239
                %v241 = vld [vmem:[%s169 + $0x278] sm:$0xff]
                %242 = vst [vmem:[%s170 + $0x144] sm:$0xff] %v241
                %v243 = vld [vmem:[%s169 + $0x2a0] sm:$0xff]
                %244 = vst [vmem:[%s170 + $0x150] sm:$0xff] %v243
                %v245 = vld [vmem:[%s169 + $0x2a8] sm:$0xff]
                %246 = vst [vmem:[%s170 + $0x158] sm:$0xff] %v245
                %v247 = vld [vmem:[%s169 + $0x2b0] sm:$0xff]
                %248 = vst [vmem:[%s170 + $0x160] sm:$0xff] %v247
                %v249 = vld [vmem:[%s169 + $0x2d8] sm:$0xff]
                %250 = vst [vmem:[%s170 + $0x16c] sm:$0xff] %v249
                %v251 = vld [vmem:[%s169 + $0x2e0] sm:$0xff]
                %252 = vst [vmem:[%s170 + $0x174] sm:$0xff] %v251
                %v253 = vld [vmem:[%s169 + $0x2e8] sm:$0xff]
                %254 = vst [vmem:[%s170 + $0x17c] sm:$0xff] %v253
                %v255 = vld [vmem:[%s169 + $0x310] sm:$0xff]
                %256 = vst [vmem:[%s170 + $0x188] sm:$0xff] %v255
                %v257 = vld [vmem:[%s169 + $0x318] sm:$0xff]
                %258 = vst [vmem:[%s170 + $0x190] sm:$0xff] %v257
                %v259 = vld [vmem:[%s169 + $0x320] sm:$0xff]
                %260 = vst [vmem:[%s170 + $0x198] sm:$0xff] %v259
                %v261 = vld [vmem:[%s169 + $0x348] sm:$0xff]
                %262 = vst [vmem:[%s170 + $0x1a4] sm:$0xff] %v261
                %v263 = vld [vmem:[%s169 + $0x350] sm:$0xff]
                %264 = vst [vmem:[%s170 + $0x1ac] sm:$0xff] %v263
                %v265 = vld [vmem:[%s169 + $0x358] sm:$0xff]
                %266 = vst [vmem:[%s170 + $0x1b4] sm:$0xff] %v265
                %v267 = vld [vmem:[%s169 + $0x380] sm:$0xff]
                %268 = vst [vmem:[%s170 + $0x1c0] sm:$0xff] %v267
                %v269 = vld [vmem:[%s169 + $0x388] sm:$0xff]
                %270 = vst [vmem:[%s170 + $0x1c8] sm:$0xff] %v269
                %v271 = vld [vmem:[%s169 + $0x390] sm:$0xff]
                %272 = vst [vmem:[%s170 + $0x1d0] sm:$0xff] %v271
                %v273 = vld [vmem:[%s169 + $0x3b8] sm:$0xff]
                %274 = vst [vmem:[%s170 + $0x1dc] sm:$0xff] %v273
                %v275 = vld [vmem:[%s169 + $0x3c0] sm:$0xff]
                %276 = vst [vmem:[%s170 + $0x1e4] sm:$0xff] %v275
                %v277 = vld [vmem:[%s169 + $0x3c8] sm:$0xff]
                %278 = vst [vmem:[%s170 + $0x1ec] sm:$0xff] %v277
                %v279 = vld [vmem:[%s169 + $0x3f0] sm:$0xff]
                %280 = vst [vmem:[%s170 + $0x1f8] sm:$0xff] %v279
                %v281 = vld [vmem:[%s169 + $0x3f8] sm:$0xff]
                %282 = vst [vmem:[%s170 + $0x200] sm:$0xff] %v281
                %v283 = vld [vmem:[%s169 + $0x400] sm:$0xff]
                %284 = vst [vmem:[%s170 + $0x208] sm:$0xff] %v283
                %v285 = vld [vmem:[%s169 + $0x428] sm:$0xff]
                %286 = vst [vmem:[%s170 + $0x214] sm:$0xff] %v285
                %v287 = vld [vmem:[%s169 + $0x430] sm:$0xff]
                %288 = vst [vmem:[%s170 + $0x21c] sm:$0xff] %v287
                %v289 = vld [vmem:[%s169 + $0x438] sm:$0xff]
                %290 = vst [vmem:[%s170 + $0x224] sm:$0xff] %v289
                %v291 = vld [vmem:[%s169 + $0x460] sm:$0xff]
                %292 = vst [vmem:[%s170 + $0x230] sm:$0xff] %v291
                %v293 = vld [vmem:[%s169 + $0x468] sm:$0xff]
                %294 = vst [vmem:[%s170 + $0x238] sm:$0xff] %v293
                %v295 = vld [vmem:[%s169 + $0x470] sm:$0xff]
                %296 = vst [vmem:[%s170 + $0x240] sm:$0xff] %v295
              $region37: #{reduction_a.7} parent=31 // loop_footer
                %s168 = sadd.s32 1, %s164
              $region38: #{reduction_a.7} parent=31 // loop_footer_branch
                %163 = sbr.rel target = $region34
              $region39: #{reduction_a.7} parent=31 // loop_exit
                _
              loop: start=0, step=1, limit=1
              $region40: #{reduction_a.7} parent=31 // loop_pre_header
                _
              $region41: #{reduction_a.7} parent=31 // loop_header
                %s299 = sphi 0, %s303
                %p300 = scmp.ge.s32.totalorder %s299, 1
                %s304 = sphi %s161, %s161
                %s305 = sphi %s162, %s162
              $region42: #{reduction_a.7} parent=31 // loop_header_branch
                %302 = sbr.rel (%p300) target = $region46
              $region43: #{reduction_a.7} parent=31 // loop_body
                %v306 = vld [vmem:[%s304] sm:$0xf]
                %307 = vst [vmem:[%s305] sm:$0xf] %v306
                %v308 = vld [vmem:[%s304 + $0x38] sm:$0xf]
                %309 = vst [vmem:[%s305 + $0x1c] sm:$0xf] %v308
                %v310 = vld [vmem:[%s304 + $0x70] sm:$0xf]
                %311 = vst [vmem:[%s305 + $0x38] sm:$0xf] %v310
                %v312 = vld [vmem:[%s304 + $0xa8] sm:$0xf]
                %313 = vst [vmem:[%s305 + $0x54] sm:$0xf] %v312
                %v314 = vld [vmem:[%s304 + $0xe0] sm:$0xf]
                %315 = vst [vmem:[%s305 + $0x70] sm:$0xf] %v314
                %v316 = vld [vmem:[%s304 + $0x118] sm:$0xf]
                %317 = vst [vmem:[%s305 + $0x8c] sm:$0xf] %v316
                %v318 = vld [vmem:[%s304 + $0x150] sm:$0xf]
                %319 = vst [vmem:[%s305 + $0xa8] sm:$0xf] %v318
                %v320 = vld [vmem:[%s304 + $0x188] sm:$0xf]
                %321 = vst [vmem:[%s305 + $0xc4] sm:$0xf] %v320
                %v322 = vld [vmem:[%s304 + $0x1c0] sm:$0xf]
                %323 = vst [vmem:[%s305 + $0xe0] sm:$0xf] %v322
                %v324 = vld [vmem:[%s304 + $0x1f8] sm:$0xf]
                %325 = vst [vmem:[%s305 + $0xfc] sm:$0xf] %v324
                %v326 = vld [vmem:[%s304 + $0x230] sm:$0xf]
                %327 = vst [vmem:[%s305 + $0x118] sm:$0xf] %v326
                %v328 = vld [vmem:[%s304 + $0x268] sm:$0xf]
                %329 = vst [vmem:[%s305 + $0x134] sm:$0xf] %v328
                %v330 = vld [vmem:[%s304 + $0x2a0] sm:$0xf]
                %331 = vst [vmem:[%s305 + $0x150] sm:$0xf] %v330
                %v332 = vld [vmem:[%s304 + $0x2d8] sm:$0xf]
                %333 = vst [vmem:[%s305 + $0x16c] sm:$0xf] %v332
                %v334 = vld [vmem:[%s304 + $0x310] sm:$0xf]
                %335 = vst [vmem:[%s305 + $0x188] sm:$0xf] %v334
                %v336 = vld [vmem:[%s304 + $0x348] sm:$0xf]
                %337 = vst [vmem:[%s305 + $0x1a4] sm:$0xf] %v336
                %v338 = vld [vmem:[%s304 + $0x380] sm:$0xf]
                %339 = vst [vmem:[%s305 + $0x1c0] sm:$0xf] %v338
                %v340 = vld [vmem:[%s304 + $0x3b8] sm:$0xf]
                %341 = vst [vmem:[%s305 + $0x1dc] sm:$0xf] %v340
                %v342 = vld [vmem:[%s304 + $0x3f0] sm:$0xf]
                %343 = vst [vmem:[%s305 + $0x1f8] sm:$0xf] %v342
                %v344 = vld [vmem:[%s304 + $0x428] sm:$0xf]
                %345 = vst [vmem:[%s305 + $0x214] sm:$0xf] %v344
                %v346 = vld [vmem:[%s304 + $0x460] sm:$0xf]
                %347 = vst [vmem:[%s305 + $0x230] sm:$0xf] %v346
              $region44: #{reduction_a.7} parent=31 // loop_footer
                %s303 = sadd.s32 1, %s299
              $region45: #{reduction_a.7} parent=31 // loop_footer_branch
                %298 = sbr.rel target = $region41
              $region46: #{reduction_a.7} parent=31 // loop_exit
                _
            $region32: #{reduction_a.7} parent=27 // pred_fallthru
              _
          $region28: #{reduction_a.7} parent=23 // pred_fallthru
            _
          %348 = vnop
        $region24: #{reduction_a.7} parent=19 // pred_fallthru
          _
        // Predicated region
        $region47: #{reduction_a.7} parent=19 // pred_check
          %p349 = pneg %p69
        $region48: #{reduction_a.7} parent=19 // pred_check_branch
          %351 = sbr.rel (%p349) target = $region50
        $region49: #{reduction_a.7} parent=19 // pred_region
          %s352 = smul.u32 112, %s17
          %p353 = scmp.lt.s32.totalorder %s352, 223
          %s354 = scalar_select %p353, %s352, 223
          %s355 = smul.addr %s354, 2
          %s356 = smul.addr %s355, 4
          %s357 = scalar_lea.vmem %s1, %s356
          %s358 = smul.u32 112, %s17
        $region50: #{reduction_a.7} parent=19 // pred_fallthru
          _
      $region20: #{reduction_a.7} parent=5 // pred_fallthru
        _
      %p359 = scmp.le.s32.totalorder 1, %s9
      %p360 = scmp.lt.s32.totalorder %s9, 3
      %p361 = pnand %p359, %p360
      %p362 = pneg %p361
      // Predicated region
      $region51: #{reduction_a.7} parent=5 // pred_check
        _
      $region52: #{reduction_a.7} parent=5 // pred_check_branch
        %364 = sbr.rel (%p361) target = $region54
      $region53: #{reduction_a.7} parent=5 // pred_region
        %s365 = ssub.s32 %s9, 1
        %s366 = sand.u32 %s36, 1
        %s367 = sand.u32 %s36, 1
        %s368 = smul.addr %s367, 588
        %s369 = scalar_lea.vmem [#allocation3], %s368
        // Predicated region
        $region55: #{reduction_a.7} parent=53 // pred_check
          %p370 = pneg %p49
        $region56: #{reduction_a.7} parent=53 // pred_check_branch
          %372 = sbr.rel (%p370) target = $region58
        $region57: #{reduction_a.7} parent=53 // pred_region
          _
        $region58: #{reduction_a.7} parent=53 // pred_fallthru
          _
        %s373 = sand.u32 %s36, 1
        %s374 = sand.u32 %s36, 1
        %s375 = smul.addr %s374, 588
        %s376 = scalar_lea.vmem [#allocation3], %s375
        %p377 = pneg %p49
        %p378 = pneg %p46
        %s379 = smul.u32 112, %s19
        %p380 = scmp.lt.s32.totalorder %s379, 223
        %s381 = scalar_select %p380, %s379, 223
        %s382 = smul.addr %s381, 2
        %s383 = smul.addr %s382, 4
        %s384 = scalar_lea.vmem %s1, %s383
        %p385 = pneg %p75
        %p386 = pneg %p72
        %p387 = pneg %p96
        %p388 = pneg %p93
        %p389 = pneg %p122
        %p390 = pneg %p119
        %s391 = smul.u32 21, %s18
        %p392 = scmp.lt.s32.totalorder %s391, 20
        %s393 = scalar_select %p392, %s391, 20
        %s394 = smul.addr %s393, 2
        %s395 = smul.addr %s394, 8
        %s396 = scalar_lea.vmem %s3, %s395
        %s397 = smul.u32 21, %s18
        %s398 = smul.u32 7, %s19
        %s399 = smul.u32 112, %s19
        %p400 = scmp.lt.s32.totalorder %s399, 223
        %s401 = scalar_select %p400, %s399, 223
        %s402 = smul.addr %s401, 2
        %s403 = smul.addr %s402, 4
        %s404 = scalar_lea.vmem %s1, %s403
        %s405 = smul.u32 112, %s19
        %s406 = smul.u32 21, %s18
        %p407 = scmp.lt.s32.totalorder %s406, 20
        %s408 = scalar_select %p407, %s406, 20
        %s409 = smul.addr %s408, 2
        %s410 = smul.addr %s409, 8
        %s411 = scalar_lea.vmem %s3, %s410
        %s412 = smul.u32 21, %s18
        %p414 = scmp.eq.s32.totalorder %s19, 0
        // Predicated region
        $region59: #{reduction_a.7} parent=53 // pred_check
          %p415 = pneg %p414
        $region60: #{reduction_a.7} parent=53 // pred_check_branch
          %417 = sbr.rel (%p415) target = $region62
        $region61: #{reduction_a.7} parent=53 // pred_region
          %418 = vst [vmem:[#allocation2] sm:$0xff] 0.0
          %419 = vst [vmem:[#allocation2 + $0x8] sm:$0xff] 0.0
          %420 = vst [vmem:[#allocation2 + $0x10] sm:$0xff] 0.0
          %421 = vst [vmem:[#allocation2 + $0x18] sm:$0xff] 0.0
          %422 = vst [vmem:[#allocation2 + $0x20] sm:$0xff] 0.0
          %423 = vst [vmem:[#allocation2 + $0x28] sm:$0xff] 0.0
          %424 = vst [vmem:[#allocation2 + $0x30] sm:$0xff] 0.0
          %425 = vst [vmem:[#allocation2 + $0x38] sm:$0xff] 0.0
          %426 = vst [vmem:[#allocation2 + $0x40] sm:$0xff] 0.0
          %427 = vst [vmem:[#allocation2 + $0x48] sm:$0xff] 0.0
          %428 = vst [vmem:[#allocation2 + $0x50] sm:$0xff] 0.0
          %429 = vst [vmem:[#allocation2 + $0x58] sm:$0xff] 0.0
          %430 = vst [vmem:[#allocation2 + $0x60] sm:$0xff] 0.0
          %431 = vst [vmem:[#allocation2 + $0x68] sm:$0xff] 0.0
          %432 = vst [vmem:[#allocation2 + $0x70] sm:$0xff] 0.0
          %433 = vst [vmem:[#allocation2 + $0x78] sm:$0xff] 0.0
          %434 = vst [vmem:[#allocation2 + $0x80] sm:$0xff] 0.0
          %435 = vst [vmem:[#allocation2 + $0x88] sm:$0xff] 0.0
          %436 = vst [vmem:[#allocation2 + $0x90] sm:$0xff] 0.0
          %437 = vst [vmem:[#allocation2 + $0x98] sm:$0xff] 0.0
          %438 = vst [vmem:[#allocation2 + $0xa0] sm:$0xff] 0.0
          %439 = vst [vmem:[#allocation2 + $0xa8] sm:$0xff] 0.0
          %440 = vst [vmem:[#allocation2 + $0xb0] sm:$0xff] 0.0
          %441 = vst [vmem:[#allocation2 + $0xb8] sm:$0xff] 0.0
          %442 = vst [vmem:[#allocation2 + $0xc0] sm:$0xff] 0.0
          %443 = vst [vmem:[#allocation2 + $0xc8] sm:$0xff] 0.0
          %444 = vst [vmem:[#allocation2 + $0xd0] sm:$0xff] 0.0
          %445 = vst [vmem:[#allocation2 + $0xd8] sm:$0xff] 0.0
          %446 = vst [vmem:[#allocation2 + $0xe0] sm:$0xff] 0.0
          %447 = vst [vmem:[#allocation2 + $0xe8] sm:$0xff] 0.0
          %448 = vst [vmem:[#allocation2 + $0xf0] sm:$0xff] 0.0
          %449 = vst [vmem:[#allocation2 + $0xf8] sm:$0xff] 0.0
          %450 = vst [vmem:[#allocation2 + $0x100] sm:$0xff] 0.0
          %451 = vst [vmem:[#allocation2 + $0x108] sm:$0xff] 0.0
          %452 = vst [vmem:[#allocation2 + $0x110] sm:$0xff] 0.0
          %453 = vst [vmem:[#allocation2 + $0x118] sm:$0xff] 0.0
          %454 = vst [vmem:[#allocation2 + $0x120] sm:$0xff] 0.0
          %455 = vst [vmem:[#allocation2 + $0x128] sm:$0xff] 0.0
          %456 = vst [vmem:[#allocation2 + $0x130] sm:$0xff] 0.0
          %457 = vst [vmem:[#allocation2 + $0x138] sm:$0xff] 0.0
          %458 = vst [vmem:[#allocation2 + $0x140] sm:$0xff] 0.0
          %459 = vst [vmem:[#allocation2 + $0x148] sm:$0xff] 0.0
        $region62: #{reduction_a.7} parent=53 // pred_fallthru
          _
        %v460 = vld [vmem:[#allocation2] sm:$0xff]
        %v461 = vld [vmem:[#allocation2 + $0x8] sm:$0xff]
        %v462 = vld [vmem:[#allocation2 + $0x10] sm:$0xff]
        %v463 = vld [vmem:[#allocation2 + $0x18] sm:$0xff]
        %v464 = vld [vmem:[#allocation2 + $0x20] sm:$0xff]
        %v465 = vld [vmem:[#allocation2 + $0x28] sm:$0xff]
        %v466 = vld [vmem:[#allocation2 + $0x30] sm:$0xff]
        %v467 = vld [vmem:[#allocation2 + $0x38] sm:$0xff]
        %v468 = vld [vmem:[#allocation2 + $0x40] sm:$0xff]
        %v469 = vld [vmem:[#allocation2 + $0x48] sm:$0xff]
        %v470 = vld [vmem:[#allocation2 + $0x50] sm:$0xff]
        %v471 = vld [vmem:[#allocation2 + $0x58] sm:$0xff]
        %v472 = vld [vmem:[#allocation2 + $0x60] sm:$0xff]
        %v473 = vld [vmem:[#allocation2 + $0x68] sm:$0xff]
        %v474 = vld [vmem:[#allocation2 + $0x70] sm:$0xff]
        %v475 = vld [vmem:[#allocation2 + $0x78] sm:$0xff]
        %v476 = vld [vmem:[#allocation2 + $0x80] sm:$0xff]
        %v477 = vld [vmem:[#allocation2 + $0x88] sm:$0xff]
        %v478 = vld [vmem:[#allocation2 + $0x90] sm:$0xff]
        %v479 = vld [vmem:[#allocation2 + $0x98] sm:$0xff]
        %v480 = vld [vmem:[#allocation2 + $0xa0] sm:$0xff]
        %v481 = vld [vmem:[#allocation2 + $0xa8] sm:$0xff]
        %v482 = vld [vmem:[#allocation2 + $0xb0] sm:$0xff]
        %v483 = vld [vmem:[#allocation2 + $0xb8] sm:$0xff]
        %v484 = vld [vmem:[#allocation2 + $0xc0] sm:$0xff]
        %v485 = vld [vmem:[#allocation2 + $0xc8] sm:$0xff]
        %v486 = vld [vmem:[#allocation2 + $0xd0] sm:$0xff]
        %v487 = vld [vmem:[#allocation2 + $0xd8] sm:$0xff]
        %v488 = vld [vmem:[#allocation2 + $0xe0] sm:$0xff]
        %v489 = vld [vmem:[#allocation2 + $0xe8] sm:$0xff]
        %v490 = vld [vmem:[#allocation2 + $0xf0] sm:$0xff]
        %v491 = vld [vmem:[#allocation2 + $0xf8] sm:$0xff]
        %v492 = vld [vmem:[#allocation2 + $0x100] sm:$0xff]
        %v493 = vld [vmem:[#allocation2 + $0x108] sm:$0xff]
        %v494 = vld [vmem:[#allocation2 + $0x110] sm:$0xff]
        %v495 = vld [vmem:[#allocation2 + $0x118] sm:$0xff]
        %v496 = vld [vmem:[#allocation2 + $0x120] sm:$0xff]
        %v497 = vld [vmem:[#allocation2 + $0x128] sm:$0xff]
        %v498 = vld [vmem:[#allocation2 + $0x130] sm:$0xff]
        %v499 = vld [vmem:[#allocation2 + $0x138] sm:$0xff]
        %v500 = vld [vmem:[#allocation2 + $0x140] sm:$0xff]
        %v501 = vld [vmem:[#allocation2 + $0x148] sm:$0xff]
        %v502 = vld [vmem:[%s369] sm:$0xff]
        %v503 = vld [vmem:[%s369 + $0x8] sm:$0xff]
        %v504 = vld [vmem:[%s369 + $0x10] sm:$0xff]
        %v505 = vld [vmem:[%s369 + $0x18] sm:$0xf]
        %v506 = vld [vmem:[%s369 + $0x1c] sm:$0xff]
        %v507 = vld [vmem:[%s369 + $0x24] sm:$0xff]
        %v508 = vld [vmem:[%s369 + $0x2c] sm:$0xff]
        %v509 = vld [vmem:[%s369 + $0x34] sm:$0xf]
        %v510 = vld [vmem:[%s369 + $0x38] sm:$0xff]
        %v511 = vld [vmem:[%s369 + $0x40] sm:$0xff]
        %v512 = vld [vmem:[%s369 + $0x48] sm:$0xff]
        %v513 = vld [vmem:[%s369 + $0x50] sm:$0xf]
        %v514 = vld [vmem:[%s369 + $0x54] sm:$0xff]
        %v515 = vld [vmem:[%s369 + $0x5c] sm:$0xff]
        %v516 = vld [vmem:[%s369 + $0x64] sm:$0xff]
        %v517 = vld [vmem:[%s369 + $0x6c] sm:$0xf]
        %v518 = vld [vmem:[%s369 + $0x70] sm:$0xff]
        %v519 = vld [vmem:[%s369 + $0x78] sm:$0xff]
        %v520 = vld [vmem:[%s369 + $0x80] sm:$0xff]
        %v521 = vld [vmem:[%s369 + $0x88] sm:$0xf]
        %v522 = vld [vmem:[%s369 + $0x8c] sm:$0xff]
        %v523 = vld [vmem:[%s369 + $0x94] sm:$0xff]
        %v524 = vld [vmem:[%s369 + $0x9c] sm:$0xff]
        %v525 = vld [vmem:[%s369 + $0xa4] sm:$0xf]
        %v526 = vld [vmem:[%s369 + $0xa8] sm:$0xff]
        %v527 = vld [vmem:[%s369 + $0xb0] sm:$0xff]
        %v528 = vld [vmem:[%s369 + $0xb8] sm:$0xff]
        %v529 = vld [vmem:[%s369 + $0xc0] sm:$0xf]
        %v530 = vld [vmem:[%s369 + $0xc4] sm:$0xff]
        %v531 = vld [vmem:[%s369 + $0xcc] sm:$0xff]
        %v532 = vld [vmem:[%s369 + $0xd4] sm:$0xff]
        %v533 = vld [vmem:[%s369 + $0xdc] sm:$0xf]
        %v534 = vld [vmem:[%s369 + $0xe0] sm:$0xff]
        %v535 = vld [vmem:[%s369 + $0xe8] sm:$0xff]
        %v536 = vld [vmem:[%s369 + $0xf0] sm:$0xff]
        %v537 = vld [vmem:[%s369 + $0xf8] sm:$0xf]
        %v538 = vld [vmem:[%s369 + $0xfc] sm:$0xff]
        %v539 = vld [vmem:[%s369 + $0x104] sm:$0xff]
        %v540 = vld [vmem:[%s369 + $0x10c] sm:$0xff]
        %v541 = vld [vmem:[%s369 + $0x114] sm:$0xf]
        %v542 = vld [vmem:[%s369 + $0x118] sm:$0xff]
        %v543 = vld [vmem:[%s369 + $0x120] sm:$0xff]
        %v544 = vld [vmem:[%s369 + $0x128] sm:$0xff]
        %v545 = vld [vmem:[%s369 + $0x130] sm:$0xf]
        %v546 = vld [vmem:[%s369 + $0x134] sm:$0xff]
        %v547 = vld [vmem:[%s369 + $0x13c] sm:$0xff]
        %v548 = vld [vmem:[%s369 + $0x144] sm:$0xff]
        %v549 = vld [vmem:[%s369 + $0x14c] sm:$0xf]
        %v550 = vld [vmem:[%s369 + $0x150] sm:$0xff]
        %v551 = vld [vmem:[%s369 + $0x158] sm:$0xff]
        %v552 = vld [vmem:[%s369 + $0x160] sm:$0xff]
        %v553 = vld [vmem:[%s369 + $0x168] sm:$0xf]
        %v554 = vld [vmem:[%s369 + $0x16c] sm:$0xff]
        %v555 = vld [vmem:[%s369 + $0x174] sm:$0xff]
        %v556 = vld [vmem:[%s369 + $0x17c] sm:$0xff]
        %v557 = vld [vmem:[%s369 + $0x184] sm:$0xf]
        %v558 = vld [vmem:[%s369 + $0x188] sm:$0xff]
        %v559 = vld [vmem:[%s369 + $0x190] sm:$0xff]
        %v560 = vld [vmem:[%s369 + $0x198] sm:$0xff]
        %v561 = vld [vmem:[%s369 + $0x1a0] sm:$0xf]
        %v562 = vld [vmem:[%s369 + $0x1a4] sm:$0xff]
        %v563 = vld [vmem:[%s369 + $0x1ac] sm:$0xff]
        %v564 = vld [vmem:[%s369 + $0x1b4] sm:$0xff]
        %v565 = vld [vmem:[%s369 + $0x1bc] sm:$0xf]
        %v566 = vld [vmem:[%s369 + $0x1c0] sm:$0xff]
        %v567 = vld [vmem:[%s369 + $0x1c8] sm:$0xff]
        %v568 = vld [vmem:[%s369 + $0x1d0] sm:$0xff]
        %v569 = vld [vmem:[%s369 + $0x1d8] sm:$0xf]
        %v570 = vld [vmem:[%s369 + $0x1dc] sm:$0xff]
        %v571 = vld [vmem:[%s369 + $0x1e4] sm:$0xff]
        %v572 = vld [vmem:[%s369 + $0x1ec] sm:$0xff]
        %v573 = vld [vmem:[%s369 + $0x1f4] sm:$0xf]
        %v574 = vld [vmem:[%s369 + $0x1f8] sm:$0xff]
        %v575 = vld [vmem:[%s369 + $0x200] sm:$0xff]
        %v576 = vld [vmem:[%s369 + $0x208] sm:$0xff]
        %v577 = vld [vmem:[%s369 + $0x210] sm:$0xf]
        %v578 = vld [vmem:[%s369 + $0x214] sm:$0xff]
        %v579 = vld [vmem:[%s369 + $0x21c] sm:$0xff]
        %v580 = vld [vmem:[%s369 + $0x224] sm:$0xff]
        %v581 = vld [vmem:[%s369 + $0x22c] sm:$0xf]
        %v582 = vld [vmem:[%s369 + $0x230] sm:$0xff]
        %v583 = vld [vmem:[%s369 + $0x238] sm:$0xff]
        %v584 = vld [vmem:[%s369 + $0x240] sm:$0xff]
        %v585 = vld [vmem:[%s369 + $0x248] sm:$0xf]
        %v586 = vld [vmem:[%s404] sm:$0xff]
        %v587 = vld [vmem:[%s404 + $0x8] sm:$0xff]
        %v588 = vld [vmem:[%s404 + $0x10] sm:$0xff]
        %v589 = vld [vmem:[%s404 + $0x18] sm:$0xff]
        %v590 = vld [vmem:[%s404 + $0x20] sm:$0xff]
        %v591 = vld [vmem:[%s404 + $0x28] sm:$0xff]
        %v592 = vld [vmem:[%s404 + $0x30] sm:$0xff]
        %v593 = vld [vmem:[%s404 + $0x38] sm:$0xff]
        %v594 = vld [vmem:[%s404 + $0x40] sm:$0xff]
        %v595 = vld [vmem:[%s404 + $0x48] sm:$0xff]
        %v596 = vld [vmem:[%s404 + $0x50] sm:$0xff]
        %v597 = vld [vmem:[%s404 + $0x58] sm:$0xff]
        %v598 = vld [vmem:[%s404 + $0x60] sm:$0xff]
        %v599 = vld [vmem:[%s404 + $0x68] sm:$0xff]
        %v600 = vld [vmem:[%s404 + $0x70] sm:$0xff]
        %v601 = vld [vmem:[%s404 + $0x78] sm:$0xff]
        %v602 = vld [vmem:[%s404 + $0x80] sm:$0xff]
        %v603 = vld [vmem:[%s404 + $0x88] sm:$0xff]
        %v604 = vld [vmem:[%s404 + $0x90] sm:$0xff]
        %v605 = vld [vmem:[%s404 + $0x98] sm:$0xff]
        %v606 = vld [vmem:[%s404 + $0xa0] sm:$0xff]
        %v607 = vld [vmem:[%s404 + $0xa8] sm:$0xff]
        %v608 = vld [vmem:[%s404 + $0xb0] sm:$0xff]
        %v609 = vld [vmem:[%s404 + $0xb8] sm:$0xff]
        %v610 = vld [vmem:[%s404 + $0xc0] sm:$0xff]
        %v611 = vld [vmem:[%s404 + $0xc8] sm:$0xff]
        %v612 = vld [vmem:[%s404 + $0xd0] sm:$0xff]
        %v613 = vld [vmem:[%s404 + $0xd8] sm:$0xff]
        %v614 = vld [vmem:[%s404 + $0xe0] sm:$0xff]
        %v615 = vld [vmem:[%s404 + $0xe8] sm:$0xff]
        %v616 = vld [vmem:[%s404 + $0xf0] sm:$0xff]
        %v617 = vld [vmem:[%s404 + $0xf8] sm:$0xff]
        %v618 = vld [vmem:[%s404 + $0x100] sm:$0xff]
        %v619 = vld [vmem:[%s404 + $0x108] sm:$0xff]
        %v620 = vld [vmem:[%s404 + $0x110] sm:$0xff]
        %v621 = vld [vmem:[%s404 + $0x118] sm:$0xff]
        %v622 = vld [vmem:[%s404 + $0x120] sm:$0xff]
        %v623 = vld [vmem:[%s404 + $0x128] sm:$0xff]
        %v624 = vld [vmem:[%s404 + $0x130] sm:$0xff]
        %v625 = vld [vmem:[%s404 + $0x138] sm:$0xff]
        %v626 = vld [vmem:[%s404 + $0x140] sm:$0xff]
        %v627 = vld [vmem:[%s404 + $0x148] sm:$0xff]
        %v628 = vld [vmem:[%s404 + $0x150] sm:$0xff]
        %v629 = vld [vmem:[%s404 + $0x158] sm:$0xff]
        %v630 = vld [vmem:[%s404 + $0x160] sm:$0xff]
        %v631 = vld [vmem:[%s404 + $0x168] sm:$0xff]
        %v632 = vld [vmem:[%s404 + $0x170] sm:$0xff]
        %v633 = vld [vmem:[%s404 + $0x178] sm:$0xff]
        %v634 = vld [vmem:[%s404 + $0x180] sm:$0xff]
        %v635 = vld [vmem:[%s404 + $0x188] sm:$0xff]
        %v636 = vld [vmem:[%s404 + $0x190] sm:$0xff]
        %v637 = vld [vmem:[%s404 + $0x198] sm:$0xff]
        %v638 = vld [vmem:[%s404 + $0x1a0] sm:$0xff]
        %v639 = vld [vmem:[%s404 + $0x1a8] sm:$0xff]
        %v640 = vld [vmem:[%s404 + $0x1b0] sm:$0xff]
        %v641 = vld [vmem:[%s404 + $0x1b8] sm:$0xff]
        %v642 = vld [vmem:[%s404 + $0x1c0] sm:$0xff]
        %v643 = vld [vmem:[%s404 + $0x1c8] sm:$0xff]
        %v644 = vld [vmem:[%s404 + $0x1d0] sm:$0xff]
        %v645 = vld [vmem:[%s404 + $0x1d8] sm:$0xff]
        %v646 = vld [vmem:[%s404 + $0x1e0] sm:$0xff]
        %v647 = vld [vmem:[%s404 + $0x1e8] sm:$0xff]
        %v648 = vld [vmem:[%s404 + $0x1f0] sm:$0xff]
        %v649 = vld [vmem:[%s404 + $0x1f8] sm:$0xff]
        %v650 = vld [vmem:[%s404 + $0x200] sm:$0xff]
        %v651 = vld [vmem:[%s404 + $0x208] sm:$0xff]
        %v652 = vld [vmem:[%s404 + $0x210] sm:$0xff]
        %v653 = vld [vmem:[%s404 + $0x218] sm:$0xff]
        %v654 = vld [vmem:[%s404 + $0x220] sm:$0xff]
        %v655 = vld [vmem:[%s404 + $0x228] sm:$0xff]
        %v656 = vld [vmem:[%s404 + $0x230] sm:$0xff]
        %v657 = vld [vmem:[%s404 + $0x238] sm:$0xff]
        %v658 = vld [vmem:[%s404 + $0x240] sm:$0xff]
        %v659 = vld [vmem:[%s404 + $0x248] sm:$0xff]
        %v660 = vld [vmem:[%s404 + $0x250] sm:$0xff]
        %v661 = vld [vmem:[%s404 + $0x258] sm:$0xff]
        %v662 = vld [vmem:[%s404 + $0x260] sm:$0xff]
        %v663 = vld [vmem:[%s404 + $0x268] sm:$0xff]
        %v664 = vld [vmem:[%s404 + $0x270] sm:$0xff]
        %v665 = vld [vmem:[%s404 + $0x278] sm:$0xff]
        %v666 = vld [vmem:[%s404 + $0x280] sm:$0xff]
        %v667 = vld [vmem:[%s404 + $0x288] sm:$0xff]
        %v668 = vld [vmem:[%s404 + $0x290] sm:$0xff]
        %v669 = vld [vmem:[%s404 + $0x298] sm:$0xff]
        %v670 = vld [vmem:[%s404 + $0x2a0] sm:$0xff]
        %v671 = vld [vmem:[%s404 + $0x2a8] sm:$0xff]
        %v672 = vld [vmem:[%s404 + $0x2b0] sm:$0xff]
        %v673 = vld [vmem:[%s404 + $0x2b8] sm:$0xff]
        %v674 = vld [vmem:[%s404 + $0x2c0] sm:$0xff]
        %v675 = vld [vmem:[%s404 + $0x2c8] sm:$0xff]
        %v676 = vld [vmem:[%s404 + $0x2d0] sm:$0xff]
        %v677 = vld [vmem:[%s404 + $0x2d8] sm:$0xff]
        %v678 = vld [vmem:[%s404 + $0x2e0] sm:$0xff]
        %v679 = vld [vmem:[%s404 + $0x2e8] sm:$0xff]
        %v680 = vld [vmem:[%s404 + $0x2f0] sm:$0xff]
        %v681 = vld [vmem:[%s404 + $0x2f8] sm:$0xff]
        %v682 = vld [vmem:[%s404 + $0x300] sm:$0xff]
        %v683 = vld [vmem:[%s404 + $0x308] sm:$0xff]
        %v684 = vld [vmem:[%s404 + $0x310] sm:$0xff]
        %v685 = vld [vmem:[%s404 + $0x318] sm:$0xff]
        %v686 = vld [vmem:[%s404 + $0x320] sm:$0xff]
        %v687 = vld [vmem:[%s404 + $0x328] sm:$0xff]
        %v688 = vld [vmem:[%s404 + $0x330] sm:$0xff]
        %v689 = vld [vmem:[%s404 + $0x338] sm:$0xff]
        %v690 = vld [vmem:[%s404 + $0x340] sm:$0xff]
        %v691 = vld [vmem:[%s404 + $0x348] sm:$0xff]
        %v692 = vld [vmem:[%s404 + $0x350] sm:$0xff]
        %v693 = vld [vmem:[%s404 + $0x358] sm:$0xff]
        %v694 = vld [vmem:[%s404 + $0x360] sm:$0xff]
        %v695 = vld [vmem:[%s404 + $0x368] sm:$0xff]
        %v696 = vld [vmem:[%s404 + $0x370] sm:$0xff]
        %v697 = vld [vmem:[%s404 + $0x378] sm:$0xff]
        %v782 = vunpack.c.l.b16 %v502
        %v783 = vunpack.c.h.b16 %v502
        %v784 = vunpack.c.l.b16 %v503
        %v785 = vunpack.c.h.b16 %v503
        %v786 = vunpack.c.l.b16 %v504
        %v787 = vunpack.c.h.b16 %v504
        %v788 = vunpack.c.l.b16 %v505
        %v789 = vunpack.c.l.b16 %v506
        %v790 = vunpack.c.h.b16 %v506
        %v791 = vunpack.c.l.b16 %v507
        %v792 = vunpack.c.h.b16 %v507
        %v793 = vunpack.c.l.b16 %v508
        %v794 = vunpack.c.h.b16 %v508
        %v795 = vunpack.c.l.b16 %v509
        %v796 = vunpack.c.l.b16 %v510
        %v797 = vunpack.c.h.b16 %v510
        %v798 = vunpack.c.l.b16 %v511
        %v799 = vunpack.c.h.b16 %v511
        %v800 = vunpack.c.l.b16 %v512
        %v801 = vunpack.c.h.b16 %v512
        %v802 = vunpack.c.l.b16 %v513
        %v803 = vunpack.c.l.b16 %v514
        %v804 = vunpack.c.h.b16 %v514
        %v805 = vunpack.c.l.b16 %v515
        %v806 = vunpack.c.h.b16 %v515
        %v807 = vunpack.c.l.b16 %v516
        %v808 = vunpack.c.h.b16 %v516
        %v809 = vunpack.c.l.b16 %v517
        %v810 = vunpack.c.l.b16 %v518
        %v811 = vunpack.c.h.b16 %v518
        %v812 = vunpack.c.l.b16 %v519
        %v813 = vunpack.c.h.b16 %v519
        %v814 = vunpack.c.l.b16 %v520
        %v815 = vunpack.c.h.b16 %v520
        %v816 = vunpack.c.l.b16 %v521
        %v817 = vunpack.c.l.b16 %v522
        %v818 = vunpack.c.h.b16 %v522
        %v819 = vunpack.c.l.b16 %v523
        %v820 = vunpack.c.h.b16 %v523
        %v821 = vunpack.c.l.b16 %v524
        %v822 = vunpack.c.h.b16 %v524
        %v823 = vunpack.c.l.b16 %v525
        %v824 = vunpack.c.l.b16 %v526
        %v825 = vunpack.c.h.b16 %v526
        %v826 = vunpack.c.l.b16 %v527
        %v827 = vunpack.c.h.b16 %v527
        %v828 = vunpack.c.l.b16 %v528
        %v829 = vunpack.c.h.b16 %v528
        %v830 = vunpack.c.l.b16 %v529
        %v831 = vunpack.c.l.b16 %v530
        %v832 = vunpack.c.h.b16 %v530
        %v833 = vunpack.c.l.b16 %v531
        %v834 = vunpack.c.h.b16 %v531
        %v835 = vunpack.c.l.b16 %v532
        %v836 = vunpack.c.h.b16 %v532
        %v837 = vunpack.c.l.b16 %v533
        %v838 = vunpack.c.l.b16 %v534
        %v839 = vunpack.c.h.b16 %v534
        %v840 = vunpack.c.l.b16 %v535
        %v841 = vunpack.c.h.b16 %v535
        %v842 = vunpack.c.l.b16 %v536
        %v843 = vunpack.c.h.b16 %v536
        %v844 = vunpack.c.l.b16 %v537
        %v845 = vunpack.c.l.b16 %v538
        %v846 = vunpack.c.h.b16 %v538
        %v847 = vunpack.c.l.b16 %v539
        %v848 = vunpack.c.h.b16 %v539
        %v849 = vunpack.c.l.b16 %v540
        %v850 = vunpack.c.h.b16 %v540
        %v851 = vunpack.c.l.b16 %v541
        %v852 = vunpack.c.l.b16 %v542
        %v853 = vunpack.c.h.b16 %v542
        %v854 = vunpack.c.l.b16 %v543
        %v855 = vunpack.c.h.b16 %v543
        %v856 = vunpack.c.l.b16 %v544
        %v857 = vunpack.c.h.b16 %v544
        %v858 = vunpack.c.l.b16 %v545
        %v859 = vunpack.c.l.b16 %v546
        %v860 = vunpack.c.h.b16 %v546
        %v861 = vunpack.c.l.b16 %v547
        %v862 = vunpack.c.h.b16 %v547
        %v863 = vunpack.c.l.b16 %v548
        %v864 = vunpack.c.h.b16 %v548
        %v865 = vunpack.c.l.b16 %v549
        %v866 = vunpack.c.l.b16 %v550
        %v867 = vunpack.c.h.b16 %v550
        %v868 = vunpack.c.l.b16 %v551
        %v869 = vunpack.c.h.b16 %v551
        %v870 = vunpack.c.l.b16 %v552
        %v871 = vunpack.c.h.b16 %v552
        %v872 = vunpack.c.l.b16 %v553
        %v873 = vunpack.c.l.b16 %v554
        %v874 = vunpack.c.h.b16 %v554
        %v875 = vunpack.c.l.b16 %v555
        %v876 = vunpack.c.h.b16 %v555
        %v877 = vunpack.c.l.b16 %v556
        %v878 = vunpack.c.h.b16 %v556
        %v879 = vunpack.c.l.b16 %v557
        %v880 = vunpack.c.l.b16 %v558
        %v881 = vunpack.c.h.b16 %v558
        %v882 = vunpack.c.l.b16 %v559
        %v883 = vunpack.c.h.b16 %v559
        %v884 = vunpack.c.l.b16 %v560
        %v885 = vunpack.c.h.b16 %v560
        %v886 = vunpack.c.l.b16 %v561
        %v887 = vunpack.c.l.b16 %v562
        %v888 = vunpack.c.h.b16 %v562
        %v889 = vunpack.c.l.b16 %v563
        %v890 = vunpack.c.h.b16 %v563
        %v891 = vunpack.c.l.b16 %v564
        %v892 = vunpack.c.h.b16 %v564
        %v893 = vunpack.c.l.b16 %v565
        %v894 = vunpack.c.l.b16 %v566
        %v895 = vunpack.c.h.b16 %v566
        %v896 = vunpack.c.l.b16 %v567
        %v897 = vunpack.c.h.b16 %v567
        %v898 = vunpack.c.l.b16 %v568
        %v899 = vunpack.c.h.b16 %v568
        %v900 = vunpack.c.l.b16 %v569
        %v901 = vunpack.c.l.b16 %v570
        %v902 = vunpack.c.h.b16 %v570
        %v903 = vunpack.c.l.b16 %v571
        %v904 = vunpack.c.h.b16 %v571
        %v905 = vunpack.c.l.b16 %v572
        %v906 = vunpack.c.h.b16 %v572
        %v907 = vunpack.c.l.b16 %v573
        %v908 = vunpack.c.l.b16 %v574
        %v909 = vunpack.c.h.b16 %v574
        %v910 = vunpack.c.l.b16 %v575
        %v911 = vunpack.c.h.b16 %v575
        %v912 = vunpack.c.l.b16 %v576
        %v913 = vunpack.c.h.b16 %v576
        %v914 = vunpack.c.l.b16 %v577
        %v915 = vunpack.c.l.b16 %v578
        %v916 = vunpack.c.h.b16 %v578
        %v917 = vunpack.c.l.b16 %v579
        %v918 = vunpack.c.h.b16 %v579
        %v919 = vunpack.c.l.b16 %v580
        %v920 = vunpack.c.h.b16 %v580
        %v921 = vunpack.c.l.b16 %v581
        %v922 = vunpack.c.l.b16 %v582
        %v923 = vunpack.c.h.b16 %v582
        %v924 = vunpack.c.l.b16 %v583
        %v925 = vunpack.c.h.b16 %v583
        %v926 = vunpack.c.l.b16 %v584
        %v927 = vunpack.c.h.b16 %v584
        %v928 = vunpack.c.l.b16 %v585
        %v929 = vpack.c.b16 %v789, %v782
        %v930 = vpack.c.b16 %v790, %v783
        %v931 = vpack.c.b16 %v791, %v784
        %v932 = vpack.c.b16 %v792, %v785
        %v933 = vpack.c.b16 %v793, %v786
        %v934 = vpack.c.b16 %v794, %v787
        %v935 = vpack.c.b16 %v795, %v788
        %v936 = vpack.c.b16 %v803, %v796
        %v937 = vpack.c.b16 %v804, %v797
        %v938 = vpack.c.b16 %v805, %v798
        %v939 = vpack.c.b16 %v806, %v799
        %v940 = vpack.c.b16 %v807, %v800
        %v941 = vpack.c.b16 %v808, %v801
        %v942 = vpack.c.b16 %v809, %v802
        %v943 = vpack.c.b16 %v817, %v810
        %v944 = vpack.c.b16 %v818, %v811
        %v945 = vpack.c.b16 %v819, %v812
        %v946 = vpack.c.b16 %v820, %v813
        %v947 = vpack.c.b16 %v821, %v814
        %v948 = vpack.c.b16 %v822, %v815
        %v949 = vpack.c.b16 %v823, %v816
        %v950 = vpack.c.b16 %v831, %v824
        %v951 = vpack.c.b16 %v832, %v825
        %v952 = vpack.c.b16 %v833, %v826
        %v953 = vpack.c.b16 %v834, %v827
        %v954 = vpack.c.b16 %v835, %v828
        %v955 = vpack.c.b16 %v836, %v829
        %v956 = vpack.c.b16 %v837, %v830
        %v957 = vpack.c.b16 %v845, %v838
        %v958 = vpack.c.b16 %v846, %v839
        %v959 = vpack.c.b16 %v847, %v840
        %v960 = vpack.c.b16 %v848, %v841
        %v961 = vpack.c.b16 %v849, %v842
        %v962 = vpack.c.b16 %v850, %v843
        %v963 = vpack.c.b16 %v851, %v844
        %v964 = vpack.c.b16 %v859, %v852
        %v965 = vpack.c.b16 %v860, %v853
        %v966 = vpack.c.b16 %v861, %v854
        %v967 = vpack.c.b16 %v862, %v855
        %v968 = vpack.c.b16 %v863, %v856
        %v969 = vpack.c.b16 %v864, %v857
        %v970 = vpack.c.b16 %v865, %v858
        %v971 = vpack.c.b16 %v873, %v866
        %v972 = vpack.c.b16 %v874, %v867
        %v973 = vpack.c.b16 %v875, %v868
        %v974 = vpack.c.b16 %v876, %v869
        %v975 = vpack.c.b16 %v877, %v870
        %v976 = vpack.c.b16 %v878, %v871
        %v977 = vpack.c.b16 %v879, %v872
        %v978 = vpack.c.b16 %v887, %v880
        %v979 = vpack.c.b16 %v888, %v881
        %v980 = vpack.c.b16 %v889, %v882
        %v981 = vpack.c.b16 %v890, %v883
        %v982 = vpack.c.b16 %v891, %v884
        %v983 = vpack.c.b16 %v892, %v885
        %v984 = vpack.c.b16 %v893, %v886
        %v985 = vpack.c.b16 %v901, %v894
        %v986 = vpack.c.b16 %v902, %v895
        %v987 = vpack.c.b16 %v903, %v896
        %v988 = vpack.c.b16 %v904, %v897
        %v989 = vpack.c.b16 %v905, %v898
        %v990 = vpack.c.b16 %v906, %v899
        %v991 = vpack.c.b16 %v907, %v900
        %v992 = vpack.c.b16 %v915, %v908
        %v993 = vpack.c.b16 %v916, %v909
        %v994 = vpack.c.b16 %v917, %v910
        %v995 = vpack.c.b16 %v918, %v911
        %v996 = vpack.c.b16 %v919, %v912
        %v997 = vpack.c.b16 %v920, %v913
        %v998 = vpack.c.b16 %v921, %v914
        %v999 = vpack.c.b16 %v922, %v922
        %v1000 = vpack.c.b16 %v923, %v923
        %v1001 = vpack.c.b16 %v924, %v924
        %v1002 = vpack.c.b16 %v925, %v925
        %v1003 = vpack.c.b16 %v926, %v926
        %v1004 = vpack.c.b16 %v927, %v927
        %v1005 = vpack.c.b16 %v928, %v928
        %v1195 = vunpack.c.l.b16 %v586
        %v1196 = vunpack.c.h.b16 %v586
        %v1197 = vunpack.c.l.b16 %v587
        %v1198 = vunpack.c.h.b16 %v587
        %v1199 = vunpack.c.l.b16 %v588
        %v1200 = vunpack.c.h.b16 %v588
        %v1201 = vunpack.c.l.b16 %v589
        %v1202 = vunpack.c.h.b16 %v589
        %v1203 = vunpack.c.l.b16 %v590
        %v1204 = vunpack.c.h.b16 %v590
        %v1205 = vunpack.c.l.b16 %v591
        %v1206 = vunpack.c.h.b16 %v591
        %v1207 = vunpack.c.l.b16 %v592
        %v1208 = vunpack.c.h.b16 %v592
        %v1209 = vunpack.c.l.b16 %v593
        %v1210 = vunpack.c.h.b16 %v593
        %v1211 = vunpack.c.l.b16 %v594
        %v1212 = vunpack.c.h.b16 %v594
        %v1213 = vunpack.c.l.b16 %v595
        %v1214 = vunpack.c.h.b16 %v595
        %v1215 = vunpack.c.l.b16 %v596
        %v1216 = vunpack.c.h.b16 %v596
        %v1217 = vunpack.c.l.b16 %v597
        %v1218 = vunpack.c.h.b16 %v597
        %v1219 = vunpack.c.l.b16 %v598
        %v1220 = vunpack.c.h.b16 %v598
        %v1221 = vunpack.c.l.b16 %v599
        %v1222 = vunpack.c.h.b16 %v599
        %v1223 = vunpack.c.l.b16 %v600
        %v1224 = vunpack.c.h.b16 %v600
        %v1225 = vunpack.c.l.b16 %v601
        %v1226 = vunpack.c.h.b16 %v601
        %v1227 = vunpack.c.l.b16 %v602
        %v1228 = vunpack.c.h.b16 %v602
        %v1229 = vunpack.c.l.b16 %v603
        %v1230 = vunpack.c.h.b16 %v603
        %v1231 = vunpack.c.l.b16 %v604
        %v1232 = vunpack.c.h.b16 %v604
        %v1233 = vunpack.c.l.b16 %v605
        %v1234 = vunpack.c.h.b16 %v605
        %v1235 = vunpack.c.l.b16 %v606
        %v1236 = vunpack.c.h.b16 %v606
        %v1237 = vunpack.c.l.b16 %v607
        %v1238 = vunpack.c.h.b16 %v607
        %v1239 = vunpack.c.l.b16 %v608
        %v1240 = vunpack.c.h.b16 %v608
        %v1241 = vunpack.c.l.b16 %v609
        %v1242 = vunpack.c.h.b16 %v609
        %v1243 = vunpack.c.l.b16 %v610
        %v1244 = vunpack.c.h.b16 %v610
        %v1245 = vunpack.c.l.b16 %v611
        %v1246 = vunpack.c.h.b16 %v611
        %v1247 = vunpack.c.l.b16 %v612
        %v1248 = vunpack.c.h.b16 %v612
        %v1249 = vunpack.c.l.b16 %v613
        %v1250 = vunpack.c.h.b16 %v613
        %v1251 = vunpack.c.l.b16 %v614
        %v1252 = vunpack.c.h.b16 %v614
        %v1253 = vunpack.c.l.b16 %v615
        %v1254 = vunpack.c.h.b16 %v615
        %v1255 = vunpack.c.l.b16 %v616
        %v1256 = vunpack.c.h.b16 %v616
        %v1257 = vunpack.c.l.b16 %v617
        %v1258 = vunpack.c.h.b16 %v617
        %v1259 = vunpack.c.l.b16 %v618
        %v1260 = vunpack.c.h.b16 %v618
        %v1261 = vunpack.c.l.b16 %v619
        %v1262 = vunpack.c.h.b16 %v619
        %v1263 = vunpack.c.l.b16 %v620
        %v1264 = vunpack.c.h.b16 %v620
        %v1265 = vunpack.c.l.b16 %v621
        %v1266 = vunpack.c.h.b16 %v621
        %v1267 = vunpack.c.l.b16 %v622
        %v1268 = vunpack.c.h.b16 %v622
        %v1269 = vunpack.c.l.b16 %v623
        %v1270 = vunpack.c.h.b16 %v623
        %v1271 = vunpack.c.l.b16 %v624
        %v1272 = vunpack.c.h.b16 %v624
        %v1273 = vunpack.c.l.b16 %v625
        %v1274 = vunpack.c.h.b16 %v625
        %v1275 = vunpack.c.l.b16 %v626
        %v1276 = vunpack.c.h.b16 %v626
        %v1277 = vunpack.c.l.b16 %v627
        %v1278 = vunpack.c.h.b16 %v627
        %v1279 = vunpack.c.l.b16 %v628
        %v1280 = vunpack.c.h.b16 %v628
        %v1281 = vunpack.c.l.b16 %v629
        %v1282 = vunpack.c.h.b16 %v629
        %v1283 = vunpack.c.l.b16 %v630
        %v1284 = vunpack.c.h.b16 %v630
        %v1285 = vunpack.c.l.b16 %v631
        %v1286 = vunpack.c.h.b16 %v631
        %v1287 = vunpack.c.l.b16 %v632
        %v1288 = vunpack.c.h.b16 %v632
        %v1289 = vunpack.c.l.b16 %v633
        %v1290 = vunpack.c.h.b16 %v633
        %v1291 = vunpack.c.l.b16 %v634
        %v1292 = vunpack.c.h.b16 %v634
        %v1293 = vunpack.c.l.b16 %v635
        %v1294 = vunpack.c.h.b16 %v635
        %v1295 = vunpack.c.l.b16 %v636
        %v1296 = vunpack.c.h.b16 %v636
        %v1297 = vunpack.c.l.b16 %v637
        %v1298 = vunpack.c.h.b16 %v637
        %v1299 = vunpack.c.l.b16 %v638
        %v1300 = vunpack.c.h.b16 %v638
        %v1301 = vunpack.c.l.b16 %v639
        %v1302 = vunpack.c.h.b16 %v639
        %v1303 = vunpack.c.l.b16 %v640
        %v1304 = vunpack.c.h.b16 %v640
        %v1305 = vunpack.c.l.b16 %v641
        %v1306 = vunpack.c.h.b16 %v641
        %v1307 = vunpack.c.l.b16 %v642
        %v1308 = vunpack.c.h.b16 %v642
        %v1309 = vunpack.c.l.b16 %v643
        %v1310 = vunpack.c.h.b16 %v643
        %v1311 = vunpack.c.l.b16 %v644
        %v1312 = vunpack.c.h.b16 %v644
        %v1313 = vunpack.c.l.b16 %v645
        %v1314 = vunpack.c.h.b16 %v645
        %v1315 = vunpack.c.l.b16 %v646
        %v1316 = vunpack.c.h.b16 %v646
        %v1317 = vunpack.c.l.b16 %v647
        %v1318 = vunpack.c.h.b16 %v647
        %v1319 = vunpack.c.l.b16 %v648
        %v1320 = vunpack.c.h.b16 %v648
        %v1321 = vunpack.c.l.b16 %v649
        %v1322 = vunpack.c.h.b16 %v649
        %v1323 = vunpack.c.l.b16 %v650
        %v1324 = vunpack.c.h.b16 %v650
        %v1325 = vunpack.c.l.b16 %v651
        %v1326 = vunpack.c.h.b16 %v651
        %v1327 = vunpack.c.l.b16 %v652
        %v1328 = vunpack.c.h.b16 %v652
        %v1329 = vunpack.c.l.b16 %v653
        %v1330 = vunpack.c.h.b16 %v653
        %v1331 = vunpack.c.l.b16 %v654
        %v1332 = vunpack.c.h.b16 %v654
        %v1333 = vunpack.c.l.b16 %v655
        %v1334 = vunpack.c.h.b16 %v655
        %v1335 = vunpack.c.l.b16 %v656
        %v1336 = vunpack.c.h.b16 %v656
        %v1337 = vunpack.c.l.b16 %v657
        %v1338 = vunpack.c.h.b16 %v657
        %v1339 = vunpack.c.l.b16 %v658
        %v1340 = vunpack.c.h.b16 %v658
        %v1341 = vunpack.c.l.b16 %v659
        %v1342 = vunpack.c.h.b16 %v659
        %v1343 = vunpack.c.l.b16 %v660
        %v1344 = vunpack.c.h.b16 %v660
        %v1345 = vunpack.c.l.b16 %v661
        %v1346 = vunpack.c.h.b16 %v661
        %v1347 = vunpack.c.l.b16 %v662
        %v1348 = vunpack.c.h.b16 %v662
        %v1349 = vunpack.c.l.b16 %v663
        %v1350 = vunpack.c.h.b16 %v663
        %v1351 = vunpack.c.l.b16 %v664
        %v1352 = vunpack.c.h.b16 %v664
        %v1353 = vunpack.c.l.b16 %v665
        %v1354 = vunpack.c.h.b16 %v665
        %v1355 = vunpack.c.l.b16 %v666
        %v1356 = vunpack.c.h.b16 %v666
        %v1357 = vunpack.c.l.b16 %v667
        %v1358 = vunpack.c.h.b16 %v667
        %v1359 = vunpack.c.l.b16 %v668
        %v1360 = vunpack.c.h.b16 %v668
        %v1361 = vunpack.c.l.b16 %v669
        %v1362 = vunpack.c.h.b16 %v669
        %v1363 = vunpack.c.l.b16 %v670
        %v1364 = vunpack.c.h.b16 %v670
        %v1365 = vunpack.c.l.b16 %v671
        %v1366 = vunpack.c.h.b16 %v671
        %v1367 = vunpack.c.l.b16 %v672
        %v1368 = vunpack.c.h.b16 %v672
        %v1369 = vunpack.c.l.b16 %v673
        %v1370 = vunpack.c.h.b16 %v673
        %v1371 = vunpack.c.l.b16 %v674
        %v1372 = vunpack.c.h.b16 %v674
        %v1373 = vunpack.c.l.b16 %v675
        %v1374 = vunpack.c.h.b16 %v675
        %v1375 = vunpack.c.l.b16 %v676
        %v1376 = vunpack.c.h.b16 %v676
        %v1377 = vunpack.c.l.b16 %v677
        %v1378 = vunpack.c.h.b16 %v677
        %v1379 = vunpack.c.l.b16 %v678
        %v1380 = vunpack.c.h.b16 %v678
        %v1381 = vunpack.c.l.b16 %v679
        %v1382 = vunpack.c.h.b16 %v679
        %v1383 = vunpack.c.l.b16 %v680
        %v1384 = vunpack.c.h.b16 %v680
        %v1385 = vunpack.c.l.b16 %v681
        %v1386 = vunpack.c.h.b16 %v681
        %v1387 = vunpack.c.l.b16 %v682
        %v1388 = vunpack.c.h.b16 %v682
        %v1389 = vunpack.c.l.b16 %v683
        %v1390 = vunpack.c.h.b16 %v683
        %v1391 = vunpack.c.l.b16 %v684
        %v1392 = vunpack.c.h.b16 %v684
        %v1393 = vunpack.c.l.b16 %v685
        %v1394 = vunpack.c.h.b16 %v685
        %v1395 = vunpack.c.l.b16 %v686
        %v1396 = vunpack.c.h.b16 %v686
        %v1397 = vunpack.c.l.b16 %v687
        %v1398 = vunpack.c.h.b16 %v687
        %v1399 = vunpack.c.l.b16 %v688
        %v1400 = vunpack.c.h.b16 %v688
        %v1401 = vunpack.c.l.b16 %v689
        %v1402 = vunpack.c.h.b16 %v689
        %v1403 = vunpack.c.l.b16 %v690
        %v1404 = vunpack.c.h.b16 %v690
        %v1405 = vunpack.c.l.b16 %v691
        %v1406 = vunpack.c.h.b16 %v691
        %v1407 = vunpack.c.l.b16 %v692
        %v1408 = vunpack.c.h.b16 %v692
        %v1409 = vunpack.c.l.b16 %v693
        %v1410 = vunpack.c.h.b16 %v693
        %v1411 = vunpack.c.l.b16 %v694
        %v1412 = vunpack.c.h.b16 %v694
        %v1413 = vunpack.c.l.b16 %v695
        %v1414 = vunpack.c.h.b16 %v695
        %v1415 = vunpack.c.l.b16 %v696
        %v1416 = vunpack.c.h.b16 %v696
        %v1417 = vunpack.c.l.b16 %v697
        %v1418 = vunpack.c.h.b16 %v697
        %v1419 = vpack.c.b16 %v1197, %v1195
        %v1420 = vpack.c.b16 %v1198, %v1196
        %v1421 = vpack.c.b16 %v1201, %v1199
        %v1422 = vpack.c.b16 %v1202, %v1200
        %v1423 = vpack.c.b16 %v1205, %v1203
        %v1424 = vpack.c.b16 %v1206, %v1204
        %v1425 = vpack.c.b16 %v1209, %v1207
        %v1426 = vpack.c.b16 %v1210, %v1208
        %v1427 = vpack.c.b16 %v1213, %v1211
        %v1428 = vpack.c.b16 %v1214, %v1212
        %v1429 = vpack.c.b16 %v1217, %v1215
        %v1430 = vpack.c.b16 %v1218, %v1216
        %v1431 = vpack.c.b16 %v1221, %v1219
        %v1432 = vpack.c.b16 %v1222, %v1220
        %v1433 = vpack.c.b16 %v1225, %v1223
        %v1434 = vpack.c.b16 %v1226, %v1224
        %v1435 = vpack.c.b16 %v1229, %v1227
        %v1436 = vpack.c.b16 %v1230, %v1228
        %v1437 = vpack.c.b16 %v1233, %v1231
        %v1438 = vpack.c.b16 %v1234, %v1232
        %v1439 = vpack.c.b16 %v1237, %v1235
        %v1440 = vpack.c.b16 %v1238, %v1236
        %v1441 = vpack.c.b16 %v1241, %v1239
        %v1442 = vpack.c.b16 %v1242, %v1240
        %v1443 = vpack.c.b16 %v1245, %v1243
        %v1444 = vpack.c.b16 %v1246, %v1244
        %v1445 = vpack.c.b16 %v1249, %v1247
        %v1446 = vpack.c.b16 %v1250, %v1248
        %v1447 = vpack.c.b16 %v1253, %v1251
        %v1448 = vpack.c.b16 %v1254, %v1252
        %v1449 = vpack.c.b16 %v1257, %v1255
        %v1450 = vpack.c.b16 %v1258, %v1256
        %v1451 = vpack.c.b16 %v1261, %v1259
        %v1452 = vpack.c.b16 %v1262, %v1260
        %v1453 = vpack.c.b16 %v1265, %v1263
        %v1454 = vpack.c.b16 %v1266, %v1264
        %v1455 = vpack.c.b16 %v1269, %v1267
        %v1456 = vpack.c.b16 %v1270, %v1268
        %v1457 = vpack.c.b16 %v1273, %v1271
        %v1458 = vpack.c.b16 %v1274, %v1272
        %v1459 = vpack.c.b16 %v1277, %v1275
        %v1460 = vpack.c.b16 %v1278, %v1276
        %v1461 = vpack.c.b16 %v1281, %v1279
        %v1462 = vpack.c.b16 %v1282, %v1280
        %v1463 = vpack.c.b16 %v1285, %v1283
        %v1464 = vpack.c.b16 %v1286, %v1284
        %v1465 = vpack.c.b16 %v1289, %v1287
        %v1466 = vpack.c.b16 %v1290, %v1288
        %v1467 = vpack.c.b16 %v1293, %v1291
        %v1468 = vpack.c.b16 %v1294, %v1292
        %v1469 = vpack.c.b16 %v1297, %v1295
        %v1470 = vpack.c.b16 %v1298, %v1296
        %v1471 = vpack.c.b16 %v1301, %v1299
        %v1472 = vpack.c.b16 %v1302, %v1300
        %v1473 = vpack.c.b16 %v1305, %v1303
        %v1474 = vpack.c.b16 %v1306, %v1304
        %v1475 = vpack.c.b16 %v1309, %v1307
        %v1476 = vpack.c.b16 %v1310, %v1308
        %v1477 = vpack.c.b16 %v1313, %v1311
        %v1478 = vpack.c.b16 %v1314, %v1312
        %v1479 = vpack.c.b16 %v1317, %v1315
        %v1480 = vpack.c.b16 %v1318, %v1316
        %v1481 = vpack.c.b16 %v1321, %v1319
        %v1482 = vpack.c.b16 %v1322, %v1320
        %v1483 = vpack.c.b16 %v1325, %v1323
        %v1484 = vpack.c.b16 %v1326, %v1324
        %v1485 = vpack.c.b16 %v1329, %v1327
        %v1486 = vpack.c.b16 %v1330, %v1328
        %v1487 = vpack.c.b16 %v1333, %v1331
        %v1488 = vpack.c.b16 %v1334, %v1332
        %v1489 = vpack.c.b16 %v1337, %v1335
        %v1490 = vpack.c.b16 %v1338, %v1336
        %v1491 = vpack.c.b16 %v1341, %v1339
        %v1492 = vpack.c.b16 %v1342, %v1340
        %v1493 = vpack.c.b16 %v1345, %v1343
        %v1494 = vpack.c.b16 %v1346, %v1344
        %v1495 = vpack.c.b16 %v1349, %v1347
        %v1496 = vpack.c.b16 %v1350, %v1348
        %v1497 = vpack.c.b16 %v1353, %v1351
        %v1498 = vpack.c.b16 %v1354, %v1352
        %v1499 = vpack.c.b16 %v1357, %v1355
        %v1500 = vpack.c.b16 %v1358, %v1356
        %v1501 = vpack.c.b16 %v1361, %v1359
        %v1502 = vpack.c.b16 %v1362, %v1360
        %v1503 = vpack.c.b16 %v1365, %v1363
        %v1504 = vpack.c.b16 %v1366, %v1364
        %v1505 = vpack.c.b16 %v1369, %v1367
        %v1506 = vpack.c.b16 %v1370, %v1368
        %v1507 = vpack.c.b16 %v1373, %v1371
        %v1508 = vpack.c.b16 %v1374, %v1372
        %v1509 = vpack.c.b16 %v1377, %v1375
        %v1510 = vpack.c.b16 %v1378, %v1376
        %v1511 = vpack.c.b16 %v1381, %v1379
        %v1512 = vpack.c.b16 %v1382, %v1380
        %v1513 = vpack.c.b16 %v1385, %v1383
        %v1514 = vpack.c.b16 %v1386, %v1384
        %v1515 = vpack.c.b16 %v1389, %v1387
        %v1516 = vpack.c.b16 %v1390, %v1388
        %v1517 = vpack.c.b16 %v1393, %v1391
        %v1518 = vpack.c.b16 %v1394, %v1392
        %v1519 = vpack.c.b16 %v1397, %v1395
        %v1520 = vpack.c.b16 %v1398, %v1396
        %v1521 = vpack.c.b16 %v1401, %v1399
        %v1522 = vpack.c.b16 %v1402, %v1400
        %v1523 = vpack.c.b16 %v1405, %v1403
        %v1524 = vpack.c.b16 %v1406, %v1404
        %v1525 = vpack.c.b16 %v1409, %v1407
        %v1526 = vpack.c.b16 %v1410, %v1408
        %v1527 = vpack.c.b16 %v1413, %v1411
        %v1528 = vpack.c.b16 %v1414, %v1412
        %v1529 = vpack.c.b16 %v1417, %v1415
        %v1530 = vpack.c.b16 %v1418, %v1416
        %1643 = vmatprep.subr.bf16.mxu0 %v1420
        %1644 = vmatpush1.bf16.msra.mxu0 %v1419
        %1645 = vmatprep.subr.bf16.mxu0 %v1422
        %1646 = vmatpush1.bf16.msra.mxu0 %v1421
        %1647 = vmatprep.subr.bf16.mxu0 %v1424
        %1648 = vmatpush1.bf16.msra.mxu0 %v1423
        %1649 = vmatprep.subr.bf16.mxu0 %v1426
        %1650 = vmatpush1.bf16.msra.mxu0 %v1425
        %1651 = vmatprep.subr.bf16.mxu0 %v1428
        %1652 = vmatpush1.bf16.msra.mxu0 %v1427
        %1653 = vmatprep.subr.bf16.mxu0 %v1430
        %1654 = vmatpush1.bf16.msra.mxu0 %v1429
        %1655 = vmatprep.subr.bf16.mxu0 %v1432
        %1656 = vmatpush1.bf16.msra.mxu0 %v1431
        %1657 = vmatprep.subr.bf16.mxu0 %v1434
        %1658 = vmatpush1.bf16.msra.mxu0 %v1433
        %1659 = vmatprep.subr.bf16.mxu0 %v1436
        %1660 = vmatpush1.bf16.msra.mxu0 %v1435
        %1661 = vmatprep.subr.bf16.mxu0 %v1438
        %1662 = vmatpush1.bf16.msra.mxu0 %v1437
        %1663 = vmatprep.subr.bf16.mxu0 %v1440
        %1664 = vmatpush1.bf16.msra.mxu0 %v1439
        %1665 = vmatprep.subr.bf16.mxu0 %v1442
        %1666 = vmatpush1.bf16.msra.mxu0 %v1441
        %1667 = vmatprep.subr.bf16.mxu0 %v1444
        %1668 = vmatpush1.bf16.msra.mxu0 %v1443
        %1669 = vmatprep.subr.bf16.mxu0 %v1446
        %1670 = vmatpush1.bf16.msra.mxu0 %v1445
        %1671 = vmatprep.subr.bf16.mxu0 %v1448
        %1672 = vmatpush1.bf16.msra.mxu0 %v1447
        %1673 = vmatprep.subr.bf16.mxu0 %v1450
        %1674 = vmatpush1.bf16.msra.mxu0 %v1449
        %1675 = vmatprep.mubr.bf16.mxu0 %v930
        %1676 = vmatmul.mubr.bf16.gmra.mrb[0].mxu0 %v929
        %v1677 = vpop.f32.mrb[0].mxu0
        %v1678 = vadd.f32 0.0, %v1677
        %v1679 = vpop.f32.mrb[0].mxu0
        %v1680 = vadd.f32 0.0, %v1679
        %v1681 = vpop.f32.mrb[0].mxu0
        %v1682 = vadd.f32 0.0, %v1681
        %v1683 = vpop.f32.mrb[0].mxu0
        %v1684 = vadd.f32 0.0, %v1683
        %1685 = vmatprep.mubr.bf16.mxu0 %v937
        %1686 = vmatmul.mubr.bf16.gmra.mrb[0].mxu0 %v936
        %v1687 = vpop.f32.mrb[0].mxu0
        %v1688 = vadd.f32 0.0, %v1687
        %v1689 = vpop.f32.mrb[0].mxu0
        %v1690 = vadd.f32 0.0, %v1689
        %v1691 = vpop.f32.mrb[0].mxu0
        %v1692 = vadd.f32 0.0, %v1691
        %v1693 = vpop.f32.mrb[0].mxu0
        %v1694 = vadd.f32 0.0, %v1693
        %1695 = vmatprep.mubr.bf16.mxu0 %v944
        %1696 = vmatmul.mubr.bf16.gmra.mrb[0].mxu0 %v943
        %v1697 = vpop.f32.mrb[0].mxu0
        %v1698 = vadd.f32 0.0, %v1697
        %v1699 = vpop.f32.mrb[0].mxu0
        %v1700 = vadd.f32 0.0, %v1699
        %v1701 = vpop.f32.mrb[0].mxu0
        %v1702 = vadd.f32 0.0, %v1701
        %v1703 = vpop.f32.mrb[0].mxu0
        %v1704 = vadd.f32 0.0, %v1703
        %1705 = vmatprep.mubr.bf16.mxu0 %v951
        %1706 = vmatmul.mubr.bf16.gmra.mrb[0].mxu0 %v950
        %v1707 = vpop.f32.mrb[0].mxu0
        %v1708 = vadd.f32 0.0, %v1707
        %v1709 = vpop.f32.mrb[0].mxu0
        %v1710 = vadd.f32 0.0, %v1709
        %v1711 = vpop.f32.mrb[0].mxu0
        %v1712 = vadd.f32 0.0, %v1711
        %v1713 = vpop.f32.mrb[0].mxu0
        %v1714 = vadd.f32 0.0, %v1713
        %1715 = vmatprep.mubr.bf16.mxu0 %v958
        %1716 = vmatmul.mubr.bf16.gmra.mrb[0].mxu0 %v957
        %v1717 = vpop.f32.mrb[0].mxu0
        %v1718 = vadd.f32 0.0, %v1717
        %v1719 = vpop.f32.mrb[0].mxu0
        %v1720 = vadd.f32 0.0, %v1719
        %v1721 = vpop.f32.mrb[0].mxu0
        %v1722 = vadd.f32 0.0, %v1721
        %v1723 = vpop.f32.mrb[0].mxu0
        %v1724 = vadd.f32 0.0, %v1723
        %1725 = vmatprep.mubr.bf16.mxu0 %v965
        %1726 = vmatmul.mubr.bf16.gmra.mrb[0].mxu0 %v964
        %v1727 = vpop.f32.mrb[0].mxu0
        %v1728 = vadd.f32 0.0, %v1727
        %v1729 = vpop.f32.mrb[0].mxu0
        %v1730 = vadd.f32 0.0, %v1729
        %v1731 = vpop.f32.mrb[0].mxu0
        %v1732 = vadd.f32 0.0, %v1731
        %v1733 = vpop.f32.mrb[0].mxu0
        %v1734 = vadd.f32 0.0, %v1733
        %1735 = vmatprep.mubr.bf16.mxu0 %v972
        %1736 = vmatmul.mubr.bf16.gmra.mrb[0].mxu0 %v971
        %v1737 = vpop.f32.mrb[0].mxu0
        %v1738 = vadd.f32 0.0, %v1737
        %v1739 = vpop.f32.mrb[0].mxu0
        %v1740 = vadd.f32 0.0, %v1739
        %v1741 = vpop.f32.mrb[0].mxu0
        %v1742 = vadd.f32 0.0, %v1741
        %v1743 = vpop.f32.mrb[0].mxu0
        %v1744 = vadd.f32 0.0, %v1743
        %1745 = vmatprep.mubr.bf16.mxu0 %v979
        %1746 = vmatmul.mubr.bf16.gmra.mrb[0].mxu0 %v978
        %v1747 = vpop.f32.mrb[0].mxu0
        %v1748 = vadd.f32 0.0, %v1747
        %v1749 = vpop.f32.mrb[0].mxu0
        %v1750 = vadd.f32 0.0, %v1749
        %v1751 = vpop.f32.mrb[0].mxu0
        %v1752 = vadd.f32 0.0, %v1751
        %v1753 = vpop.f32.mrb[0].mxu0
        %v1754 = vadd.f32 0.0, %v1753
        %1755 = vmatprep.mubr.bf16.mxu0 %v986
        %1756 = vmatmul.mubr.bf16.gmra.mrb[0].mxu0 %v985
        %v1757 = vpop.f32.mrb[0].mxu0
        %v1758 = vadd.f32 0.0, %v1757
        %v1759 = vpop.f32.mrb[0].mxu0
        %v1760 = vadd.f32 0.0, %v1759
        %v1761 = vpop.f32.mrb[0].mxu0
        %v1762 = vadd.f32 0.0, %v1761
        %v1763 = vpop.f32.mrb[0].mxu0
        %v1764 = vadd.f32 0.0, %v1763
        %1765 = vmatprep.mubr.bf16.mxu0 %v993
        %1766 = vmatmul.mubr.bf16.gmra.mrb[0].mxu0 %v992
        %v1767 = vpop.f32.mrb[0].mxu0
        %v1768 = vadd.f32 0.0, %v1767
        %v1769 = vpop.f32.mrb[0].mxu0
        %v1770 = vadd.f32 0.0, %v1769
        %v1771 = vpop.f32.mrb[0].mxu0
        %v1772 = vadd.f32 0.0, %v1771
        %v1773 = vpop.f32.mrb[0].mxu0
        %v1774 = vadd.f32 0.0, %v1773
        %1775 = vmatprep.mubr.bf16.mxu0 %v1000
        %1776 = vmatmul.mubr.bf16.gmra.mrb[0].mxu0 %v999
        %v1777 = vpop.f32.mrb[0].mxu0
        %v1778 = vadd.f32 0.0, %v1777
        %v1779 = vpop.f32.mrb[0].mxu0
        %v1780 = vadd.f32 0.0, %v1779
        %v1781 = vpop.f32.mrb[0].mxu0
        %v1782 = vpop.f32.mrb[0].mxu0
        %1783 = vdwg.mxu0
        %1784 = vmatprep.subr.bf16.mxu0 %v1452
        %1785 = vmatpush1.bf16.msra.mxu0 %v1451
        %1786 = vmatprep.subr.bf16.mxu0 %v1454
        %1787 = vmatpush1.bf16.msra.mxu0 %v1453
        %1788 = vmatprep.subr.bf16.mxu0 %v1456
        %1789 = vmatpush1.bf16.msra.mxu0 %v1455
        %1790 = vmatprep.subr.bf16.mxu0 %v1458
        %1791 = vmatpush1.bf16.msra.mxu0 %v1457
        %1792 = vmatprep.subr.bf16.mxu0 %v1460
        %1793 = vmatpush1.bf16.msra.mxu0 %v1459
        %1794 = vmatprep.subr.bf16.mxu0 %v1462
        %1795 = vmatpush1.bf16.msra.mxu0 %v1461
        %1796 = vmatprep.subr.bf16.mxu0 %v1464
        %1797 = vmatpush1.bf16.msra.mxu0 %v1463
        %1798 = vmatprep.subr.bf16.mxu0 %v1466
        %1799 = vmatpush1.bf16.msra.mxu0 %v1465
        %1800 = vmatprep.subr.bf16.mxu0 %v1468
        %1801 = vmatpush1.bf16.msra.mxu0 %v1467
        %1802 = vmatprep.subr.bf16.mxu0 %v1470
        %1803 = vmatpush1.bf16.msra.mxu0 %v1469
        %1804 = vmatprep.subr.bf16.mxu0 %v1472
        %1805 = vmatpush1.bf16.msra.mxu0 %v1471
        %1806 = vmatprep.subr.bf16.mxu0 %v1474
        %1807 = vmatpush1.bf16.msra.mxu0 %v1473
        %1808 = vmatprep.subr.bf16.mxu0 %v1476
        %1809 = vmatpush1.bf16.msra.mxu0 %v1475
        %1810 = vmatprep.subr.bf16.mxu0 %v1478
        %1811 = vmatpush1.bf16.msra.mxu0 %v1477
        %1812 = vmatprep.subr.bf16.mxu0 %v1480
        %1813 = vmatpush1.bf16.msra.mxu0 %v1479
        %1814 = vmatprep.subr.bf16.mxu0 %v1482
        %1815 = vmatpush1.bf16.msra.mxu0 %v1481
        %1816 = vmatprep.mubr.bf16.mxu0 %v932
        %1817 = vmatmul.mubr.bf16.gmra.mrb[0].mxu0 %v931
        %v1818 = vpop.f32.mrb[0].mxu0
        %v1819 = vadd.f32 %v1678, %v1818
        %v1820 = vpop.f32.mrb[0].mxu0
        %v1821 = vadd.f32 %v1680, %v1820
        %v1822 = vpop.f32.mrb[0].mxu0
        %v1823 = vadd.f32 %v1682, %v1822
        %v1824 = vpop.f32.mrb[0].mxu0
        %v1825 = vadd.f32 %v1684, %v1824
        %1826 = vmatprep.mubr.bf16.mxu0 %v939
        %1827 = vmatmul.mubr.bf16.gmra.mrb[0].mxu0 %v938
        %v1828 = vpop.f32.mrb[0].mxu0
        %v1829 = vadd.f32 %v1688, %v1828
        %v1830 = vpop.f32.mrb[0].mxu0
        %v1831 = vadd.f32 %v1690, %v1830
        %v1832 = vpop.f32.mrb[0].mxu0
        %v1833 = vadd.f32 %v1692, %v1832
        %v1834 = vpop.f32.mrb[0].mxu0
        %v1835 = vadd.f32 %v1694, %v1834
        %1836 = vmatprep.mubr.bf16.mxu0 %v946
        %1837 = vmatmul.mubr.bf16.gmra.mrb[0].mxu0 %v945
        %v1838 = vpop.f32.mrb[0].mxu0
        %v1839 = vadd.f32 %v1698, %v1838
        %v1840 = vpop.f32.mrb[0].mxu0
        %v1841 = vadd.f32 %v1700, %v1840
        %v1842 = vpop.f32.mrb[0].mxu0
        %v1843 = vadd.f32 %v1702, %v1842
        %v1844 = vpop.f32.mrb[0].mxu0
        %v1845 = vadd.f32 %v1704, %v1844
        %1846 = vmatprep.mubr.bf16.mxu0 %v953
        %1847 = vmatmul.mubr.bf16.gmra.mrb[0].mxu0 %v952
        %v1848 = vpop.f32.mrb[0].mxu0
        %v1849 = vadd.f32 %v1708, %v1848
        %v1850 = vpop.f32.mrb[0].mxu0
        %v1851 = vadd.f32 %v1710, %v1850
        %v1852 = vpop.f32.mrb[0].mxu0
        %v1853 = vadd.f32 %v1712, %v1852
        %v1854 = vpop.f32.mrb[0].mxu0
        %v1855 = vadd.f32 %v1714, %v1854
        %1856 = vmatprep.mubr.bf16.mxu0 %v960
        %1857 = vmatmul.mubr.bf16.gmra.mrb[0].mxu0 %v959
        %v1858 = vpop.f32.mrb[0].mxu0
        %v1859 = vadd.f32 %v1718, %v1858
        %v1860 = vpop.f32.mrb[0].mxu0
        %v1861 = vadd.f32 %v1720, %v1860
        %v1862 = vpop.f32.mrb[0].mxu0
        %v1863 = vadd.f32 %v1722, %v1862
        %v1864 = vpop.f32.mrb[0].mxu0
        %v1865 = vadd.f32 %v1724, %v1864
        %1866 = vmatprep.mubr.bf16.mxu0 %v967
        %1867 = vmatmul.mubr.bf16.gmra.mrb[0].mxu0 %v966
        %v1868 = vpop.f32.mrb[0].mxu0
        %v1869 = vadd.f32 %v1728, %v1868
        %v1870 = vpop.f32.mrb[0].mxu0
        %v1871 = vadd.f32 %v1730, %v1870
        %v1872 = vpop.f32.mrb[0].mxu0
        %v1873 = vadd.f32 %v1732, %v1872
        %v1874 = vpop.f32.mrb[0].mxu0
        %v1875 = vadd.f32 %v1734, %v1874
        %1876 = vmatprep.mubr.bf16.mxu0 %v974
        %1877 = vmatmul.mubr.bf16.gmra.mrb[0].mxu0 %v973
        %v1878 = vpop.f32.mrb[0].mxu0
        %v1879 = vadd.f32 %v1738, %v1878
        %v1880 = vpop.f32.mrb[0].mxu0
        %v1881 = vadd.f32 %v1740, %v1880
        %v1882 = vpop.f32.mrb[0].mxu0
        %v1883 = vadd.f32 %v1742, %v1882
        %v1884 = vpop.f32.mrb[0].mxu0
        %v1885 = vadd.f32 %v1744, %v1884
        %1886 = vmatprep.mubr.bf16.mxu0 %v981
        %1887 = vmatmul.mubr.bf16.gmra.mrb[0].mxu0 %v980
        %v1888 = vpop.f32.mrb[0].mxu0
        %v1889 = vadd.f32 %v1748, %v1888
        %v1890 = vpop.f32.mrb[0].mxu0
        %v1891 = vadd.f32 %v1750, %v1890
        %v1892 = vpop.f32.mrb[0].mxu0
        %v1893 = vadd.f32 %v1752, %v1892
        %v1894 = vpop.f32.mrb[0].mxu0
        %v1895 = vadd.f32 %v1754, %v1894
        %1896 = vmatprep.mubr.bf16.mxu0 %v988
        %1897 = vmatmul.mubr.bf16.gmra.mrb[0].mxu0 %v987
        %v1898 = vpop.f32.mrb[0].mxu0
        %v1899 = vadd.f32 %v1758, %v1898
        %v1900 = vpop.f32.mrb[0].mxu0
        %v1901 = vadd.f32 %v1760, %v1900
        %v1902 = vpop.f32.mrb[0].mxu0
        %v1903 = vadd.f32 %v1762, %v1902
        %v1904 = vpop.f32.mrb[0].mxu0
        %v1905 = vadd.f32 %v1764, %v1904
        %1906 = vmatprep.mubr.bf16.mxu0 %v995
        %1907 = vmatmul.mubr.bf16.gmra.mrb[0].mxu0 %v994
        %v1908 = vpop.f32.mrb[0].mxu0
        %v1909 = vadd.f32 %v1768, %v1908
        %v1910 = vpop.f32.mrb[0].mxu0
        %v1911 = vadd.f32 %v1770, %v1910
        %v1912 = vpop.f32.mrb[0].mxu0
        %v1913 = vadd.f32 %v1772, %v1912
        %v1914 = vpop.f32.mrb[0].mxu0
        %v1915 = vadd.f32 %v1774, %v1914
        %1916 = vmatprep.mubr.bf16.mxu0 %v1002
        %1917 = vmatmul.mubr.bf16.gmra.mrb[0].mxu0 %v1001
        %v1918 = vpop.f32.mrb[0].mxu0
        %v1919 = vadd.f32 %v1778, %v1918
        %v1920 = vpop.f32.mrb[0].mxu0
        %v1921 = vadd.f32 %v1780, %v1920
        %v1922 = vpop.f32.mrb[0].mxu0
        %v1923 = vpop.f32.mrb[0].mxu0
        %1924 = vdwg.mxu0
        %1925 = vmatprep.subr.bf16.mxu0 %v1484
        %1926 = vmatpush1.bf16.msra.mxu0 %v1483
        %1927 = vmatprep.subr.bf16.mxu0 %v1486
        %1928 = vmatpush1.bf16.msra.mxu0 %v1485
        %1929 = vmatprep.subr.bf16.mxu0 %v1488
        %1930 = vmatpush1.bf16.msra.mxu0 %v1487
        %1931 = vmatprep.subr.bf16.mxu0 %v1490
        %1932 = vmatpush1.bf16.msra.mxu0 %v1489
        %1933 = vmatprep.subr.bf16.mxu0 %v1492
        %1934 = vmatpush1.bf16.msra.mxu0 %v1491
        %1935 = vmatprep.subr.bf16.mxu0 %v1494
        %1936 = vmatpush1.bf16.msra.mxu0 %v1493
        %1937 = vmatprep.subr.bf16.mxu0 %v1496
        %1938 = vmatpush1.bf16.msra.mxu0 %v1495
        %1939 = vmatprep.subr.bf16.mxu0 %v1498
        %1940 = vmatpush1.bf16.msra.mxu0 %v1497
        %1941 = vmatprep.subr.bf16.mxu0 %v1500
        %1942 = vmatpush1.bf16.msra.mxu0 %v1499
        %1943 = vmatprep.subr.bf16.mxu0 %v1502
        %1944 = vmatpush1.bf16.msra.mxu0 %v1501
        %1945 = vmatprep.subr.bf16.mxu0 %v1504
        %1946 = vmatpush1.bf16.msra.mxu0 %v1503
        %1947 = vmatprep.subr.bf16.mxu0 %v1506
        %1948 = vmatpush1.bf16.msra.mxu0 %v1505
        %1949 = vmatprep.subr.bf16.mxu0 %v1508
        %1950 = vmatpush1.bf16.msra.mxu0 %v1507
        %1951 = vmatprep.subr.bf16.mxu0 %v1510
        %1952 = vmatpush1.bf16.msra.mxu0 %v1509
        %1953 = vmatprep.subr.bf16.mxu0 %v1512
        %1954 = vmatpush1.bf16.msra.mxu0 %v1511
        %1955 = vmatprep.subr.bf16.mxu0 %v1514
        %1956 = vmatpush1.bf16.msra.mxu0 %v1513
        %1957 = vmatprep.mubr.bf16.mxu0 %v934
        %1958 = vmatmul.mubr.bf16.gmra.mrb[0].mxu0 %v933
        %v1959 = vpop.f32.mrb[0].mxu0
        %v1960 = vadd.f32 %v1819, %v1959
        %v1961 = vpop.f32.mrb[0].mxu0
        %v1962 = vadd.f32 %v1821, %v1961
        %v1963 = vpop.f32.mrb[0].mxu0
        %v1964 = vadd.f32 %v1823, %v1963
        %v1965 = vpop.f32.mrb[0].mxu0
        %v1966 = vadd.f32 %v1825, %v1965
        %1967 = vmatprep.mubr.bf16.mxu0 %v941
        %1968 = vmatmul.mubr.bf16.gmra.mrb[0].mxu0 %v940
        %v1969 = vpop.f32.mrb[0].mxu0
        %v1970 = vadd.f32 %v1829, %v1969
        %v1971 = vpop.f32.mrb[0].mxu0
        %v1972 = vadd.f32 %v1831, %v1971
        %v1973 = vpop.f32.mrb[0].mxu0
        %v1974 = vadd.f32 %v1833, %v1973
        %v1975 = vpop.f32.mrb[0].mxu0
        %v1976 = vadd.f32 %v1835, %v1975
        %1977 = vmatprep.mubr.bf16.mxu0 %v948
        %1978 = vmatmul.mubr.bf16.gmra.mrb[0].mxu0 %v947
        %v1979 = vpop.f32.mrb[0].mxu0
        %v1980 = vadd.f32 %v1839, %v1979
        %v1981 = vpop.f32.mrb[0].mxu0
        %v1982 = vadd.f32 %v1841, %v1981
        %v1983 = vpop.f32.mrb[0].mxu0
        %v1984 = vadd.f32 %v1843, %v1983
        %v1985 = vpop.f32.mrb[0].mxu0
        %v1986 = vadd.f32 %v1845, %v1985
        %1987 = vmatprep.mubr.bf16.mxu0 %v955
        %1988 = vmatmul.mubr.bf16.gmra.mrb[0].mxu0 %v954
        %v1989 = vpop.f32.mrb[0].mxu0
        %v1990 = vadd.f32 %v1849, %v1989
        %v1991 = vpop.f32.mrb[0].mxu0
        %v1992 = vadd.f32 %v1851, %v1991
        %v1993 = vpop.f32.mrb[0].mxu0
        %v1994 = vadd.f32 %v1853, %v1993
        %v1995 = vpop.f32.mrb[0].mxu0
        %v1996 = vadd.f32 %v1855, %v1995
        %1997 = vmatprep.mubr.bf16.mxu0 %v962
        %1998 = vmatmul.mubr.bf16.gmra.mrb[0].mxu0 %v961
        %v1999 = vpop.f32.mrb[0].mxu0
        %v2000 = vadd.f32 %v1859, %v1999
        %v2001 = vpop.f32.mrb[0].mxu0
        %v2002 = vadd.f32 %v1861, %v2001
        %v2003 = vpop.f32.mrb[0].mxu0
        %v2004 = vadd.f32 %v1863, %v2003
        %v2005 = vpop.f32.mrb[0].mxu0
        %v2006 = vadd.f32 %v1865, %v2005
        %2007 = vmatprep.mubr.bf16.mxu0 %v969
        %2008 = vmatmul.mubr.bf16.gmra.mrb[0].mxu0 %v968
        %v2009 = vpop.f32.mrb[0].mxu0
        %v2010 = vadd.f32 %v1869, %v2009
        %v2011 = vpop.f32.mrb[0].mxu0
        %v2012 = vadd.f32 %v1871, %v2011
        %v2013 = vpop.f32.mrb[0].mxu0
        %v2014 = vadd.f32 %v1873, %v2013
        %v2015 = vpop.f32.mrb[0].mxu0
        %v2016 = vadd.f32 %v1875, %v2015
        %2017 = vmatprep.mubr.bf16.mxu0 %v976
        %2018 = vmatmul.mubr.bf16.gmra.mrb[0].mxu0 %v975
        %v2019 = vpop.f32.mrb[0].mxu0
        %v2020 = vadd.f32 %v1879, %v2019
        %v2021 = vpop.f32.mrb[0].mxu0
        %v2022 = vadd.f32 %v1881, %v2021
        %v2023 = vpop.f32.mrb[0].mxu0
        %v2024 = vadd.f32 %v1883, %v2023
        %v2025 = vpop.f32.mrb[0].mxu0
        %v2026 = vadd.f32 %v1885, %v2025
        %2027 = vmatprep.mubr.bf16.mxu0 %v983
        %2028 = vmatmul.mubr.bf16.gmra.mrb[0].mxu0 %v982
        %v2029 = vpop.f32.mrb[0].mxu0
        %v2030 = vadd.f32 %v1889, %v2029
        %v2031 = vpop.f32.mrb[0].mxu0
        %v2032 = vadd.f32 %v1891, %v2031
        %v2033 = vpop.f32.mrb[0].mxu0
        %v2034 = vadd.f32 %v1893, %v2033
        %v2035 = vpop.f32.mrb[0].mxu0
        %v2036 = vadd.f32 %v1895, %v2035
        %2037 = vmatprep.mubr.bf16.mxu0 %v990
        %2038 = vmatmul.mubr.bf16.gmra.mrb[0].mxu0 %v989
        %v2039 = vpop.f32.mrb[0].mxu0
        %v2040 = vadd.f32 %v1899, %v2039
        %v2041 = vpop.f32.mrb[0].mxu0
        %v2042 = vadd.f32 %v1901, %v2041
        %v2043 = vpop.f32.mrb[0].mxu0
        %v2044 = vadd.f32 %v1903, %v2043
        %v2045 = vpop.f32.mrb[0].mxu0
        %v2046 = vadd.f32 %v1905, %v2045
        %2047 = vmatprep.mubr.bf16.mxu0 %v997
        %2048 = vmatmul.mubr.bf16.gmra.mrb[0].mxu0 %v996
        %v2049 = vpop.f32.mrb[0].mxu0
        %v2050 = vadd.f32 %v1909, %v2049
        %v2051 = vpop.f32.mrb[0].mxu0
        %v2052 = vadd.f32 %v1911, %v2051
        %v2053 = vpop.f32.mrb[0].mxu0
        %v2054 = vadd.f32 %v1913, %v2053
        %v2055 = vpop.f32.mrb[0].mxu0
        %v2056 = vadd.f32 %v1915, %v2055
        %2057 = vmatprep.mubr.bf16.mxu0 %v1004
        %2058 = vmatmul.mubr.bf16.gmra.mrb[0].mxu0 %v1003
        %v2059 = vpop.f32.mrb[0].mxu0
        %v2060 = vadd.f32 %v1919, %v2059
        %v2061 = vpop.f32.mrb[0].mxu0
        %v2062 = vadd.f32 %v1921, %v2061
        %v2063 = vpop.f32.mrb[0].mxu0
        %v2064 = vpop.f32.mrb[0].mxu0
        %2065 = vdwg.mxu0
        %2066 = vmatprep.subr.bf16.mxu0 %v1516
        %2067 = vmatpush1.bf16.msra.mxu0 %v1515
        %2068 = vmatprep.subr.bf16.mxu0 %v1518
        %2069 = vmatpush1.bf16.msra.mxu0 %v1517
        %2070 = vmatprep.subr.bf16.mxu0 %v1520
        %2071 = vmatpush1.bf16.msra.mxu0 %v1519
        %2072 = vmatprep.subr.bf16.mxu0 %v1522
        %2073 = vmatpush1.bf16.msra.mxu0 %v1521
        %2074 = vmatprep.subr.bf16.mxu0 %v1524
        %2075 = vmatpush1.bf16.msra.mxu0 %v1523
        %2076 = vmatprep.subr.bf16.mxu0 %v1526
        %2077 = vmatpush1.bf16.msra.mxu0 %v1525
        %2078 = vmatprep.subr.bf16.mxu0 %v1528
        %2079 = vmatpush1.bf16.msra.mxu0 %v1527
        %2080 = vmatprep.subr.bf16.mxu0 %v1530
        %2081 = vmatpush1.bf16.msra.mxu0 %v1529
        %2082 = vmatprep.subr.bf16.mxu0 0
        %2083 = vmatpush1.bf16.msra.mxu0 0
        %2084 = vmatprep.subr.bf16.mxu0 0
        %2085 = vmatpush1.bf16.msra.mxu0 0
        %2086 = vmatprep.subr.bf16.mxu0 0
        %2087 = vmatpush1.bf16.msra.mxu0 0
        %2088 = vmatprep.subr.bf16.mxu0 0
        %2089 = vmatpush1.bf16.msra.mxu0 0
        %2090 = vmatprep.subr.bf16.mxu0 0
        %2091 = vmatpush1.bf16.msra.mxu0 0
        %2092 = vmatprep.subr.bf16.mxu0 0
        %2093 = vmatpush1.bf16.msra.mxu0 0
        %2094 = vmatprep.subr.bf16.mxu0 0
        %2095 = vmatpush1.bf16.msra.mxu0 0
        %2096 = vmatprep.subr.bf16.mxu0 0
        %2097 = vmatpush1.bf16.msra.mxu0 0
        %2098 = vmatprep.mubr.bf16.mxu0 0
        %2099 = vmatmul.mubr.bf16.gmra.mrb[0].mxu0 %v935
        %v2100 = vpop.f32.mrb[0].mxu0
        %v2101 = vadd.f32 %v1960, %v2100
        %v2102 = vpop.f32.mrb[0].mxu0
        %v2103 = vadd.f32 %v1962, %v2102
        %v2104 = vpop.f32.mrb[0].mxu0
        %v2105 = vadd.f32 %v1964, %v2104
        %v2106 = vpop.f32.mrb[0].mxu0
        %v2107 = vadd.f32 %v1966, %v2106
        %2108 = vmatprep.mubr.bf16.mxu0 0
        %2109 = vmatmul.mubr.bf16.gmra.mrb[0].mxu0 %v942
        %v2110 = vpop.f32.mrb[0].mxu0
        %v2111 = vadd.f32 %v1970, %v2110
        %v2112 = vpop.f32.mrb[0].mxu0
        %v2113 = vadd.f32 %v1972, %v2112
        %v2114 = vpop.f32.mrb[0].mxu0
        %v2115 = vadd.f32 %v1974, %v2114
        %v2116 = vpop.f32.mrb[0].mxu0
        %v2117 = vadd.f32 %v1976, %v2116
        %2118 = vmatprep.mubr.bf16.mxu0 0
        %2119 = vmatmul.mubr.bf16.gmra.mrb[0].mxu0 %v949
        %v2120 = vpop.f32.mrb[0].mxu0
        %v2121 = vadd.f32 %v1980, %v2120
        %v2122 = vpop.f32.mrb[0].mxu0
        %v2123 = vadd.f32 %v1982, %v2122
        %v2124 = vpop.f32.mrb[0].mxu0
        %v2125 = vadd.f32 %v1984, %v2124
        %v2126 = vpop.f32.mrb[0].mxu0
        %v2127 = vadd.f32 %v1986, %v2126
        %2128 = vmatprep.mubr.bf16.mxu0 0
        %2129 = vmatmul.mubr.bf16.gmra.mrb[0].mxu0 %v956
        %v2130 = vpop.f32.mrb[0].mxu0
        %v2131 = vadd.f32 %v1990, %v2130
        %v2132 = vpop.f32.mrb[0].mxu0
        %v2133 = vadd.f32 %v1992, %v2132
        %v2134 = vpop.f32.mrb[0].mxu0
        %v2135 = vadd.f32 %v1994, %v2134
        %v2136 = vpop.f32.mrb[0].mxu0
        %v2137 = vadd.f32 %v1996, %v2136
        %2138 = vmatprep.mubr.bf16.mxu0 0
        %2139 = vmatmul.mubr.bf16.gmra.mrb[0].mxu0 %v963
        %v2140 = vpop.f32.mrb[0].mxu0
        %v2141 = vadd.f32 %v2000, %v2140
        %v2142 = vpop.f32.mrb[0].mxu0
        %v2143 = vadd.f32 %v2002, %v2142
        %v2144 = vpop.f32.mrb[0].mxu0
        %v2145 = vadd.f32 %v2004, %v2144
        %v2146 = vpop.f32.mrb[0].mxu0
        %v2147 = vadd.f32 %v2006, %v2146
        %2148 = vmatprep.mubr.bf16.mxu0 0
        %2149 = vmatmul.mubr.bf16.gmra.mrb[0].mxu0 %v970
        %v2150 = vpop.f32.mrb[0].mxu0
        %v2151 = vadd.f32 %v2010, %v2150
        %v2152 = vpop.f32.mrb[0].mxu0
        %v2153 = vadd.f32 %v2012, %v2152
        %v2154 = vpop.f32.mrb[0].mxu0
        %v2155 = vadd.f32 %v2014, %v2154
        %v2156 = vpop.f32.mrb[0].mxu0
        %v2157 = vadd.f32 %v2016, %v2156
        %2158 = vmatprep.mubr.bf16.mxu0 0
        %2159 = vmatmul.mubr.bf16.gmra.mrb[0].mxu0 %v977
        %v2160 = vpop.f32.mrb[0].mxu0
        %v2161 = vadd.f32 %v2020, %v2160
        %v2162 = vpop.f32.mrb[0].mxu0
        %v2163 = vadd.f32 %v2022, %v2162
        %v2164 = vpop.f32.mrb[0].mxu0
        %v2165 = vadd.f32 %v2024, %v2164
        %v2166 = vpop.f32.mrb[0].mxu0
        %v2167 = vadd.f32 %v2026, %v2166
        %2168 = vmatprep.mubr.bf16.mxu0 0
        %2169 = vmatmul.mubr.bf16.gmra.mrb[0].mxu0 %v984
        %v2170 = vpop.f32.mrb[0].mxu0
        %v2171 = vadd.f32 %v2030, %v2170
        %v2172 = vpop.f32.mrb[0].mxu0
        %v2173 = vadd.f32 %v2032, %v2172
        %v2174 = vpop.f32.mrb[0].mxu0
        %v2175 = vadd.f32 %v2034, %v2174
        %v2176 = vpop.f32.mrb[0].mxu0
        %v2177 = vadd.f32 %v2036, %v2176
        %2178 = vmatprep.mubr.bf16.mxu0 0
        %2179 = vmatmul.mubr.bf16.gmra.mrb[0].mxu0 %v991
        %v2180 = vpop.f32.mrb[0].mxu0
        %v2181 = vadd.f32 %v2040, %v2180
        %v2182 = vpop.f32.mrb[0].mxu0
        %v2183 = vadd.f32 %v2042, %v2182
        %v2184 = vpop.f32.mrb[0].mxu0
        %v2185 = vadd.f32 %v2044, %v2184
        %v2186 = vpop.f32.mrb[0].mxu0
        %v2187 = vadd.f32 %v2046, %v2186
        %2188 = vmatprep.mubr.bf16.mxu0 0
        %2189 = vmatmul.mubr.bf16.gmra.mrb[0].mxu0 %v998
        %v2190 = vpop.f32.mrb[0].mxu0
        %v2191 = vadd.f32 %v2050, %v2190
        %v2192 = vpop.f32.mrb[0].mxu0
        %v2193 = vadd.f32 %v2052, %v2192
        %v2194 = vpop.f32.mrb[0].mxu0
        %v2195 = vadd.f32 %v2054, %v2194
        %v2196 = vpop.f32.mrb[0].mxu0
        %v2197 = vadd.f32 %v2056, %v2196
        %2198 = vmatprep.mubr.bf16.mxu0 0
        %2199 = vmatmul.mubr.bf16.gmra.mrb[0].mxu0 %v1005
        %v2200 = vpop.f32.mrb[0].mxu0
        %v2201 = vadd.f32 %v2060, %v2200
        %v2202 = vpop.f32.mrb[0].mxu0
        %v2203 = vadd.f32 %v2062, %v2202
        %v2204 = vpop.f32.mrb[0].mxu0
        %v2205 = vpop.f32.mrb[0].mxu0
        %2206 = vdwg.mxu0
        %v2207 = vadd.f32 %v460, %v2101
        %v2208 = vadd.f32 %v461, %v2103
        %v2209 = vadd.f32 %v462, %v2105
        %v2210 = vadd.f32 %v463, %v2107
        %v2211 = vadd.f32 %v464, %v2111
        %v2212 = vadd.f32 %v465, %v2113
        %v2213 = vadd.f32 %v466, %v2115
        %v2214 = vadd.f32 %v467, %v2117
        %v2215 = vadd.f32 %v468, %v2121
        %v2216 = vadd.f32 %v469, %v2123
        %v2217 = vadd.f32 %v470, %v2125
        %v2218 = vadd.f32 %v471, %v2127
        %v2219 = vadd.f32 %v472, %v2131
        %v2220 = vadd.f32 %v473, %v2133
        %v2221 = vadd.f32 %v474, %v2135
        %v2222 = vadd.f32 %v475, %v2137
        %v2223 = vadd.f32 %v476, %v2141
        %v2224 = vadd.f32 %v477, %v2143
        %v2225 = vadd.f32 %v478, %v2145
        %v2226 = vadd.f32 %v479, %v2147
        %v2227 = vadd.f32 %v480, %v2151
        %v2228 = vadd.f32 %v481, %v2153
        %v2229 = vadd.f32 %v482, %v2155
        %v2230 = vadd.f32 %v483, %v2157
        %v2231 = vadd.f32 %v484, %v2161
        %v2232 = vadd.f32 %v485, %v2163
        %v2233 = vadd.f32 %v486, %v2165
        %v2234 = vadd.f32 %v487, %v2167
        %v2235 = vadd.f32 %v488, %v2171
        %v2236 = vadd.f32 %v489, %v2173
        %v2237 = vadd.f32 %v490, %v2175
        %v2238 = vadd.f32 %v491, %v2177
        %v2239 = vadd.f32 %v492, %v2181
        %v2240 = vadd.f32 %v493, %v2183
        %v2241 = vadd.f32 %v494, %v2185
        %v2242 = vadd.f32 %v495, %v2187
        %v2243 = vadd.f32 %v496, %v2191
        %v2244 = vadd.f32 %v497, %v2193
        %v2245 = vadd.f32 %v498, %v2195
        %v2246 = vadd.f32 %v499, %v2197
        %v2247 = vadd.f32 %v500, %v2201
        %v2248 = vadd.f32 %v501, %v2203
        %2249 = vst [vmem:[#allocation2] sm:$0xff] %v2207
        %2250 = vst [vmem:[#allocation2 + $0x8] sm:$0xff] %v2208
        %2251 = vst [vmem:[#allocation2 + $0x10] sm:$0xff] %v2209
        %2252 = vst [vmem:[#allocation2 + $0x18] sm:$0xff] %v2210
        %2253 = vst [vmem:[#allocation2 + $0x20] sm:$0xff] %v2211
        %2254 = vst [vmem:[#allocation2 + $0x28] sm:$0xff] %v2212
        %2255 = vst [vmem:[#allocation2 + $0x30] sm:$0xff] %v2213
        %2256 = vst [vmem:[#allocation2 + $0x38] sm:$0xff] %v2214
        %2257 = vst [vmem:[#allocation2 + $0x40] sm:$0xff] %v2215
        %2258 = vst [vmem:[#allocation2 + $0x48] sm:$0xff] %v2216
        %2259 = vst [vmem:[#allocation2 + $0x50] sm:$0xff] %v2217
        %2260 = vst [vmem:[#allocation2 + $0x58] sm:$0xff] %v2218
        %2261 = vst [vmem:[#allocation2 + $0x60] sm:$0xff] %v2219
        %2262 = vst [vmem:[#allocation2 + $0x68] sm:$0xff] %v2220
        %2263 = vst [vmem:[#allocation2 + $0x70] sm:$0xff] %v2221
        %2264 = vst [vmem:[#allocation2 + $0x78] sm:$0xff] %v2222
        %2265 = vst [vmem:[#allocation2 + $0x80] sm:$0xff] %v2223
        %2266 = vst [vmem:[#allocation2 + $0x88] sm:$0xff] %v2224
        %2267 = vst [vmem:[#allocation2 + $0x90] sm:$0xff] %v2225
        %2268 = vst [vmem:[#allocation2 + $0x98] sm:$0xff] %v2226
        %2269 = vst [vmem:[#allocation2 + $0xa0] sm:$0xff] %v2227
        %2270 = vst [vmem:[#allocation2 + $0xa8] sm:$0xff] %v2228
        %2271 = vst [vmem:[#allocation2 + $0xb0] sm:$0xff] %v2229
        %2272 = vst [vmem:[#allocation2 + $0xb8] sm:$0xff] %v2230
        %2273 = vst [vmem:[#allocation2 + $0xc0] sm:$0xff] %v2231
        %2274 = vst [vmem:[#allocation2 + $0xc8] sm:$0xff] %v2232
        %2275 = vst [vmem:[#allocation2 + $0xd0] sm:$0xff] %v2233
        %2276 = vst [vmem:[#allocation2 + $0xd8] sm:$0xff] %v2234
        %2277 = vst [vmem:[#allocation2 + $0xe0] sm:$0xff] %v2235
        %2278 = vst [vmem:[#allocation2 + $0xe8] sm:$0xff] %v2236
        %2279 = vst [vmem:[#allocation2 + $0xf0] sm:$0xff] %v2237
        %2280 = vst [vmem:[#allocation2 + $0xf8] sm:$0xff] %v2238
        %2281 = vst [vmem:[#allocation2 + $0x100] sm:$0xff] %v2239
        %2282 = vst [vmem:[#allocation2 + $0x108] sm:$0xff] %v2240
        %2283 = vst [vmem:[#allocation2 + $0x110] sm:$0xff] %v2241
        %2284 = vst [vmem:[#allocation2 + $0x118] sm:$0xff] %v2242
        %2285 = vst [vmem:[#allocation2 + $0x120] sm:$0xff] %v2243
        %2286 = vst [vmem:[#allocation2 + $0x128] sm:$0xff] %v2244
        %2287 = vst [vmem:[#allocation2 + $0x130] sm:$0xff] %v2245
        %2288 = vst [vmem:[#allocation2 + $0x138] sm:$0xff] %v2246
        %2289 = vst [vmem:[#allocation2 + $0x140] sm:$0xff] %v2247
        %2290 = vst [vmem:[#allocation2 + $0x148] sm:$0xff] %v2248
        %p2291 = scmp.eq.s32.totalorder %s19, 1
        // Predicated region
        $region63: #{reduction_a.7} parent=53 // pred_check
          %p2292 = pneg %p2291
        $region64: #{reduction_a.7} parent=53 // pred_check_branch
          %2294 = sbr.rel (%p2292) target = $region66
        $region65: #{reduction_a.7} parent=53 // pred_region
          %v2295 = vld [vmem:[#allocation2] sm:$0xff]
          %v2296 = vld [vmem:[#allocation2 + $0x8] sm:$0xff]
          %v2297 = vld [vmem:[#allocation2 + $0x10] sm:$0xff]
          %v2298 = vld [vmem:[#allocation2 + $0x18] sm:$0xff]
          %v2299 = vld [vmem:[#allocation2 + $0x20] sm:$0xff]
          %v2300 = vld [vmem:[#allocation2 + $0x28] sm:$0xff]
          %v2301 = vld [vmem:[#allocation2 + $0x30] sm:$0xff]
          %v2302 = vld [vmem:[#allocation2 + $0x38] sm:$0xff]
          %v2303 = vld [vmem:[#allocation2 + $0x40] sm:$0xff]
          %v2304 = vld [vmem:[#allocation2 + $0x48] sm:$0xff]
          %v2305 = vld [vmem:[#allocation2 + $0x50] sm:$0xff]
          %v2306 = vld [vmem:[#allocation2 + $0x58] sm:$0xff]
          %v2307 = vld [vmem:[#allocation2 + $0x60] sm:$0xff]
          %v2308 = vld [vmem:[#allocation2 + $0x68] sm:$0xff]
          %v2309 = vld [vmem:[#allocation2 + $0x70] sm:$0xff]
          %v2310 = vld [vmem:[#allocation2 + $0x78] sm:$0xff]
          %v2311 = vld [vmem:[#allocation2 + $0x80] sm:$0xff]
          %v2312 = vld [vmem:[#allocation2 + $0x88] sm:$0xff]
          %v2313 = vld [vmem:[#allocation2 + $0x90] sm:$0xff]
          %v2314 = vld [vmem:[#allocation2 + $0x98] sm:$0xff]
          %v2315 = vld [vmem:[#allocation2 + $0xa0] sm:$0xff]
          %v2316 = vld [vmem:[#allocation2 + $0xa8] sm:$0xff]
          %v2317 = vld [vmem:[#allocation2 + $0xb0] sm:$0xff]
          %v2318 = vld [vmem:[#allocation2 + $0xb8] sm:$0xff]
          %v2319 = vld [vmem:[#allocation2 + $0xc0] sm:$0xff]
          %v2320 = vld [vmem:[#allocation2 + $0xc8] sm:$0xff]
          %v2321 = vld [vmem:[#allocation2 + $0xd0] sm:$0xff]
          %v2322 = vld [vmem:[#allocation2 + $0xd8] sm:$0xff]
          %v2323 = vld [vmem:[#allocation2 + $0xe0] sm:$0xff]
          %v2324 = vld [vmem:[#allocation2 + $0xe8] sm:$0xff]
          %v2325 = vld [vmem:[#allocation2 + $0xf0] sm:$0xff]
          %v2326 = vld [vmem:[#allocation2 + $0xf8] sm:$0xff]
          %v2327 = vld [vmem:[#allocation2 + $0x100] sm:$0xff]
          %v2328 = vld [vmem:[#allocation2 + $0x108] sm:$0xff]
          %v2329 = vld [vmem:[#allocation2 + $0x110] sm:$0xff]
          %v2330 = vld [vmem:[#allocation2 + $0x118] sm:$0xff]
          %v2331 = vld [vmem:[#allocation2 + $0x120] sm:$0xff]
          %v2332 = vld [vmem:[#allocation2 + $0x128] sm:$0xff]
          %v2333 = vld [vmem:[#allocation2 + $0x130] sm:$0xff]
          %v2334 = vld [vmem:[#allocation2 + $0x138] sm:$0xff]
          %v2335 = vld [vmem:[#allocation2 + $0x140] sm:$0xff]
          %v2336 = vld [vmem:[#allocation2 + $0x148] sm:$0xff]
          %v2337 = vld [vmem:[%s2] sm:$0x3]
          %v2339 = vlaneseq
          %v2340 = vshrl.u32 %v2339, 7
          %v2341 = vsub.s32 0, %v2340
          %v2342 = vrot.slane %v2337, %v2341
          %v2343 = vlaneseq
          %v2344 = vshrl.u32 %v2343, 7
          %v2345 = vsub.s32 1, %v2344
          %v2346 = vrot.slane %v2337, %v2345
          %v2349 = vadd.f32 %v2295, %v2342
          %v2350 = vadd.f32 %v2296, %v2346
          %v2351 = vadd.f32 %v2297, %v2342
          %v2352 = vadd.f32 %v2298, %v2346
          %v2353 = vadd.f32 %v2299, %v2342
          %v2354 = vadd.f32 %v2300, %v2346
          %v2355 = vadd.f32 %v2301, %v2342
          %v2356 = vadd.f32 %v2302, %v2346
          %v2357 = vadd.f32 %v2303, %v2342
          %v2358 = vadd.f32 %v2304, %v2346
          %v2359 = vadd.f32 %v2305, %v2342
          %v2360 = vadd.f32 %v2306, %v2346
          %v2361 = vadd.f32 %v2307, %v2342
          %v2362 = vadd.f32 %v2308, %v2346
          %v2363 = vadd.f32 %v2309, %v2342
          %v2364 = vadd.f32 %v2310, %v2346
          %v2365 = vadd.f32 %v2311, %v2342
          %v2366 = vadd.f32 %v2312, %v2346
          %v2367 = vadd.f32 %v2313, %v2342
          %v2368 = vadd.f32 %v2314, %v2346
          %v2369 = vadd.f32 %v2315, %v2342
          %v2370 = vadd.f32 %v2316, %v2346
          %v2371 = vadd.f32 %v2317, %v2342
          %v2372 = vadd.f32 %v2318, %v2346
          %v2373 = vadd.f32 %v2319, %v2342
          %v2374 = vadd.f32 %v2320, %v2346
          %v2375 = vadd.f32 %v2321, %v2342
          %v2376 = vadd.f32 %v2322, %v2346
          %v2377 = vadd.f32 %v2323, %v2342
          %v2378 = vadd.f32 %v2324, %v2346
          %v2379 = vadd.f32 %v2325, %v2342
          %v2380 = vadd.f32 %v2326, %v2346
          %v2381 = vadd.f32 %v2327, %v2342
          %v2382 = vadd.f32 %v2328, %v2346
          %v2383 = vadd.f32 %v2329, %v2342
          %v2384 = vadd.f32 %v2330, %v2346
          %v2385 = vadd.f32 %v2331, %v2342
          %v2386 = vadd.f32 %v2332, %v2346
          %v2387 = vadd.f32 %v2333, %v2342
          %v2388 = vadd.f32 %v2334, %v2346
          %v2389 = vadd.f32 %v2335, %v2342
          %v2390 = vadd.f32 %v2336, %v2346
          %v2391 = vmax.f32 %v2349, 0.0
          %v2392 = vmax.f32 %v2350, 0.0
          %v2393 = vmax.f32 %v2351, 0.0
          %v2394 = vmax.f32 %v2352, 0.0
          %v2395 = vmax.f32 %v2353, 0.0
          %v2396 = vmax.f32 %v2354, 0.0
          %v2397 = vmax.f32 %v2355, 0.0
          %v2398 = vmax.f32 %v2356, 0.0
          %v2399 = vmax.f32 %v2357, 0.0
          %v2400 = vmax.f32 %v2358, 0.0
          %v2401 = vmax.f32 %v2359, 0.0
          %v2402 = vmax.f32 %v2360, 0.0
          %v2403 = vmax.f32 %v2361, 0.0
          %v2404 = vmax.f32 %v2362, 0.0
          %v2405 = vmax.f32 %v2363, 0.0
          %v2406 = vmax.f32 %v2364, 0.0
          %v2407 = vmax.f32 %v2365, 0.0
          %v2408 = vmax.f32 %v2366, 0.0
          %v2409 = vmax.f32 %v2367, 0.0
          %v2410 = vmax.f32 %v2368, 0.0
          %v2411 = vmax.f32 %v2369, 0.0
          %v2412 = vmax.f32 %v2370, 0.0
          %v2413 = vmax.f32 %v2371, 0.0
          %v2414 = vmax.f32 %v2372, 0.0
          %v2415 = vmax.f32 %v2373, 0.0
          %v2416 = vmax.f32 %v2374, 0.0
          %v2417 = vmax.f32 %v2375, 0.0
          %v2418 = vmax.f32 %v2376, 0.0
          %v2419 = vmax.f32 %v2377, 0.0
          %v2420 = vmax.f32 %v2378, 0.0
          %v2421 = vmax.f32 %v2379, 0.0
          %v2422 = vmax.f32 %v2380, 0.0
          %v2423 = vmax.f32 %v2381, 0.0
          %v2424 = vmax.f32 %v2382, 0.0
          %v2425 = vmax.f32 %v2383, 0.0
          %v2426 = vmax.f32 %v2384, 0.0
          %v2427 = vmax.f32 %v2385, 0.0
          %v2428 = vmax.f32 %v2386, 0.0
          %v2429 = vmax.f32 %v2387, 0.0
          %v2430 = vmax.f32 %v2388, 0.0
          %v2431 = vmax.f32 %v2389, 0.0
          %v2432 = vmax.f32 %v2390, 0.0
          %2433 = vst [vmem:[%s411] sm:$0xff] %v2391
          %2434 = vst [vmem:[%s411 + $0x8] sm:$0xff] %v2392
          %2435 = vst [vmem:[%s411 + $0x10] sm:$0xff] %v2393
          %2436 = vst [vmem:[%s411 + $0x18] sm:$0xff] %v2394
          %2437 = vst [vmem:[%s411 + $0x20] sm:$0xff] %v2395
          %2438 = vst [vmem:[%s411 + $0x28] sm:$0xff] %v2396
          %2439 = vst [vmem:[%s411 + $0x30] sm:$0xff] %v2397
          %2440 = vst [vmem:[%s411 + $0x38] sm:$0xff] %v2398
          %2441 = vst [vmem:[%s411 + $0x40] sm:$0xff] %v2399
          %2442 = vst [vmem:[%s411 + $0x48] sm:$0xff] %v2400
          %2443 = vst [vmem:[%s411 + $0x50] sm:$0xff] %v2401
          %2444 = vst [vmem:[%s411 + $0x58] sm:$0xff] %v2402
          %2445 = vst [vmem:[%s411 + $0x60] sm:$0xff] %v2403
          %2446 = vst [vmem:[%s411 + $0x68] sm:$0xff] %v2404
          %2447 = vst [vmem:[%s411 + $0x70] sm:$0xff] %v2405
          %2448 = vst [vmem:[%s411 + $0x78] sm:$0xff] %v2406
          %2449 = vst [vmem:[%s411 + $0x80] sm:$0xff] %v2407
          %2450 = vst [vmem:[%s411 + $0x88] sm:$0xff] %v2408
          %2451 = vst [vmem:[%s411 + $0x90] sm:$0xff] %v2409
          %2452 = vst [vmem:[%s411 + $0x98] sm:$0xff] %v2410
          %2453 = vst [vmem:[%s411 + $0xa0] sm:$0xff] %v2411
          %2454 = vst [vmem:[%s411 + $0xa8] sm:$0xff] %v2412
          %2455 = vst [vmem:[%s411 + $0xb0] sm:$0xff] %v2413
          %2456 = vst [vmem:[%s411 + $0xb8] sm:$0xff] %v2414
          %2457 = vst [vmem:[%s411 + $0xc0] sm:$0xff] %v2415
          %2458 = vst [vmem:[%s411 + $0xc8] sm:$0xff] %v2416
          %2459 = vst [vmem:[%s411 + $0xd0] sm:$0xff] %v2417
          %2460 = vst [vmem:[%s411 + $0xd8] sm:$0xff] %v2418
          %2461 = vst [vmem:[%s411 + $0xe0] sm:$0xff] %v2419
          %2462 = vst [vmem:[%s411 + $0xe8] sm:$0xff] %v2420
          %2463 = vst [vmem:[%s411 + $0xf0] sm:$0xff] %v2421
          %2464 = vst [vmem:[%s411 + $0xf8] sm:$0xff] %v2422
          %2465 = vst [vmem:[%s411 + $0x100] sm:$0xff] %v2423
          %2466 = vst [vmem:[%s411 + $0x108] sm:$0xff] %v2424
          %2467 = vst [vmem:[%s411 + $0x110] sm:$0xff] %v2425
          %2468 = vst [vmem:[%s411 + $0x118] sm:$0xff] %v2426
          %2469 = vst [vmem:[%s411 + $0x120] sm:$0xff] %v2427
          %2470 = vst [vmem:[%s411 + $0x128] sm:$0xff] %v2428
          %2471 = vst [vmem:[%s411 + $0x130] sm:$0xff] %v2429
          %2472 = vst [vmem:[%s411 + $0x138] sm:$0xff] %v2430
          %2473 = vst [vmem:[%s411 + $0x140] sm:$0xff] %v2431
          %2474 = vst [vmem:[%s411 + $0x148] sm:$0xff] %v2432
        $region66: #{reduction_a.7} parent=53 // pred_fallthru
          _
        %s2475 = smul.u32 21, %s18
        %p2476 = scmp.lt.s32.totalorder %s2475, 20
        %s2477 = scalar_select %p2476, %s2475, 20
        %s2478 = smul.addr %s2477, 2
        %s2479 = smul.addr %s2478, 8
        %s2480 = scalar_lea.vmem %s3, %s2479
        // Predicated region
        $region67: #{reduction_a.7} parent=53 // pred_check
          %p2481 = pneg %p119
        $region68: #{reduction_a.7} parent=53 // pred_check_branch
          %2483 = sbr.rel (%p2481) target = $region70
        $region69: #{reduction_a.7} parent=53 // pred_region
          %s2484 = smul.u32 21, %s18
        $region70: #{reduction_a.7} parent=53 // pred_fallthru
          _
        // Predicated region
        $region71: #{reduction_a.7} parent=53 // pred_check
          %p2485 = pneg %p119
        $region72: #{reduction_a.7} parent=53 // pred_check_branch
          %2487 = sbr.rel (%p2485) target = $region74
        $region73: #{reduction_a.7} parent=53 // pred_region
          %s2488 = smul.u32 21, %s18
          %p2489 = scmp.lt.s32.totalorder %s2488, 20
          %s2490 = scalar_select %p2489, %s2488, 20
          %s2491 = smul.addr %s2490, 2
          %s2492 = smul.addr %s2491, 8
          %s2493 = scalar_lea.vmem %s3, %s2492
        $region74: #{reduction_a.7} parent=53 // pred_fallthru
          _
      $region54: #{reduction_a.7} parent=5 // pred_fallthru
        _
      %p2494 = scmp.le.s32.totalorder 2, %s9
      // Predicated region
      $region75: #{reduction_a.7} parent=5 // pred_check
        %p2495 = pneg %p2494
      $region76: #{reduction_a.7} parent=5 // pred_check_branch
        %2497 = sbr.rel (%p2495) target = $region78
      $region77: #{reduction_a.7} parent=5 // pred_region
        %s2498 = ssub.s32 %s9, 2
      $region78: #{reduction_a.7} parent=5 // pred_fallthru
        _
    $region6: #{reduction_a.7} parent=1 // loop_footer
      %s13 = sadd.s32 1, %s9
    $region7: #{reduction_a.7} parent=1 // loop_footer_branch
      %8 = sbr.rel target = $region3
    $region8: #{reduction_a.7} parent=1 // loop_exit
      _

// kernel: reduction_a.8
$region0: #{reduction_a.8}
  #allocation0 [shape = 'u32[]', space=smem, size = 0x4, offset = 0x4, fixed_abs, tag = 'smem constant byte address 0x4 - core index']
  #allocation1 [shape = 'u32[144,128]{1,0:T(1,128)}', space=vmem, size = 0x12000, scoped, tag = 'internal scratch']
  #allocation2 [shape = 'f32[32,256]{1,0:T(8,128)}', space=vmem, size = 0x8000, scoped, tag = 'scratch operand']
  %s0 = inlined_call_operand.vmem [shape: bf16[32,1792], index: 0, kind: input, shape index: {}]
  %s1 = inlined_call_operand.vmem [shape: bf16[1792,256], index: 1, kind: input, shape index: {}]
  %s2 = inlined_call_operand.vmem [shape: f32[1,256], index: 2, kind: input, shape index: {}]
  %s3 = inlined_call_operand.vmem [shape: f32[32,256], index: 3, kind: output, shape index: {}]
  %s4 = sld [smem:[#allocation0]]
  $region79: #{reduction_a.8} parent=0
    _
  %s6 = ssub.s32 1, %s4
  %s7 = scalar_select 0, %s6, %s4
  $region1: #{reduction_a.8} parent=0
    #allocation3 [shape = 'u8[114688]{0}', space=vmem, size = 0x1c000, scoped, tag = 'input window, operand 0']
    loop: start=0, step=1, limit=4
    $region2: #{reduction_a.8} parent=1 // loop_pre_header
      _
    $region3: #{reduction_a.8} parent=1 // loop_header
      %s9 = sphi 0, %s13
      %p10 = scmp.ge.s32.totalorder %s9, 4
      %s16 = sphi 0, %s28
      %s17 = sphi 0, %s24
      %s18 = sphi 0, %s16
      %s19 = sphi 0, %s17
      %s20 = sphi 0, %s18
      %s21 = sphi 0, %s19
      %s33 = sphi 0, %s35
      %s36 = sphi 0, %s33
      %s37 = sphi 0, %s36
      %s53 = sphi 0, %s37
      %s59 = sphi 0, %s61
      %s62 = sphi 0, %s59
      %s63 = sphi 0, %s62
      %s79 = sphi 0, %s63
      %s83 = sphi 0, %s83
      %s85 = sphi 0, %s83
      %s86 = sphi 0, %s85
      %s100 = sphi 0, %s86
      %s106 = sphi 0, %s108
      %s109 = sphi 0, %s106
      %s110 = sphi 0, %s109
      %s126 = sphi 0, %s110
    $region4: #{reduction_a.8} parent=1 // loop_header_branch
      %12 = sbr.rel (%p10) target = $region8
    $region5: #{reduction_a.8} parent=1 // loop_body
      %s14 = ssub.s32 %s9, 1
      %s15 = ssub.s32 %s9, 2
      %s22 = sadd.s32 1, %s17
      %p23 = scmp.ge.s32.totalorder %s22, 2
      %s24 = scalar_select %p23, 0, %s22
      %s25 = sadd.s32 1, %s16
      %s26 = scalar_select %p23, %s25, %s16
      %p27 = scmp.ge.s32.totalorder %s26, 1
      %s28 = scalar_select %p27, 0, %s26
      %s29 = ssub.s32 %s16, %s28
      %s30 = ssub.s32 %s17, %s24
      %s31 = sor.u32 %s29, %s30
      %p32 = scmp.eq.s32.totalorder %s31, 0
      %s34 = sadd.s32 %s33, 1
      %s35 = scalar_select %p32, %s33, %s34
      %p38 = pneg %p32
      %p39 = scmp.eq.s32.totalorder %s9, 1
      %p40 = por %p38, %p39
      %p41 = scmp.ne.s32.totalorder %s33, %s36
      %p42 = scmp.eq.s32.totalorder %s9, 0
      %p43 = por %p41, %p42
      %p44 = scmp.ne.s32.totalorder %s33, %s36
      %p45 = scmp.eq.s32.totalorder %s14, 1
      %p46 = por %p44, %p45
      %p47 = scmp.ne.s32.totalorder %s36, %s37
      %p48 = scmp.eq.s32.totalorder %s14, 0
      %p49 = por %p47, %p48
      %p50 = scmp.ne.s32.totalorder %s36, %s37
      %p51 = scmp.eq.s32.totalorder %s15, 1
      %p52 = por %p50, %p51
      %p54 = scmp.ne.s32.totalorder %s37, %s53
      %p55 = scmp.eq.s32.totalorder %s15, 0
      %p56 = por %p54, %p55
      %s57 = ssub.s32 %s17, %s24
      %p58 = scmp.eq.s32.totalorder %s57, 0
      %s60 = sadd.s32 %s59, 1
      %s61 = scalar_select %p58, %s59, %s60
      %p64 = pneg %p58
      %p65 = scmp.eq.s32.totalorder %s9, 1
      %p66 = por %p64, %p65
      %p67 = scmp.ne.s32.totalorder %s59, %s62
      %p68 = scmp.eq.s32.totalorder %s9, 0
      %p69 = por %p67, %p68
      %p70 = scmp.ne.s32.totalorder %s59, %s62
      %p71 = scmp.eq.s32.totalorder %s14, 1
      %p72 = por %p70, %p71
      %p73 = scmp.ne.s32.totalorder %s62, %s63
      %p74 = scmp.eq.s32.totalorder %s14, 0
      %p75 = por %p73, %p74
      %p76 = scmp.ne.s32.totalorder %s62, %s63
      %p77 = scmp.eq.s32.totalorder %s15, 1
      %p78 = por %p76, %p77
      %p80 = scmp.ne.s32.totalorder %s63, %s79
      %p81 = scmp.eq.s32.totalorder %s15, 0
      %p82 = por %p80, %p81
      %s84 = sadd.s32 %s83, 1
      %p87 = scmp.eq.s32.totalorder %s9, 1
      %p88 = scmp.ne.s32.totalorder %s83, %s85
      %p89 = scmp.eq.s32.totalorder %s9, 0
      %p90 = por %p88, %p89
      %p91 = scmp.ne.s32.totalorder %s83, %s85
      %p92 = scmp.eq.s32.totalorder %s14, 1
      %p93 = por %p91, %p92
      %p94 = scmp.ne.s32.totalorder %s85, %s86
      %p95 = scmp.eq.s32.totalorder %s14, 0
      %p96 = por %p94, %p95
      %p97 = scmp.ne.s32.totalorder %s85, %s86
      %p98 = scmp.eq.s32.totalorder %s15, 1
      %p99 = por %p97, %p98
      %p101 = scmp.ne.s32.totalorder %s86, %s100
      %p102 = scmp.eq.s32.totalorder %s15, 0
      %p103 = por %p101, %p102
      %s104 = ssub.s32 %s16, %s28
      %p105 = scmp.eq.s32.totalorder %s104, 0
      %s107 = sadd.s32 %s106, 1
      %s108 = scalar_select %p105, %s106, %s107
      %p111 = pneg %p105
      %p112 = scmp.eq.s32.totalorder %s9, 1
      %p113 = por %p111, %p112
      %p114 = scmp.ne.s32.totalorder %s106, %s109
      %p115 = scmp.eq.s32.totalorder %s9, 0
      %p116 = por %p114, %p115
      %p117 = scmp.ne.s32.totalorder %s106, %s109
      %p118 = scmp.eq.s32.totalorder %s14, 1
      %p119 = por %p117, %p118
      %p120 = scmp.ne.s32.totalorder %s109, %s110
      %p121 = scmp.eq.s32.totalorder %s14, 0
      %p122 = por %p120, %p121
      %p123 = scmp.ne.s32.totalorder %s109, %s110
      %p124 = scmp.eq.s32.totalorder %s15, 1
      %p125 = por %p123, %p124
      %p127 = scmp.ne.s32.totalorder %s110, %s126
      %p128 = scmp.eq.s32.totalorder %s15, 0
      %p129 = por %p127, %p128
      %p130 = scmp.le.s32.totalorder 1, %s9
      %p131 = scmp.lt.s32.totalorder %s9, 3
      %p132 = pnand %p130, %p131
      %p133 = pneg %p132
      // Predicated region
      $region9: #{reduction_a.8} parent=5 // pred_check
        _
      $region10: #{reduction_a.8} parent=5 // pred_check_branch
        %135 = sbr.rel (%p132) target = $region12
      $region11: #{reduction_a.8} parent=5 // pred_region
        %s136 = ssub.s32 %s9, 1
        // Predicated region
        $region13: #{reduction_a.8} parent=11 // pred_check
          %p137 = pneg %p96
        $region14: #{reduction_a.8} parent=11 // pred_check_branch
          %139 = sbr.rel (%p137) target = $region16
        $region15: #{reduction_a.8} parent=11 // pred_region
          _
        $region16: #{reduction_a.8} parent=11 // pred_fallthru
          _
      $region12: #{reduction_a.8} parent=5 // pred_fallthru
        _
      %p140 = scmp.lt.s32.totalorder %s9, 2
      // Predicated region
      $region17: #{reduction_a.8} parent=5 // pred_check
        %p141 = pneg %p140
      $region18: #{reduction_a.8} parent=5 // pred_check_branch
        %143 = sbr.rel (%p141) target = $region20
      $region19: #{reduction_a.8} parent=5 // pred_region
        // Predicated region
        $region21: #{reduction_a.8} parent=19 // pred_check
          %p144 = pneg %p43
        $region22: #{reduction_a.8} parent=19 // pred_check_branch
          %146 = sbr.rel (%p144) target = $region24
        $region23: #{reduction_a.8} parent=19 // pred_region
          %s147 = sand.u32 %s33, 1
          %s148 = sand.u32 %s33, 1
          %s149 = smul.addr %s148, 112
          %s150 = scalar_lea.vmem [#allocation3], %s149
          %s151 = smul.u32 4, %s16
          %s152 = smul.u32 7, %s17
          %s153 = smul.addr %s151, 14
          %s154 = sadd.s32 %s152, %s153
          %s155 = smul.addr %s154, 4
          %s156 = scalar_lea.vmem %s0, %s155
          // Predicated region
          $region25: #{reduction_a.8} parent=23 // pred_check
            _
          $region26: #{reduction_a.8} parent=23 // pred_check_branch
            %158 = sbr.rel (0) target = $region28
          $region27: #{reduction_a.8} parent=23 // pred_region
            // Predicated region
            $region29: #{reduction_a.8} parent=27 // pred_check
              _
            $region30: #{reduction_a.8} parent=27 // pred_check_branch
              %160 = sbr.rel (0) target = $region32
            $region31: #{reduction_a.8} parent=27 // pred_region
              %s161 = scalar_lea.vmem %s156, 24
              %s162 = scalar_lea.vmem %s150, 24 [#allocation3]
              loop: start=0, step=1, limit=1
              $region33: #{reduction_a.8} parent=31 // loop_pre_header
                _
              $region34: #{reduction_a.8} parent=31 // loop_header
                %s164 = sphi 0, %s168
                %p165 = scmp.ge.s32.totalorder %s164, 1
                %s169 = sphi %s156, %s156
                %s170 = sphi %s150, %s150
              $region35: #{reduction_a.8} parent=31 // loop_header_branch
                %167 = sbr.rel (%p165) target = $region39
              $region36: #{reduction_a.8} parent=31 // loop_body
                %v171 = vld [vmem:[%s169] sm:$0xff]
                %172 = vst [vmem:[%s170] sm:$0xff] %v171
                %v173 = vld [vmem:[%s169 + $0x8] sm:$0xff]
                %174 = vst [vmem:[%s170 + $0x8] sm:$0xff] %v173
                %v175 = vld [vmem:[%s169 + $0x10] sm:$0xff]
                %176 = vst [vmem:[%s170 + $0x10] sm:$0xff] %v175
                %v177 = vld [vmem:[%s169 + $0x38] sm:$0xff]
                %178 = vst [vmem:[%s170 + $0x1c] sm:$0xff] %v177
                %v179 = vld [vmem:[%s169 + $0x40] sm:$0xff]
                %180 = vst [vmem:[%s170 + $0x24] sm:$0xff] %v179
                %v181 = vld [vmem:[%s169 + $0x48] sm:$0xff]
                %182 = vst [vmem:[%s170 + $0x2c] sm:$0xff] %v181
                %v183 = vld [vmem:[%s169 + $0x70] sm:$0xff]
                %184 = vst [vmem:[%s170 + $0x38] sm:$0xff] %v183
                %v185 = vld [vmem:[%s169 + $0x78] sm:$0xff]
                %186 = vst [vmem:[%s170 + $0x40] sm:$0xff] %v185
                %v187 = vld [vmem:[%s169 + $0x80] sm:$0xff]
                %188 = vst [vmem:[%s170 + $0x48] sm:$0xff] %v187
                %v189 = vld [vmem:[%s169 + $0xa8] sm:$0xff]
                %190 = vst [vmem:[%s170 + $0x54] sm:$0xff] %v189
                %v191 = vld [vmem:[%s169 + $0xb0] sm:$0xff]
                %192 = vst [vmem:[%s170 + $0x5c] sm:$0xff] %v191
                %v193 = vld [vmem:[%s169 + $0xb8] sm:$0xff]
                %194 = vst [vmem:[%s170 + $0x64] sm:$0xff] %v193
              $region37: #{reduction_a.8} parent=31 // loop_footer
                %s168 = sadd.s32 1, %s164
              $region38: #{reduction_a.8} parent=31 // loop_footer_branch
                %163 = sbr.rel target = $region34
              $region39: #{reduction_a.8} parent=31 // loop_exit
                _
              loop: start=0, step=1, limit=1
              $region40: #{reduction_a.8} parent=31 // loop_pre_header
                _
              $region41: #{reduction_a.8} parent=31 // loop_header
                %s197 = sphi 0, %s201
                %p198 = scmp.ge.s32.totalorder %s197, 1
                %s202 = sphi %s161, %s161
                %s203 = sphi %s162, %s162
              $region42: #{reduction_a.8} parent=31 // loop_header_branch
                %200 = sbr.rel (%p198) target = $region46
              $region43: #{reduction_a.8} parent=31 // loop_body
                %v204 = vld [vmem:[%s202] sm:$0xf]
                %205 = vst [vmem:[%s203] sm:$0xf] %v204
                %v206 = vld [vmem:[%s202 + $0x38] sm:$0xf]
                %207 = vst [vmem:[%s203 + $0x1c] sm:$0xf] %v206
                %v208 = vld [vmem:[%s202 + $0x70] sm:$0xf]
                %209 = vst [vmem:[%s203 + $0x38] sm:$0xf] %v208
                %v210 = vld [vmem:[%s202 + $0xa8] sm:$0xf]
                %211 = vst [vmem:[%s203 + $0x54] sm:$0xf] %v210
              $region44: #{reduction_a.8} parent=31 // loop_footer
                %s201 = sadd.s32 1, %s197
              $region45: #{reduction_a.8} parent=31 // loop_footer_branch
                %196 = sbr.rel target = $region41
              $region46: #{reduction_a.8} parent=31 // loop_exit
                _
            $region32: #{reduction_a.8} parent=27 // pred_fallthru
              _
          $region28: #{reduction_a.8} parent=23 // pred_fallthru
            _
          %212 = vnop
        $region24: #{reduction_a.8} parent=19 // pred_fallthru
          _
        // Predicated region
        $region47: #{reduction_a.8} parent=19 // pred_check
          %p213 = pneg %p69
        $region48: #{reduction_a.8} parent=19 // pred_check_branch
          %215 = sbr.rel (%p213) target = $region50
        $region49: #{reduction_a.8} parent=19 // pred_region
          %s216 = smul.u32 112, %s17
          %p217 = scmp.lt.s32.totalorder %s216, 223
          %s218 = scalar_select %p217, %s216, 223
          %s219 = smul.addr %s218, 2
          %s220 = smul.addr %s219, 4
          %s221 = scalar_lea.vmem %s1, %s220
          %s222 = smul.u32 112, %s17
        $region50: #{reduction_a.8} parent=19 // pred_fallthru
          _
      $region20: #{reduction_a.8} parent=5 // pred_fallthru
        _
      %p223 = scmp.le.s32.totalorder 1, %s9
      %p224 = scmp.lt.s32.totalorder %s9, 3
      %p225 = pnand %p223, %p224
      %p226 = pneg %p225
      // Predicated region
      $region51: #{reduction_a.8} parent=5 // pred_check
        _
      $region52: #{reduction_a.8} parent=5 // pred_check_branch
        %228 = sbr.rel (%p225) target = $region54
      $region53: #{reduction_a.8} parent=5 // pred_region
        %s229 = ssub.s32 %s9, 1
        %s230 = sand.u32 %s36, 1
        %s231 = sand.u32 %s36, 1
        %s232 = smul.addr %s231, 112
        %s233 = scalar_lea.vmem [#allocation3], %s232
        // Predicated region
        $region55: #{reduction_a.8} parent=53 // pred_check
          %p234 = pneg %p49
        $region56: #{reduction_a.8} parent=53 // pred_check_branch
          %236 = sbr.rel (%p234) target = $region58
        $region57: #{reduction_a.8} parent=53 // pred_region
          _
        $region58: #{reduction_a.8} parent=53 // pred_fallthru
          _
        %s237 = sand.u32 %s36, 1
        %s238 = sand.u32 %s36, 1
        %s239 = smul.addr %s238, 112
        %s240 = scalar_lea.vmem [#allocation3], %s239
        %p241 = pneg %p49
        %p242 = pneg %p46
        %s243 = smul.u32 112, %s19
        %p244 = scmp.lt.s32.totalorder %s243, 223
        %s245 = scalar_select %p244, %s243, 223
        %s246 = smul.addr %s245, 2
        %s247 = smul.addr %s246, 4
        %s248 = scalar_lea.vmem %s1, %s247
        %p249 = pneg %p75
        %p250 = pneg %p72
        %p251 = pneg %p96
        %p252 = pneg %p93
        %p253 = pneg %p122
        %p254 = pneg %p119
        %s255 = smul.u32 4, %s18
        %p256 = scmp.lt.s32.totalorder %s255, 3
        %s257 = scalar_select %p256, %s255, 3
        %s258 = smul.addr %s257, 2
        %s259 = smul.addr %s258, 8
        %s260 = scalar_lea.vmem %s3, %s259
        %s261 = smul.u32 4, %s18
        %s262 = smul.u32 7, %s19
        %s263 = smul.u32 112, %s19
        %p264 = scmp.lt.s32.totalorder %s263, 223
        %s265 = scalar_select %p264, %s263, 223
        %s266 = smul.addr %s265, 2
        %s267 = smul.addr %s266, 4
        %s268 = scalar_lea.vmem %s1, %s267
        %s269 = smul.u32 112, %s19
        %s270 = smul.u32 4, %s18
        %p271 = scmp.lt.s32.totalorder %s270, 3
        %s272 = scalar_select %p271, %s270, 3
        %s273 = smul.addr %s272, 2
        %s274 = smul.addr %s273, 8
        %s275 = scalar_lea.vmem %s3, %s274
        %s276 = smul.u32 4, %s18
        %p278 = scmp.eq.s32.totalorder %s19, 0
        // Predicated region
        $region59: #{reduction_a.8} parent=53 // pred_check
          %p279 = pneg %p278
        $region60: #{reduction_a.8} parent=53 // pred_check_branch
          %281 = sbr.rel (%p279) target = $region62
        $region61: #{reduction_a.8} parent=53 // pred_region
          %282 = vst [vmem:[#allocation2] sm:$0xff] 0.0
          %283 = vst [vmem:[#allocation2 + $0x8] sm:$0xff] 0.0
          %284 = vst [vmem:[#allocation2 + $0x10] sm:$0xff] 0.0
          %285 = vst [vmem:[#allocation2 + $0x18] sm:$0xff] 0.0
          %286 = vst [vmem:[#allocation2 + $0x20] sm:$0xff] 0.0
          %287 = vst [vmem:[#allocation2 + $0x28] sm:$0xff] 0.0
          %288 = vst [vmem:[#allocation2 + $0x30] sm:$0xff] 0.0
          %289 = vst [vmem:[#allocation2 + $0x38] sm:$0xff] 0.0
        $region62: #{reduction_a.8} parent=53 // pred_fallthru
          _
        %v290 = vld [vmem:[#allocation2] sm:$0xff]
        %v291 = vld [vmem:[#allocation2 + $0x8] sm:$0xff]
        %v292 = vld [vmem:[#allocation2 + $0x10] sm:$0xff]
        %v293 = vld [vmem:[#allocation2 + $0x18] sm:$0xff]
        %v294 = vld [vmem:[#allocation2 + $0x20] sm:$0xff]
        %v295 = vld [vmem:[#allocation2 + $0x28] sm:$0xff]
        %v296 = vld [vmem:[#allocation2 + $0x30] sm:$0xff]
        %v297 = vld [vmem:[#allocation2 + $0x38] sm:$0xff]
        %v298 = vld [vmem:[%s233] sm:$0xff]
        %v299 = vld [vmem:[%s233 + $0x8] sm:$0xff]
        %v300 = vld [vmem:[%s233 + $0x10] sm:$0xff]
        %v301 = vld [vmem:[%s233 + $0x18] sm:$0xf]
        %v302 = vld [vmem:[%s233 + $0x1c] sm:$0xff]
        %v303 = vld [vmem:[%s233 + $0x24] sm:$0xff]
        %v304 = vld [vmem:[%s233 + $0x2c] sm:$0xff]
        %v305 = vld [vmem:[%s233 + $0x34] sm:$0xf]
        %v306 = vld [vmem:[%s233 + $0x38] sm:$0xff]
        %v307 = vld [vmem:[%s233 + $0x40] sm:$0xff]
        %v308 = vld [vmem:[%s233 + $0x48] sm:$0xff]
        %v309 = vld [vmem:[%s233 + $0x50] sm:$0xf]
        %v310 = vld [vmem:[%s233 + $0x54] sm:$0xff]
        %v311 = vld [vmem:[%s233 + $0x5c] sm:$0xff]
        %v312 = vld [vmem:[%s233 + $0x64] sm:$0xff]
        %v313 = vld [vmem:[%s233 + $0x6c] sm:$0xf]
        %v314 = vld [vmem:[%s268] sm:$0xff]
        %v315 = vld [vmem:[%s268 + $0x8] sm:$0xff]
        %v316 = vld [vmem:[%s268 + $0x10] sm:$0xff]
        %v317 = vld [vmem:[%s268 + $0x18] sm:$0xff]
        %v318 = vld [vmem:[%s268 + $0x20] sm:$0xff]
        %v319 = vld [vmem:[%s268 + $0x28] sm:$0xff]
        %v320 = vld [vmem:[%s268 + $0x30] sm:$0xff]
        %v321 = vld [vmem:[%s268 + $0x38] sm:$0xff]
        %v322 = vld [vmem:[%s268 + $0x40] sm:$0xff]
        %v323 = vld [vmem:[%s268 + $0x48] sm:$0xff]
        %v324 = vld [vmem:[%s268 + $0x50] sm:$0xff]
        %v325 = vld [vmem:[%s268 + $0x58] sm:$0xff]
        %v326 = vld [vmem:[%s268 + $0x60] sm:$0xff]
        %v327 = vld [vmem:[%s268 + $0x68] sm:$0xff]
        %v328 = vld [vmem:[%s268 + $0x70] sm:$0xff]
        %v329 = vld [vmem:[%s268 + $0x78] sm:$0xff]
        %v330 = vld [vmem:[%s268 + $0x80] sm:$0xff]
        %v331 = vld [vmem:[%s268 + $0x88] sm:$0xff]
        %v332 = vld [vmem:[%s268 + $0x90] sm:$0xff]
        %v333 = vld [vmem:[%s268 + $0x98] sm:$0xff]
        %v334 = vld [vmem:[%s268 + $0xa0] sm:$0xff]
        %v335 = vld [vmem:[%s268 + $0xa8] sm:$0xff]
        %v336 = vld [vmem:[%s268 + $0xb0] sm:$0xff]
        %v337 = vld [vmem:[%s268 + $0xb8] sm:$0xff]
        %v338 = vld [vmem:[%s268 + $0xc0] sm:$0xff]
        %v339 = vld [vmem:[%s268 + $0xc8] sm:$0xff]
        %v340 = vld [vmem:[%s268 + $0xd0] sm:$0xff]
        %v341 = vld [vmem:[%s268 + $0xd8] sm:$0xff]
        %v342 = vld [vmem:[%s268 + $0xe0] sm:$0xff]
        %v343 = vld [vmem:[%s268 + $0xe8] sm:$0xff]
        %v344 = vld [vmem:[%s268 + $0xf0] sm:$0xff]
        %v345 = vld [vmem:[%s268 + $0xf8] sm:$0xff]
        %v346 = vld [vmem:[%s268 + $0x100] sm:$0xff]
        %v347 = vld [vmem:[%s268 + $0x108] sm:$0xff]
        %v348 = vld [vmem:[%s268 + $0x110] sm:$0xff]
        %v349 = vld [vmem:[%s268 + $0x118] sm:$0xff]
        %v350 = vld [vmem:[%s268 + $0x120] sm:$0xff]
        %v351 = vld [vmem:[%s268 + $0x128] sm:$0xff]
        %v352 = vld [vmem:[%s268 + $0x130] sm:$0xff]
        %v353 = vld [vmem:[%s268 + $0x138] sm:$0xff]
        %v354 = vld [vmem:[%s268 + $0x140] sm:$0xff]
        %v355 = vld [vmem:[%s268 + $0x148] sm:$0xff]
        %v356 = vld [vmem:[%s268 + $0x150] sm:$0xff]
        %v357 = vld [vmem:[%s268 + $0x158] sm:$0xff]
        %v358 = vld [vmem:[%s268 + $0x160] sm:$0xff]
        %v359 = vld [vmem:[%s268 + $0x168] sm:$0xff]
        %v360 = vld [vmem:[%s268 + $0x170] sm:$0xff]
        %v361 = vld [vmem:[%s268 + $0x178] sm:$0xff]
        %v362 = vld [vmem:[%s268 + $0x180] sm:$0xff]
        %v363 = vld [vmem:[%s268 + $0x188] sm:$0xff]
        %v364 = vld [vmem:[%s268 + $0x190] sm:$0xff]
        %v365 = vld [vmem:[%s268 + $0x198] sm:$0xff]
        %v366 = vld [vmem:[%s268 + $0x1a0] sm:$0xff]
        %v367 = vld [vmem:[%s268 + $0x1a8] sm:$0xff]
        %v368 = vld [vmem:[%s268 + $0x1b0] sm:$0xff]
        %v369 = vld [vmem:[%s268 + $0x1b8] sm:$0xff]
        %v370 = vld [vmem:[%s268 + $0x1c0] sm:$0xff]
        %v371 = vld [vmem:[%s268 + $0x1c8] sm:$0xff]
        %v372 = vld [vmem:[%s268 + $0x1d0] sm:$0xff]
        %v373 = vld [vmem:[%s268 + $0x1d8] sm:$0xff]
        %v374 = vld [vmem:[%s268 + $0x1e0] sm:$0xff]
        %v375 = vld [vmem:[%s268 + $0x1e8] sm:$0xff]
        %v376 = vld [vmem:[%s268 + $0x1f0] sm:$0xff]
        %v377 = vld [vmem:[%s268 + $0x1f8] sm:$0xff]
        %v378 = vld [vmem:[%s268 + $0x200] sm:$0xff]
        %v379 = vld [vmem:[%s268 + $0x208] sm:$0xff]
        %v380 = vld [vmem:[%s268 + $0x210] sm:$0xff]
        %v381 = vld [vmem:[%s268 + $0x218] sm:$0xff]
        %v382 = vld [vmem:[%s268 + $0x220] sm:$0xff]
        %v383 = vld [vmem:[%s268 + $0x228] sm:$0xff]
        %v384 = vld [vmem:[%s268 + $0x230] sm:$0xff]
        %v385 = vld [vmem:[%s268 + $0x238] sm:$0xff]
        %v386 = vld [vmem:[%s268 + $0x240] sm:$0xff]
        %v387 = vld [vmem:[%s268 + $0x248] sm:$0xff]
        %v388 = vld [vmem:[%s268 + $0x250] sm:$0xff]
        %v389 = vld [vmem:[%s268 + $0x258] sm:$0xff]
        %v390 = vld [vmem:[%s268 + $0x260] sm:$0xff]
        %v391 = vld [vmem:[%s268 + $0x268] sm:$0xff]
        %v392 = vld [vmem:[%s268 + $0x270] sm:$0xff]
        %v393 = vld [vmem:[%s268 + $0x278] sm:$0xff]
        %v394 = vld [vmem:[%s268 + $0x280] sm:$0xff]
        %v395 = vld [vmem:[%s268 + $0x288] sm:$0xff]
        %v396 = vld [vmem:[%s268 + $0x290] sm:$0xff]
        %v397 = vld [vmem:[%s268 + $0x298] sm:$0xff]
        %v398 = vld [vmem:[%s268 + $0x2a0] sm:$0xff]
        %v399 = vld [vmem:[%s268 + $0x2a8] sm:$0xff]
        %v400 = vld [vmem:[%s268 + $0x2b0] sm:$0xff]
        %v401 = vld [vmem:[%s268 + $0x2b8] sm:$0xff]
        %v402 = vld [vmem:[%s268 + $0x2c0] sm:$0xff]
        %v403 = vld [vmem:[%s268 + $0x2c8] sm:$0xff]
        %v404 = vld [vmem:[%s268 + $0x2d0] sm:$0xff]
        %v405 = vld [vmem:[%s268 + $0x2d8] sm:$0xff]
        %v406 = vld [vmem:[%s268 + $0x2e0] sm:$0xff]
        %v407 = vld [vmem:[%s268 + $0x2e8] sm:$0xff]
        %v408 = vld [vmem:[%s268 + $0x2f0] sm:$0xff]
        %v409 = vld [vmem:[%s268 + $0x2f8] sm:$0xff]
        %v410 = vld [vmem:[%s268 + $0x300] sm:$0xff]
        %v411 = vld [vmem:[%s268 + $0x308] sm:$0xff]
        %v412 = vld [vmem:[%s268 + $0x310] sm:$0xff]
        %v413 = vld [vmem:[%s268 + $0x318] sm:$0xff]
        %v414 = vld [vmem:[%s268 + $0x320] sm:$0xff]
        %v415 = vld [vmem:[%s268 + $0x328] sm:$0xff]
        %v416 = vld [vmem:[%s268 + $0x330] sm:$0xff]
        %v417 = vld [vmem:[%s268 + $0x338] sm:$0xff]
        %v418 = vld [vmem:[%s268 + $0x340] sm:$0xff]
        %v419 = vld [vmem:[%s268 + $0x348] sm:$0xff]
        %v420 = vld [vmem:[%s268 + $0x350] sm:$0xff]
        %v421 = vld [vmem:[%s268 + $0x358] sm:$0xff]
        %v422 = vld [vmem:[%s268 + $0x360] sm:$0xff]
        %v423 = vld [vmem:[%s268 + $0x368] sm:$0xff]
        %v424 = vld [vmem:[%s268 + $0x370] sm:$0xff]
        %v425 = vld [vmem:[%s268 + $0x378] sm:$0xff]
        %v442 = vunpack.c.l.b16 %v298
        %v443 = vunpack.c.h.b16 %v298
        %v444 = vunpack.c.l.b16 %v299
        %v445 = vunpack.c.h.b16 %v299
        %v446 = vunpack.c.l.b16 %v300
        %v447 = vunpack.c.h.b16 %v300
        %v448 = vunpack.c.l.b16 %v301
        %v449 = vunpack.c.l.b16 %v302
        %v450 = vunpack.c.h.b16 %v302
        %v451 = vunpack.c.l.b16 %v303
        %v452 = vunpack.c.h.b16 %v303
        %v453 = vunpack.c.l.b16 %v304
        %v454 = vunpack.c.h.b16 %v304
        %v455 = vunpack.c.l.b16 %v305
        %v456 = vunpack.c.l.b16 %v306
        %v457 = vunpack.c.h.b16 %v306
        %v458 = vunpack.c.l.b16 %v307
        %v459 = vunpack.c.h.b16 %v307
        %v460 = vunpack.c.l.b16 %v308
        %v461 = vunpack.c.h.b16 %v308
        %v462 = vunpack.c.l.b16 %v309
        %v463 = vunpack.c.l.b16 %v310
        %v464 = vunpack.c.h.b16 %v310
        %v465 = vunpack.c.l.b16 %v311
        %v466 = vunpack.c.h.b16 %v311
        %v467 = vunpack.c.l.b16 %v312
        %v468 = vunpack.c.h.b16 %v312
        %v469 = vunpack.c.l.b16 %v313
        %v470 = vpack.c.b16 %v449, %v442
        %v471 = vpack.c.b16 %v450, %v443
        %v472 = vpack.c.b16 %v451, %v444
        %v473 = vpack.c.b16 %v452, %v445
        %v474 = vpack.c.b16 %v453, %v446
        %v475 = vpack.c.b16 %v454, %v447
        %v476 = vpack.c.b16 %v455, %v448
        %v477 = vpack.c.b16 %v463, %v456
        %v478 = vpack.c.b16 %v464, %v457
        %v479 = vpack.c.b16 %v465, %v458
        %v480 = vpack.c.b16 %v466, %v459
        %v481 = vpack.c.b16 %v467, %v460
        %v482 = vpack.c.b16 %v468, %v461
        %v483 = vpack.c.b16 %v469, %v462
        %v610 = vunpack.c.l.b16 %v314
        %v611 = vunpack.c.h.b16 %v314
        %v612 = vunpack.c.l.b16 %v315
        %v613 = vunpack.c.h.b16 %v315
        %v614 = vunpack.c.l.b16 %v316
        %v615 = vunpack.c.h.b16 %v316
        %v616 = vunpack.c.l.b16 %v317
        %v617 = vunpack.c.h.b16 %v317
        %v618 = vunpack.c.l.b16 %v318
        %v619 = vunpack.c.h.b16 %v318
        %v620 = vunpack.c.l.b16 %v319
        %v621 = vunpack.c.h.b16 %v319
        %v622 = vunpack.c.l.b16 %v320
        %v623 = vunpack.c.h.b16 %v320
        %v624 = vunpack.c.l.b16 %v321
        %v625 = vunpack.c.h.b16 %v321
        %v626 = vunpack.c.l.b16 %v322
        %v627 = vunpack.c.h.b16 %v322
        %v628 = vunpack.c.l.b16 %v323
        %v629 = vunpack.c.h.b16 %v323
        %v630 = vunpack.c.l.b16 %v324
        %v631 = vunpack.c.h.b16 %v324
        %v632 = vunpack.c.l.b16 %v325
        %v633 = vunpack.c.h.b16 %v325
        %v634 = vunpack.c.l.b16 %v326
        %v635 = vunpack.c.h.b16 %v326
        %v636 = vunpack.c.l.b16 %v327
        %v637 = vunpack.c.h.b16 %v327
        %v638 = vunpack.c.l.b16 %v328
        %v639 = vunpack.c.h.b16 %v328
        %v640 = vunpack.c.l.b16 %v329
        %v641 = vunpack.c.h.b16 %v329
        %v642 = vunpack.c.l.b16 %v330
        %v643 = vunpack.c.h.b16 %v330
        %v644 = vunpack.c.l.b16 %v331
        %v645 = vunpack.c.h.b16 %v331
        %v646 = vunpack.c.l.b16 %v332
        %v647 = vunpack.c.h.b16 %v332
        %v648 = vunpack.c.l.b16 %v333
        %v649 = vunpack.c.h.b16 %v333
        %v650 = vunpack.c.l.b16 %v334
        %v651 = vunpack.c.h.b16 %v334
        %v652 = vunpack.c.l.b16 %v335
        %v653 = vunpack.c.h.b16 %v335
        %v654 = vunpack.c.l.b16 %v336
        %v655 = vunpack.c.h.b16 %v336
        %v656 = vunpack.c.l.b16 %v337
        %v657 = vunpack.c.h.b16 %v337
        %v658 = vunpack.c.l.b16 %v338
        %v659 = vunpack.c.h.b16 %v338
        %v660 = vunpack.c.l.b16 %v339
        %v661 = vunpack.c.h.b16 %v339
        %v662 = vunpack.c.l.b16 %v340
        %v663 = vunpack.c.h.b16 %v340
        %v664 = vunpack.c.l.b16 %v341
        %v665 = vunpack.c.h.b16 %v341
        %v666 = vunpack.c.l.b16 %v342
        %v667 = vunpack.c.h.b16 %v342
        %v668 = vunpack.c.l.b16 %v343
        %v669 = vunpack.c.h.b16 %v343
        %v670 = vunpack.c.l.b16 %v344
        %v671 = vunpack.c.h.b16 %v344
        %v672 = vunpack.c.l.b16 %v345
        %v673 = vunpack.c.h.b16 %v345
        %v674 = vunpack.c.l.b16 %v346
        %v675 = vunpack.c.h.b16 %v346
        %v676 = vunpack.c.l.b16 %v347
        %v677 = vunpack.c.h.b16 %v347
        %v678 = vunpack.c.l.b16 %v348
        %v679 = vunpack.c.h.b16 %v348
        %v680 = vunpack.c.l.b16 %v349
        %v681 = vunpack.c.h.b16 %v349
        %v682 = vunpack.c.l.b16 %v350
        %v683 = vunpack.c.h.b16 %v350
        %v684 = vunpack.c.l.b16 %v351
        %v685 = vunpack.c.h.b16 %v351
        %v686 = vunpack.c.l.b16 %v352
        %v687 = vunpack.c.h.b16 %v352
        %v688 = vunpack.c.l.b16 %v353
        %v689 = vunpack.c.h.b16 %v353
        %v690 = vunpack.c.l.b16 %v354
        %v691 = vunpack.c.h.b16 %v354
        %v692 = vunpack.c.l.b16 %v355
        %v693 = vunpack.c.h.b16 %v355
        %v694 = vunpack.c.l.b16 %v356
        %v695 = vunpack.c.h.b16 %v356
        %v696 = vunpack.c.l.b16 %v357
        %v697 = vunpack.c.h.b16 %v357
        %v698 = vunpack.c.l.b16 %v358
        %v699 = vunpack.c.h.b16 %v358
        %v700 = vunpack.c.l.b16 %v359
        %v701 = vunpack.c.h.b16 %v359
        %v702 = vunpack.c.l.b16 %v360
        %v703 = vunpack.c.h.b16 %v360
        %v704 = vunpack.c.l.b16 %v361
        %v705 = vunpack.c.h.b16 %v361
        %v706 = vunpack.c.l.b16 %v362
        %v707 = vunpack.c.h.b16 %v362
        %v708 = vunpack.c.l.b16 %v363
        %v709 = vunpack.c.h.b16 %v363
        %v710 = vunpack.c.l.b16 %v364
        %v711 = vunpack.c.h.b16 %v364
        %v712 = vunpack.c.l.b16 %v365
        %v713 = vunpack.c.h.b16 %v365
        %v714 = vunpack.c.l.b16 %v366
        %v715 = vunpack.c.h.b16 %v366
        %v716 = vunpack.c.l.b16 %v367
        %v717 = vunpack.c.h.b16 %v367
        %v718 = vunpack.c.l.b16 %v368
        %v719 = vunpack.c.h.b16 %v368
        %v720 = vunpack.c.l.b16 %v369
        %v721 = vunpack.c.h.b16 %v369
        %v722 = vunpack.c.l.b16 %v370
        %v723 = vunpack.c.h.b16 %v370
        %v724 = vunpack.c.l.b16 %v371
        %v725 = vunpack.c.h.b16 %v371
        %v726 = vunpack.c.l.b16 %v372
        %v727 = vunpack.c.h.b16 %v372
        %v728 = vunpack.c.l.b16 %v373
        %v729 = vunpack.c.h.b16 %v373
        %v730 = vunpack.c.l.b16 %v374
        %v731 = vunpack.c.h.b16 %v374
        %v732 = vunpack.c.l.b16 %v375
        %v733 = vunpack.c.h.b16 %v375
        %v734 = vunpack.c.l.b16 %v376
        %v735 = vunpack.c.h.b16 %v376
        %v736 = vunpack.c.l.b16 %v377
        %v737 = vunpack.c.h.b16 %v377
        %v738 = vunpack.c.l.b16 %v378
        %v739 = vunpack.c.h.b16 %v378
        %v740 = vunpack.c.l.b16 %v379
        %v741 = vunpack.c.h.b16 %v379
        %v742 = vunpack.c.l.b16 %v380
        %v743 = vunpack.c.h.b16 %v380
        %v744 = vunpack.c.l.b16 %v381
        %v745 = vunpack.c.h.b16 %v381
        %v746 = vunpack.c.l.b16 %v382
        %v747 = vunpack.c.h.b16 %v382
        %v748 = vunpack.c.l.b16 %v383
        %v749 = vunpack.c.h.b16 %v383
        %v750 = vunpack.c.l.b16 %v384
        %v751 = vunpack.c.h.b16 %v384
        %v752 = vunpack.c.l.b16 %v385
        %v753 = vunpack.c.h.b16 %v385
        %v754 = vunpack.c.l.b16 %v386
        %v755 = vunpack.c.h.b16 %v386
        %v756 = vunpack.c.l.b16 %v387
        %v757 = vunpack.c.h.b16 %v387
        %v758 = vunpack.c.l.b16 %v388
        %v759 = vunpack.c.h.b16 %v388
        %v760 = vunpack.c.l.b16 %v389
        %v761 = vunpack.c.h.b16 %v389
        %v762 = vunpack.c.l.b16 %v390
        %v763 = vunpack.c.h.b16 %v390
        %v764 = vunpack.c.l.b16 %v391
        %v765 = vunpack.c.h.b16 %v391
        %v766 = vunpack.c.l.b16 %v392
        %v767 = vunpack.c.h.b16 %v392
        %v768 = vunpack.c.l.b16 %v393
        %v769 = vunpack.c.h.b16 %v393
        %v770 = vunpack.c.l.b16 %v394
        %v771 = vunpack.c.h.b16 %v394
        %v772 = vunpack.c.l.b16 %v395
        %v773 = vunpack.c.h.b16 %v395
        %v774 = vunpack.c.l.b16 %v396
        %v775 = vunpack.c.h.b16 %v396
        %v776 = vunpack.c.l.b16 %v397
        %v777 = vunpack.c.h.b16 %v397
        %v778 = vunpack.c.l.b16 %v398
        %v779 = vunpack.c.h.b16 %v398
        %v780 = vunpack.c.l.b16 %v399
        %v781 = vunpack.c.h.b16 %v399
        %v782 = vunpack.c.l.b16 %v400
        %v783 = vunpack.c.h.b16 %v400
        %v784 = vunpack.c.l.b16 %v401
        %v785 = vunpack.c.h.b16 %v401
        %v786 = vunpack.c.l.b16 %v402
        %v787 = vunpack.c.h.b16 %v402
        %v788 = vunpack.c.l.b16 %v403
        %v789 = vunpack.c.h.b16 %v403
        %v790 = vunpack.c.l.b16 %v404
        %v791 = vunpack.c.h.b16 %v404
        %v792 = vunpack.c.l.b16 %v405
        %v793 = vunpack.c.h.b16 %v405
        %v794 = vunpack.c.l.b16 %v406
        %v795 = vunpack.c.h.b16 %v406
        %v796 = vunpack.c.l.b16 %v407
        %v797 = vunpack.c.h.b16 %v407
        %v798 = vunpack.c.l.b16 %v408
        %v799 = vunpack.c.h.b16 %v408
        %v800 = vunpack.c.l.b16 %v409
        %v801 = vunpack.c.h.b16 %v409
        %v802 = vunpack.c.l.b16 %v410
        %v803 = vunpack.c.h.b16 %v410
        %v804 = vunpack.c.l.b16 %v411
        %v805 = vunpack.c.h.b16 %v411
        %v806 = vunpack.c.l.b16 %v412
        %v807 = vunpack.c.h.b16 %v412
        %v808 = vunpack.c.l.b16 %v413
        %v809 = vunpack.c.h.b16 %v413
        %v810 = vunpack.c.l.b16 %v414
        %v811 = vunpack.c.h.b16 %v414
        %v812 = vunpack.c.l.b16 %v415
        %v813 = vunpack.c.h.b16 %v415
        %v814 = vunpack.c.l.b16 %v416
        %v815 = vunpack.c.h.b16 %v416
        %v816 = vunpack.c.l.b16 %v417
        %v817 = vunpack.c.h.b16 %v417
        %v818 = vunpack.c.l.b16 %v418
        %v819 = vunpack.c.h.b16 %v418
        %v820 = vunpack.c.l.b16 %v419
        %v821 = vunpack.c.h.b16 %v419
        %v822 = vunpack.c.l.b16 %v420
        %v823 = vunpack.c.h.b16 %v420
        %v824 = vunpack.c.l.b16 %v421
        %v825 = vunpack.c.h.b16 %v421
        %v826 = vunpack.c.l.b16 %v422
        %v827 = vunpack.c.h.b16 %v422
        %v828 = vunpack.c.l.b16 %v423
        %v829 = vunpack.c.h.b16 %v423
        %v830 = vunpack.c.l.b16 %v424
        %v831 = vunpack.c.h.b16 %v424
        %v832 = vunpack.c.l.b16 %v425
        %v833 = vunpack.c.h.b16 %v425
        %v834 = vpack.c.b16 %v612, %v610
        %v835 = vpack.c.b16 %v613, %v611
        %v836 = vpack.c.b16 %v616, %v614
        %v837 = vpack.c.b16 %v617, %v615
        %v838 = vpack.c.b16 %v620, %v618
        %v839 = vpack.c.b16 %v621, %v619
        %v840 = vpack.c.b16 %v624, %v622
        %v841 = vpack.c.b16 %v625, %v623
        %v842 = vpack.c.b16 %v628, %v626
        %v843 = vpack.c.b16 %v629, %v627
        %v844 = vpack.c.b16 %v632, %v630
        %v845 = vpack.c.b16 %v633, %v631
        %v846 = vpack.c.b16 %v636, %v634
        %v847 = vpack.c.b16 %v637, %v635
        %v848 = vpack.c.b16 %v640, %v638
        %v849 = vpack.c.b16 %v641, %v639
        %v850 = vpack.c.b16 %v644, %v642
        %v851 = vpack.c.b16 %v645, %v643
        %v852 = vpack.c.b16 %v648, %v646
        %v853 = vpack.c.b16 %v649, %v647
        %v854 = vpack.c.b16 %v652, %v650
        %v855 = vpack.c.b16 %v653, %v651
        %v856 = vpack.c.b16 %v656, %v654
        %v857 = vpack.c.b16 %v657, %v655
        %v858 = vpack.c.b16 %v660, %v658
        %v859 = vpack.c.b16 %v661, %v659
        %v860 = vpack.c.b16 %v664, %v662
        %v861 = vpack.c.b16 %v665, %v663
        %v862 = vpack.c.b16 %v668, %v666
        %v863 = vpack.c.b16 %v669, %v667
        %v864 = vpack.c.b16 %v672, %v670
        %v865 = vpack.c.b16 %v673, %v671
        %v866 = vpack.c.b16 %v676, %v674
        %v867 = vpack.c.b16 %v677, %v675
        %v868 = vpack.c.b16 %v680, %v678
        %v869 = vpack.c.b16 %v681, %v679
        %v870 = vpack.c.b16 %v684, %v682
        %v871 = vpack.c.b16 %v685, %v683
        %v872 = vpack.c.b16 %v688, %v686
        %v873 = vpack.c.b16 %v689, %v687
        %v874 = vpack.c.b16 %v692, %v690
        %v875 = vpack.c.b16 %v693, %v691
        %v876 = vpack.c.b16 %v696, %v694
        %v877 = vpack.c.b16 %v697, %v695
        %v878 = vpack.c.b16 %v700, %v698
        %v879 = vpack.c.b16 %v701, %v699
        %v880 = vpack.c.b16 %v704, %v702
        %v881 = vpack.c.b16 %v705, %v703
        %v882 = vpack.c.b16 %v708, %v706
        %v883 = vpack.c.b16 %v709, %v707
        %v884 = vpack.c.b16 %v712, %v710
        %v885 = vpack.c.b16 %v713, %v711
        %v886 = vpack.c.b16 %v716, %v714
        %v887 = vpack.c.b16 %v717, %v715
        %v888 = vpack.c.b16 %v720, %v718
        %v889 = vpack.c.b16 %v721, %v719
        %v890 = vpack.c.b16 %v724, %v722
        %v891 = vpack.c.b16 %v725, %v723
        %v892 = vpack.c.b16 %v728, %v726
        %v893 = vpack.c.b16 %v729, %v727
        %v894 = vpack.c.b16 %v732, %v730
        %v895 = vpack.c.b16 %v733, %v731
        %v896 = vpack.c.b16 %v736, %v734
        %v897 = vpack.c.b16 %v737, %v735
        %v898 = vpack.c.b16 %v740, %v738
        %v899 = vpack.c.b16 %v741, %v739
        %v900 = vpack.c.b16 %v744, %v742
        %v901 = vpack.c.b16 %v745, %v743
        %v902 = vpack.c.b16 %v748, %v746
        %v903 = vpack.c.b16 %v749, %v747
        %v904 = vpack.c.b16 %v752, %v750
        %v905 = vpack.c.b16 %v753, %v751
        %v906 = vpack.c.b16 %v756, %v754
        %v907 = vpack.c.b16 %v757, %v755
        %v908 = vpack.c.b16 %v760, %v758
        %v909 = vpack.c.b16 %v761, %v759
        %v910 = vpack.c.b16 %v764, %v762
        %v911 = vpack.c.b16 %v765, %v763
        %v912 = vpack.c.b16 %v768, %v766
        %v913 = vpack.c.b16 %v769, %v767
        %v914 = vpack.c.b16 %v772, %v770
        %v915 = vpack.c.b16 %v773, %v771
        %v916 = vpack.c.b16 %v776, %v774
        %v917 = vpack.c.b16 %v777, %v775
        %v918 = vpack.c.b16 %v780, %v778
        %v919 = vpack.c.b16 %v781, %v779
        %v920 = vpack.c.b16 %v784, %v782
        %v921 = vpack.c.b16 %v785, %v783
        %v922 = vpack.c.b16 %v788, %v786
        %v923 = vpack.c.b16 %v789, %v787
        %v924 = vpack.c.b16 %v792, %v790
        %v925 = vpack.c.b16 %v793, %v791
        %v926 = vpack.c.b16 %v796, %v794
        %v927 = vpack.c.b16 %v797, %v795
        %v928 = vpack.c.b16 %v800, %v798
        %v929 = vpack.c.b16 %v801, %v799
        %v930 = vpack.c.b16 %v804, %v802
        %v931 = vpack.c.b16 %v805, %v803
        %v932 = vpack.c.b16 %v808, %v806
        %v933 = vpack.c.b16 %v809, %v807
        %v934 = vpack.c.b16 %v812, %v810
        %v935 = vpack.c.b16 %v813, %v811
        %v936 = vpack.c.b16 %v816, %v814
        %v937 = vpack.c.b16 %v817, %v815
        %v938 = vpack.c.b16 %v820, %v818
        %v939 = vpack.c.b16 %v821, %v819
        %v940 = vpack.c.b16 %v824, %v822
        %v941 = vpack.c.b16 %v825, %v823
        %v942 = vpack.c.b16 %v828, %v826
        %v943 = vpack.c.b16 %v829, %v827
        %v944 = vpack.c.b16 %v832, %v830
        %v945 = vpack.c.b16 %v833, %v831
        %1058 = vmatprep.subr.bf16.mxu0 %v835
        %1059 = vmatpush1.bf16.msra.mxu0 %v834
        %1060 = vmatprep.subr.bf16.mxu0 %v837
        %1061 = vmatpush1.bf16.msra.mxu0 %v836
        %1062 = vmatprep.subr.bf16.mxu0 %v839
        %1063 = vmatpush1.bf16.msra.mxu0 %v838
        %1064 = vmatprep.subr.bf16.mxu0 %v841
        %1065 = vmatpush1.bf16.msra.mxu0 %v840
        %1066 = vmatprep.subr.bf16.mxu0 %v843
        %1067 = vmatpush1.bf16.msra.mxu0 %v842
        %1068 = vmatprep.subr.bf16.mxu0 %v845
        %1069 = vmatpush1.bf16.msra.mxu0 %v844
        %1070 = vmatprep.subr.bf16.mxu0 %v847
        %1071 = vmatpush1.bf16.msra.mxu0 %v846
        %1072 = vmatprep.subr.bf16.mxu0 %v849
        %1073 = vmatpush1.bf16.msra.mxu0 %v848
        %1074 = vmatprep.subr.bf16.mxu0 %v851
        %1075 = vmatpush1.bf16.msra.mxu0 %v850
        %1076 = vmatprep.subr.bf16.mxu0 %v853
        %1077 = vmatpush1.bf16.msra.mxu0 %v852
        %1078 = vmatprep.subr.bf16.mxu0 %v855
        %1079 = vmatpush1.bf16.msra.mxu0 %v854
        %1080 = vmatprep.subr.bf16.mxu0 %v857
        %1081 = vmatpush1.bf16.msra.mxu0 %v856
        %1082 = vmatprep.subr.bf16.mxu0 %v859
        %1083 = vmatpush1.bf16.msra.mxu0 %v858
        %1084 = vmatprep.subr.bf16.mxu0 %v861
        %1085 = vmatpush1.bf16.msra.mxu0 %v860
        %1086 = vmatprep.subr.bf16.mxu0 %v863
        %1087 = vmatpush1.bf16.msra.mxu0 %v862
        %1088 = vmatprep.subr.bf16.mxu0 %v865
        %1089 = vmatpush1.bf16.msra.mxu0 %v864
        %1090 = vmatprep.mubr.bf16.mxu0 %v471
        %1091 = vmatmul.mubr.bf16.gmra.mrb[0].mxu0 %v470
        %v1092 = vpop.f32.mrb[0].mxu0
        %v1093 = vadd.f32 0.0, %v1092
        %v1094 = vpop.f32.mrb[0].mxu0
        %v1095 = vadd.f32 0.0, %v1094
        %v1096 = vpop.f32.mrb[0].mxu0
        %v1097 = vadd.f32 0.0, %v1096
        %v1098 = vpop.f32.mrb[0].mxu0
        %v1099 = vadd.f32 0.0, %v1098
        %1100 = vmatprep.mubr.bf16.mxu0 %v478
        %1101 = vmatmul.mubr.bf16.gmra.mrb[0].mxu0 %v477
        %v1102 = vpop.f32.mrb[0].mxu0
        %v1103 = vadd.f32 0.0, %v1102
        %v1104 = vpop.f32.mrb[0].mxu0
        %v1105 = vadd.f32 0.0, %v1104
        %v1106 = vpop.f32.mrb[0].mxu0
        %v1107 = vadd.f32 0.0, %v1106
        %v1108 = vpop.f32.mrb[0].mxu0
        %v1109 = vadd.f32 0.0, %v1108
        %1110 = vdwg.mxu0
        %1111 = vmatprep.subr.bf16.mxu0 %v867
        %1112 = vmatpush1.bf16.msra.mxu0 %v866
        %1113 = vmatprep.subr.bf16.mxu0 %v869
        %1114 = vmatpush1.bf16.msra.mxu0 %v868
        %1115 = vmatprep.subr.bf16.mxu0 %v871
        %1116 = vmatpush1.bf16.msra.mxu0 %v870
        %1117 = vmatprep.subr.bf16.mxu0 %v873
        %1118 = vmatpush1.bf16.msra.mxu0 %v872
        %1119 = vmatprep.subr.bf16.mxu0 %v875
        %1120 = vmatpush1.bf16.msra.mxu0 %v874
        %1121 = vmatprep.subr.bf16.mxu0 %v877
        %1122 = vmatpush1.bf16.msra.mxu0 %v876
        %1123 = vmatprep.subr.bf16.mxu0 %v879
        %1124 = vmatpush1.bf16.msra.mxu0 %v878
        %1125 = vmatprep.subr.bf16.mxu0 %v881
        %1126 = vmatpush1.bf16.msra.mxu0 %v880
        %1127 = vmatprep.subr.bf16.mxu0 %v883
        %1128 = vmatpush1.bf16.msra.mxu0 %v882
        %1129 = vmatprep.subr.bf16.mxu0 %v885
        %1130 = vmatpush1.bf16.msra.mxu0 %v884
        %1131 = vmatprep.subr.bf16.mxu0 %v887
        %1132 = vmatpush1.bf16.msra.mxu0 %v886
        %1133 = vmatprep.subr.bf16.mxu0 %v889
        %1134 = vmatpush1.bf16.msra.mxu0 %v888
        %1135 = vmatprep.subr.bf16.mxu0 %v891
        %1136 = vmatpush1.bf16.msra.mxu0 %v890
        %1137 = vmatprep.subr.bf16.mxu0 %v893
        %1138 = vmatpush1.bf16.msra.mxu0 %v892
        %1139 = vmatprep.subr.bf16.mxu0 %v895
        %1140 = vmatpush1.bf16.msra.mxu0 %v894
        %1141 = vmatprep.subr.bf16.mxu0 %v897
        %1142 = vmatpush1.bf16.msra.mxu0 %v896
        %1143 = vmatprep.mubr.bf16.mxu0 %v473
        %1144 = vmatmul.mubr.bf16.gmra.mrb[0].mxu0 %v472
        %v1145 = vpop.f32.mrb[0].mxu0
        %v1146 = vadd.f32 %v1093, %v1145
        %v1147 = vpop.f32.mrb[0].mxu0
        %v1148 = vadd.f32 %v1095, %v1147
        %v1149 = vpop.f32.mrb[0].mxu0
        %v1150 = vadd.f32 %v1097, %v1149
        %v1151 = vpop.f32.mrb[0].mxu0
        %v1152 = vadd.f32 %v1099, %v1151
        %1153 = vmatprep.mubr.bf16.mxu0 %v480
        %1154 = vmatmul.mubr.bf16.gmra.mrb[0].mxu0 %v479
        %v1155 = vpop.f32.mrb[0].mxu0
        %v1156 = vadd.f32 %v1103, %v1155
        %v1157 = vpop.f32.mrb[0].mxu0
        %v1158 = vadd.f32 %v1105, %v1157
        %v1159 = vpop.f32.mrb[0].mxu0
        %v1160 = vadd.f32 %v1107, %v1159
        %v1161 = vpop.f32.mrb[0].mxu0
        %v1162 = vadd.f32 %v1109, %v1161
        %1163 = vdwg.mxu0
        %1164 = vmatprep.subr.bf16.mxu0 %v899
        %1165 = vmatpush1.bf16.msra.mxu0 %v898
        %1166 = vmatprep.subr.bf16.mxu0 %v901
        %1167 = vmatpush1.bf16.msra.mxu0 %v900
        %1168 = vmatprep.subr.bf16.mxu0 %v903
        %1169 = vmatpush1.bf16.msra.mxu0 %v902
        %1170 = vmatprep.subr.bf16.mxu0 %v905
        %1171 = vmatpush1.bf16.msra.mxu0 %v904
        %1172 = vmatprep.subr.bf16.mxu0 %v907
        %1173 = vmatpush1.bf16.msra.mxu0 %v906
        %1174 = vmatprep.subr.bf16.mxu0 %v909
        %1175 = vmatpush1.bf16.msra.mxu0 %v908
        %1176 = vmatprep.subr.bf16.mxu0 %v911
        %1177 = vmatpush1.bf16.msra.mxu0 %v910
        %1178 = vmatprep.subr.bf16.mxu0 %v913
        %1179 = vmatpush1.bf16.msra.mxu0 %v912
        %1180 = vmatprep.subr.bf16.mxu0 %v915
        %1181 = vmatpush1.bf16.msra.mxu0 %v914
        %1182 = vmatprep.subr.bf16.mxu0 %v917
        %1183 = vmatpush1.bf16.msra.mxu0 %v916
        %1184 = vmatprep.subr.bf16.mxu0 %v919
        %1185 = vmatpush1.bf16.msra.mxu0 %v918
        %1186 = vmatprep.subr.bf16.mxu0 %v921
        %1187 = vmatpush1.bf16.msra.mxu0 %v920
        %1188 = vmatprep.subr.bf16.mxu0 %v923
        %1189 = vmatpush1.bf16.msra.mxu0 %v922
        %1190 = vmatprep.subr.bf16.mxu0 %v925
        %1191 = vmatpush1.bf16.msra.mxu0 %v924
        %1192 = vmatprep.subr.bf16.mxu0 %v927
        %1193 = vmatpush1.bf16.msra.mxu0 %v926
        %1194 = vmatprep.subr.bf16.mxu0 %v929
        %1195 = vmatpush1.bf16.msra.mxu0 %v928
        %1196 = vmatprep.mubr.bf16.mxu0 %v475
        %1197 = vmatmul.mubr.bf16.gmra.mrb[0].mxu0 %v474
        %v1198 = vpop.f32.mrb[0].mxu0
        %v1199 = vadd.f32 %v1146, %v1198
        %v1200 = vpop.f32.mrb[0].mxu0
        %v1201 = vadd.f32 %v1148, %v1200
        %v1202 = vpop.f32.mrb[0].mxu0
        %v1203 = vadd.f32 %v1150, %v1202
        %v1204 = vpop.f32.mrb[0].mxu0
        %v1205 = vadd.f32 %v1152, %v1204
        %1206 = vmatprep.mubr.bf16.mxu0 %v482
        %1207 = vmatmul.mubr.bf16.gmra.mrb[0].mxu0 %v481
        %v1208 = vpop.f32.mrb[0].mxu0
        %v1209 = vadd.f32 %v1156, %v1208
        %v1210 = vpop.f32.mrb[0].mxu0
        %v1211 = vadd.f32 %v1158, %v1210
        %v1212 = vpop.f32.mrb[0].mxu0
        %v1213 = vadd.f32 %v1160, %v1212
        %v1214 = vpop.f32.mrb[0].mxu0
        %v1215 = vadd.f32 %v1162, %v1214
        %1216 = vdwg.mxu0
        %1217 = vmatprep.subr.bf16.mxu0 %v931
        %1218 = vmatpush1.bf16.msra.mxu0 %v930
        %1219 = vmatprep.subr.bf16.mxu0 %v933
        %1220 = vmatpush1.bf16.msra.mxu0 %v932
        %1221 = vmatprep.subr.bf16.mxu0 %v935
        %1222 = vmatpush1.bf16.msra.mxu0 %v934
        %1223 = vmatprep.subr.bf16.mxu0 %v937
        %1224 = vmatpush1.bf16.msra.mxu0 %v936
        %1225 = vmatprep.subr.bf16.mxu0 %v939
        %1226 = vmatpush1.bf16.msra.mxu0 %v938
        %1227 = vmatprep.subr.bf16.mxu0 %v941
        %1228 = vmatpush1.bf16.msra.mxu0 %v940
        %1229 = vmatprep.subr.bf16.mxu0 %v943
        %1230 = vmatpush1.bf16.msra.mxu0 %v942
        %1231 = vmatprep.subr.bf16.mxu0 %v945
        %1232 = vmatpush1.bf16.msra.mxu0 %v944
        %1233 = vmatprep.subr.bf16.mxu0 0
        %1234 = vmatpush1.bf16.msra.mxu0 0
        %1235 = vmatprep.subr.bf16.mxu0 0
        %1236 = vmatpush1.bf16.msra.mxu0 0
        %1237 = vmatprep.subr.bf16.mxu0 0
        %1238 = vmatpush1.bf16.msra.mxu0 0
        %1239 = vmatprep.subr.bf16.mxu0 0
        %1240 = vmatpush1.bf16.msra.mxu0 0
        %1241 = vmatprep.subr.bf16.mxu0 0
        %1242 = vmatpush1.bf16.msra.mxu0 0
        %1243 = vmatprep.subr.bf16.mxu0 0
        %1244 = vmatpush1.bf16.msra.mxu0 0
        %1245 = vmatprep.subr.bf16.mxu0 0
        %1246 = vmatpush1.bf16.msra.mxu0 0
        %1247 = vmatprep.subr.bf16.mxu0 0
        %1248 = vmatpush1.bf16.msra.mxu0 0
        %1249 = vmatprep.mubr.bf16.mxu0 0
        %1250 = vmatmul.mubr.bf16.gmra.mrb[0].mxu0 %v476
        %v1251 = vpop.f32.mrb[0].mxu0
        %v1252 = vadd.f32 %v1199, %v1251
        %v1253 = vpop.f32.mrb[0].mxu0
        %v1254 = vadd.f32 %v1201, %v1253
        %v1255 = vpop.f32.mrb[0].mxu0
        %v1256 = vadd.f32 %v1203, %v1255
        %v1257 = vpop.f32.mrb[0].mxu0
        %v1258 = vadd.f32 %v1205, %v1257
        %1259 = vmatprep.mubr.bf16.mxu0 0
        %1260 = vmatmul.mubr.bf16.gmra.mrb[0].mxu0 %v483
        %v1261 = vpop.f32.mrb[0].mxu0
        %v1262 = vadd.f32 %v1209, %v1261
        %v1263 = vpop.f32.mrb[0].mxu0
        %v1264 = vadd.f32 %v1211, %v1263
        %v1265 = vpop.f32.mrb[0].mxu0
        %v1266 = vadd.f32 %v1213, %v1265
        %v1267 = vpop.f32.mrb[0].mxu0
        %v1268 = vadd.f32 %v1215, %v1267
        %1269 = vdwg.mxu0
        %v1270 = vadd.f32 %v290, %v1252
        %v1271 = vadd.f32 %v291, %v1254
        %v1272 = vadd.f32 %v292, %v1256
        %v1273 = vadd.f32 %v293, %v1258
        %v1274 = vadd.f32 %v294, %v1262
        %v1275 = vadd.f32 %v295, %v1264
        %v1276 = vadd.f32 %v296, %v1266
        %v1277 = vadd.f32 %v297, %v1268
        %1278 = vst [vmem:[#allocation2] sm:$0xff] %v1270
        %1279 = vst [vmem:[#allocation2 + $0x8] sm:$0xff] %v1271
        %1280 = vst [vmem:[#allocation2 + $0x10] sm:$0xff] %v1272
        %1281 = vst [vmem:[#allocation2 + $0x18] sm:$0xff] %v1273
        %1282 = vst [vmem:[#allocation2 + $0x20] sm:$0xff] %v1274
        %1283 = vst [vmem:[#allocation2 + $0x28] sm:$0xff] %v1275
        %1284 = vst [vmem:[#allocation2 + $0x30] sm:$0xff] %v1276
        %1285 = vst [vmem:[#allocation2 + $0x38] sm:$0xff] %v1277
        %p1286 = scmp.eq.s32.totalorder %s19, 1
        // Predicated region
        $region63: #{reduction_a.8} parent=53 // pred_check
          %p1287 = pneg %p1286
        $region64: #{reduction_a.8} parent=53 // pred_check_branch
          %1289 = sbr.rel (%p1287) target = $region66
        $region65: #{reduction_a.8} parent=53 // pred_region
          %v1290 = vld [vmem:[#allocation2] sm:$0xff]
          %v1291 = vld [vmem:[#allocation2 + $0x8] sm:$0xff]
          %v1292 = vld [vmem:[#allocation2 + $0x10] sm:$0xff]
          %v1293 = vld [vmem:[#allocation2 + $0x18] sm:$0xff]
          %v1294 = vld [vmem:[#allocation2 + $0x20] sm:$0xff]
          %v1295 = vld [vmem:[#allocation2 + $0x28] sm:$0xff]
          %v1296 = vld [vmem:[#allocation2 + $0x30] sm:$0xff]
          %v1297 = vld [vmem:[#allocation2 + $0x38] sm:$0xff]
          %v1298 = vld [vmem:[%s2] sm:$0x3]
          %v1300 = vlaneseq
          %v1301 = vshrl.u32 %v1300, 7
          %v1302 = vsub.s32 0, %v1301
          %v1303 = vrot.slane %v1298, %v1302
          %v1304 = vlaneseq
          %v1305 = vshrl.u32 %v1304, 7
          %v1306 = vsub.s32 1, %v1305
          %v1307 = vrot.slane %v1298, %v1306
          %v1310 = vadd.f32 %v1290, %v1303
          %v1311 = vadd.f32 %v1291, %v1307
          %v1312 = vadd.f32 %v1292, %v1303
          %v1313 = vadd.f32 %v1293, %v1307
          %v1314 = vadd.f32 %v1294, %v1303
          %v1315 = vadd.f32 %v1295, %v1307
          %v1316 = vadd.f32 %v1296, %v1303
          %v1317 = vadd.f32 %v1297, %v1307
          %v1318 = vmax.f32 %v1310, 0.0
          %v1319 = vmax.f32 %v1311, 0.0
          %v1320 = vmax.f32 %v1312, 0.0
          %v1321 = vmax.f32 %v1313, 0.0
          %v1322 = vmax.f32 %v1314, 0.0
          %v1323 = vmax.f32 %v1315, 0.0
          %v1324 = vmax.f32 %v1316, 0.0
          %v1325 = vmax.f32 %v1317, 0.0
          %1326 = vst [vmem:[%s275] sm:$0xff] %v1318
          %1327 = vst [vmem:[%s275 + $0x8] sm:$0xff] %v1319
          %1328 = vst [vmem:[%s275 + $0x10] sm:$0xff] %v1320
          %1329 = vst [vmem:[%s275 + $0x18] sm:$0xff] %v1321
          %1330 = vst [vmem:[%s275 + $0x20] sm:$0xff] %v1322
          %1331 = vst [vmem:[%s275 + $0x28] sm:$0xff] %v1323
          %1332 = vst [vmem:[%s275 + $0x30] sm:$0xff] %v1324
          %1333 = vst [vmem:[%s275 + $0x38] sm:$0xff] %v1325
        $region66: #{reduction_a.8} parent=53 // pred_fallthru
          _
        %s1334 = smul.u32 4, %s18
        %p1335 = scmp.lt.s32.totalorder %s1334, 3
        %s1336 = scalar_select %p1335, %s1334, 3
        %s1337 = smul.addr %s1336, 2
        %s1338 = smul.addr %s1337, 8
        %s1339 = scalar_lea.vmem %s3, %s1338
        // Predicated region
        $region67: #{reduction_a.8} parent=53 // pred_check
          %p1340 = pneg %p119
        $region68: #{reduction_a.8} parent=53 // pred_check_branch
          %1342 = sbr.rel (%p1340) target = $region70
        $region69: #{reduction_a.8} parent=53 // pred_region
          %s1343 = smul.u32 4, %s18
        $region70: #{reduction_a.8} parent=53 // pred_fallthru
          _
        // Predicated region
        $region71: #{reduction_a.8} parent=53 // pred_check
          %p1344 = pneg %p119
        $region72: #{reduction_a.8} parent=53 // pred_check_branch
          %1346 = sbr.rel (%p1344) target = $region74
        $region73: #{reduction_a.8} parent=53 // pred_region
          %s1347 = smul.u32 4, %s18
          %p1348 = scmp.lt.s32.totalorder %s1347, 3
          %s1349 = scalar_select %p1348, %s1347, 3
          %s1350 = smul.addr %s1349, 2
          %s1351 = smul.addr %s1350, 8
          %s1352 = scalar_lea.vmem %s3, %s1351
        $region74: #{reduction_a.8} parent=53 // pred_fallthru
          _
      $region54: #{reduction_a.8} parent=5 // pred_fallthru
        _
      %p1353 = scmp.le.s32.totalorder 2, %s9
      // Predicated region
      $region75: #{reduction_a.8} parent=5 // pred_check
        %p1354 = pneg %p1353
      $region76: #{reduction_a.8} parent=5 // pred_check_branch
        %1356 = sbr.rel (%p1354) target = $region78
      $region77: #{reduction_a.8} parent=5 // pred_region
        %s1357 = ssub.s32 %s9, 2
      $region78: #{reduction_a.8} parent=5 // pred_fallthru
        _
    $region6: #{reduction_a.8} parent=1 // loop_footer
      %s13 = sadd.s32 1, %s9
    $region7: #{reduction_a.8} parent=1 // loop_footer_branch
      %8 = sbr.rel target = $region3
    $region8: #{reduction_a.8} parent=1 // loop_exit
      _

// kernel: reduction_a.5
$region0: #{reduction_a.5}
  #allocation0 [shape = 'u32[]', space=smem, size = 0x4, offset = 0x4, fixed_abs, tag = 'smem constant byte address 0x4 - core index']
  #allocation1 [shape = 'u32[144,128]{1,0:T(1,128)}', space=vmem, size = 0x12000, scoped, tag = 'internal scratch']
  #allocation2 [shape = 'f32[32,384]{1,0:T(8,128)}', space=vmem, size = 0xc000, scoped, tag = 'scratch operand']
  %s0 = inlined_call_operand.vmem [shape: bf16[32,2304], index: 0, kind: input, shape index: {}]
  %s1 = inlined_call_operand.vmem [shape: bf16[2304,384], index: 1, kind: input, shape index: {}]
  %s2 = inlined_call_operand.vmem [shape: f32[1,384], index: 2, kind: input, shape index: {}]
  %s3 = inlined_call_operand.vmem [shape: f32[32,384], index: 3, kind: output, shape index: {}]
  %s4 = sld [smem:[#allocation0]]
  $region76: #{reduction_a.5} parent=0
    _
  %s6 = ssub.s32 1, %s4
  %s7 = scalar_select 0, %s6, %s4
  $region1: #{reduction_a.5} parent=0
    #allocation3 [shape = 'u8[98304]{0}', space=vmem, size = 0x18000, scoped, tag = 'input window, operand 0']
    loop: start=0, step=1, limit=5
    $region2: #{reduction_a.5} parent=1 // loop_pre_header
      _
    $region3: #{reduction_a.5} parent=1 // loop_header
      %s9 = sphi 0, %s13
      %p10 = scmp.ge.s32.totalorder %s9, 5
      %s16 = sphi 0, %s28
      %s17 = sphi 0, %s24
      %s18 = sphi 0, %s16
      %s19 = sphi 0, %s17
      %s20 = sphi 0, %s18
      %s21 = sphi 0, %s19
      %s33 = sphi 0, %s35
      %s36 = sphi 0, %s33
      %s37 = sphi 0, %s36
      %s53 = sphi 0, %s37
      %s59 = sphi 0, %s61
      %s62 = sphi 0, %s59
      %s63 = sphi 0, %s62
      %s79 = sphi 0, %s63
      %s83 = sphi 0, %s83
      %s85 = sphi 0, %s83
      %s86 = sphi 0, %s85
      %s100 = sphi 0, %s86
      %s106 = sphi 0, %s108
      %s109 = sphi 0, %s106
      %s110 = sphi 0, %s109
      %s126 = sphi 0, %s110
    $region4: #{reduction_a.5} parent=1 // loop_header_branch
      %12 = sbr.rel (%p10) target = $region8
    $region5: #{reduction_a.5} parent=1 // loop_body
      %s14 = ssub.s32 %s9, 1
      %s15 = ssub.s32 %s9, 2
      %s22 = sadd.s32 1, %s17
      %p23 = scmp.ge.s32.totalorder %s22, 3
      %s24 = scalar_select %p23, 0, %s22
      %s25 = sadd.s32 1, %s16
      %s26 = scalar_select %p23, %s25, %s16
      %p27 = scmp.ge.s32.totalorder %s26, 1
      %s28 = scalar_select %p27, 0, %s26
      %s29 = ssub.s32 %s16, %s28
      %s30 = ssub.s32 %s17, %s24
      %s31 = sor.u32 %s29, %s30
      %p32 = scmp.eq.s32.totalorder %s31, 0
      %s34 = sadd.s32 %s33, 1
      %s35 = scalar_select %p32, %s33, %s34
      %p38 = pneg %p32
      %p39 = scmp.eq.s32.totalorder %s9, 2
      %p40 = por %p38, %p39
      %p41 = scmp.ne.s32.totalorder %s33, %s36
      %p42 = scmp.eq.s32.totalorder %s9, 0
      %p43 = por %p41, %p42
      %p44 = scmp.ne.s32.totalorder %s33, %s36
      %p45 = scmp.eq.s32.totalorder %s14, 2
      %p46 = por %p44, %p45
      %p47 = scmp.ne.s32.totalorder %s36, %s37
      %p48 = scmp.eq.s32.totalorder %s14, 0
      %p49 = por %p47, %p48
      %p50 = scmp.ne.s32.totalorder %s36, %s37
      %p51 = scmp.eq.s32.totalorder %s15, 2
      %p52 = por %p50, %p51
      %p54 = scmp.ne.s32.totalorder %s37, %s53
      %p55 = scmp.eq.s32.totalorder %s15, 0
      %p56 = por %p54, %p55
      %s57 = ssub.s32 %s17, %s24
      %p58 = scmp.eq.s32.totalorder %s57, 0
      %s60 = sadd.s32 %s59, 1
      %s61 = scalar_select %p58, %s59, %s60
      %p64 = pneg %p58
      %p65 = scmp.eq.s32.totalorder %s9, 2
      %p66 = por %p64, %p65
      %p67 = scmp.ne.s32.totalorder %s59, %s62
      %p68 = scmp.eq.s32.totalorder %s9, 0
      %p69 = por %p67, %p68
      %p70 = scmp.ne.s32.totalorder %s59, %s62
      %p71 = scmp.eq.s32.totalorder %s14, 2
      %p72 = por %p70, %p71
      %p73 = scmp.ne.s32.totalorder %s62, %s63
      %p74 = scmp.eq.s32.totalorder %s14, 0
      %p75 = por %p73, %p74
      %p76 = scmp.ne.s32.totalorder %s62, %s63
      %p77 = scmp.eq.s32.totalorder %s15, 2
      %p78 = por %p76, %p77
      %p80 = scmp.ne.s32.totalorder %s63, %s79
      %p81 = scmp.eq.s32.totalorder %s15, 0
      %p82 = por %p80, %p81
      %s84 = sadd.s32 %s83, 1
      %p87 = scmp.eq.s32.totalorder %s9, 2
      %p88 = scmp.ne.s32.totalorder %s83, %s85
      %p89 = scmp.eq.s32.totalorder %s9, 0
      %p90 = por %p88, %p89
      %p91 = scmp.ne.s32.totalorder %s83, %s85
      %p92 = scmp.eq.s32.totalorder %s14, 2
      %p93 = por %p91, %p92
      %p94 = scmp.ne.s32.totalorder %s85, %s86
      %p95 = scmp.eq.s32.totalorder %s14, 0
      %p96 = por %p94, %p95
      %p97 = scmp.ne.s32.totalorder %s85, %s86
      %p98 = scmp.eq.s32.totalorder %s15, 2
      %p99 = por %p97, %p98
      %p101 = scmp.ne.s32.totalorder %s86, %s100
      %p102 = scmp.eq.s32.totalorder %s15, 0
      %p103 = por %p101, %p102
      %s104 = ssub.s32 %s16, %s28
      %p105 = scmp.eq.s32.totalorder %s104, 0
      %s107 = sadd.s32 %s106, 1
      %s108 = scalar_select %p105, %s106, %s107
      %p111 = pneg %p105
      %p112 = scmp.eq.s32.totalorder %s9, 2
      %p113 = por %p111, %p112
      %p114 = scmp.ne.s32.totalorder %s106, %s109
      %p115 = scmp.eq.s32.totalorder %s9, 0
      %p116 = por %p114, %p115
      %p117 = scmp.ne.s32.totalorder %s106, %s109
      %p118 = scmp.eq.s32.totalorder %s14, 2
      %p119 = por %p117, %p118
      %p120 = scmp.ne.s32.totalorder %s109, %s110
      %p121 = scmp.eq.s32.totalorder %s14, 0
      %p122 = por %p120, %p121
      %p123 = scmp.ne.s32.totalorder %s109, %s110
      %p124 = scmp.eq.s32.totalorder %s15, 2
      %p125 = por %p123, %p124
      %p127 = scmp.ne.s32.totalorder %s110, %s126
      %p128 = scmp.eq.s32.totalorder %s15, 0
      %p129 = por %p127, %p128
      %p130 = scmp.le.s32.totalorder 1, %s9
      %p131 = scmp.lt.s32.totalorder %s9, 4
      %p132 = pnand %p130, %p131
      %p133 = pneg %p132
      // Predicated region
      $region9: #{reduction_a.5} parent=5 // pred_check
        _
      $region10: #{reduction_a.5} parent=5 // pred_check_branch
        %135 = sbr.rel (%p132) target = $region12
      $region11: #{reduction_a.5} parent=5 // pred_region
        %s136 = ssub.s32 %s9, 1
        // Predicated region
        $region13: #{reduction_a.5} parent=11 // pred_check
          %p137 = pneg %p96
        $region14: #{reduction_a.5} parent=11 // pred_check_branch
          %139 = sbr.rel (%p137) target = $region16
        $region15: #{reduction_a.5} parent=11 // pred_region
          _
        $region16: #{reduction_a.5} parent=11 // pred_fallthru
          _
      $region12: #{reduction_a.5} parent=5 // pred_fallthru
        _
      %p140 = scmp.lt.s32.totalorder %s9, 3
      // Predicated region
      $region17: #{reduction_a.5} parent=5 // pred_check
        %p141 = pneg %p140
      $region18: #{reduction_a.5} parent=5 // pred_check_branch
        %143 = sbr.rel (%p141) target = $region20
      $region19: #{reduction_a.5} parent=5 // pred_region
        // Predicated region
        $region21: #{reduction_a.5} parent=19 // pred_check
          %p144 = pneg %p43
        $region22: #{reduction_a.5} parent=19 // pred_check_branch
          %146 = sbr.rel (%p144) target = $region24
        $region23: #{reduction_a.5} parent=19 // pred_region
          %s147 = sand.u32 %s33, 1
          %s148 = sand.u32 %s33, 1
          %s149 = smul.addr %s148, 96
          %s150 = scalar_lea.vmem [#allocation3], %s149
          %s151 = smul.u32 4, %s16
          %s152 = smul.u32 6, %s17
          %s153 = smul.addr %s151, 18
          %s154 = sadd.s32 %s152, %s153
          %s155 = smul.addr %s154, 4
          %s156 = scalar_lea.vmem %s0, %s155
          // Predicated region
          $region25: #{reduction_a.5} parent=23 // pred_check
            _
          $region26: #{reduction_a.5} parent=23 // pred_check_branch
            %158 = sbr.rel (0) target = $region28
          $region27: #{reduction_a.5} parent=23 // pred_region
            // Predicated region
            $region29: #{reduction_a.5} parent=27 // pred_check
              _
            $region30: #{reduction_a.5} parent=27 // pred_check_branch
              %160 = sbr.rel (0) target = $region32
            $region31: #{reduction_a.5} parent=27 // pred_region
              loop: start=0, step=1, limit=1
              $region33: #{reduction_a.5} parent=31 // loop_pre_header
                _
              $region34: #{reduction_a.5} parent=31 // loop_header
                %s162 = sphi 0, %s166
                %p163 = scmp.ge.s32.totalorder %s162, 1
                %s167 = sphi %s156, %s156
                %s168 = sphi %s150, %s150
              $region35: #{reduction_a.5} parent=31 // loop_header_branch
                %165 = sbr.rel (%p163) target = $region39
              $region36: #{reduction_a.5} parent=31 // loop_body
                %v169 = vld [vmem:[%s167] sm:$0xff]
                %170 = vst [vmem:[%s168] sm:$0xff] %v169
                %v171 = vld [vmem:[%s167 + $0x8] sm:$0xff]
                %172 = vst [vmem:[%s168 + $0x8] sm:$0xff] %v171
                %v173 = vld [vmem:[%s167 + $0x10] sm:$0xff]
                %174 = vst [vmem:[%s168 + $0x10] sm:$0xff] %v173
                %v175 = vld [vmem:[%s167 + $0x48] sm:$0xff]
                %176 = vst [vmem:[%s168 + $0x18] sm:$0xff] %v175
                %v177 = vld [vmem:[%s167 + $0x50] sm:$0xff]
                %178 = vst [vmem:[%s168 + $0x20] sm:$0xff] %v177
                %v179 = vld [vmem:[%s167 + $0x58] sm:$0xff]
                %180 = vst [vmem:[%s168 + $0x28] sm:$0xff] %v179
                %v181 = vld [vmem:[%s167 + $0x90] sm:$0xff]
                %182 = vst [vmem:[%s168 + $0x30] sm:$0xff] %v181
                %v183 = vld [vmem:[%s167 + $0x98] sm:$0xff]
                %184 = vst [vmem:[%s168 + $0x38] sm:$0xff] %v183
                %v185 = vld [vmem:[%s167 + $0xa0] sm:$0xff]
                %186 = vst [vmem:[%s168 + $0x40] sm:$0xff] %v185
                %v187 = vld [vmem:[%s167 + $0xd8] sm:$0xff]
                %188 = vst [vmem:[%s168 + $0x48] sm:$0xff] %v187
                %v189 = vld [vmem:[%s167 + $0xe0] sm:$0xff]
                %190 = vst [vmem:[%s168 + $0x50] sm:$0xff] %v189
                %v191 = vld [vmem:[%s167 + $0xe8] sm:$0xff]
                %192 = vst [vmem:[%s168 + $0x58] sm:$0xff] %v191
              $region37: #{reduction_a.5} parent=31 // loop_footer
                %s166 = sadd.s32 1, %s162
              $region38: #{reduction_a.5} parent=31 // loop_footer_branch
                %161 = sbr.rel target = $region34
              $region39: #{reduction_a.5} parent=31 // loop_exit
                _
            $region32: #{reduction_a.5} parent=27 // pred_fallthru
              _
            // Predicated region
            $region40: #{reduction_a.5} parent=27 // pred_check
              _
            $region41: #{reduction_a.5} parent=27 // pred_check_branch
              %194 = sbr.rel target = $region43
            $region42: #{reduction_a.5} parent=27 // pred_region
              _
            $region43: #{reduction_a.5} parent=27 // pred_fallthru
              _
          $region28: #{reduction_a.5} parent=23 // pred_fallthru
            _
          %195 = vnop
        $region24: #{reduction_a.5} parent=19 // pred_fallthru
          _
        // Predicated region
        $region44: #{reduction_a.5} parent=19 // pred_check
          %p196 = pneg %p69
        $region45: #{reduction_a.5} parent=19 // pred_check_branch
          %198 = sbr.rel (%p196) target = $region47
        $region46: #{reduction_a.5} parent=19 // pred_region
          %s199 = smul.u32 96, %s17
          %p200 = scmp.lt.s32.totalorder %s199, 287
          %s201 = scalar_select %p200, %s199, 287
          %s202 = smul.addr %s201, 3
          %s203 = smul.addr %s202, 4
          %s204 = scalar_lea.vmem %s1, %s203
          %s205 = smul.u32 96, %s17
        $region47: #{reduction_a.5} parent=19 // pred_fallthru
          _
      $region20: #{reduction_a.5} parent=5 // pred_fallthru
        _
      %p206 = scmp.le.s32.totalorder 1, %s9
      %p207 = scmp.lt.s32.totalorder %s9, 4
      %p208 = pnand %p206, %p207
      %p209 = pneg %p208
      // Predicated region
      $region48: #{reduction_a.5} parent=5 // pred_check
        _
      $region49: #{reduction_a.5} parent=5 // pred_check_branch
        %211 = sbr.rel (%p208) target = $region51
      $region50: #{reduction_a.5} parent=5 // pred_region
        %s212 = ssub.s32 %s9, 1
        %s213 = sand.u32 %s36, 1
        %s214 = sand.u32 %s36, 1
        %s215 = smul.addr %s214, 96
        %s216 = scalar_lea.vmem [#allocation3], %s215
        // Predicated region
        $region52: #{reduction_a.5} parent=50 // pred_check
          %p217 = pneg %p49
        $region53: #{reduction_a.5} parent=50 // pred_check_branch
          %219 = sbr.rel (%p217) target = $region55
        $region54: #{reduction_a.5} parent=50 // pred_region
          _
        $region55: #{reduction_a.5} parent=50 // pred_fallthru
          _
        %s220 = sand.u32 %s36, 1
        %s221 = sand.u32 %s36, 1
        %s222 = smul.addr %s221, 96
        %s223 = scalar_lea.vmem [#allocation3], %s222
        %p224 = pneg %p49
        %p225 = pneg %p46
        %s226 = smul.u32 96, %s19
        %p227 = scmp.lt.s32.totalorder %s226, 287
        %s228 = scalar_select %p227, %s226, 287
        %s229 = smul.addr %s228, 3
        %s230 = smul.addr %s229, 4
        %s231 = scalar_lea.vmem %s1, %s230
        %p232 = pneg %p75
        %p233 = pneg %p72
        %p234 = pneg %p96
        %p235 = pneg %p93
        %p236 = pneg %p122
        %p237 = pneg %p119
        %s238 = smul.u32 4, %s18
        %p239 = scmp.lt.s32.totalorder %s238, 3
        %s240 = scalar_select %p239, %s238, 3
        %s241 = smul.addr %s240, 3
        %s242 = smul.addr %s241, 8
        %s243 = scalar_lea.vmem %s3, %s242
        %s244 = smul.u32 4, %s18
        %s245 = smul.u32 6, %s19
        %s246 = smul.u32 96, %s19
        %p247 = scmp.lt.s32.totalorder %s246, 287
        %s248 = scalar_select %p247, %s246, 287
        %s249 = smul.addr %s248, 3
        %s250 = smul.addr %s249, 4
        %s251 = scalar_lea.vmem %s1, %s250
        %s252 = smul.u32 96, %s19
        %s253 = smul.u32 4, %s18
        %p254 = scmp.lt.s32.totalorder %s253, 3
        %s255 = scalar_select %p254, %s253, 3
        %s256 = smul.addr %s255, 3
        %s257 = smul.addr %s256, 8
        %s258 = scalar_lea.vmem %s3, %s257
        %s259 = smul.u32 4, %s18
        %p261 = scmp.eq.s32.totalorder %s19, 0
        // Predicated region
        $region56: #{reduction_a.5} parent=50 // pred_check
          %p262 = pneg %p261
        $region57: #{reduction_a.5} parent=50 // pred_check_branch
          %264 = sbr.rel (%p262) target = $region59
        $region58: #{reduction_a.5} parent=50 // pred_region
          %265 = vst [vmem:[#allocation2] sm:$0xff] 0.0
          %266 = vst [vmem:[#allocation2 + $0x8] sm:$0xff] 0.0
          %267 = vst [vmem:[#allocation2 + $0x10] sm:$0xff] 0.0
          %268 = vst [vmem:[#allocation2 + $0x18] sm:$0xff] 0.0
          %269 = vst [vmem:[#allocation2 + $0x20] sm:$0xff] 0.0
          %270 = vst [vmem:[#allocation2 + $0x28] sm:$0xff] 0.0
          %271 = vst [vmem:[#allocation2 + $0x30] sm:$0xff] 0.0
          %272 = vst [vmem:[#allocation2 + $0x38] sm:$0xff] 0.0
          %273 = vst [vmem:[#allocation2 + $0x40] sm:$0xff] 0.0
          %274 = vst [vmem:[#allocation2 + $0x48] sm:$0xff] 0.0
          %275 = vst [vmem:[#allocation2 + $0x50] sm:$0xff] 0.0
          %276 = vst [vmem:[#allocation2 + $0x58] sm:$0xff] 0.0
        $region59: #{reduction_a.5} parent=50 // pred_fallthru
          _
        %v277 = vld [vmem:[#allocation2] sm:$0xff]
        %v278 = vld [vmem:[#allocation2 + $0x8] sm:$0xff]
        %v279 = vld [vmem:[#allocation2 + $0x10] sm:$0xff]
        %v280 = vld [vmem:[#allocation2 + $0x18] sm:$0xff]
        %v281 = vld [vmem:[#allocation2 + $0x20] sm:$0xff]
        %v282 = vld [vmem:[#allocation2 + $0x28] sm:$0xff]
        %v283 = vld [vmem:[#allocation2 + $0x30] sm:$0xff]
        %v284 = vld [vmem:[#allocation2 + $0x38] sm:$0xff]
        %v285 = vld [vmem:[#allocation2 + $0x40] sm:$0xff]
        %v286 = vld [vmem:[#allocation2 + $0x48] sm:$0xff]
        %v287 = vld [vmem:[#allocation2 + $0x50] sm:$0xff]
        %v288 = vld [vmem:[#allocation2 + $0x58] sm:$0xff]
        %v289 = vld [vmem:[%s216] sm:$0xff]
        %v290 = vld [vmem:[%s216 + $0x8] sm:$0xff]
        %v291 = vld [vmem:[%s216 + $0x10] sm:$0xff]
        %v292 = vld [vmem:[%s216 + $0x18] sm:$0xff]
        %v293 = vld [vmem:[%s216 + $0x20] sm:$0xff]
        %v294 = vld [vmem:[%s216 + $0x28] sm:$0xff]
        %v295 = vld [vmem:[%s216 + $0x30] sm:$0xff]
        %v296 = vld [vmem:[%s216 + $0x38] sm:$0xff]
        %v297 = vld [vmem:[%s216 + $0x40] sm:$0xff]
        %v298 = vld [vmem:[%s216 + $0x48] sm:$0xff]
        %v299 = vld [vmem:[%s216 + $0x50] sm:$0xff]
        %v300 = vld [vmem:[%s216 + $0x58] sm:$0xff]
        %v301 = vld [vmem:[%s251] sm:$0xff]
        %v302 = vld [vmem:[%s251 + $0x8] sm:$0xf]
        %v303 = vld [vmem:[%s251 + $0xc] sm:$0xff]
        %v304 = vld [vmem:[%s251 + $0x14] sm:$0xf]
        %v305 = vld [vmem:[%s251 + $0x18] sm:$0xff]
        %v306 = vld [vmem:[%s251 + $0x20] sm:$0xf]
        %v307 = vld [vmem:[%s251 + $0x24] sm:$0xff]
        %v308 = vld [vmem:[%s251 + $0x2c] sm:$0xf]
        %v309 = vld [vmem:[%s251 + $0x30] sm:$0xff]
        %v310 = vld [vmem:[%s251 + $0x38] sm:$0xf]
        %v311 = vld [vmem:[%s251 + $0x3c] sm:$0xff]
        %v312 = vld [vmem:[%s251 + $0x44] sm:$0xf]
        %v313 = vld [vmem:[%s251 + $0x48] sm:$0xff]
        %v314 = vld [vmem:[%s251 + $0x50] sm:$0xf]
        %v315 = vld [vmem:[%s251 + $0x54] sm:$0xff]
        %v316 = vld [vmem:[%s251 + $0x5c] sm:$0xf]
        %v317 = vld [vmem:[%s251 + $0x60] sm:$0xff]
        %v318 = vld [vmem:[%s251 + $0x68] sm:$0xf]
        %v319 = vld [vmem:[%s251 + $0x6c] sm:$0xff]
        %v320 = vld [vmem:[%s251 + $0x74] sm:$0xf]
        %v321 = vld [vmem:[%s251 + $0x78] sm:$0xff]
        %v322 = vld [vmem:[%s251 + $0x80] sm:$0xf]
        %v323 = vld [vmem:[%s251 + $0x84] sm:$0xff]
        %v324 = vld [vmem:[%s251 + $0x8c] sm:$0xf]
        %v325 = vld [vmem:[%s251 + $0x90] sm:$0xff]
        %v326 = vld [vmem:[%s251 + $0x98] sm:$0xf]
        %v327 = vld [vmem:[%s251 + $0x9c] sm:$0xff]
        %v328 = vld [vmem:[%s251 + $0xa4] sm:$0xf]
        %v329 = vld [vmem:[%s251 + $0xa8] sm:$0xff]
        %v330 = vld [vmem:[%s251 + $0xb0] sm:$0xf]
        %v331 = vld [vmem:[%s251 + $0xb4] sm:$0xff]
        %v332 = vld [vmem:[%s251 + $0xbc] sm:$0xf]
        %v333 = vld [vmem:[%s251 + $0xc0] sm:$0xff]
        %v334 = vld [vmem:[%s251 + $0xc8] sm:$0xf]
        %v335 = vld [vmem:[%s251 + $0xcc] sm:$0xff]
        %v336 = vld [vmem:[%s251 + $0xd4] sm:$0xf]
        %v337 = vld [vmem:[%s251 + $0xd8] sm:$0xff]
        %v338 = vld [vmem:[%s251 + $0xe0] sm:$0xf]
        %v339 = vld [vmem:[%s251 + $0xe4] sm:$0xff]
        %v340 = vld [vmem:[%s251 + $0xec] sm:$0xf]
        %v341 = vld [vmem:[%s251 + $0xf0] sm:$0xff]
        %v342 = vld [vmem:[%s251 + $0xf8] sm:$0xf]
        %v343 = vld [vmem:[%s251 + $0xfc] sm:$0xff]
        %v344 = vld [vmem:[%s251 + $0x104] sm:$0xf]
        %v345 = vld [vmem:[%s251 + $0x108] sm:$0xff]
        %v346 = vld [vmem:[%s251 + $0x110] sm:$0xf]
        %v347 = vld [vmem:[%s251 + $0x114] sm:$0xff]
        %v348 = vld [vmem:[%s251 + $0x11c] sm:$0xf]
        %v349 = vld [vmem:[%s251 + $0x120] sm:$0xff]
        %v350 = vld [vmem:[%s251 + $0x128] sm:$0xf]
        %v351 = vld [vmem:[%s251 + $0x12c] sm:$0xff]
        %v352 = vld [vmem:[%s251 + $0x134] sm:$0xf]
        %v353 = vld [vmem:[%s251 + $0x138] sm:$0xff]
        %v354 = vld [vmem:[%s251 + $0x140] sm:$0xf]
        %v355 = vld [vmem:[%s251 + $0x144] sm:$0xff]
        %v356 = vld [vmem:[%s251 + $0x14c] sm:$0xf]
        %v357 = vld [vmem:[%s251 + $0x150] sm:$0xff]
        %v358 = vld [vmem:[%s251 + $0x158] sm:$0xf]
        %v359 = vld [vmem:[%s251 + $0x15c] sm:$0xff]
        %v360 = vld [vmem:[%s251 + $0x164] sm:$0xf]
        %v361 = vld [vmem:[%s251 + $0x168] sm:$0xff]
        %v362 = vld [vmem:[%s251 + $0x170] sm:$0xf]
        %v363 = vld [vmem:[%s251 + $0x174] sm:$0xff]
        %v364 = vld [vmem:[%s251 + $0x17c] sm:$0xf]
        %v365 = vld [vmem:[%s251 + $0x180] sm:$0xff]
        %v366 = vld [vmem:[%s251 + $0x188] sm:$0xf]
        %v367 = vld [vmem:[%s251 + $0x18c] sm:$0xff]
        %v368 = vld [vmem:[%s251 + $0x194] sm:$0xf]
        %v369 = vld [vmem:[%s251 + $0x198] sm:$0xff]
        %v370 = vld [vmem:[%s251 + $0x1a0] sm:$0xf]
        %v371 = vld [vmem:[%s251 + $0x1a4] sm:$0xff]
        %v372 = vld [vmem:[%s251 + $0x1ac] sm:$0xf]
        %v373 = vld [vmem:[%s251 + $0x1b0] sm:$0xff]
        %v374 = vld [vmem:[%s251 + $0x1b8] sm:$0xf]
        %v375 = vld [vmem:[%s251 + $0x1bc] sm:$0xff]
        %v376 = vld [vmem:[%s251 + $0x1c4] sm:$0xf]
        %v377 = vld [vmem:[%s251 + $0x1c8] sm:$0xff]
        %v378 = vld [vmem:[%s251 + $0x1d0] sm:$0xf]
        %v379 = vld [vmem:[%s251 + $0x1d4] sm:$0xff]
        %v380 = vld [vmem:[%s251 + $0x1dc] sm:$0xf]
        %v381 = vld [vmem:[%s251 + $0x1e0] sm:$0xff]
        %v382 = vld [vmem:[%s251 + $0x1e8] sm:$0xf]
        %v383 = vld [vmem:[%s251 + $0x1ec] sm:$0xff]
        %v384 = vld [vmem:[%s251 + $0x1f4] sm:$0xf]
        %v385 = vld [vmem:[%s251 + $0x1f8] sm:$0xff]
        %v386 = vld [vmem:[%s251 + $0x200] sm:$0xf]
        %v387 = vld [vmem:[%s251 + $0x204] sm:$0xff]
        %v388 = vld [vmem:[%s251 + $0x20c] sm:$0xf]
        %v389 = vld [vmem:[%s251 + $0x210] sm:$0xff]
        %v390 = vld [vmem:[%s251 + $0x218] sm:$0xf]
        %v391 = vld [vmem:[%s251 + $0x21c] sm:$0xff]
        %v392 = vld [vmem:[%s251 + $0x224] sm:$0xf]
        %v393 = vld [vmem:[%s251 + $0x228] sm:$0xff]
        %v394 = vld [vmem:[%s251 + $0x230] sm:$0xf]
        %v395 = vld [vmem:[%s251 + $0x234] sm:$0xff]
        %v396 = vld [vmem:[%s251 + $0x23c] sm:$0xf]
        %v397 = vld [vmem:[%s251 + $0x240] sm:$0xff]
        %v398 = vld [vmem:[%s251 + $0x248] sm:$0xf]
        %v399 = vld [vmem:[%s251 + $0x24c] sm:$0xff]
        %v400 = vld [vmem:[%s251 + $0x254] sm:$0xf]
        %v401 = vld [vmem:[%s251 + $0x258] sm:$0xff]
        %v402 = vld [vmem:[%s251 + $0x260] sm:$0xf]
        %v403 = vld [vmem:[%s251 + $0x264] sm:$0xff]
        %v404 = vld [vmem:[%s251 + $0x26c] sm:$0xf]
        %v405 = vld [vmem:[%s251 + $0x270] sm:$0xff]
        %v406 = vld [vmem:[%s251 + $0x278] sm:$0xf]
        %v407 = vld [vmem:[%s251 + $0x27c] sm:$0xff]
        %v408 = vld [vmem:[%s251 + $0x284] sm:$0xf]
        %v409 = vld [vmem:[%s251 + $0x288] sm:$0xff]
        %v410 = vld [vmem:[%s251 + $0x290] sm:$0xf]
        %v411 = vld [vmem:[%s251 + $0x294] sm:$0xff]
        %v412 = vld [vmem:[%s251 + $0x29c] sm:$0xf]
        %v413 = vld [vmem:[%s251 + $0x2a0] sm:$0xff]
        %v414 = vld [vmem:[%s251 + $0x2a8] sm:$0xf]
        %v415 = vld [vmem:[%s251 + $0x2ac] sm:$0xff]
        %v416 = vld [vmem:[%s251 + $0x2b4] sm:$0xf]
        %v417 = vld [vmem:[%s251 + $0x2b8] sm:$0xff]
        %v418 = vld [vmem:[%s251 + $0x2c0] sm:$0xf]
        %v419 = vld [vmem:[%s251 + $0x2c4] sm:$0xff]
        %v420 = vld [vmem:[%s251 + $0x2cc] sm:$0xf]
        %v421 = vld [vmem:[%s251 + $0x2d0] sm:$0xff]
        %v422 = vld [vmem:[%s251 + $0x2d8] sm:$0xf]
        %v423 = vld [vmem:[%s251 + $0x2dc] sm:$0xff]
        %v424 = vld [vmem:[%s251 + $0x2e4] sm:$0xf]
        %v425 = vld [vmem:[%s251 + $0x2e8] sm:$0xff]
        %v426 = vld [vmem:[%s251 + $0x2f0] sm:$0xf]
        %v427 = vld [vmem:[%s251 + $0x2f4] sm:$0xff]
        %v428 = vld [vmem:[%s251 + $0x2fc] sm:$0xf]
        %v429 = vld [vmem:[%s251 + $0x300] sm:$0xff]
        %v430 = vld [vmem:[%s251 + $0x308] sm:$0xf]
        %v431 = vld [vmem:[%s251 + $0x30c] sm:$0xff]
        %v432 = vld [vmem:[%s251 + $0x314] sm:$0xf]
        %v433 = vld [vmem:[%s251 + $0x318] sm:$0xff]
        %v434 = vld [vmem:[%s251 + $0x320] sm:$0xf]
        %v435 = vld [vmem:[%s251 + $0x324] sm:$0xff]
        %v436 = vld [vmem:[%s251 + $0x32c] sm:$0xf]
        %v437 = vld [vmem:[%s251 + $0x330] sm:$0xff]
        %v438 = vld [vmem:[%s251 + $0x338] sm:$0xf]
        %v439 = vld [vmem:[%s251 + $0x33c] sm:$0xff]
        %v440 = vld [vmem:[%s251 + $0x344] sm:$0xf]
        %v441 = vld [vmem:[%s251 + $0x348] sm:$0xff]
        %v442 = vld [vmem:[%s251 + $0x350] sm:$0xf]
        %v443 = vld [vmem:[%s251 + $0x354] sm:$0xff]
        %v444 = vld [vmem:[%s251 + $0x35c] sm:$0xf]
        %v445 = vld [vmem:[%s251 + $0x360] sm:$0xff]
        %v446 = vld [vmem:[%s251 + $0x368] sm:$0xf]
        %v447 = vld [vmem:[%s251 + $0x36c] sm:$0xff]
        %v448 = vld [vmem:[%s251 + $0x374] sm:$0xf]
        %v449 = vld [vmem:[%s251 + $0x378] sm:$0xff]
        %v450 = vld [vmem:[%s251 + $0x380] sm:$0xf]
        %v451 = vld [vmem:[%s251 + $0x384] sm:$0xff]
        %v452 = vld [vmem:[%s251 + $0x38c] sm:$0xf]
        %v453 = vld [vmem:[%s251 + $0x390] sm:$0xff]
        %v454 = vld [vmem:[%s251 + $0x398] sm:$0xf]
        %v455 = vld [vmem:[%s251 + $0x39c] sm:$0xff]
        %v456 = vld [vmem:[%s251 + $0x3a4] sm:$0xf]
        %v457 = vld [vmem:[%s251 + $0x3a8] sm:$0xff]
        %v458 = vld [vmem:[%s251 + $0x3b0] sm:$0xf]
        %v459 = vld [vmem:[%s251 + $0x3b4] sm:$0xff]
        %v460 = vld [vmem:[%s251 + $0x3bc] sm:$0xf]
        %v461 = vld [vmem:[%s251 + $0x3c0] sm:$0xff]
        %v462 = vld [vmem:[%s251 + $0x3c8] sm:$0xf]
        %v463 = vld [vmem:[%s251 + $0x3cc] sm:$0xff]
        %v464 = vld [vmem:[%s251 + $0x3d4] sm:$0xf]
        %v465 = vld [vmem:[%s251 + $0x3d8] sm:$0xff]
        %v466 = vld [vmem:[%s251 + $0x3e0] sm:$0xf]
        %v467 = vld [vmem:[%s251 + $0x3e4] sm:$0xff]
        %v468 = vld [vmem:[%s251 + $0x3ec] sm:$0xf]
        %v469 = vld [vmem:[%s251 + $0x3f0] sm:$0xff]
        %v470 = vld [vmem:[%s251 + $0x3f8] sm:$0xf]
        %v471 = vld [vmem:[%s251 + $0x3fc] sm:$0xff]
        %v472 = vld [vmem:[%s251 + $0x404] sm:$0xf]
        %v473 = vld [vmem:[%s251 + $0x408] sm:$0xff]
        %v474 = vld [vmem:[%s251 + $0x410] sm:$0xf]
        %v475 = vld [vmem:[%s251 + $0x414] sm:$0xff]
        %v476 = vld [vmem:[%s251 + $0x41c] sm:$0xf]
        %v477 = vld [vmem:[%s251 + $0x420] sm:$0xff]
        %v478 = vld [vmem:[%s251 + $0x428] sm:$0xf]
        %v479 = vld [vmem:[%s251 + $0x42c] sm:$0xff]
        %v480 = vld [vmem:[%s251 + $0x434] sm:$0xf]
        %v481 = vld [vmem:[%s251 + $0x438] sm:$0xff]
        %v482 = vld [vmem:[%s251 + $0x440] sm:$0xf]
        %v483 = vld [vmem:[%s251 + $0x444] sm:$0xff]
        %v484 = vld [vmem:[%s251 + $0x44c] sm:$0xf]
        %v485 = vld [vmem:[%s251 + $0x450] sm:$0xff]
        %v486 = vld [vmem:[%s251 + $0x458] sm:$0xf]
        %v487 = vld [vmem:[%s251 + $0x45c] sm:$0xff]
        %v488 = vld [vmem:[%s251 + $0x464] sm:$0xf]
        %v489 = vld [vmem:[%s251 + $0x468] sm:$0xff]
        %v490 = vld [vmem:[%s251 + $0x470] sm:$0xf]
        %v491 = vld [vmem:[%s251 + $0x474] sm:$0xff]
        %v492 = vld [vmem:[%s251 + $0x47c] sm:$0xf]
        %v505 = vunpack.c.l.b16 %v289
        %v506 = vunpack.c.h.b16 %v289
        %v507 = vunpack.c.l.b16 %v290
        %v508 = vunpack.c.h.b16 %v290
        %v509 = vunpack.c.l.b16 %v291
        %v510 = vunpack.c.h.b16 %v291
        %v511 = vunpack.c.l.b16 %v292
        %v512 = vunpack.c.h.b16 %v292
        %v513 = vunpack.c.l.b16 %v293
        %v514 = vunpack.c.h.b16 %v293
        %v515 = vunpack.c.l.b16 %v294
        %v516 = vunpack.c.h.b16 %v294
        %v517 = vunpack.c.l.b16 %v295
        %v518 = vunpack.c.h.b16 %v295
        %v519 = vunpack.c.l.b16 %v296
        %v520 = vunpack.c.h.b16 %v296
        %v521 = vunpack.c.l.b16 %v297
        %v522 = vunpack.c.h.b16 %v297
        %v523 = vunpack.c.l.b16 %v298
        %v524 = vunpack.c.h.b16 %v298
        %v525 = vunpack.c.l.b16 %v299
        %v526 = vunpack.c.h.b16 %v299
        %v527 = vunpack.c.l.b16 %v300
        %v528 = vunpack.c.h.b16 %v300
        %v529 = vpack.c.b16 %v511, %v505
        %v530 = vpack.c.b16 %v512, %v506
        %v531 = vpack.c.b16 %v513, %v507
        %v532 = vpack.c.b16 %v514, %v508
        %v533 = vpack.c.b16 %v515, %v509
        %v534 = vpack.c.b16 %v516, %v510
        %v535 = vpack.c.b16 %v523, %v517
        %v536 = vpack.c.b16 %v524, %v518
        %v537 = vpack.c.b16 %v525, %v519
        %v538 = vpack.c.b16 %v526, %v520
        %v539 = vpack.c.b16 %v527, %v521
        %v540 = vpack.c.b16 %v528, %v522
        %v745 = vunpack.c.l.b16 %v301
        %v746 = vunpack.c.h.b16 %v301
        %v747 = vunpack.c.l.b16 %v302
        %v748 = vunpack.c.l.b16 %v303
        %v749 = vunpack.c.h.b16 %v303
        %v750 = vunpack.c.l.b16 %v304
        %v751 = vunpack.c.l.b16 %v305
        %v752 = vunpack.c.h.b16 %v305
        %v753 = vunpack.c.l.b16 %v306
        %v754 = vunpack.c.l.b16 %v307
        %v755 = vunpack.c.h.b16 %v307
        %v756 = vunpack.c.l.b16 %v308
        %v757 = vunpack.c.l.b16 %v309
        %v758 = vunpack.c.h.b16 %v309
        %v759 = vunpack.c.l.b16 %v310
        %v760 = vunpack.c.l.b16 %v311
        %v761 = vunpack.c.h.b16 %v311
        %v762 = vunpack.c.l.b16 %v312
        %v763 = vunpack.c.l.b16 %v313
        %v764 = vunpack.c.h.b16 %v313
        %v765 = vunpack.c.l.b16 %v314
        %v766 = vunpack.c.l.b16 %v315
        %v767 = vunpack.c.h.b16 %v315
        %v768 = vunpack.c.l.b16 %v316
        %v769 = vunpack.c.l.b16 %v317
        %v770 = vunpack.c.h.b16 %v317
        %v771 = vunpack.c.l.b16 %v318
        %v772 = vunpack.c.l.b16 %v319
        %v773 = vunpack.c.h.b16 %v319
        %v774 = vunpack.c.l.b16 %v320
        %v775 = vunpack.c.l.b16 %v321
        %v776 = vunpack.c.h.b16 %v321
        %v777 = vunpack.c.l.b16 %v322
        %v778 = vunpack.c.l.b16 %v323
        %v779 = vunpack.c.h.b16 %v323
        %v780 = vunpack.c.l.b16 %v324
        %v781 = vunpack.c.l.b16 %v325
        %v782 = vunpack.c.h.b16 %v325
        %v783 = vunpack.c.l.b16 %v326
        %v784 = vunpack.c.l.b16 %v327
        %v785 = vunpack.c.h.b16 %v327
        %v786 = vunpack.c.l.b16 %v328
        %v787 = vunpack.c.l.b16 %v329
        %v788 = vunpack.c.h.b16 %v329
        %v789 = vunpack.c.l.b16 %v330
        %v790 = vunpack.c.l.b16 %v331
        %v791 = vunpack.c.h.b16 %v331
        %v792 = vunpack.c.l.b16 %v332
        %v793 = vunpack.c.l.b16 %v333
        %v794 = vunpack.c.h.b16 %v333
        %v795 = vunpack.c.l.b16 %v334
        %v796 = vunpack.c.l.b16 %v335
        %v797 = vunpack.c.h.b16 %v335
        %v798 = vunpack.c.l.b16 %v336
        %v799 = vunpack.c.l.b16 %v337
        %v800 = vunpack.c.h.b16 %v337
        %v801 = vunpack.c.l.b16 %v338
        %v802 = vunpack.c.l.b16 %v339
        %v803 = vunpack.c.h.b16 %v339
        %v804 = vunpack.c.l.b16 %v340
        %v805 = vunpack.c.l.b16 %v341
        %v806 = vunpack.c.h.b16 %v341
        %v807 = vunpack.c.l.b16 %v342
        %v808 = vunpack.c.l.b16 %v343
        %v809 = vunpack.c.h.b16 %v343
        %v810 = vunpack.c.l.b16 %v344
        %v811 = vunpack.c.l.b16 %v345
        %v812 = vunpack.c.h.b16 %v345
        %v813 = vunpack.c.l.b16 %v346
        %v814 = vunpack.c.l.b16 %v347
        %v815 = vunpack.c.h.b16 %v347
        %v816 = vunpack.c.l.b16 %v348
        %v817 = vunpack.c.l.b16 %v349
        %v818 = vunpack.c.h.b16 %v349
        %v819 = vunpack.c.l.b16 %v350
        %v820 = vunpack.c.l.b16 %v351
        %v821 = vunpack.c.h.b16 %v351
        %v822 = vunpack.c.l.b16 %v352
        %v823 = vunpack.c.l.b16 %v353
        %v824 = vunpack.c.h.b16 %v353
        %v825 = vunpack.c.l.b16 %v354
        %v826 = vunpack.c.l.b16 %v355
        %v827 = vunpack.c.h.b16 %v355
        %v828 = vunpack.c.l.b16 %v356
        %v829 = vunpack.c.l.b16 %v357
        %v830 = vunpack.c.h.b16 %v357
        %v831 = vunpack.c.l.b16 %v358
        %v832 = vunpack.c.l.b16 %v359
        %v833 = vunpack.c.h.b16 %v359
        %v834 = vunpack.c.l.b16 %v360
        %v835 = vunpack.c.l.b16 %v361
        %v836 = vunpack.c.h.b16 %v361
        %v837 = vunpack.c.l.b16 %v362
        %v838 = vunpack.c.l.b16 %v363
        %v839 = vunpack.c.h.b16 %v363
        %v840 = vunpack.c.l.b16 %v364
        %v841 = vunpack.c.l.b16 %v365
        %v842 = vunpack.c.h.b16 %v365
        %v843 = vunpack.c.l.b16 %v366
        %v844 = vunpack.c.l.b16 %v367
        %v845 = vunpack.c.h.b16 %v367
        %v846 = vunpack.c.l.b16 %v368
        %v847 = vunpack.c.l.b16 %v369
        %v848 = vunpack.c.h.b16 %v369
        %v849 = vunpack.c.l.b16 %v370
        %v850 = vunpack.c.l.b16 %v371
        %v851 = vunpack.c.h.b16 %v371
        %v852 = vunpack.c.l.b16 %v372
        %v853 = vunpack.c.l.b16 %v373
        %v854 = vunpack.c.h.b16 %v373
        %v855 = vunpack.c.l.b16 %v374
        %v856 = vunpack.c.l.b16 %v375
        %v857 = vunpack.c.h.b16 %v375
        %v858 = vunpack.c.l.b16 %v376
        %v859 = vunpack.c.l.b16 %v377
        %v860 = vunpack.c.h.b16 %v377
        %v861 = vunpack.c.l.b16 %v378
        %v862 = vunpack.c.l.b16 %v379
        %v863 = vunpack.c.h.b16 %v379
        %v864 = vunpack.c.l.b16 %v380
        %v865 = vunpack.c.l.b16 %v381
        %v866 = vunpack.c.h.b16 %v381
        %v867 = vunpack.c.l.b16 %v382
        %v868 = vunpack.c.l.b16 %v383
        %v869 = vunpack.c.h.b16 %v383
        %v870 = vunpack.c.l.b16 %v384
        %v871 = vunpack.c.l.b16 %v385
        %v872 = vunpack.c.h.b16 %v385
        %v873 = vunpack.c.l.b16 %v386
        %v874 = vunpack.c.l.b16 %v387
        %v875 = vunpack.c.h.b16 %v387
        %v876 = vunpack.c.l.b16 %v388
        %v877 = vunpack.c.l.b16 %v389
        %v878 = vunpack.c.h.b16 %v389
        %v879 = vunpack.c.l.b16 %v390
        %v880 = vunpack.c.l.b16 %v391
        %v881 = vunpack.c.h.b16 %v391
        %v882 = vunpack.c.l.b16 %v392
        %v883 = vunpack.c.l.b16 %v393
        %v884 = vunpack.c.h.b16 %v393
        %v885 = vunpack.c.l.b16 %v394
        %v886 = vunpack.c.l.b16 %v395
        %v887 = vunpack.c.h.b16 %v395
        %v888 = vunpack.c.l.b16 %v396
        %v889 = vunpack.c.l.b16 %v397
        %v890 = vunpack.c.h.b16 %v397
        %v891 = vunpack.c.l.b16 %v398
        %v892 = vunpack.c.l.b16 %v399
        %v893 = vunpack.c.h.b16 %v399
        %v894 = vunpack.c.l.b16 %v400
        %v895 = vunpack.c.l.b16 %v401
        %v896 = vunpack.c.h.b16 %v401
        %v897 = vunpack.c.l.b16 %v402
        %v898 = vunpack.c.l.b16 %v403
        %v899 = vunpack.c.h.b16 %v403
        %v900 = vunpack.c.l.b16 %v404
        %v901 = vunpack.c.l.b16 %v405
        %v902 = vunpack.c.h.b16 %v405
        %v903 = vunpack.c.l.b16 %v406
        %v904 = vunpack.c.l.b16 %v407
        %v905 = vunpack.c.h.b16 %v407
        %v906 = vunpack.c.l.b16 %v408
        %v907 = vunpack.c.l.b16 %v409
        %v908 = vunpack.c.h.b16 %v409
        %v909 = vunpack.c.l.b16 %v410
        %v910 = vunpack.c.l.b16 %v411
        %v911 = vunpack.c.h.b16 %v411
        %v912 = vunpack.c.l.b16 %v412
        %v913 = vunpack.c.l.b16 %v413
        %v914 = vunpack.c.h.b16 %v413
        %v915 = vunpack.c.l.b16 %v414
        %v916 = vunpack.c.l.b16 %v415
        %v917 = vunpack.c.h.b16 %v415
        %v918 = vunpack.c.l.b16 %v416
        %v919 = vunpack.c.l.b16 %v417
        %v920 = vunpack.c.h.b16 %v417
        %v921 = vunpack.c.l.b16 %v418
        %v922 = vunpack.c.l.b16 %v419
        %v923 = vunpack.c.h.b16 %v419
        %v924 = vunpack.c.l.b16 %v420
        %v925 = vunpack.c.l.b16 %v421
        %v926 = vunpack.c.h.b16 %v421
        %v927 = vunpack.c.l.b16 %v422
        %v928 = vunpack.c.l.b16 %v423
        %v929 = vunpack.c.h.b16 %v423
        %v930 = vunpack.c.l.b16 %v424
        %v931 = vunpack.c.l.b16 %v425
        %v932 = vunpack.c.h.b16 %v425
        %v933 = vunpack.c.l.b16 %v426
        %v934 = vunpack.c.l.b16 %v427
        %v935 = vunpack.c.h.b16 %v427
        %v936 = vunpack.c.l.b16 %v428
        %v937 = vunpack.c.l.b16 %v429
        %v938 = vunpack.c.h.b16 %v429
        %v939 = vunpack.c.l.b16 %v430
        %v940 = vunpack.c.l.b16 %v431
        %v941 = vunpack.c.h.b16 %v431
        %v942 = vunpack.c.l.b16 %v432
        %v943 = vunpack.c.l.b16 %v433
        %v944 = vunpack.c.h.b16 %v433
        %v945 = vunpack.c.l.b16 %v434
        %v946 = vunpack.c.l.b16 %v435
        %v947 = vunpack.c.h.b16 %v435
        %v948 = vunpack.c.l.b16 %v436
        %v949 = vunpack.c.l.b16 %v437
        %v950 = vunpack.c.h.b16 %v437
        %v951 = vunpack.c.l.b16 %v438
        %v952 = vunpack.c.l.b16 %v439
        %v953 = vunpack.c.h.b16 %v439
        %v954 = vunpack.c.l.b16 %v440
        %v955 = vunpack.c.l.b16 %v441
        %v956 = vunpack.c.h.b16 %v441
        %v957 = vunpack.c.l.b16 %v442
        %v958 = vunpack.c.l.b16 %v443
        %v959 = vunpack.c.h.b16 %v443
        %v960 = vunpack.c.l.b16 %v444
        %v961 = vunpack.c.l.b16 %v445
        %v962 = vunpack.c.h.b16 %v445
        %v963 = vunpack.c.l.b16 %v446
        %v964 = vunpack.c.l.b16 %v447
        %v965 = vunpack.c.h.b16 %v447
        %v966 = vunpack.c.l.b16 %v448
        %v967 = vunpack.c.l.b16 %v449
        %v968 = vunpack.c.h.b16 %v449
        %v969 = vunpack.c.l.b16 %v450
        %v970 = vunpack.c.l.b16 %v451
        %v971 = vunpack.c.h.b16 %v451
        %v972 = vunpack.c.l.b16 %v452
        %v973 = vunpack.c.l.b16 %v453
        %v974 = vunpack.c.h.b16 %v453
        %v975 = vunpack.c.l.b16 %v454
        %v976 = vunpack.c.l.b16 %v455
        %v977 = vunpack.c.h.b16 %v455
        %v978 = vunpack.c.l.b16 %v456
        %v979 = vunpack.c.l.b16 %v457
        %v980 = vunpack.c.h.b16 %v457
        %v981 = vunpack.c.l.b16 %v458
        %v982 = vunpack.c.l.b16 %v459
        %v983 = vunpack.c.h.b16 %v459
        %v984 = vunpack.c.l.b16 %v460
        %v985 = vunpack.c.l.b16 %v461
        %v986 = vunpack.c.h.b16 %v461
        %v987 = vunpack.c.l.b16 %v462
        %v988 = vunpack.c.l.b16 %v463
        %v989 = vunpack.c.h.b16 %v463
        %v990 = vunpack.c.l.b16 %v464
        %v991 = vunpack.c.l.b16 %v465
        %v992 = vunpack.c.h.b16 %v465
        %v993 = vunpack.c.l.b16 %v466
        %v994 = vunpack.c.l.b16 %v467
        %v995 = vunpack.c.h.b16 %v467
        %v996 = vunpack.c.l.b16 %v468
        %v997 = vunpack.c.l.b16 %v469
        %v998 = vunpack.c.h.b16 %v469
        %v999 = vunpack.c.l.b16 %v470
        %v1000 = vunpack.c.l.b16 %v471
        %v1001 = vunpack.c.h.b16 %v471
        %v1002 = vunpack.c.l.b16 %v472
        %v1003 = vunpack.c.l.b16 %v473
        %v1004 = vunpack.c.h.b16 %v473
        %v1005 = vunpack.c.l.b16 %v474
        %v1006 = vunpack.c.l.b16 %v475
        %v1007 = vunpack.c.h.b16 %v475
        %v1008 = vunpack.c.l.b16 %v476
        %v1009 = vunpack.c.l.b16 %v477
        %v1010 = vunpack.c.h.b16 %v477
        %v1011 = vunpack.c.l.b16 %v478
        %v1012 = vunpack.c.l.b16 %v479
        %v1013 = vunpack.c.h.b16 %v479
        %v1014 = vunpack.c.l.b16 %v480
        %v1015 = vunpack.c.l.b16 %v481
        %v1016 = vunpack.c.h.b16 %v481
        %v1017 = vunpack.c.l.b16 %v482
        %v1018 = vunpack.c.l.b16 %v483
        %v1019 = vunpack.c.h.b16 %v483
        %v1020 = vunpack.c.l.b16 %v484
        %v1021 = vunpack.c.l.b16 %v485
        %v1022 = vunpack.c.h.b16 %v485
        %v1023 = vunpack.c.l.b16 %v486
        %v1024 = vunpack.c.l.b16 %v487
        %v1025 = vunpack.c.h.b16 %v487
        %v1026 = vunpack.c.l.b16 %v488
        %v1027 = vunpack.c.l.b16 %v489
        %v1028 = vunpack.c.h.b16 %v489
        %v1029 = vunpack.c.l.b16 %v490
        %v1030 = vunpack.c.l.b16 %v491
        %v1031 = vunpack.c.h.b16 %v491
        %v1032 = vunpack.c.l.b16 %v492
        %v1033 = vpack.c.b16 %v748, %v745
        %v1034 = vpack.c.b16 %v749, %v746
        %v1035 = vpack.c.b16 %v750, %v747
        %v1036 = vpack.c.b16 %v754, %v751
        %v1037 = vpack.c.b16 %v755, %v752
        %v1038 = vpack.c.b16 %v756, %v753
        %v1039 = vpack.c.b16 %v760, %v757
        %v1040 = vpack.c.b16 %v761, %v758
        %v1041 = vpack.c.b16 %v762, %v759
        %v1042 = vpack.c.b16 %v766, %v763
        %v1043 = vpack.c.b16 %v767, %v764
        %v1044 = vpack.c.b16 %v768, %v765
        %v1045 = vpack.c.b16 %v772, %v769
        %v1046 = vpack.c.b16 %v773, %v770
        %v1047 = vpack.c.b16 %v774, %v771
        %v1048 = vpack.c.b16 %v778, %v775
        %v1049 = vpack.c.b16 %v779, %v776
        %v1050 = vpack.c.b16 %v780, %v777
        %v1051 = vpack.c.b16 %v784, %v781
        %v1052 = vpack.c.b16 %v785, %v782
        %v1053 = vpack.c.b16 %v786, %v783
        %v1054 = vpack.c.b16 %v790, %v787
        %v1055 = vpack.c.b16 %v791, %v788
        %v1056 = vpack.c.b16 %v792, %v789
        %v1057 = vpack.c.b16 %v796, %v793
        %v1058 = vpack.c.b16 %v797, %v794
        %v1059 = vpack.c.b16 %v798, %v795
        %v1060 = vpack.c.b16 %v802, %v799
        %v1061 = vpack.c.b16 %v803, %v800
        %v1062 = vpack.c.b16 %v804, %v801
        %v1063 = vpack.c.b16 %v808, %v805
        %v1064 = vpack.c.b16 %v809, %v806
        %v1065 = vpack.c.b16 %v810, %v807
        %v1066 = vpack.c.b16 %v814, %v811
        %v1067 = vpack.c.b16 %v815, %v812
        %v1068 = vpack.c.b16 %v816, %v813
        %v1069 = vpack.c.b16 %v820, %v817
        %v1070 = vpack.c.b16 %v821, %v818
        %v1071 = vpack.c.b16 %v822, %v819
        %v1072 = vpack.c.b16 %v826, %v823
        %v1073 = vpack.c.b16 %v827, %v824
        %v1074 = vpack.c.b16 %v828, %v825
        %v1075 = vpack.c.b16 %v832, %v829
        %v1076 = vpack.c.b16 %v833, %v830
        %v1077 = vpack.c.b16 %v834, %v831
        %v1078 = vpack.c.b16 %v838, %v835
        %v1079 = vpack.c.b16 %v839, %v836
        %v1080 = vpack.c.b16 %v840, %v837
        %v1081 = vpack.c.b16 %v844, %v841
        %v1082 = vpack.c.b16 %v845, %v842
        %v1083 = vpack.c.b16 %v846, %v843
        %v1084 = vpack.c.b16 %v850, %v847
        %v1085 = vpack.c.b16 %v851, %v848
        %v1086 = vpack.c.b16 %v852, %v849
        %v1087 = vpack.c.b16 %v856, %v853
        %v1088 = vpack.c.b16 %v857, %v854
        %v1089 = vpack.c.b16 %v858, %v855
        %v1090 = vpack.c.b16 %v862, %v859
        %v1091 = vpack.c.b16 %v863, %v860
        %v1092 = vpack.c.b16 %v864, %v861
        %v1093 = vpack.c.b16 %v868, %v865
        %v1094 = vpack.c.b16 %v869, %v866
        %v1095 = vpack.c.b16 %v870, %v867
        %v1096 = vpack.c.b16 %v874, %v871
        %v1097 = vpack.c.b16 %v875, %v872
        %v1098 = vpack.c.b16 %v876, %v873
        %v1099 = vpack.c.b16 %v880, %v877
        %v1100 = vpack.c.b16 %v881, %v878
        %v1101 = vpack.c.b16 %v882, %v879
        %v1102 = vpack.c.b16 %v886, %v883
        %v1103 = vpack.c.b16 %v887, %v884
        %v1104 = vpack.c.b16 %v888, %v885
        %v1105 = vpack.c.b16 %v892, %v889
        %v1106 = vpack.c.b16 %v893, %v890
        %v1107 = vpack.c.b16 %v894, %v891
        %v1108 = vpack.c.b16 %v898, %v895
        %v1109 = vpack.c.b16 %v899, %v896
        %v1110 = vpack.c.b16 %v900, %v897
        %v1111 = vpack.c.b16 %v904, %v901
        %v1112 = vpack.c.b16 %v905, %v902
        %v1113 = vpack.c.b16 %v906, %v903
        %v1114 = vpack.c.b16 %v910, %v907
        %v1115 = vpack.c.b16 %v911, %v908
        %v1116 = vpack.c.b16 %v912, %v909
        %v1117 = vpack.c.b16 %v916, %v913
        %v1118 = vpack.c.b16 %v917, %v914
        %v1119 = vpack.c.b16 %v918, %v915
        %v1120 = vpack.c.b16 %v922, %v919
        %v1121 = vpack.c.b16 %v923, %v920
        %v1122 = vpack.c.b16 %v924, %v921
        %v1123 = vpack.c.b16 %v928, %v925
        %v1124 = vpack.c.b16 %v929, %v926
        %v1125 = vpack.c.b16 %v930, %v927
        %v1126 = vpack.c.b16 %v934, %v931
        %v1127 = vpack.c.b16 %v935, %v932
        %v1128 = vpack.c.b16 %v936, %v933
        %v1129 = vpack.c.b16 %v940, %v937
        %v1130 = vpack.c.b16 %v941, %v938
        %v1131 = vpack.c.b16 %v942, %v939
        %v1132 = vpack.c.b16 %v946, %v943
        %v1133 = vpack.c.b16 %v947, %v944
        %v1134 = vpack.c.b16 %v948, %v945
        %v1135 = vpack.c.b16 %v952, %v949
        %v1136 = vpack.c.b16 %v953, %v950
        %v1137 = vpack.c.b16 %v954, %v951
        %v1138 = vpack.c.b16 %v958, %v955
        %v1139 = vpack.c.b16 %v959, %v956
        %v1140 = vpack.c.b16 %v960, %v957
        %v1141 = vpack.c.b16 %v964, %v961
        %v1142 = vpack.c.b16 %v965, %v962
        %v1143 = vpack.c.b16 %v966, %v963
        %v1144 = vpack.c.b16 %v970, %v967
        %v1145 = vpack.c.b16 %v971, %v968
        %v1146 = vpack.c.b16 %v972, %v969
        %v1147 = vpack.c.b16 %v976, %v973
        %v1148 = vpack.c.b16 %v977, %v974
        %v1149 = vpack.c.b16 %v978, %v975
        %v1150 = vpack.c.b16 %v982, %v979
        %v1151 = vpack.c.b16 %v983, %v980
        %v1152 = vpack.c.b16 %v984, %v981
        %v1153 = vpack.c.b16 %v988, %v985
        %v1154 = vpack.c.b16 %v989, %v986
        %v1155 = vpack.c.b16 %v990, %v987
        %v1156 = vpack.c.b16 %v994, %v991
        %v1157 = vpack.c.b16 %v995, %v992
        %v1158 = vpack.c.b16 %v996, %v993
        %v1159 = vpack.c.b16 %v1000, %v997
        %v1160 = vpack.c.b16 %v1001, %v998
        %v1161 = vpack.c.b16 %v1002, %v999
        %v1162 = vpack.c.b16 %v1006, %v1003
        %v1163 = vpack.c.b16 %v1007, %v1004
        %v1164 = vpack.c.b16 %v1008, %v1005
        %v1165 = vpack.c.b16 %v1012, %v1009
        %v1166 = vpack.c.b16 %v1013, %v1010
        %v1167 = vpack.c.b16 %v1014, %v1011
        %v1168 = vpack.c.b16 %v1018, %v1015
        %v1169 = vpack.c.b16 %v1019, %v1016
        %v1170 = vpack.c.b16 %v1020, %v1017
        %v1171 = vpack.c.b16 %v1024, %v1021
        %v1172 = vpack.c.b16 %v1025, %v1022
        %v1173 = vpack.c.b16 %v1026, %v1023
        %v1174 = vpack.c.b16 %v1030, %v1027
        %v1175 = vpack.c.b16 %v1031, %v1028
        %v1176 = vpack.c.b16 %v1032, %v1029
        %1321 = vmatprep.subr.bf16.mxu0 %v1034
        %1322 = vmatpush1.bf16.msra.mxu0 %v1033
        %1323 = vmatprep.subr.bf16.mxu0 %v1037
        %1324 = vmatpush1.bf16.msra.mxu0 %v1036
        %1325 = vmatprep.subr.bf16.mxu0 %v1040
        %1326 = vmatpush1.bf16.msra.mxu0 %v1039
        %1327 = vmatprep.subr.bf16.mxu0 %v1043
        %1328 = vmatpush1.bf16.msra.mxu0 %v1042
        %1329 = vmatprep.subr.bf16.mxu0 %v1046
        %1330 = vmatpush1.bf16.msra.mxu0 %v1045
        %1331 = vmatprep.subr.bf16.mxu0 %v1049
        %1332 = vmatpush1.bf16.msra.mxu0 %v1048
        %1333 = vmatprep.subr.bf16.mxu0 %v1052
        %1334 = vmatpush1.bf16.msra.mxu0 %v1051
        %1335 = vmatprep.subr.bf16.mxu0 %v1055
        %1336 = vmatpush1.bf16.msra.mxu0 %v1054
        %1337 = vmatprep.subr.bf16.mxu0 %v1058
        %1338 = vmatpush1.bf16.msra.mxu0 %v1057
        %1339 = vmatprep.subr.bf16.mxu0 %v1061
        %1340 = vmatpush1.bf16.msra.mxu0 %v1060
        %1341 = vmatprep.subr.bf16.mxu0 %v1064
        %1342 = vmatpush1.bf16.msra.mxu0 %v1063
        %1343 = vmatprep.subr.bf16.mxu0 %v1067
        %1344 = vmatpush1.bf16.msra.mxu0 %v1066
        %1345 = vmatprep.subr.bf16.mxu0 %v1070
        %1346 = vmatpush1.bf16.msra.mxu0 %v1069
        %1347 = vmatprep.subr.bf16.mxu0 %v1073
        %1348 = vmatpush1.bf16.msra.mxu0 %v1072
        %1349 = vmatprep.subr.bf16.mxu0 %v1076
        %1350 = vmatpush1.bf16.msra.mxu0 %v1075
        %1351 = vmatprep.subr.bf16.mxu0 %v1079
        %1352 = vmatpush1.bf16.msra.mxu0 %v1078
        %1353 = vmatprep.mubr.bf16.mxu0 %v530
        %1354 = vmatmul.mubr.bf16.gmra.mrb[0].mxu0 %v529
        %v1355 = vpop.f32.mrb[0].mxu0
        %v1356 = vadd.f32 0.0, %v1355
        %v1357 = vpop.f32.mrb[0].mxu0
        %v1358 = vadd.f32 0.0, %v1357
        %v1359 = vpop.f32.mrb[0].mxu0
        %v1360 = vadd.f32 0.0, %v1359
        %v1361 = vpop.f32.mrb[0].mxu0
        %v1362 = vadd.f32 0.0, %v1361
        %1363 = vmatprep.mubr.bf16.mxu0 %v536
        %1364 = vmatmul.mubr.bf16.gmra.mrb[0].mxu0 %v535
        %v1365 = vpop.f32.mrb[0].mxu0
        %v1366 = vadd.f32 0.0, %v1365
        %v1367 = vpop.f32.mrb[0].mxu0
        %v1368 = vadd.f32 0.0, %v1367
        %v1369 = vpop.f32.mrb[0].mxu0
        %v1370 = vadd.f32 0.0, %v1369
        %v1371 = vpop.f32.mrb[0].mxu0
        %v1372 = vadd.f32 0.0, %v1371
        %1373 = vdwg.mxu0
        %1374 = vmatprep.subr.bf16.mxu0 %v1082
        %1375 = vmatpush1.bf16.msra.mxu0 %v1081
        %1376 = vmatprep.subr.bf16.mxu0 %v1085
        %1377 = vmatpush1.bf16.msra.mxu0 %v1084
        %1378 = vmatprep.subr.bf16.mxu0 %v1088
        %1379 = vmatpush1.bf16.msra.mxu0 %v1087
        %1380 = vmatprep.subr.bf16.mxu0 %v1091
        %1381 = vmatpush1.bf16.msra.mxu0 %v1090
        %1382 = vmatprep.subr.bf16.mxu0 %v1094
        %1383 = vmatpush1.bf16.msra.mxu0 %v1093
        %1384 = vmatprep.subr.bf16.mxu0 %v1097
        %1385 = vmatpush1.bf16.msra.mxu0 %v1096
        %1386 = vmatprep.subr.bf16.mxu0 %v1100
        %1387 = vmatpush1.bf16.msra.mxu0 %v1099
        %1388 = vmatprep.subr.bf16.mxu0 %v1103
        %1389 = vmatpush1.bf16.msra.mxu0 %v1102
        %1390 = vmatprep.subr.bf16.mxu0 %v1106
        %1391 = vmatpush1.bf16.msra.mxu0 %v1105
        %1392 = vmatprep.subr.bf16.mxu0 %v1109
        %1393 = vmatpush1.bf16.msra.mxu0 %v1108
        %1394 = vmatprep.subr.bf16.mxu0 %v1112
        %1395 = vmatpush1.bf16.msra.mxu0 %v1111
        %1396 = vmatprep.subr.bf16.mxu0 %v1115
        %1397 = vmatpush1.bf16.msra.mxu0 %v1114
        %1398 = vmatprep.subr.bf16.mxu0 %v1118
        %1399 = vmatpush1.bf16.msra.mxu0 %v1117
        %1400 = vmatprep.subr.bf16.mxu0 %v1121
        %1401 = vmatpush1.bf16.msra.mxu0 %v1120
        %1402 = vmatprep.subr.bf16.mxu0 %v1124
        %1403 = vmatpush1.bf16.msra.mxu0 %v1123
        %1404 = vmatprep.subr.bf16.mxu0 %v1127
        %1405 = vmatpush1.bf16.msra.mxu0 %v1126
        %1406 = vmatprep.mubr.bf16.mxu0 %v532
        %1407 = vmatmul.mubr.bf16.gmra.mrb[0].mxu0 %v531
        %v1408 = vpop.f32.mrb[0].mxu0
        %v1409 = vadd.f32 %v1356, %v1408
        %v1410 = vpop.f32.mrb[0].mxu0
        %v1411 = vadd.f32 %v1358, %v1410
        %v1412 = vpop.f32.mrb[0].mxu0
        %v1413 = vadd.f32 %v1360, %v1412
        %v1414 = vpop.f32.mrb[0].mxu0
        %v1415 = vadd.f32 %v1362, %v1414
        %1416 = vmatprep.mubr.bf16.mxu0 %v538
        %1417 = vmatmul.mubr.bf16.gmra.mrb[0].mxu0 %v537
        %v1418 = vpop.f32.mrb[0].mxu0
        %v1419 = vadd.f32 %v1366, %v1418
        %v1420 = vpop.f32.mrb[0].mxu0
        %v1421 = vadd.f32 %v1368, %v1420
        %v1422 = vpop.f32.mrb[0].mxu0
        %v1423 = vadd.f32 %v1370, %v1422
        %v1424 = vpop.f32.mrb[0].mxu0
        %v1425 = vadd.f32 %v1372, %v1424
        %1426 = vdwg.mxu0
        %1427 = vmatprep.subr.bf16.mxu0 %v1130
        %1428 = vmatpush1.bf16.msra.mxu0 %v1129
        %1429 = vmatprep.subr.bf16.mxu0 %v1133
        %1430 = vmatpush1.bf16.msra.mxu0 %v1132
        %1431 = vmatprep.subr.bf16.mxu0 %v1136
        %1432 = vmatpush1.bf16.msra.mxu0 %v1135
        %1433 = vmatprep.subr.bf16.mxu0 %v1139
        %1434 = vmatpush1.bf16.msra.mxu0 %v1138
        %1435 = vmatprep.subr.bf16.mxu0 %v1142
        %1436 = vmatpush1.bf16.msra.mxu0 %v1141
        %1437 = vmatprep.subr.bf16.mxu0 %v1145
        %1438 = vmatpush1.bf16.msra.mxu0 %v1144
        %1439 = vmatprep.subr.bf16.mxu0 %v1148
        %1440 = vmatpush1.bf16.msra.mxu0 %v1147
        %1441 = vmatprep.subr.bf16.mxu0 %v1151
        %1442 = vmatpush1.bf16.msra.mxu0 %v1150
        %1443 = vmatprep.subr.bf16.mxu0 %v1154
        %1444 = vmatpush1.bf16.msra.mxu0 %v1153
        %1445 = vmatprep.subr.bf16.mxu0 %v1157
        %1446 = vmatpush1.bf16.msra.mxu0 %v1156
        %1447 = vmatprep.subr.bf16.mxu0 %v1160
        %1448 = vmatpush1.bf16.msra.mxu0 %v1159
        %1449 = vmatprep.subr.bf16.mxu0 %v1163
        %1450 = vmatpush1.bf16.msra.mxu0 %v1162
        %1451 = vmatprep.subr.bf16.mxu0 %v1166
        %1452 = vmatpush1.bf16.msra.mxu0 %v1165
        %1453 = vmatprep.subr.bf16.mxu0 %v1169
        %1454 = vmatpush1.bf16.msra.mxu0 %v1168
        %1455 = vmatprep.subr.bf16.mxu0 %v1172
        %1456 = vmatpush1.bf16.msra.mxu0 %v1171
        %1457 = vmatprep.subr.bf16.mxu0 %v1175
        %1458 = vmatpush1.bf16.msra.mxu0 %v1174
        %1459 = vmatprep.mubr.bf16.mxu0 %v534
        %1460 = vmatmul.mubr.bf16.gmra.mrb[0].mxu0 %v533
        %v1461 = vpop.f32.mrb[0].mxu0
        %v1462 = vadd.f32 %v1409, %v1461
        %v1463 = vpop.f32.mrb[0].mxu0
        %v1464 = vadd.f32 %v1411, %v1463
        %v1465 = vpop.f32.mrb[0].mxu0
        %v1466 = vadd.f32 %v1413, %v1465
        %v1467 = vpop.f32.mrb[0].mxu0
        %v1468 = vadd.f32 %v1415, %v1467
        %1469 = vmatprep.mubr.bf16.mxu0 %v540
        %1470 = vmatmul.mubr.bf16.gmra.mrb[0].mxu0 %v539
        %v1471 = vpop.f32.mrb[0].mxu0
        %v1472 = vadd.f32 %v1419, %v1471
        %v1473 = vpop.f32.mrb[0].mxu0
        %v1474 = vadd.f32 %v1421, %v1473
        %v1475 = vpop.f32.mrb[0].mxu0
        %v1476 = vadd.f32 %v1423, %v1475
        %v1477 = vpop.f32.mrb[0].mxu0
        %v1478 = vadd.f32 %v1425, %v1477
        %1479 = vdwg.mxu0
        %1480 = vmatprep.subr.bf16.mxu0 0
        %1481 = vmatpush1.bf16.msra.mxu0 %v1035
        %1482 = vmatprep.subr.bf16.mxu0 0
        %1483 = vmatpush1.bf16.msra.mxu0 %v1038
        %1484 = vmatprep.subr.bf16.mxu0 0
        %1485 = vmatpush1.bf16.msra.mxu0 %v1041
        %1486 = vmatprep.subr.bf16.mxu0 0
        %1487 = vmatpush1.bf16.msra.mxu0 %v1044
        %1488 = vmatprep.subr.bf16.mxu0 0
        %1489 = vmatpush1.bf16.msra.mxu0 %v1047
        %1490 = vmatprep.subr.bf16.mxu0 0
        %1491 = vmatpush1.bf16.msra.mxu0 %v1050
        %1492 = vmatprep.subr.bf16.mxu0 0
        %1493 = vmatpush1.bf16.msra.mxu0 %v1053
        %1494 = vmatprep.subr.bf16.mxu0 0
        %1495 = vmatpush1.bf16.msra.mxu0 %v1056
        %1496 = vmatprep.subr.bf16.mxu0 0
        %1497 = vmatpush1.bf16.msra.mxu0 %v1059
        %1498 = vmatprep.subr.bf16.mxu0 0
        %1499 = vmatpush1.bf16.msra.mxu0 %v1062
        %1500 = vmatprep.subr.bf16.mxu0 0
        %1501 = vmatpush1.bf16.msra.mxu0 %v1065
        %1502 = vmatprep.subr.bf16.mxu0 0
        %1503 = vmatpush1.bf16.msra.mxu0 %v1068
        %1504 = vmatprep.subr.bf16.mxu0 0
        %1505 = vmatpush1.bf16.msra.mxu0 %v1071
        %1506 = vmatprep.subr.bf16.mxu0 0
        %1507 = vmatpush1.bf16.msra.mxu0 %v1074
        %1508 = vmatprep.subr.bf16.mxu0 0
        %1509 = vmatpush1.bf16.msra.mxu0 %v1077
        %1510 = vmatprep.subr.bf16.mxu0 0
        %1511 = vmatpush1.bf16.msra.mxu0 %v1080
        %1512 = vmatprep.mubr.bf16.mxu0 %v530
        %1513 = vmatmul.mubr.bf16.gmra.mrb[0].mxu0 %v529
        %v1514 = vpop.f32.mrb[0].mxu0
        %v1515 = vadd.f32 0.0, %v1514
        %v1516 = vpop.f32.mrb[0].mxu0
        %v1517 = vpop.f32.mrb[0].mxu0
        %v1518 = vadd.f32 0.0, %v1517
        %v1519 = vpop.f32.mrb[0].mxu0
        %1520 = vmatprep.mubr.bf16.mxu0 %v536
        %1521 = vmatmul.mubr.bf16.gmra.mrb[0].mxu0 %v535
        %v1522 = vpop.f32.mrb[0].mxu0
        %v1523 = vadd.f32 0.0, %v1522
        %v1524 = vpop.f32.mrb[0].mxu0
        %v1525 = vpop.f32.mrb[0].mxu0
        %v1526 = vadd.f32 0.0, %v1525
        %v1527 = vpop.f32.mrb[0].mxu0
        %1528 = vdwg.mxu0
        %1529 = vmatprep.subr.bf16.mxu0 0
        %1530 = vmatpush1.bf16.msra.mxu0 %v1083
        %1531 = vmatprep.subr.bf16.mxu0 0
        %1532 = vmatpush1.bf16.msra.mxu0 %v1086
        %1533 = vmatprep.subr.bf16.mxu0 0
        %1534 = vmatpush1.bf16.msra.mxu0 %v1089
        %1535 = vmatprep.subr.bf16.mxu0 0
        %1536 = vmatpush1.bf16.msra.mxu0 %v1092
        %1537 = vmatprep.subr.bf16.mxu0 0
        %1538 = vmatpush1.bf16.msra.mxu0 %v1095
        %1539 = vmatprep.subr.bf16.mxu0 0
        %1540 = vmatpush1.bf16.msra.mxu0 %v1098
        %1541 = vmatprep.subr.bf16.mxu0 0
        %1542 = vmatpush1.bf16.msra.mxu0 %v1101
        %1543 = vmatprep.subr.bf16.mxu0 0
        %1544 = vmatpush1.bf16.msra.mxu0 %v1104
        %1545 = vmatprep.subr.bf16.mxu0 0
        %1546 = vmatpush1.bf16.msra.mxu0 %v1107
        %1547 = vmatprep.subr.bf16.mxu0 0
        %1548 = vmatpush1.bf16.msra.mxu0 %v1110
        %1549 = vmatprep.subr.bf16.mxu0 0
        %1550 = vmatpush1.bf16.msra.mxu0 %v1113
        %1551 = vmatprep.subr.bf16.mxu0 0
        %1552 = vmatpush1.bf16.msra.mxu0 %v1116
        %1553 = vmatprep.subr.bf16.mxu0 0
        %1554 = vmatpush1.bf16.msra.mxu0 %v1119
        %1555 = vmatprep.subr.bf16.mxu0 0
        %1556 = vmatpush1.bf16.msra.mxu0 %v1122
        %1557 = vmatprep.subr.bf16.mxu0 0
        %1558 = vmatpush1.bf16.msra.mxu0 %v1125
        %1559 = vmatprep.subr.bf16.mxu0 0
        %1560 = vmatpush1.bf16.msra.mxu0 %v1128
        %1561 = vmatprep.mubr.bf16.mxu0 %v532
        %1562 = vmatmul.mubr.bf16.gmra.mrb[0].mxu0 %v531
        %v1563 = vpop.f32.mrb[0].mxu0
        %v1564 = vadd.f32 %v1515, %v1563
        %v1565 = vpop.f32.mrb[0].mxu0
        %v1566 = vpop.f32.mrb[0].mxu0
        %v1567 = vadd.f32 %v1518, %v1566
        %v1568 = vpop.f32.mrb[0].mxu0
        %1569 = vmatprep.mubr.bf16.mxu0 %v538
        %1570 = vmatmul.mubr.bf16.gmra.mrb[0].mxu0 %v537
        %v1571 = vpop.f32.mrb[0].mxu0
        %v1572 = vadd.f32 %v1523, %v1571
        %v1573 = vpop.f32.mrb[0].mxu0
        %v1574 = vpop.f32.mrb[0].mxu0
        %v1575 = vadd.f32 %v1526, %v1574
        %v1576 = vpop.f32.mrb[0].mxu0
        %1577 = vdwg.mxu0
        %1578 = vmatprep.subr.bf16.mxu0 0
        %1579 = vmatpush1.bf16.msra.mxu0 %v1131
        %1580 = vmatprep.subr.bf16.mxu0 0
        %1581 = vmatpush1.bf16.msra.mxu0 %v1134
        %1582 = vmatprep.subr.bf16.mxu0 0
        %1583 = vmatpush1.bf16.msra.mxu0 %v1137
        %1584 = vmatprep.subr.bf16.mxu0 0
        %1585 = vmatpush1.bf16.msra.mxu0 %v1140
        %1586 = vmatprep.subr.bf16.mxu0 0
        %1587 = vmatpush1.bf16.msra.mxu0 %v1143
        %1588 = vmatprep.subr.bf16.mxu0 0
        %1589 = vmatpush1.bf16.msra.mxu0 %v1146
        %1590 = vmatprep.subr.bf16.mxu0 0
        %1591 = vmatpush1.bf16.msra.mxu0 %v1149
        %1592 = vmatprep.subr.bf16.mxu0 0
        %1593 = vmatpush1.bf16.msra.mxu0 %v1152
        %1594 = vmatprep.subr.bf16.mxu0 0
        %1595 = vmatpush1.bf16.msra.mxu0 %v1155
        %1596 = vmatprep.subr.bf16.mxu0 0
        %1597 = vmatpush1.bf16.msra.mxu0 %v1158
        %1598 = vmatprep.subr.bf16.mxu0 0
        %1599 = vmatpush1.bf16.msra.mxu0 %v1161
        %1600 = vmatprep.subr.bf16.mxu0 0
        %1601 = vmatpush1.bf16.msra.mxu0 %v1164
        %1602 = vmatprep.subr.bf16.mxu0 0
        %1603 = vmatpush1.bf16.msra.mxu0 %v1167
        %1604 = vmatprep.subr.bf16.mxu0 0
        %1605 = vmatpush1.bf16.msra.mxu0 %v1170
        %1606 = vmatprep.subr.bf16.mxu0 0
        %1607 = vmatpush1.bf16.msra.mxu0 %v1173
        %1608 = vmatprep.subr.bf16.mxu0 0
        %1609 = vmatpush1.bf16.msra.mxu0 %v1176
        %1610 = vmatprep.mubr.bf16.mxu0 %v534
        %1611 = vmatmul.mubr.bf16.gmra.mrb[0].mxu0 %v533
        %v1612 = vpop.f32.mrb[0].mxu0
        %v1613 = vadd.f32 %v1564, %v1612
        %v1614 = vpop.f32.mrb[0].mxu0
        %v1615 = vpop.f32.mrb[0].mxu0
        %v1616 = vadd.f32 %v1567, %v1615
        %v1617 = vpop.f32.mrb[0].mxu0
        %1618 = vmatprep.mubr.bf16.mxu0 %v540
        %1619 = vmatmul.mubr.bf16.gmra.mrb[0].mxu0 %v539
        %v1620 = vpop.f32.mrb[0].mxu0
        %v1621 = vadd.f32 %v1572, %v1620
        %v1622 = vpop.f32.mrb[0].mxu0
        %v1623 = vpop.f32.mrb[0].mxu0
        %v1624 = vadd.f32 %v1575, %v1623
        %v1625 = vpop.f32.mrb[0].mxu0
        %1626 = vdwg.mxu0
        %v1627 = vadd.f32 %v277, %v1462
        %v1628 = vadd.f32 %v278, %v1464
        %v1629 = vadd.f32 %v279, %v1613
        %v1630 = vadd.f32 %v280, %v1466
        %v1631 = vadd.f32 %v281, %v1468
        %v1632 = vadd.f32 %v282, %v1616
        %v1633 = vadd.f32 %v283, %v1472
        %v1634 = vadd.f32 %v284, %v1474
        %v1635 = vadd.f32 %v285, %v1621
        %v1636 = vadd.f32 %v286, %v1476
        %v1637 = vadd.f32 %v287, %v1478
        %v1638 = vadd.f32 %v288, %v1624
        %1639 = vst [vmem:[#allocation2] sm:$0xff] %v1627
        %1640 = vst [vmem:[#allocation2 + $0x8] sm:$0xff] %v1628
        %1641 = vst [vmem:[#allocation2 + $0x10] sm:$0xff] %v1629
        %1642 = vst [vmem:[#allocation2 + $0x18] sm:$0xff] %v1630
        %1643 = vst [vmem:[#allocation2 + $0x20] sm:$0xff] %v1631
        %1644 = vst [vmem:[#allocation2 + $0x28] sm:$0xff] %v1632
        %1645 = vst [vmem:[#allocation2 + $0x30] sm:$0xff] %v1633
        %1646 = vst [vmem:[#allocation2 + $0x38] sm:$0xff] %v1634
        %1647 = vst [vmem:[#allocation2 + $0x40] sm:$0xff] %v1635
        %1648 = vst [vmem:[#allocation2 + $0x48] sm:$0xff] %v1636
        %1649 = vst [vmem:[#allocation2 + $0x50] sm:$0xff] %v1637
        %1650 = vst [vmem:[#allocation2 + $0x58] sm:$0xff] %v1638
        %p1651 = scmp.eq.s32.totalorder %s19, 2
        // Predicated region
        $region60: #{reduction_a.5} parent=50 // pred_check
          %p1652 = pneg %p1651
        $region61: #{reduction_a.5} parent=50 // pred_check_branch
          %1654 = sbr.rel (%p1652) target = $region63
        $region62: #{reduction_a.5} parent=50 // pred_region
          %v1655 = vld [vmem:[#allocation2] sm:$0xff]
          %v1656 = vld [vmem:[#allocation2 + $0x8] sm:$0xff]
          %v1657 = vld [vmem:[#allocation2 + $0x10] sm:$0xff]
          %v1658 = vld [vmem:[#allocation2 + $0x18] sm:$0xff]
          %v1659 = vld [vmem:[#allocation2 + $0x20] sm:$0xff]
          %v1660 = vld [vmem:[#allocation2 + $0x28] sm:$0xff]
          %v1661 = vld [vmem:[#allocation2 + $0x30] sm:$0xff]
          %v1662 = vld [vmem:[#allocation2 + $0x38] sm:$0xff]
          %v1663 = vld [vmem:[#allocation2 + $0x40] sm:$0xff]
          %v1664 = vld [vmem:[#allocation2 + $0x48] sm:$0xff]
          %v1665 = vld [vmem:[#allocation2 + $0x50] sm:$0xff]
          %v1666 = vld [vmem:[#allocation2 + $0x58] sm:$0xff]
          %v1667 = vld [vmem:[%s2] sm:$0x7]
          %v1669 = vlaneseq
          %v1670 = vshrl.u32 %v1669, 7
          %v1671 = vsub.s32 0, %v1670
          %v1672 = vrot.slane %v1667, %v1671
          %v1673 = vlaneseq
          %v1674 = vshrl.u32 %v1673, 7
          %v1675 = vsub.s32 1, %v1674
          %v1676 = vrot.slane %v1667, %v1675
          %v1677 = vlaneseq
          %v1678 = vshrl.u32 %v1677, 7
          %v1679 = vsub.s32 2, %v1678
          %v1680 = vrot.slane %v1667, %v1679
          %v1684 = vadd.f32 %v1655, %v1672
          %v1685 = vadd.f32 %v1656, %v1676
          %v1686 = vadd.f32 %v1657, %v1680
          %v1687 = vadd.f32 %v1658, %v1672
          %v1688 = vadd.f32 %v1659, %v1676
          %v1689 = vadd.f32 %v1660, %v1680
          %v1690 = vadd.f32 %v1661, %v1672
          %v1691 = vadd.f32 %v1662, %v1676
          %v1692 = vadd.f32 %v1663, %v1680
          %v1693 = vadd.f32 %v1664, %v1672
          %v1694 = vadd.f32 %v1665, %v1676
          %v1695 = vadd.f32 %v1666, %v1680
          %v1696 = vmax.f32 %v1684, 0.0
          %v1697 = vmax.f32 %v1685, 0.0
          %v1698 = vmax.f32 %v1686, 0.0
          %v1699 = vmax.f32 %v1687, 0.0
          %v1700 = vmax.f32 %v1688, 0.0
          %v1701 = vmax.f32 %v1689, 0.0
          %v1702 = vmax.f32 %v1690, 0.0
          %v1703 = vmax.f32 %v1691, 0.0
          %v1704 = vmax.f32 %v1692, 0.0
          %v1705 = vmax.f32 %v1693, 0.0
          %v1706 = vmax.f32 %v1694, 0.0
          %v1707 = vmax.f32 %v1695, 0.0
          %1708 = vst [vmem:[%s258] sm:$0xff] %v1696
          %1709 = vst [vmem:[%s258 + $0x8] sm:$0xff] %v1697
          %1710 = vst [vmem:[%s258 + $0x10] sm:$0xff] %v1698
          %1711 = vst [vmem:[%s258 + $0x18] sm:$0xff] %v1699
          %1712 = vst [vmem:[%s258 + $0x20] sm:$0xff] %v1700
          %1713 = vst [vmem:[%s258 + $0x28] sm:$0xff] %v1701
          %1714 = vst [vmem:[%s258 + $0x30] sm:$0xff] %v1702
          %1715 = vst [vmem:[%s258 + $0x38] sm:$0xff] %v1703
          %1716 = vst [vmem:[%s258 + $0x40] sm:$0xff] %v1704
          %1717 = vst [vmem:[%s258 + $0x48] sm:$0xff] %v1705
          %1718 = vst [vmem:[%s258 + $0x50] sm:$0xff] %v1706
          %1719 = vst [vmem:[%s258 + $0x58] sm:$0xff] %v1707
        $region63: #{reduction_a.5} parent=50 // pred_fallthru
          _
        %s1720 = smul.u32 4, %s18
        %p1721 = scmp.lt.s32.totalorder %s1720, 3
        %s1722 = scalar_select %p1721, %s1720, 3
        %s1723 = smul.addr %s1722, 3
        %s1724 = smul.addr %s1723, 8
        %s1725 = scalar_lea.vmem %s3, %s1724
        // Predicated region
        $region64: #{reduction_a.5} parent=50 // pred_check
          %p1726 = pneg %p119
        $region65: #{reduction_a.5} parent=50 // pred_check_branch
          %1728 = sbr.rel (%p1726) target = $region67
        $region66: #{reduction_a.5} parent=50 // pred_region
          %s1729 = smul.u32 4, %s18
        $region67: #{reduction_a.5} parent=50 // pred_fallthru
          _
        // Predicated region
        $region68: #{reduction_a.5} parent=50 // pred_check
          %p1730 = pneg %p119
        $region69: #{reduction_a.5} parent=50 // pred_check_branch
          %1732 = sbr.rel (%p1730) target = $region71
        $region70: #{reduction_a.5} parent=50 // pred_region
          %s1733 = smul.u32 4, %s18
          %p1734 = scmp.lt.s32.totalorder %s1733, 3
          %s1735 = scalar_select %p1734, %s1733, 3
          %s1736 = smul.addr %s1735, 3
          %s1737 = smul.addr %s1736, 8
          %s1738 = scalar_lea.vmem %s3, %s1737
        $region71: #{reduction_a.5} parent=50 // pred_fallthru
          _
      $region51: #{reduction_a.5} parent=5 // pred_fallthru
        _
      %p1739 = scmp.le.s32.totalorder 2, %s9
      // Predicated region
      $region72: #{reduction_a.5} parent=5 // pred_check
        %p1740 = pneg %p1739
      $region73: #{reduction_a.5} parent=5 // pred_check_branch
        %1742 = sbr.rel (%p1740) target = $region75
      $region74: #{reduction_a.5} parent=5 // pred_region
        %s1743 = ssub.s32 %s9, 2
      $region75: #{reduction_a.5} parent=5 // pred_fallthru
        _
    $region6: #{reduction_a.5} parent=1 // loop_footer
      %s13 = sadd.s32 1, %s9
    $region7: #{reduction_a.5} parent=1 // loop_footer_branch
      %8 = sbr.rel target = $region3
    $region8: #{reduction_a.5} parent=1 // loop_exit
      _

</llo_original>
